<compile_context>
chip_gen: v7x
topology: tpu7x:2x2x1
jax: 0.10.0
libtpu: 0.0.40
codegen_flags: <defaults>
</compile_context>

<pallas_src>
import functools

import jax
import jax.numpy as jnp
import numpy as np
from jax.experimental import pallas as pl
from jax.experimental.pallas import tpu as pltpu

# Tile constants: 256-row / 512-col tiles are viable on all of v5e/v6e/v7x now
# that activations are bf16; worst-case double-buffered tiles stay far below
# the 48 MiB scoped-VMEM request (headroom on v7x's 64 MiB per-core VMEM).
_TM = 256          # linear: row (M) tile
_TN = 512          # linear: output-column (N) tile (lane-dense, weight stream)
_TQ = 256          # flash attention: query tile
_TK = 256          # flash attention: kv tile
_VMEM_LIMIT = 48 * 1024 * 1024
_NEG = -1e30       # large finite negative instead of -inf (NaN-safe masking)


# ----------------------------------------------------------------------------
# small helpers
# ----------------------------------------------------------------------------
def _round_up(x, m):
    return ((x + m - 1) // m) * m


def _pad_dim(a, axis, target):
    pad = target - a.shape[axis]
    if pad <= 0:
        return a
    widths = [(0, 0)] * a.ndim
    widths[axis] = (0, pad)
    return jnp.pad(a, widths)


def _pick_tile(n, cap):
    """Largest tile <= cap (full dim if small, else a 128-multiple dividing n)."""
    if n <= cap:
        return n
    t = (cap // 128) * 128
    while t >= 128:
        if n % t == 0:
            return t
        t -= 128
    return None                      # caller falls back to padding


def _gelu(x):
    # tanh-form GELU: the transcendental goes to the (otherwise idle) EUP slot
    # instead of a ~12-op VALU erf polynomial (VALU was the binding slot).
    # TODO(synk): torch F.gelu defaults to the exact erf form; the tanh form
    # differs by <~1e-3 which is acceptable for inference.
    return 0.5 * x * (1.0 + jnp.tanh(0.7978845608028654 *
                                     (x + 0.044715 * x * x * x)))


# ----------------------------------------------------------------------------
# Pallas kernels
# ----------------------------------------------------------------------------
def _make_linear_kernel(has_ln, has_bias, has_res, act, eps):
    """out = act( LN?(x) @ w + b? ) + res?   (bf16 MXU operands, f32 epilogue)."""

    def kernel(*refs):
        i = 0
        x_ref = refs[i]; i += 1
        w_ref = refs[i]; i += 1
        if has_ln:
            g_ref, bln_ref = refs[i], refs[i + 1]; i += 2
        if has_bias:
            b_ref = refs[i]; i += 1
        if has_res:
            r_ref = refs[i]; i += 1
        o_ref = refs[i]; i += 1

        if has_ln:
            xs_ref = refs[i]                    # (tm, K) bf16 scratch

            # LN + bf16 cast hoisted out of the output-column (j) loop: computed
            # once per row tile, reused for every j (j axis is "arbitrary").
            @pl.when(pl.program_id(1) == 0)
            def _():
                xf = x_ref[...].astype(jnp.float32)
                mu = jnp.mean(xf, axis=-1, keepdims=True)
                var = jnp.mean(jnp.square(xf - mu), axis=-1, keepdims=True)
                xf = (xf - mu) * jax.lax.rsqrt(var + eps)
                xs_ref[...] = (xf * g_ref[...] + bln_ref[...]).astype(jnp.bfloat16)

            xs = xs_ref[...]
        else:
            xs = x_ref[...]
            if xs.dtype != jnp.bfloat16:
                xs = xs.astype(jnp.bfloat16)

        y = jnp.dot(xs, w_ref[...], preferred_element_type=jnp.float32)
        if has_bias:
            y = y + b_ref[...]
        if act == "gelu":
            y = _gelu(y)
        if has_res:
            y = y + r_ref[...].astype(jnp.float32)
        o_ref[...] = y.astype(o_ref.dtype)

    return kernel


def _layernorm_kernel(x_ref, g_ref, b_ref, o_ref, *, eps):
    x = x_ref[...].astype(jnp.float32)
    mu = jnp.mean(x, axis=-1, keepdims=True)
    var = jnp.mean(jnp.square(x - mu), axis=-1, keepdims=True)
    y = (x - mu) * jax.lax.rsqrt(var + eps)
    o_ref[...] = (y * g_ref[...] + b_ref[...]).astype(o_ref.dtype)


def _flash_kernel(q_ref, k_ref, v_ref, o_ref, m_sc, l_sc, acc_sc, *,
                  n_head, causal, mask_kv, kv_len, tq, tk):
    # Online-softmax attention over KV tiles; q/k/v arrive as lane-dense (T, D)
    # blocks and heads are sliced in-kernel with static column slices.
    qi = pl.program_id(0)
    ki = pl.program_id(1)
    d_head = q_ref.shape[-1] // n_head

    @pl.when(ki == 0)
    def _():
        m_sc[...] = jnp.full(m_sc.shape, _NEG, jnp.float32)
        l_sc[...] = jnp.zeros(l_sc.shape, jnp.float32)
        acc_sc[...] = jnp.zeros(acc_sc.shape, jnp.float32)

    def body():
        mask = None
        if causal or mask_kv:
            k_idx = ki * tk + jax.lax.broadcasted_iota(jnp.int32, (tq, tk), 1)
            if mask_kv:                      # mask padded KV rows
                mask = k_idx >= kv_len
            if causal:
                q_idx = qi * tq + jax.lax.broadcasted_iota(jnp.int32, (tq, tk), 0)
                cmask = k_idx > q_idx
                mask = cmask if mask is None else jnp.logical_or(mask, cmask)
        for h in range(n_head):
            sl = slice(h * d_head, (h + 1) * d_head)
            # Dh**-0.5 scaling is pre-folded into the q projection weights.
            s = jax.lax.dot_general(q_ref[:, sl], k_ref[:, sl],
                                    (((1,), (1,)), ((), ())),
                                    preferred_element_type=jnp.float32)
            if mask is not None:
                s = jnp.where(mask, _NEG, s)
            m_prev = m_sc[h]
            m_new = jnp.maximum(m_prev, jnp.max(s, axis=-1, keepdims=True))
            alpha = jnp.exp(m_prev - m_new)
            # TODO(synk): on v6e/v7x a bf16 exp argument would use the faster
            # bf16 EUP path; kept f32 here so the same kernel also runs on v5e.
            p = jnp.exp(s - m_new)
            l_sc[h] = alpha * l_sc[h] + jnp.sum(p, axis=-1, keepdims=True)
            acc_sc[h] = alpha * acc_sc[h] + jax.lax.dot_general(
                p.astype(jnp.bfloat16), v_ref[:, sl],
                (((1,), (0,)), ((), ())), preferred_element_type=jnp.float32)
            m_sc[h] = m_new

    if causal or mask_kv:
        # Skip KV tiles that are entirely masked (fully above the causal
        # diagonal or fully inside the padded-KV region).
        live = None
        if mask_kv:
            live = ki * tk < kv_len
        if causal:
            c = ki * tk <= qi * tq + (tq - 1)
            live = c if live is None else jnp.logical_and(live, c)
        pl.when(live)(body)
    else:
        body()

    @pl.when(ki == pl.num_programs(1) - 1)
    def _():
        # Exact reciprocal: runs once per query tile, negligible cost.
        heads = [acc_sc[h] / l_sc[h] for h in range(n_head)]
        o_ref[...] = jnp.concatenate(heads, axis=-1).astype(o_ref.dtype)


# ----------------------------------------------------------------------------
# pallas_call wrappers (tiled grids, auto-pipelined)
# ----------------------------------------------------------------------------
def fused_linear(x, w, b=None, *, ln=None, act=None, residual=None,
                 eps=1e-5, out_dtype=jnp.bfloat16):
    """act(LN?(x) @ w + b?) + residual?

    x:(M,K), w:(K,N) bf16, b:(1,N) f32, ln=(g,b):(1,K) f32, residual:(M,N).
    Inputs are expected tile-aligned (pad-once glue / pre-padded weights); a
    pad+slice fallback exists but is never hit in this script.
    """
    m, k = x.shape
    kw, n = w.shape
    assert k == kw
    tm = _pick_tile(m, _TM)
    tn = _pick_tile(n, _TN)
    padded = False
    if tm is None:
        tm, padded = _TM, True
        x = _pad_dim(x, 0, _round_up(m, _TM))
        if residual is not None:
            residual = _pad_dim(residual, 0, _round_up(m, _TM))
    if tn is None:
        tn, padded = _TN, True
        w = _pad_dim(w, 1, _round_up(n, _TN))
        if b is not None:
            b = _pad_dim(b, 1, _round_up(n, _TN))
        if residual is not None:
            residual = _pad_dim(residual, 1, _round_up(n, _TN))
    m_p, n_p = x.shape[0], w.shape[1]

    in_arrays = [x, w]
    in_specs = [pl.BlockSpec((tm, k), lambda i, j: (i, 0)),
                pl.BlockSpec((k, tn), lambda i, j: (0, j))]
    scratch = []
    if ln is not None:
        in_arrays += [ln[0], ln[1]]
        in_specs += [pl.BlockSpec((1, k), lambda i, j: (0, 0)),
                     pl.BlockSpec((1, k), lambda i, j: (0, 0))]
        scratch = [pltpu.VMEM((tm, k), jnp.bfloat16)]   # LN(x) cache per row tile
    if b is not None:
        in_arrays.append(b)
        in_specs.append(pl.BlockSpec((1, tn), lambda i, j: (0, j)))
    if residual is not None:
        in_arrays.append(residual)
        in_specs.append(pl.BlockSpec((tm, tn), lambda i, j: (i, j)))

    kernel = _make_linear_kernel(ln is not None, b is not None,
                                 residual is not None, act, eps)
    out = pl.pallas_call(
        kernel,
        grid=(m_p // tm, n_p // tn),
        in_specs=in_specs,
        out_specs=pl.BlockSpec((tm, tn), lambda i, j: (i, j)),
        out_shape=jax.ShapeDtypeStruct((m_p, n_p), out_dtype),
        scratch_shapes=scratch,
        compiler_params=pltpu.CompilerParams(
            # j must iterate sequentially when the LN scratch is reused
            dimension_semantics=("parallel",
                                 "arbitrary" if ln is not None else "parallel"),
            vmem_limit_bytes=_VMEM_LIMIT),
    )(*in_arrays)
    return out[:m, :n] if padded else out


def flash_attention(q, k, v, *, n_head, causal, kv_len):
    """q:(Tq,D), k/v:(Tk,D) bf16 lane-dense blocks; heads sliced in-kernel."""
    tq_len, d = q.shape
    tk_len = k.shape[0]
    tq = _pick_tile(tq_len, _TQ)
    tk = _pick_tile(tk_len, _TK)
    if tq is None:                                  # fallback; unused here
        tq = _TQ
        q = _pad_dim(q, 0, _round_up(tq_len, tq))
    if tk is None:
        tk = _TK
        k = _pad_dim(k, 0, _round_up(tk_len, tk))
        v = _pad_dim(v, 0, _round_up(tk_len, tk))
    tq_p, tk_p = q.shape[0], k.shape[0]
    d_head = d // n_head

    kernel = functools.partial(
        _flash_kernel, n_head=n_head, causal=causal,
        mask_kv=(tk_p != kv_len), kv_len=kv_len, tq=tq, tk=tk)
    out = pl.pallas_call(
        kernel,
        grid=(tq_p // tq, tk_p // tk),
        in_specs=[pl.BlockSpec((tq, d), lambda qi, ki: (qi, 0)),
                  pl.BlockSpec((tk, d), lambda qi, ki: (ki, 0)),
                  pl.BlockSpec((tk, d), lambda qi, ki: (ki, 0))],
        out_specs=pl.BlockSpec((tq, d), lambda qi, ki: (qi, 0)),
        out_shape=jax.ShapeDtypeStruct((tq_p, d), jnp.bfloat16),
        scratch_shapes=[pltpu.VMEM((n_head, tq, 1), jnp.float32),
                        pltpu.VMEM((n_head, tq, 1), jnp.float32),
                        pltpu.VMEM((n_head, tq, d_head), jnp.float32)],
        compiler_params=pltpu.CompilerParams(
            dimension_semantics=("parallel", "arbitrary"),
            vmem_limit_bytes=_VMEM_LIMIT),
    )(q, k, v)
    return out[:tq_len] if tq_p != tq_len else out


def pallas_layernorm(x, g, b, eps=1e-5):
    m, d = x.shape
    tm = _pick_tile(m, _TM)
    out = pl.pallas_call(
        functools.partial(_layernorm_kernel, eps=eps),
        grid=(m // tm,),
        in_specs=[pl.BlockSpec((tm, d), lambda i: (i, 0)),
                  pl.BlockSpec((1, d), lambda i: (0, 0)),
                  pl.BlockSpec((1, d), lambda i: (0, 0))],
        out_specs=pl.BlockSpec((tm, d), lambda i: (i, 0)),
        out_shape=jax.ShapeDtypeStruct((m, d), jnp.bfloat16),
        compiler_params=pltpu.CompilerParams(
            dimension_semantics=("parallel",),
            vmem_limit_bytes=_VMEM_LIMIT),
    )(x, g, b)
    return out


def conv1d_gelu(x_tc, w_col, b, *, stride):
    # im2col: build (T_out, K*C_in) in glue, run one tiled matmul (+GELU).
    # x_tc: (T_in, C_in); w_col: (K*C_in, C_out) bf16; padding = 1, K = 3.
    t_in, _ = x_tc.shape
    k, pad = 3, 1
    t_out = (t_in + 2 * pad - k) // stride + 1
    x_pad = jnp.pad(x_tc, ((pad, pad), (0, 0)))
    cols = [x_pad[kk: kk + stride * t_out: stride, :] for kk in range(k)]
    xcol = jnp.concatenate(cols, axis=1).astype(jnp.bfloat16)
    return fused_linear(xcol, w_col, b, act="gelu")


# ----------------------------------------------------------------------------
# Whisper model glue (per-sample)
# ----------------------------------------------------------------------------
def self_attention(p, x, n_head, causal, kv_len):
    d = x.shape[1]
    # LN fused into the (D, 3D) QKV projection; key bias is a stored zero block.
    qkv = fused_linear(x, p["qkv_w"], p["qkv_b"], ln=(p["ln_g"], p["ln_b"]))
    q, k, v = qkv[:, :d], qkv[:, d:2 * d], qkv[:, 2 * d:]
    o = flash_attention(q, k, v, n_head=n_head, causal=causal, kv_len=kv_len)
    # residual add fused into the output-projection epilogue
    return fused_linear(o, p["o_w"], p["o_b"], residual=x)


def cross_attention(p, x, xa, n_head, kv_len):
    q = fused_linear(x, p["q_w"], p["q_b"], ln=(p["ln_g"], p["ln_b"]))
    k = fused_linear(xa, p["k_w"], None)            # Whisper key proj: no bias
    v = fused_linear(xa, p["v_w"], p["v_b"])
    o = flash_attention(q, k, v, n_head=n_head, causal=False, kv_len=kv_len)
    return fused_linear(o, p["o_w"], p["o_b"], residual=x)


def mlp_block(p, x):
    h = fused_linear(x, p["mlp1_w"], p["mlp1_b"],
                     ln=(p["mlp_ln_g"], p["mlp_ln_b"]), act="gelu")
    return fused_linear(h, p["mlp2_w"], p["mlp2_b"], residual=x)


def encoder_forward(p, cfg, mel):
    # mel: (n_mels, T_in) -- PyTorch NCW with batch dropped
    x = mel.T                                       # (T_in, n_mels), time-major
    x = conv1d_gelu(x, p["conv1_w"], p["conv1_b"], stride=1)
    x = conv1d_gelu(x, p["conv2_w"], p["conv2_b"], stride=2)
    t_ctx = x.shape[0]
    x = (x.astype(jnp.float32) + p["pos_emb"]).astype(jnp.bfloat16)
    # Pad the sequence ONCE to the row/attention tile multiple (_TM == _TQ);
    # all subsequent encoder activations stay tile-aligned (no per-call pads).
    if t_ctx > _TM:
        x = _pad_dim(x, 0, _round_up(t_ctx, _TM))
    for blk in p["blocks"]:
        x = self_attention(blk["attn"], x, cfg["n_audio_head"],
                           causal=False, kv_len=t_ctx)
        x = mlp_block(blk, x)
    x = pallas_layernorm(x, p["ln_post_g"], p["ln_post_b"])
    return x, t_ctx                                 # padded output + true length


def decoder_forward(p, cfg, tokens, xa, xa_len):
    t = tokens.shape[0]
    x = (p["tok_emb"][tokens] + p["pos_emb"][:t]).astype(jnp.bfloat16)
    if t > _TM:                                     # decoder ctx small; no-op here
        x = _pad_dim(x, 0, _round_up(t, _TM))
    for blk in p["blocks"]:
        x = self_attention(blk["attn"], x, cfg["n_text_head"],
                           causal=True, kv_len=t)
        x = cross_attention(blk["cross"], x, xa, cfg["n_text_head"],
                            kv_len=xa_len)
        x = mlp_block(blk, x)
    # final LN fused into the vocab-tiled logits matmul; tok_emb^T is
    # pre-transposed and pre-padded at init.  Slice only here, at the very end.
    logits = fused_linear(x, p["tok_emb_T"], None, ln=(p["ln_g"], p["ln_b"]),
                          out_dtype=jnp.float32)
    return logits[:t, :cfg["n_vocab"]]


def sensevoice_forward(params, mel, tokens, *, cfg):
    # Whisper.forward(mel, tokens) == decoder(tokens, encoder(mel)).
    # TODO(synk): the source module only supports batch_size=1 inference; the
    # per-sample loop could be folded into a batch grid axis if needed.
    outs = []
    for b in range(mel.shape[0]):
        xa, xa_len = encoder_forward(params["encoder"], cfg, mel[b])
        outs.append(decoder_forward(params["decoder"], cfg, tokens[b], xa, xa_len))
    return jnp.stack(outs)


# ----------------------------------------------------------------------------
# Deterministic parameter init (shapes follow whisper.model.ModelDimensions)
# Matmul weights stored bf16 (MXU operands); biases / LN params f32, (1, N).
# ----------------------------------------------------------------------------
class _KeyGen:
    def __init__(self, key):
        self._key = key

    def __call__(self):
        self._key, sub = jax.random.split(self._key)
        return sub


def _sinusoids(length, channels, max_timescale=10000.0):
    log_inc = np.log(max_timescale) / (channels // 2 - 1)
    inv_ts = jnp.exp(-log_inc * jnp.arange(channels // 2, dtype=jnp.float32))
    t = jnp.arange(length, dtype=jnp.float32)[:, None] * inv_ts[None, :]
    return jnp.concatenate([jnp.sin(t), jnp.cos(t)], axis=1)


def init_params(key, dims):
    kg = _KeyGen(key)

    def w32(shape, scale=0.05):
        return scale * jax.random.normal(kg(), shape, jnp.float32)

    def w(shape):
        return w32(shape).astype(jnp.bfloat16)

    def bias(n):
        return w32((1, n))

    def ones(n):
        return jnp.ones((1, n), jnp.float32)

    def zeros(n):
        return jnp.zeros((1, n), jnp.float32)

    def init_self_attn(d, n_head):
        sc = float(d // n_head) ** -0.5             # attention scale folded into q
        qw, kw, vw = w32((d, d)) * sc, w32((d, d)), w32((d, d))
        return dict(
            ln_g=ones(d), ln_b=zeros(d),
            qkv_w=jnp.concatenate([qw, kw, vw], axis=1).astype(jnp.bfloat16),
            qkv_b=jnp.concatenate([bias(d) * sc, zeros(d), bias(d)], axis=1),
            o_w=w((d, d)), o_b=bias(d))

    def init_cross_attn(d, n_head):
        sc = float(d // n_head) ** -0.5
        return dict(
            ln_g=ones(d), ln_b=zeros(d),
            q_w=(w32((d, d)) * sc).astype(jnp.bfloat16), q_b=bias(d) * sc,
            k_w=w((d, d)),                           # key proj: no bias
            v_w=w((d, d)), v_b=bias(d),
            o_w=w((d, d)), o_b=bias(d))

    def init_block(d, n_head, cross):
        blk = dict(attn=init_self_attn(d, n_head),
                   mlp_ln_g=ones(d), mlp_ln_b=zeros(d),
                   mlp1_w=w((d, 4 * d)), mlp1_b=bias(4 * d),
                   mlp2_w=w((4 * d, d)), mlp2_b=bias(d))
        if cross:
            blk["cross"] = init_cross_attn(d, n_head)
        return blk

    da, dt = dims["n_audio_state"], dims["n_text_state"]
    encoder = dict(
        conv1_w=w((3 * dims["n_mels"], da)), conv1_b=bias(da),
        conv2_w=w((3 * da, da)), conv2_b=bias(da),
        pos_emb=_sinusoids(dims["n_audio_ctx"], da),
        blocks=[init_block(da, dims["n_audio_head"], cross=False)
                for _ in range(dims["n_audio_layer"])],
        ln_post_g=ones(da), ln_post_b=zeros(da))

    n_vocab = dims["n_vocab"]
    tok_emb = w32((n_vocab, dt))
    # tok_emb^T is pre-transposed AND pre-padded to a tile multiple at init so
    # the vocab-tiled logits matmul never pads / copies the weight per call.
    n_vocab_p = (n_vocab if _pick_tile(n_vocab, _TN) is not None
                 else _round_up(n_vocab, _TN))
    tok_emb_t = _pad_dim(tok_emb.T.astype(jnp.bfloat16), 1, n_vocab_p)
    decoder = dict(
        tok_emb=tok_emb, tok_emb_T=tok_emb_t,
        pos_emb=w32((dims["n_text_ctx"], dt)),
        blocks=[init_block(dt, dims["n_text_head"], cross=True)
                for _ in range(dims["n_text_layer"])],
        ln_g=ones(dt), ln_b=zeros(dt))
    return dict(encoder=encoder, decoder=decoder)


# ----------------------------------------------------------------------------
if __name__ == "__main__":
    # Small, consistent ModelDimensions (n_audio_state == n_text_state, as
    # required by Whisper's cross-attention).
    dims = dict(n_mels=16, n_audio_ctx=16, n_audio_state=32, n_audio_head=4,
                n_audio_layer=2, n_vocab=64, n_text_ctx=8, n_text_state=32,
                n_text_head=4, n_text_layer=2)
    cfg = dict(n_audio_head=dims["n_audio_head"],
               n_text_head=dims["n_text_head"],
               n_vocab=dims["n_vocab"])

    root = jax.random.PRNGKey(0)
    kparams, kmel, ktok = jax.random.split(root, 3)
    params = init_params(kparams, dims)

    B = 2
    t_in = 2 * dims["n_audio_ctx"]                  # conv2 stride-2 halves it
    mel = jax.random.normal(kmel, (B, dims["n_mels"], t_in), jnp.float32)
    tokens = jax.random.randint(ktok, (B, 6), 0, dims["n_vocab"],
                                dtype=jnp.int32)

    fwd = jax.jit(functools.partial(sensevoice_forward, cfg=cfg))
    logits = fwd(params, mel, tokens)               # (B, 6, n_vocab)
    jax.block_until_ready(logits)
    assert logits.shape == (B, 6, dims["n_vocab"])
    assert bool(jnp.all(jnp.isfinite(logits)))
    # TODO(synk): whisper.decode's beam/greedy token search, tokenizer and
    # audio/fbank frontend are host-side control flow with no Pallas equivalent;
    # only the model forward (encoder + decoder logits) is implemented.
    print("KERNEL_OK")
</pallas_src>

<mosaic_0001>
module attributes {stable_mosaic.version = 11 : i64} {
  func.func @kernel(%arg0: i32, %arg1: i32, %arg2: memref<32x48xbf16, #tpu.memory_space<vmem>>, %arg3: memref<48x32xbf16, #tpu.memory_space<vmem>>, %arg4: memref<1x32xf32, #tpu.memory_space<vmem>>, %arg5: memref<32x32xbf16, #tpu.memory_space<vmem>>) attributes {dimension_semantics = [#tpu.dimension_semantics<parallel>, #tpu.dimension_semantics<parallel>], iteration_bounds = array<i64: 1, 1>, scalar_prefetch = 0 : i64, scratch_operands = 0 : i64, tpu.core_type = #tpu.core_type<tc>, window_params = [{transform_indices = @transform_0, window_bounds = array<i64: 32, 48>}, {transform_indices = @transform_1, window_bounds = array<i64: 48, 32>}, {transform_indices = @transform_2, window_bounds = array<i64: 1, 32>}, {transform_indices = @transform_3, window_bounds = array<i64: 32, 32>}]} {
    %c0 = arith.constant 0 : index
    %c0_0 = arith.constant 0 : index
    %0 = vector.load %arg2[%c0, %c0_0] : memref<32x48xbf16, #tpu.memory_space<vmem>>, vector<32x48xbf16>
    %c0_1 = arith.constant 0 : index
    %c0_2 = arith.constant 0 : index
    %1 = vector.load %arg3[%c0_1, %c0_2] : memref<48x32xbf16, #tpu.memory_space<vmem>>, vector<48x32xbf16>
    %cst = arith.constant dense<0.000000e+00> : vector<32x32xf32>
    %2 = tpu.matmul %0, %1, %cst {dimension_numbers = #tpu.dot_dimension_numbers<[1], [0], [0], [1], [0, 0, 1, 1], [], []>} : vector<32x48xbf16>, vector<48x32xbf16>, vector<32x32xf32> -> vector<32x32xf32>
    %c0_3 = arith.constant 0 : index
    %c0_4 = arith.constant 0 : index
    %3 = vector.load %arg4[%c0_3, %c0_4] : memref<1x32xf32, #tpu.memory_space<vmem>>, vector<1x32xf32>
    %4 = vector.broadcast %3 : vector<1x32xf32> to vector<32x32xf32>
    %5 = arith.addf %2, %4 : vector<32x32xf32>
    %cst_5 = arith.constant 5.000000e-01 : f32
    %6 = vector.broadcast %cst_5 : f32 to vector<32x32xf32>
    %7 = arith.mulf %6, %5 : vector<32x32xf32>
    %cst_6 = arith.constant 4.471500e-02 : f32
    %8 = vector.broadcast %cst_6 : f32 to vector<32x32xf32>
    %9 = arith.mulf %8, %5 : vector<32x32xf32>
    %10 = arith.mulf %9, %5 : vector<32x32xf32>
    %11 = arith.mulf %10, %5 : vector<32x32xf32>
    %12 = arith.addf %5, %11 : vector<32x32xf32>
    %cst_7 = arith.constant 0.797884583 : f32
    %13 = vector.broadcast %cst_7 : f32 to vector<32x32xf32>
    %14 = arith.mulf %13, %12 : vector<32x32xf32>
    %15 = math.tanh %14 : vector<32x32xf32>
    %cst_8 = arith.constant 1.000000e+00 : f32
    %16 = vector.broadcast %cst_8 : f32 to vector<32x32xf32>
    %17 = arith.addf %16, %15 : vector<32x32xf32>
    %18 = arith.mulf %7, %17 : vector<32x32xf32>
    %19 = arith.truncf %18 : vector<32x32xf32> to vector<32x32xbf16>
    %c0_9 = arith.constant 0 : index
    %c0_10 = arith.constant 0 : index
    %20 = vector.load %arg5[%c0_9, %c0_10] : memref<32x32xbf16, #tpu.memory_space<vmem>>, vector<32x32xbf16>
    tpu.vector_store %arg5[%c0_9, %c0_10], %19 {strides = array<i32>} : memref<32x32xbf16, #tpu.memory_space<vmem>>, vector<32x32xbf16>,
    return
  }
  func.func @transform_0(%arg0: i32, %arg1: i32) -> (i32, i32) {
    %c0_i32 = arith.constant 0 : i32
    %c0_i32_0 = arith.constant 0 : i32
    return %arg0, %c0_i32 : i32, i32
  }
  func.func @transform_1(%arg0: i32, %arg1: i32) -> (i32, i32) {
    %c0_i32 = arith.constant 0 : i32
    %c0_i32_0 = arith.constant 0 : i32
    return %c0_i32, %arg1 : i32, i32
  }
  func.func @transform_2(%arg0: i32, %arg1: i32) -> (i32, i32) {
    %c0_i32 = arith.constant 0 : i32
    %c0_i32_0 = arith.constant 0 : i32
    return %c0_i32, %arg1 : i32, i32
  }
  func.func @transform_3(%arg0: i32, %arg1: i32) -> (i32, i32) {
    %c0_i32 = arith.constant 0 : i32
    return %arg0, %arg1 : i32, i32
  }
}

module attributes {stable_mosaic.version = 11 : i64} {
  func.func @kernel(%arg0: i32, %arg1: i32, %arg2: memref<16x96xbf16, #tpu.memory_space<vmem>>, %arg3: memref<96x32xbf16, #tpu.memory_space<vmem>>, %arg4: memref<1x32xf32, #tpu.memory_space<vmem>>, %arg5: memref<16x32xbf16, #tpu.memory_space<vmem>>) attributes {dimension_semantics = [#tpu.dimension_semantics<parallel>, #tpu.dimension_semantics<parallel>], iteration_bounds = array<i64: 1, 1>, scalar_prefetch = 0 : i64, scratch_operands = 0 : i64, tpu.core_type = #tpu.core_type<tc>, window_params = [{transform_indices = @transform_0, window_bounds = array<i64: 16, 96>}, {transform_indices = @transform_1, window_bounds = array<i64: 96, 32>}, {transform_indices = @transform_2, window_bounds = array<i64: 1, 32>}, {transform_indices = @transform_3, window_bounds = array<i64: 16, 32>}]} {
    %c0 = arith.constant 0 : index
    %c0_0 = arith.constant 0 : index
    %0 = vector.load %arg2[%c0, %c0_0] : memref<16x96xbf16, #tpu.memory_space<vmem>>, vector<16x96xbf16>
    %c0_1 = arith.constant 0 : index
    %c0_2 = arith.constant 0 : index
    %1 = vector.load %arg3[%c0_1, %c0_2] : memref<96x32xbf16, #tpu.memory_space<vmem>>, vector<96x32xbf16>
    %cst = arith.constant dense<0.000000e+00> : vector<16x32xf32>
    %2 = tpu.matmul %0, %1, %cst {dimension_numbers = #tpu.dot_dimension_numbers<[1], [0], [0], [1], [0, 0, 1, 1], [], []>} : vector<16x96xbf16>, vector<96x32xbf16>, vector<16x32xf32> -> vector<16x32xf32>
    %c0_3 = arith.constant 0 : index
    %c0_4 = arith.constant 0 : index
    %3 = vector.load %arg4[%c0_3, %c0_4] : memref<1x32xf32, #tpu.memory_space<vmem>>, vector<1x32xf32>
    %4 = vector.broadcast %3 : vector<1x32xf32> to vector<16x32xf32>
    %5 = arith.addf %2, %4 : vector<16x32xf32>
    %cst_5 = arith.constant 5.000000e-01 : f32
    %6 = vector.broadcast %cst_5 : f32 to vector<16x32xf32>
    %7 = arith.mulf %6, %5 : vector<16x32xf32>
    %cst_6 = arith.constant 4.471500e-02 : f32
    %8 = vector.broadcast %cst_6 : f32 to vector<16x32xf32>
    %9 = arith.mulf %8, %5 : vector<16x32xf32>
    %10 = arith.mulf %9, %5 : vector<16x32xf32>
    %11 = arith.mulf %10, %5 : vector<16x32xf32>
    %12 = arith.addf %5, %11 : vector<16x32xf32>
    %cst_7 = arith.constant 0.797884583 : f32
    %13 = vector.broadcast %cst_7 : f32 to vector<16x32xf32>
    %14 = arith.mulf %13, %12 : vector<16x32xf32>
    %15 = math.tanh %14 : vector<16x32xf32>
    %cst_8 = arith.constant 1.000000e+00 : f32
    %16 = vector.broadcast %cst_8 : f32 to vector<16x32xf32>
    %17 = arith.addf %16, %15 : vector<16x32xf32>
    %18 = arith.mulf %7, %17 : vector<16x32xf32>
    %19 = arith.truncf %18 : vector<16x32xf32> to vector<16x32xbf16>
    %c0_9 = arith.constant 0 : index
    %c0_10 = arith.constant 0 : index
    %20 = vector.load %arg5[%c0_9, %c0_10] : memref<16x32xbf16, #tpu.memory_space<vmem>>, vector<16x32xbf16>
    tpu.vector_store %arg5[%c0_9, %c0_10], %19 {strides = array<i32>} : memref<16x32xbf16, #tpu.memory_space<vmem>>, vector<16x32xbf16>,
    return
  }
  func.func @transform_0(%arg0: i32, %arg1: i32) -> (i32, i32) {
    %c0_i32 = arith.constant 0 : i32
    %c0_i32_0 = arith.constant 0 : i32
    return %arg0, %c0_i32 : i32, i32
  }
  func.func @transform_1(%arg0: i32, %arg1: i32) -> (i32, i32) {
    %c0_i32 = arith.constant 0 : i32
    %c0_i32_0 = arith.constant 0 : i32
    return %c0_i32, %arg1 : i32, i32
  }
  func.func @transform_2(%arg0: i32, %arg1: i32) -> (i32, i32) {
    %c0_i32 = arith.constant 0 : i32
    %c0_i32_0 = arith.constant 0 : i32
    return %c0_i32, %arg1 : i32, i32
  }
  func.func @transform_3(%arg0: i32, %arg1: i32) -> (i32, i32) {
    %c0_i32 = arith.constant 0 : i32
    return %arg0, %arg1 : i32, i32
  }
}

module attributes {stable_mosaic.version = 11 : i64} {
  func.func @kernel(%arg0: i32, %arg1: i32, %arg2: memref<16x32xbf16, #tpu.memory_space<vmem>>, %arg3: memref<32x96xbf16, #tpu.memory_space<vmem>>, %arg4: memref<1x32xf32, #tpu.memory_space<vmem>>, %arg5: memref<1x32xf32, #tpu.memory_space<vmem>>, %arg6: memref<1x96xf32, #tpu.memory_space<vmem>>, %arg7: memref<16x96xbf16, #tpu.memory_space<vmem>>, %arg8: memref<16x32xbf16, #tpu.memory_space<vmem>>) attributes {dimension_semantics = [#tpu.dimension_semantics<parallel>, #tpu.dimension_semantics<arbitrary>], iteration_bounds = array<i64: 1, 1>, scalar_prefetch = 0 : i64, scratch_operands = 1 : i64, tpu.core_type = #tpu.core_type<tc>, window_params = [{transform_indices = @transform_0, window_bounds = array<i64: 16, 32>}, {transform_indices = @transform_1, window_bounds = array<i64: 32, 96>}, {pipeline_mode = #tpu.pipeline_mode<synchronous>, transform_indices = @transform_2, window_bounds = array<i64: 1, 32>}, {pipeline_mode = #tpu.pipeline_mode<synchronous>, transform_indices = @transform_3, window_bounds = array<i64: 1, 32>}, {transform_indices = @transform_4, window_bounds = array<i64: 1, 96>}, {transform_indices = @transform_5, window_bounds = array<i64: 16, 96>}]} {
    %c0_i32 = arith.constant 0 : i32
    %0 = arith.cmpi eq, %arg1, %c0_i32 : i32
    %1 = arith.extui %0 : i1 to i32
    %c0_i32_0 = arith.constant 0 : i32
    %2 = arith.cmpi ne, %1, %c0_i32_0 : i32
    scf.if %2 {
      %c0_8 = arith.constant 0 : index
      %c0_9 = arith.constant 0 : index
      %11 = vector.load %arg2[%c0_8, %c0_9] : memref<16x32xbf16, #tpu.memory_space<vmem>>, vector<16x32xbf16>
      %12 = arith.extf %11 : vector<16x32xbf16> to vector<16x32xf32>
      %cst_10 = arith.constant dense<0.000000e+00> : vector<16xf32>
      %13 = vector.multi_reduction <add>, %12, %cst_10 [1] : vector<16x32xf32> to vector<16xf32>
      %14 = vector.shape_cast %13 : vector<16xf32> to vector<16x1xf32>
      %cst_11 = arith.constant 3.200000e+01 : f32
      %15 = vector.broadcast %cst_11 : f32 to vector<16x1xf32>
      %16 = arith.divf %14, %15 : vector<16x1xf32>
      %17 = vector.broadcast %16 : vector<16x1xf32> to vector<16x32xf32>
      %18 = arith.subf %12, %17 : vector<16x32xf32>
      %19 = arith.mulf %18, %18 : vector<16x32xf32>
      %cst_12 = arith.constant dense<0.000000e+00> : vector<16xf32>
      %20 = vector.multi_reduction <add>, %19, %cst_12 [1] : vector<16x32xf32> to vector<16xf32>
      %21 = vector.shape_cast %20 : vector<16xf32> to vector<16x1xf32>
      %cst_13 = arith.constant 3.200000e+01 : f32
      %22 = vector.broadcast %cst_13 : f32 to vector<16x1xf32>
      %23 = arith.divf %21, %22 : vector<16x1xf32>
      %24 = vector.broadcast %16 : vector<16x1xf32> to vector<16x32xf32>
      %25 = arith.subf %12, %24 : vector<16x32xf32>
      %cst_14 = arith.constant 9.99999974E-6 : f32
      %26 = vector.broadcast %cst_14 : f32 to vector<16x1xf32>
      %27 = arith.addf %23, %26 : vector<16x1xf32>
      %28 = math.rsqrt %27 : vector<16x1xf32>
      %29 = vector.broadcast %28 : vector<16x1xf32> to vector<16x32xf32>
      %30 = arith.mulf %25, %29 : vector<16x32xf32>
      %c0_15 = arith.constant 0 : index
      %c0_16 = arith.constant 0 : index
      %31 = vector.load %arg4[%c0_15, %c0_16] : memref<1x32xf32, #tpu.memory_space<vmem>>, vector<1x32xf32>
      %32 = vector.broadcast %31 : vector<1x32xf32> to vector<16x32xf32>
      %33 = arith.mulf %30, %32 : vector<16x32xf32>
      %c0_17 = arith.constant 0 : index
      %c0_18 = arith.constant 0 : index
      %34 = vector.load %arg5[%c0_17, %c0_18] : memref<1x32xf32, #tpu.memory_space<vmem>>, vector<1x32xf32>
      %35 = vector.broadcast %34 : vector<1x32xf32> to vector<16x32xf32>
      %36 = arith.addf %33, %35 : vector<16x32xf32>
      %37 = arith.truncf %36 : vector<16x32xf32> to vector<16x32xbf16>
      %c0_19 = arith.constant 0 : index
      %c0_20 = arith.constant 0 : index
      %38 = vector.load %arg8[%c0_19, %c0_20] : memref<16x32xbf16, #tpu.memory_space<vmem>>, vector<16x32xbf16>
      tpu.vector_store %arg8[%c0_19, %c0_20], %37 {strides = array<i32>} : memref<16x32xbf16, #tpu.memory_space<vmem>>, vector<16x32xbf16>,
    } else {
    }
    %c0 = arith.constant 0 : index
    %c0_1 = arith.constant 0 : index
    %3 = vector.load %arg8[%c0, %c0_1] : memref<16x32xbf16, #tpu.memory_space<vmem>>, vector<16x32xbf16>
    %c0_2 = arith.constant 0 : index
    %c0_3 = arith.constant 0 : index
    %4 = vector.load %arg3[%c0_2, %c0_3] : memref<32x96xbf16, #tpu.memory_space<vmem>>, vector<32x96xbf16>
    %cst = arith.constant dense<0.000000e+00> : vector<16x96xf32>
    %5 = tpu.matmul %3, %4, %cst {dimension_numbers = #tpu.dot_dimension_numbers<[1], [0], [0], [1], [0, 0, 1, 1], [], []>} : vector<16x32xbf16>, vector<32x96xbf16>, vector<16x96xf32> -> vector<16x96xf32>
    %c0_4 = arith.constant 0 : index
    %c0_5 = arith.constant 0 : index
    %6 = vector.load %arg6[%c0_4, %c0_5] : memref<1x96xf32, #tpu.memory_space<vmem>>, vector<1x96xf32>
    %7 = vector.broadcast %6 : vector<1x96xf32> to vector<16x96xf32>
    %8 = arith.addf %5, %7 : vector<16x96xf32>
    %9 = arith.truncf %8 : vector<16x96xf32> to vector<16x96xbf16>
    %c0_6 = arith.constant 0 : index
    %c0_7 = arith.constant 0 : index
    %10 = vector.load %arg7[%c0_6, %c0_7] : memref<16x96xbf16, #tpu.memory_space<vmem>>, vector<16x96xbf16>
    tpu.vector_store %arg7[%c0_6, %c0_7], %9 {strides = array<i32>} : memref<16x96xbf16, #tpu.memory_space<vmem>>, vector<16x96xbf16>,
    return
  }
  func.func @transform_0(%arg0: i32, %arg1: i32) -> (i32, i32) {
    %c0_i32 = arith.constant 0 : i32
    %c0_i32_0 = arith.constant 0 : i32
    return %arg0, %c0_i32 : i32, i32
  }
  func.func @transform_1(%arg0: i32, %arg1: i32) -> (i32, i32) {
    %c0_i32 = arith.constant 0 : i32
    %c0_i32_0 = arith.constant 0 : i32
    return %c0_i32, %arg1 : i32, i32
  }
  func.func @transform_2(%arg0: i32, %arg1: i32) -> (i32, i32) {
    %c0_i32 = arith.constant 0 : i32
    %c0_i32_0 = arith.constant 0 : i32
    %c0_i32_1 = arith.constant 0 : i32
    return %c0_i32, %c0_i32_0 : i32, i32
  }
  func.func @transform_3(%arg0: i32, %arg1: i32) -> (i32, i32) {
    %c0_i32 = arith.constant 0 : i32
    %c0_i32_0 = arith.constant 0 : i32
    %c0_i32_1 = arith.constant 0 : i32
    return %c0_i32, %c0_i32_0 : i32, i32
  }
  func.func @transform_4(%arg0: i32, %arg1: i32) -> (i32, i32) {
    %c0_i32 = arith.constant 0 : i32
    %c0_i32_0 = arith.constant 0 : i32
    return %c0_i32, %arg1 : i32, i32
  }
  func.func @transform_5(%arg0: i32, %arg1: i32) -> (i32, i32) {
    %c0_i32 = arith.constant 0 : i32
    return %arg0, %arg1 : i32, i32
  }
}

module attributes {stable_mosaic.version = 11 : i64} {
  func.func @_flash_kernel(%arg0: i32, %arg1: i32, %arg2: memref<16x32xbf16, #tpu.memory_space<vmem>>, %arg3: memref<16x32xbf16, #tpu.memory_space<vmem>>, %arg4: memref<16x32xbf16, #tpu.memory_space<vmem>>, %arg5: memref<16x32xbf16, #tpu.memory_space<vmem>>, %arg6: memref<4x16x1xf32, #tpu.memory_space<vmem>>, %arg7: memref<4x16x1xf32, #tpu.memory_space<vmem>>, %arg8: memref<4x16x8xf32, #tpu.memory_space<vmem>>) attributes {dimension_semantics = [#tpu.dimension_semantics<parallel>, #tpu.dimension_semantics<arbitrary>], iteration_bounds = array<i64: 1, 1>, scalar_prefetch = 0 : i64, scratch_operands = 3 : i64, tpu.core_type = #tpu.core_type<tc>, window_params = [{transform_indices = @transform_0, window_bounds = array<i64: 16, 32>}, {transform_indices = @transform_1, window_bounds = array<i64: 16, 32>}, {transform_indices = @transform_2, window_bounds = array<i64: 16, 32>}, {transform_indices = @transform_3, window_bounds = array<i64: 16, 32>}]} {
    %c0_i32 = arith.constant 0 : i32
    %0 = arith.cmpi eq, %arg1, %c0_i32 : i32
    %1 = arith.extui %0 : i1 to i32
    %c0_i32_0 = arith.constant 0 : i32
    %2 = arith.cmpi ne, %1, %c0_i32_0 : i32
    scf.if %2 {
      %cst_107 = arith.constant -1.000000e+30 : f32
      %150 = vector.broadcast %cst_107 : f32 to vector<4x16x1xf32>
      %c0_108 = arith.constant 0 : index
      %c0_109 = arith.constant 0 : index
      %c0_110 = arith.constant 0 : index
      %151 = vector.load %arg6[%c0_108, %c0_109, %c0_110] : memref<4x16x1xf32, #tpu.memory_space<vmem>>, vector<4x16x1xf32>
      tpu.vector_store %arg6[%c0_108, %c0_109, %c0_110], %150 {strides = array<i32>} : memref<4x16x1xf32, #tpu.memory_space<vmem>>, vector<4x16x1xf32>,
      %cst_111 = arith.constant 0.000000e+00 : f32
      %152 = vector.broadcast %cst_111 : f32 to vector<4x16x1xf32>
      %c0_112 = arith.constant 0 : index
      %c0_113 = arith.constant 0 : index
      %c0_114 = arith.constant 0 : index
      %153 = vector.load %arg7[%c0_112, %c0_113, %c0_114] : memref<4x16x1xf32, #tpu.memory_space<vmem>>, vector<4x16x1xf32>
      tpu.vector_store %arg7[%c0_112, %c0_113, %c0_114], %152 {strides = array<i32>} : memref<4x16x1xf32, #tpu.memory_space<vmem>>, vector<4x16x1xf32>,
      %cst_115 = arith.constant 0.000000e+00 : f32
      %154 = vector.broadcast %cst_115 : f32 to vector<4x16x8xf32>
      %c0_116 = arith.constant 0 : index
      %c0_117 = arith.constant 0 : index
      %c0_118 = arith.constant 0 : index
      %155 = vector.load %arg8[%c0_116, %c0_117, %c0_118] : memref<4x16x8xf32, #tpu.memory_space<vmem>>, vector<4x16x8xf32>
      tpu.vector_store %arg8[%c0_116, %c0_117, %c0_118], %154 {strides = array<i32>} : memref<4x16x8xf32, #tpu.memory_space<vmem>>, vector<4x16x8xf32>,
    } else {
    }
    %c0 = arith.constant 0 : index
    %c0_1 = arith.constant 0 : index
    %3 = vector.load %arg2[%c0, %c0_1] : memref<16x32xbf16, #tpu.memory_space<vmem>>, vector<16x8xbf16>
    %c0_2 = arith.constant 0 : index
    %c0_3 = arith.constant 0 : index
    %4 = vector.load %arg3[%c0_2, %c0_3] : memref<16x32xbf16, #tpu.memory_space<vmem>>, vector<16x8xbf16>
    %cst = arith.constant dense<0.000000e+00> : vector<16x16xf32>
    %5 = tpu.matmul %3, %4, %cst {dimension_numbers = #tpu.dot_dimension_numbers<[1], [1], [0], [0], [0, 0, 1, 0], [], []>} : vector<16x8xbf16>, vector<16x8xbf16>, vector<16x16xf32> -> vector<16x16xf32>
    %c0_4 = arith.constant 0 : index
    %c0_5 = arith.constant 0 : index
    %c0_6 = arith.constant 0 : index
    %6 = vector.load %arg6[%c0_4, %c0_5, %c0_6] : memref<4x16x1xf32, #tpu.memory_space<vmem>>, vector<1x16x1xf32>
    %7 = vector.shape_cast %6 : vector<1x16x1xf32> to vector<16x1xf32>
    %cst_7 = arith.constant dense<0xFF800000> : vector<16xf32>
    %8 = vector.multi_reduction <maximumf>, %5, %cst_7 [1] : vector<16x16xf32> to vector<16xf32>
    %9 = vector.shape_cast %8 : vector<16xf32> to vector<16x1xf32>
    %10 = arith.maximumf %7, %9 : vector<16x1xf32>
    %11 = arith.subf %7, %10 : vector<16x1xf32>
    %12 = math.exp %11 : vector<16x1xf32>
    %13 = vector.broadcast %10 : vector<16x1xf32> to vector<16x16xf32>
    %14 = arith.subf %5, %13 : vector<16x16xf32>
    %15 = math.exp %14 : vector<16x16xf32>
    %c0_8 = arith.constant 0 : index
    %c0_9 = arith.constant 0 : index
    %c0_10 = arith.constant 0 : index
    %16 = vector.load %arg7[%c0_8, %c0_9, %c0_10] : memref<4x16x1xf32, #tpu.memory_space<vmem>>, vector<1x16x1xf32>
    %17 = vector.shape_cast %16 : vector<1x16x1xf32> to vector<16x1xf32>
    %18 = arith.mulf %12, %17 : vector<16x1xf32>
    %cst_11 = arith.constant dense<0.000000e+00> : vector<16xf32>
    %19 = vector.multi_reduction <add>, %15, %cst_11 [1] : vector<16x16xf32> to vector<16xf32>
    %20 = vector.shape_cast %19 : vector<16xf32> to vector<16x1xf32>
    %21 = arith.addf %18, %20 : vector<16x1xf32>
    %c0_12 = arith.constant 0 : index
    %c0_13 = arith.constant 0 : index
    %c0_14 = arith.constant 0 : index
    %22 = vector.load %arg7[%c0_12, %c0_13, %c0_14] : memref<4x16x1xf32, #tpu.memory_space<vmem>>, vector<1x16x1xf32>
    %23 = vector.shape_cast %22 : vector<1x16x1xf32> to vector<16x1xf32>
    %24 = vector.shape_cast %21 : vector<16x1xf32> to vector<1x16x1xf32>
    tpu.vector_store %arg7[%c0_12, %c0_13, %c0_14], %24 {strides = array<i32>} : memref<4x16x1xf32, #tpu.memory_space<vmem>>, vector<1x16x1xf32>,
    %c0_15 = arith.constant 0 : index
    %c0_16 = arith.constant 0 : index
    %c0_17 = arith.constant 0 : index
    %25 = vector.load %arg8[%c0_15, %c0_16, %c0_17] : memref<4x16x8xf32, #tpu.memory_space<vmem>>, vector<1x16x8xf32>
    %26 = vector.shape_cast %25 : vector<1x16x8xf32> to vector<16x8xf32>
    %27 = vector.broadcast %12 : vector<16x1xf32> to vector<16x8xf32>
    %28 = arith.mulf %27, %26 : vector<16x8xf32>
    %29 = arith.truncf %15 : vector<16x16xf32> to vector<16x16xbf16>
    %c0_18 = arith.constant 0 : index
    %c0_19 = arith.constant 0 : index
    %30 = vector.load %arg4[%c0_18, %c0_19] : memref<16x32xbf16, #tpu.memory_space<vmem>>, vector<16x8xbf16>
    %cst_20 = arith.constant dense<0.000000e+00> : vector<16x8xf32>
    %31 = tpu.matmul %29, %30, %cst_20 {dimension_numbers = #tpu.dot_dimension_numbers<[1], [0], [0], [1], [0, 0, 1, 1], [], []>} : vector<16x16xbf16>, vector<16x8xbf16>, vector<16x8xf32> -> vector<16x8xf32>
    %32 = arith.addf %28, %31 : vector<16x8xf32>
    %c0_21 = arith.constant 0 : index
    %c0_22 = arith.constant 0 : index
    %c0_23 = arith.constant 0 : index
    %33 = vector.load %arg8[%c0_21, %c0_22, %c0_23] : memref<4x16x8xf32, #tpu.memory_space<vmem>>, vector<1x16x8xf32>
    %34 = vector.shape_cast %33 : vector<1x16x8xf32> to vector<16x8xf32>
    %35 = vector.shape_cast %32 : vector<16x8xf32> to vector<1x16x8xf32>
    tpu.vector_store %arg8[%c0_21, %c0_22, %c0_23], %35 {strides = array<i32>} : memref<4x16x8xf32, #tpu.memory_space<vmem>>, vector<1x16x8xf32>,
    %c0_24 = arith.constant 0 : index
    %c0_25 = arith.constant 0 : index
    %c0_26 = arith.constant 0 : index
    %36 = vector.load %arg6[%c0_24, %c0_25, %c0_26] : memref<4x16x1xf32, #tpu.memory_space<vmem>>, vector<1x16x1xf32>
    %37 = vector.shape_cast %36 : vector<1x16x1xf32> to vector<16x1xf32>
    %38 = vector.shape_cast %10 : vector<16x1xf32> to vector<1x16x1xf32>
    tpu.vector_store %arg6[%c0_24, %c0_25, %c0_26], %38 {strides = array<i32>} : memref<4x16x1xf32, #tpu.memory_space<vmem>>, vector<1x16x1xf32>,
    %c0_27 = arith.constant 0 : index
    %c8 = arith.constant 8 : index
    %39 = vector.load %arg2[%c0_27, %c8] : memref<16x32xbf16, #tpu.memory_space<vmem>>, vector<16x8xbf16>
    %c0_28 = arith.constant 0 : index
    %c8_29 = arith.constant 8 : index
    %40 = vector.load %arg3[%c0_28, %c8_29] : memref<16x32xbf16, #tpu.memory_space<vmem>>, vector<16x8xbf16>
    %cst_30 = arith.constant dense<0.000000e+00> : vector<16x16xf32>
    %41 = tpu.matmul %39, %40, %cst_30 {dimension_numbers = #tpu.dot_dimension_numbers<[1], [1], [0], [0], [0, 0, 1, 0], [], []>} : vector<16x8xbf16>, vector<16x8xbf16>, vector<16x16xf32> -> vector<16x16xf32>
    %c1 = arith.constant 1 : index
    %c0_31 = arith.constant 0 : index
    %c0_32 = arith.constant 0 : index
    %42 = vector.load %arg6[%c1, %c0_31, %c0_32] : memref<4x16x1xf32, #tpu.memory_space<vmem>>, vector<1x16x1xf32>
    %43 = vector.shape_cast %42 : vector<1x16x1xf32> to vector<16x1xf32>
    %cst_33 = arith.constant dense<0xFF800000> : vector<16xf32>
    %44 = vector.multi_reduction <maximumf>, %41, %cst_33 [1] : vector<16x16xf32> to vector<16xf32>
    %45 = vector.shape_cast %44 : vector<16xf32> to vector<16x1xf32>
    %46 = arith.maximumf %43, %45 : vector<16x1xf32>
    %47 = arith.subf %43, %46 : vector<16x1xf32>
    %48 = math.exp %47 : vector<16x1xf32>
    %49 = vector.broadcast %46 : vector<16x1xf32> to vector<16x16xf32>
    %50 = arith.subf %41, %49 : vector<16x16xf32>
    %51 = math.exp %50 : vector<16x16xf32>
    %c1_34 = arith.constant 1 : index
    %c0_35 = arith.constant 0 : index
    %c0_36 = arith.constant 0 : index
    %52 = vector.load %arg7[%c1_34, %c0_35, %c0_36] : memref<4x16x1xf32, #tpu.memory_space<vmem>>, vector<1x16x1xf32>
    %53 = vector.shape_cast %52 : vector<1x16x1xf32> to vector<16x1xf32>
    %54 = arith.mulf %48, %53 : vector<16x1xf32>
    %cst_37 = arith.constant dense<0.000000e+00> : vector<16xf32>
    %55 = vector.multi_reduction <add>, %51, %cst_37 [1] : vector<16x16xf32> to vector<16xf32>
    %56 = vector.shape_cast %55 : vector<16xf32> to vector<16x1xf32>
    %57 = arith.addf %54, %56 : vector<16x1xf32>
    %c1_38 = arith.constant 1 : index
    %c0_39 = arith.constant 0 : index
    %c0_40 = arith.constant 0 : index
    %58 = vector.load %arg7[%c1_38, %c0_39, %c0_40] : memref<4x16x1xf32, #tpu.memory_space<vmem>>, vector<1x16x1xf32>
    %59 = vector.shape_cast %58 : vector<1x16x1xf32> to vector<16x1xf32>
    %60 = vector.shape_cast %57 : vector<16x1xf32> to vector<1x16x1xf32>
    tpu.vector_store %arg7[%c1_38, %c0_39, %c0_40], %60 {strides = array<i32>} : memref<4x16x1xf32, #tpu.memory_space<vmem>>, vector<1x16x1xf32>,
    %c1_41 = arith.constant 1 : index
    %c0_42 = arith.constant 0 : index
    %c0_43 = arith.constant 0 : index
    %61 = vector.load %arg8[%c1_41, %c0_42, %c0_43] : memref<4x16x8xf32, #tpu.memory_space<vmem>>, vector<1x16x8xf32>
    %62 = vector.shape_cast %61 : vector<1x16x8xf32> to vector<16x8xf32>
    %63 = vector.broadcast %48 : vector<16x1xf32> to vector<16x8xf32>
    %64 = arith.mulf %63, %62 : vector<16x8xf32>
    %65 = arith.truncf %51 : vector<16x16xf32> to vector<16x16xbf16>
    %c0_44 = arith.constant 0 : index
    %c8_45 = arith.constant 8 : index
    %66 = vector.load %arg4[%c0_44, %c8_45] : memref<16x32xbf16, #tpu.memory_space<vmem>>, vector<16x8xbf16>
    %cst_46 = arith.constant dense<0.000000e+00> : vector<16x8xf32>
    %67 = tpu.matmul %65, %66, %cst_46 {dimension_numbers = #tpu.dot_dimension_numbers<[1], [0], [0], [1], [0, 0, 1, 1], [], []>} : vector<16x16xbf16>, vector<16x8xbf16>, vector<16x8xf32> -> vector<16x8xf32>
    %68 = arith.addf %64, %67 : vector<16x8xf32>
    %c1_47 = arith.constant 1 : index
    %c0_48 = arith.constant 0 : index
    %c0_49 = arith.constant 0 : index
    %69 = vector.load %arg8[%c1_47, %c0_48, %c0_49] : memref<4x16x8xf32, #tpu.memory_space<vmem>>, vector<1x16x8xf32>
    %70 = vector.shape_cast %69 : vector<1x16x8xf32> to vector<16x8xf32>
    %71 = vector.shape_cast %68 : vector<16x8xf32> to vector<1x16x8xf32>
    tpu.vector_store %arg8[%c1_47, %c0_48, %c0_49], %71 {strides = array<i32>} : memref<4x16x8xf32, #tpu.memory_space<vmem>>, vector<1x16x8xf32>,
    %c1_50 = arith.constant 1 : index
    %c0_51 = arith.constant 0 : index
    %c0_52 = arith.constant 0 : index
    %72 = vector.load %arg6[%c1_50, %c0_51, %c0_52] : memref<4x16x1xf32, #tpu.memory_space<vmem>>, vector<1x16x1xf32>
    %73 = vector.shape_cast %72 : vector<1x16x1xf32> to vector<16x1xf32>
    %74 = vector.shape_cast %46 : vector<16x1xf32> to vector<1x16x1xf32>
    tpu.vector_store %arg6[%c1_50, %c0_51, %c0_52], %74 {strides = array<i32>} : memref<4x16x1xf32, #tpu.memory_space<vmem>>, vector<1x16x1xf32>,
    %c0_53 = arith.constant 0 : index
    %c16 = arith.constant 16 : index
    %75 = vector.load %arg2[%c0_53, %c16] : memref<16x32xbf16, #tpu.memory_space<vmem>>, vector<16x8xbf16>
    %c0_54 = arith.constant 0 : index
    %c16_55 = arith.constant 16 : index
    %76 = vector.load %arg3[%c0_54, %c16_55] : memref<16x32xbf16, #tpu.memory_space<vmem>>, vector<16x8xbf16>
    %cst_56 = arith.constant dense<0.000000e+00> : vector<16x16xf32>
    %77 = tpu.matmul %75, %76, %cst_56 {dimension_numbers = #tpu.dot_dimension_numbers<[1], [1], [0], [0], [0, 0, 1, 0], [], []>} : vector<16x8xbf16>, vector<16x8xbf16>, vector<16x16xf32> -> vector<16x16xf32>
    %c2 = arith.constant 2 : index
    %c0_57 = arith.constant 0 : index
    %c0_58 = arith.constant 0 : index
    %78 = vector.load %arg6[%c2, %c0_57, %c0_58] : memref<4x16x1xf32, #tpu.memory_space<vmem>>, vector<1x16x1xf32>
    %79 = vector.shape_cast %78 : vector<1x16x1xf32> to vector<16x1xf32>
    %cst_59 = arith.constant dense<0xFF800000> : vector<16xf32>
    %80 = vector.multi_reduction <maximumf>, %77, %cst_59 [1] : vector<16x16xf32> to vector<16xf32>
    %81 = vector.shape_cast %80 : vector<16xf32> to vector<16x1xf32>
    %82 = arith.maximumf %79, %81 : vector<16x1xf32>
    %83 = arith.subf %79, %82 : vector<16x1xf32>
    %84 = math.exp %83 : vector<16x1xf32>
    %85 = vector.broadcast %82 : vector<16x1xf32> to vector<16x16xf32>
    %86 = arith.subf %77, %85 : vector<16x16xf32>
    %87 = math.exp %86 : vector<16x16xf32>
    %c2_60 = arith.constant 2 : index
    %c0_61 = arith.constant 0 : index
    %c0_62 = arith.constant 0 : index
    %88 = vector.load %arg7[%c2_60, %c0_61, %c0_62] : memref<4x16x1xf32, #tpu.memory_space<vmem>>, vector<1x16x1xf32>
    %89 = vector.shape_cast %88 : vector<1x16x1xf32> to vector<16x1xf32>
    %90 = arith.mulf %84, %89 : vector<16x1xf32>
    %cst_63 = arith.constant dense<0.000000e+00> : vector<16xf32>
    %91 = vector.multi_reduction <add>, %87, %cst_63 [1] : vector<16x16xf32> to vector<16xf32>
    %92 = vector.shape_cast %91 : vector<16xf32> to vector<16x1xf32>
    %93 = arith.addf %90, %92 : vector<16x1xf32>
    %c2_64 = arith.constant 2 : index
    %c0_65 = arith.constant 0 : index
    %c0_66 = arith.constant 0 : index
    %94 = vector.load %arg7[%c2_64, %c0_65, %c0_66] : memref<4x16x1xf32, #tpu.memory_space<vmem>>, vector<1x16x1xf32>
    %95 = vector.shape_cast %94 : vector<1x16x1xf32> to vector<16x1xf32>
    %96 = vector.shape_cast %93 : vector<16x1xf32> to vector<1x16x1xf32>
    tpu.vector_store %arg7[%c2_64, %c0_65, %c0_66], %96 {strides = array<i32>} : memref<4x16x1xf32, #tpu.memory_space<vmem>>, vector<1x16x1xf32>,
    %c2_67 = arith.constant 2 : index
    %c0_68 = arith.constant 0 : index
    %c0_69 = arith.constant 0 : index
    %97 = vector.load %arg8[%c2_67, %c0_68, %c0_69] : memref<4x16x8xf32, #tpu.memory_space<vmem>>, vector<1x16x8xf32>
    %98 = vector.shape_cast %97 : vector<1x16x8xf32> to vector<16x8xf32>
    %99 = vector.broadcast %84 : vector<16x1xf32> to vector<16x8xf32>
    %100 = arith.mulf %99, %98 : vector<16x8xf32>
    %101 = arith.truncf %87 : vector<16x16xf32> to vector<16x16xbf16>
    %c0_70 = arith.constant 0 : index
    %c16_71 = arith.constant 16 : index
    %102 = vector.load %arg4[%c0_70, %c16_71] : memref<16x32xbf16, #tpu.memory_space<vmem>>, vector<16x8xbf16>
    %cst_72 = arith.constant dense<0.000000e+00> : vector<16x8xf32>
    %103 = tpu.matmul %101, %102, %cst_72 {dimension_numbers = #tpu.dot_dimension_numbers<[1], [0], [0], [1], [0, 0, 1, 1], [], []>} : vector<16x16xbf16>, vector<16x8xbf16>, vector<16x8xf32> -> vector<16x8xf32>
    %104 = arith.addf %100, %103 : vector<16x8xf32>
    %c2_73 = arith.constant 2 : index
    %c0_74 = arith.constant 0 : index
    %c0_75 = arith.constant 0 : index
    %105 = vector.load %arg8[%c2_73, %c0_74, %c0_75] : memref<4x16x8xf32, #tpu.memory_space<vmem>>, vector<1x16x8xf32>
    %106 = vector.shape_cast %105 : vector<1x16x8xf32> to vector<16x8xf32>
    %107 = vector.shape_cast %104 : vector<16x8xf32> to vector<1x16x8xf32>
    tpu.vector_store %arg8[%c2_73, %c0_74, %c0_75], %107 {strides = array<i32>} : memref<4x16x8xf32, #tpu.memory_space<vmem>>, vector<1x16x8xf32>,
    %c2_76 = arith.constant 2 : index
    %c0_77 = arith.constant 0 : index
    %c0_78 = arith.constant 0 : index
    %108 = vector.load %arg6[%c2_76, %c0_77, %c0_78] : memref<4x16x1xf32, #tpu.memory_space<vmem>>, vector<1x16x1xf32>
    %109 = vector.shape_cast %108 : vector<1x16x1xf32> to vector<16x1xf32>
    %110 = vector.shape_cast %82 : vector<16x1xf32> to vector<1x16x1xf32>
    tpu.vector_store %arg6[%c2_76, %c0_77, %c0_78], %110 {strides = array<i32>} : memref<4x16x1xf32, #tpu.memory_space<vmem>>, vector<1x16x1xf32>,
    %c0_79 = arith.constant 0 : index
    %c24 = arith.constant 24 : index
    %111 = vector.load %arg2[%c0_79, %c24] : memref<16x32xbf16, #tpu.memory_space<vmem>>, vector<16x8xbf16>
    %c0_80 = arith.constant 0 : index
    %c24_81 = arith.constant 24 : index
    %112 = vector.load %arg3[%c0_80, %c24_81] : memref<16x32xbf16, #tpu.memory_space<vmem>>, vector<16x8xbf16>
    %cst_82 = arith.constant dense<0.000000e+00> : vector<16x16xf32>
    %113 = tpu.matmul %111, %112, %cst_82 {dimension_numbers = #tpu.dot_dimension_numbers<[1], [1], [0], [0], [0, 0, 1, 0], [], []>} : vector<16x8xbf16>, vector<16x8xbf16>, vector<16x16xf32> -> vector<16x16xf32>
    %c3 = arith.constant 3 : index
    %c0_83 = arith.constant 0 : index
    %c0_84 = arith.constant 0 : index
    %114 = vector.load %arg6[%c3, %c0_83, %c0_84] : memref<4x16x1xf32, #tpu.memory_space<vmem>>, vector<1x16x1xf32>
    %115 = vector.shape_cast %114 : vector<1x16x1xf32> to vector<16x1xf32>
    %cst_85 = arith.constant dense<0xFF800000> : vector<16xf32>
    %116 = vector.multi_reduction <maximumf>, %113, %cst_85 [1] : vector<16x16xf32> to vector<16xf32>
    %117 = vector.shape_cast %116 : vector<16xf32> to vector<16x1xf32>
    %118 = arith.maximumf %115, %117 : vector<16x1xf32>
    %119 = arith.subf %115, %118 : vector<16x1xf32>
    %120 = math.exp %119 : vector<16x1xf32>
    %121 = vector.broadcast %118 : vector<16x1xf32> to vector<16x16xf32>
    %122 = arith.subf %113, %121 : vector<16x16xf32>
    %123 = math.exp %122 : vector<16x16xf32>
    %c3_86 = arith.constant 3 : index
    %c0_87 = arith.constant 0 : index
    %c0_88 = arith.constant 0 : index
    %124 = vector.load %arg7[%c3_86, %c0_87, %c0_88] : memref<4x16x1xf32, #tpu.memory_space<vmem>>, vector<1x16x1xf32>
    %125 = vector.shape_cast %124 : vector<1x16x1xf32> to vector<16x1xf32>
    %126 = arith.mulf %120, %125 : vector<16x1xf32>
    %cst_89 = arith.constant dense<0.000000e+00> : vector<16xf32>
    %127 = vector.multi_reduction <add>, %123, %cst_89 [1] : vector<16x16xf32> to vector<16xf32>
    %128 = vector.shape_cast %127 : vector<16xf32> to vector<16x1xf32>
    %129 = arith.addf %126, %128 : vector<16x1xf32>
    %c3_90 = arith.constant 3 : index
    %c0_91 = arith.constant 0 : index
    %c0_92 = arith.constant 0 : index
    %130 = vector.load %arg7[%c3_90, %c0_91, %c0_92] : memref<4x16x1xf32, #tpu.memory_space<vmem>>, vector<1x16x1xf32>
    %131 = vector.shape_cast %130 : vector<1x16x1xf32> to vector<16x1xf32>
    %132 = vector.shape_cast %129 : vector<16x1xf32> to vector<1x16x1xf32>
    tpu.vector_store %arg7[%c3_90, %c0_91, %c0_92], %132 {strides = array<i32>} : memref<4x16x1xf32, #tpu.memory_space<vmem>>, vector<1x16x1xf32>,
    %c3_93 = arith.constant 3 : index
    %c0_94 = arith.constant 0 : index
    %c0_95 = arith.constant 0 : index
    %133 = vector.load %arg8[%c3_93, %c0_94, %c0_95] : memref<4x16x8xf32, #tpu.memory_space<vmem>>, vector<1x16x8xf32>
    %134 = vector.shape_cast %133 : vector<1x16x8xf32> to vector<16x8xf32>
    %135 = vector.broadcast %120 : vector<16x1xf32> to vector<16x8xf32>
    %136 = arith.mulf %135, %134 : vector<16x8xf32>
    %137 = arith.truncf %123 : vector<16x16xf32> to vector<16x16xbf16>
    %c0_96 = arith.constant 0 : index
    %c24_97 = arith.constant 24 : index
    %138 = vector.load %arg4[%c0_96, %c24_97] : memref<16x32xbf16, #tpu.memory_space<vmem>>, vector<16x8xbf16>
    %cst_98 = arith.constant dense<0.000000e+00> : vector<16x8xf32>
    %139 = tpu.matmul %137, %138, %cst_98 {dimension_numbers = #tpu.dot_dimension_numbers<[1], [0], [0], [1], [0, 0, 1, 1], [], []>} : vector<16x16xbf16>, vector<16x8xbf16>, vector<16x8xf32> -> vector<16x8xf32>
    %140 = arith.addf %136, %139 : vector<16x8xf32>
    %c3_99 = arith.constant 3 : index
    %c0_100 = arith.constant 0 : index
    %c0_101 = arith.constant 0 : index
    %141 = vector.load %arg8[%c3_99, %c0_100, %c0_101] : memref<4x16x8xf32, #tpu.memory_space<vmem>>, vector<1x16x8xf32>
    %142 = vector.shape_cast %141 : vector<1x16x8xf32> to vector<16x8xf32>
    %143 = vector.shape_cast %140 : vector<16x8xf32> to vector<1x16x8xf32>
    tpu.vector_store %arg8[%c3_99, %c0_100, %c0_101], %143 {strides = array<i32>} : memref<4x16x8xf32, #tpu.memory_space<vmem>>, vector<1x16x8xf32>,
    %c3_102 = arith.constant 3 : index
    %c0_103 = arith.constant 0 : index
    %c0_104 = arith.constant 0 : index
    %144 = vector.load %arg6[%c3_102, %c0_103, %c0_104] : memref<4x16x1xf32, #tpu.memory_space<vmem>>, vector<1x16x1xf32>
    %145 = vector.shape_cast %144 : vector<1x16x1xf32> to vector<16x1xf32>
    %146 = vector.shape_cast %118 : vector<16x1xf32> to vector<1x16x1xf32>
    tpu.vector_store %arg6[%c3_102, %c0_103, %c0_104], %146 {strides = array<i32>} : memref<4x16x1xf32, #tpu.memory_space<vmem>>, vector<1x16x1xf32>,
    %c0_i32_105 = arith.constant 0 : i32
    %147 = arith.cmpi eq, %arg1, %c0_i32_105 : i32
    %148 = arith.extui %147 : i1 to i32
    %c0_i32_106 = arith.constant 0 : i32
    %149 = arith.cmpi ne, %148, %c0_i32_106 : i32
    scf.if %149 {
      %c0_107 = arith.constant 0 : index
      %c0_108 = arith.constant 0 : index
      %c0_109 = arith.constant 0 : index
      %150 = vector.load %arg8[%c0_107, %c0_108, %c0_109] : memref<4x16x8xf32, #tpu.memory_space<vmem>>, vector<1x16x8xf32>
      %151 = vector.shape_cast %150 : vector<1x16x8xf32> to vector<16x8xf32>
      %c0_110 = arith.constant 0 : index
      %c0_111 = arith.constant 0 : index
      %c0_112 = arith.constant 0 : index
      %152 = vector.load %arg7[%c0_110, %c0_111, %c0_112] : memref<4x16x1xf32, #tpu.memory_space<vmem>>, vector<1x16x1xf32>
      %153 = vector.shape_cast %152 : vector<1x16x1xf32> to vector<16x1xf32>
      %154 = vector.broadcast %153 : vector<16x1xf32> to vector<16x8xf32>
      %155 = arith.divf %151, %154 : vector<16x8xf32>
      %c1_113 = arith.constant 1 : index
      %c0_114 = arith.constant 0 : index
      %c0_115 = arith.constant 0 : index
      %156 = vector.load %arg8[%c1_113, %c0_114, %c0_115] : memref<4x16x8xf32, #tpu.memory_space<vmem>>, vector<1x16x8xf32>
      %157 = vector.shape_cast %156 : vector<1x16x8xf32> to vector<16x8xf32>
      %c1_116 = arith.constant 1 : index
      %c0_117 = arith.constant 0 : index
      %c0_118 = arith.constant 0 : index
      %158 = vector.load %arg7[%c1_116, %c0_117, %c0_118] : memref<4x16x1xf32, #tpu.memory_space<vmem>>, vector<1x16x1xf32>
      %159 = vector.shape_cast %158 : vector<1x16x1xf32> to vector<16x1xf32>
      %160 = vector.broadcast %159 : vector<16x1xf32> to vector<16x8xf32>
      %161 = arith.divf %157, %160 : vector<16x8xf32>
      %c2_119 = arith.constant 2 : index
      %c0_120 = arith.constant 0 : index
      %c0_121 = arith.constant 0 : index
      %162 = vector.load %arg8[%c2_119, %c0_120, %c0_121] : memref<4x16x8xf32, #tpu.memory_space<vmem>>, vector<1x16x8xf32>
      %163 = vector.shape_cast %162 : vector<1x16x8xf32> to vector<16x8xf32>
      %c2_122 = arith.constant 2 : index
      %c0_123 = arith.constant 0 : index
      %c0_124 = arith.constant 0 : index
      %164 = vector.load %arg7[%c2_122, %c0_123, %c0_124] : memref<4x16x1xf32, #tpu.memory_space<vmem>>, vector<1x16x1xf32>
      %165 = vector.shape_cast %164 : vector<1x16x1xf32> to vector<16x1xf32>
      %166 = vector.broadcast %165 : vector<16x1xf32> to vector<16x8xf32>
      %167 = arith.divf %163, %166 : vector<16x8xf32>
      %c3_125 = arith.constant 3 : index
      %c0_126 = arith.constant 0 : index
      %c0_127 = arith.constant 0 : index
      %168 = vector.load %arg8[%c3_125, %c0_126, %c0_127] : memref<4x16x8xf32, #tpu.memory_space<vmem>>, vector<1x16x8xf32>
      %169 = vector.shape_cast %168 : vector<1x16x8xf32> to vector<16x8xf32>
      %c3_128 = arith.constant 3 : index
      %c0_129 = arith.constant 0 : index
      %c0_130 = arith.constant 0 : index
      %170 = vector.load %arg7[%c3_128, %c0_129, %c0_130] : memref<4x16x1xf32, #tpu.memory_space<vmem>>, vector<1x16x1xf32>
      %171 = vector.shape_cast %170 : vector<1x16x1xf32> to vector<16x1xf32>
      %172 = vector.broadcast %171 : vector<16x1xf32> to vector<16x8xf32>
      %173 = arith.divf %169, %172 : vector<16x8xf32>
      %174 = tpu.concatenate %155, %161, %167, %173 in 1 : vector<16x8xf32>, vector<16x8xf32>, vector<16x8xf32>, vector<16x8xf32> -> vector<16x32xf32>
      %175 = arith.truncf %174 : vector<16x32xf32> to vector<16x32xbf16>
      %c0_131 = arith.constant 0 : index
      %c0_132 = arith.constant 0 : index
      %176 = vector.load %arg5[%c0_131, %c0_132] : memref<16x32xbf16, #tpu.memory_space<vmem>>, vector<16x32xbf16>
      tpu.vector_store %arg5[%c0_131, %c0_132], %175 {strides = array<i32>} : memref<16x32xbf16, #tpu.memory_space<vmem>>, vector<16x32xbf16>,
    } else {
    }
    return
  }
  func.func @transform_0(%arg0: i32, %arg1: i32) -> (i32, i32) {
    %c0_i32 = arith.constant 0 : i32
    %c0_i32_0 = arith.constant 0 : i32
    return %arg0, %c0_i32 : i32, i32
  }
  func.func @transform_1(%arg0: i32, %arg1: i32) -> (i32, i32) {
    %c0_i32 = arith.constant 0 : i32
    %c0_i32_0 = arith.constant 0 : i32
    return %arg1, %c0_i32 : i32, i32
  }
  func.func @transform_2(%arg0: i32, %arg1: i32) -> (i32, i32) {
    %c0_i32 = arith.constant 0 : i32
    %c0_i32_0 = arith.constant 0 : i32
    return %arg1, %c0_i32 : i32, i32
  }
  func.func @transform_3(%arg0: i32, %arg1: i32) -> (i32, i32) {
    %c0_i32 = arith.constant 0 : i32
    %c0_i32_0 = arith.constant 0 : i32
    return %arg0, %c0_i32 : i32, i32
  }
}

module attributes {stable_mosaic.version = 11 : i64} {
  func.func @kernel(%arg0: i32, %arg1: i32, %arg2: memref<16x32xbf16, #tpu.memory_space<vmem>>, %arg3: memref<32x32xbf16, #tpu.memory_space<vmem>>, %arg4: memref<1x32xf32, #tpu.memory_space<vmem>>, %arg5: memref<16x32xbf16, #tpu.memory_space<vmem>>, %arg6: memref<16x32xbf16, #tpu.memory_space<vmem>>) attributes {dimension_semantics = [#tpu.dimension_semantics<parallel>, #tpu.dimension_semantics<parallel>], iteration_bounds = array<i64: 1, 1>, scalar_prefetch = 0 : i64, scratch_operands = 0 : i64, tpu.core_type = #tpu.core_type<tc>, window_params = [{transform_indices = @transform_0, window_bounds = array<i64: 16, 32>}, {transform_indices = @transform_1, window_bounds = array<i64: 32, 32>}, {transform_indices = @transform_2, window_bounds = array<i64: 1, 32>}, {transform_indices = @transform_3, window_bounds = array<i64: 16, 32>}, {transform_indices = @transform_4, window_bounds = array<i64: 16, 32>}]} {
    %c0 = arith.constant 0 : index
    %c0_0 = arith.constant 0 : index
    %0 = vector.load %arg2[%c0, %c0_0] : memref<16x32xbf16, #tpu.memory_space<vmem>>, vector<16x32xbf16>
    %c0_1 = arith.constant 0 : index
    %c0_2 = arith.constant 0 : index
    %1 = vector.load %arg3[%c0_1, %c0_2] : memref<32x32xbf16, #tpu.memory_space<vmem>>, vector<32x32xbf16>
    %cst = arith.constant dense<0.000000e+00> : vector<16x32xf32>
    %2 = tpu.matmul %0, %1, %cst {dimension_numbers = #tpu.dot_dimension_numbers<[1], [0], [0], [1], [0, 0, 1, 1], [], []>} : vector<16x32xbf16>, vector<32x32xbf16>, vector<16x32xf32> -> vector<16x32xf32>
    %c0_3 = arith.constant 0 : index
    %c0_4 = arith.constant 0 : index
    %3 = vector.load %arg4[%c0_3, %c0_4] : memref<1x32xf32, #tpu.memory_space<vmem>>, vector<1x32xf32>
    %4 = vector.broadcast %3 : vector<1x32xf32> to vector<16x32xf32>
    %5 = arith.addf %2, %4 : vector<16x32xf32>
    %c0_5 = arith.constant 0 : index
    %c0_6 = arith.constant 0 : index
    %6 = vector.load %arg5[%c0_5, %c0_6] : memref<16x32xbf16, #tpu.memory_space<vmem>>, vector<16x32xbf16>
    %7 = arith.extf %6 : vector<16x32xbf16> to vector<16x32xf32>
    %8 = arith.addf %5, %7 : vector<16x32xf32>
    %9 = arith.truncf %8 : vector<16x32xf32> to vector<16x32xbf16>
    %c0_7 = arith.constant 0 : index
    %c0_8 = arith.constant 0 : index
    %10 = vector.load %arg6[%c0_7, %c0_8] : memref<16x32xbf16, #tpu.memory_space<vmem>>, vector<16x32xbf16>
    tpu.vector_store %arg6[%c0_7, %c0_8], %9 {strides = array<i32>} : memref<16x32xbf16, #tpu.memory_space<vmem>>, vector<16x32xbf16>,
    return
  }
  func.func @transform_0(%arg0: i32, %arg1: i32) -> (i32, i32) {
    %c0_i32 = arith.constant 0 : i32
    %c0_i32_0 = arith.constant 0 : i32
    return %arg0, %c0_i32 : i32, i32
  }
  func.func @transform_1(%arg0: i32, %arg1: i32) -> (i32, i32) {
    %c0_i32 = arith.constant 0 : i32
    %c0_i32_0 = arith.constant 0 : i32
    return %c0_i32, %arg1 : i32, i32
  }
  func.func @transform_2(%arg0: i32, %arg1: i32) -> (i32, i32) {
    %c0_i32 = arith.constant 0 : i32
    %c0_i32_0 = arith.constant 0 : i32
    return %c0_i32, %arg1 : i32, i32
  }
  func.func @transform_3(%arg0: i32, %arg1: i32) -> (i32, i32) {
    %c0_i32 = arith.constant 0 : i32
    return %arg0, %arg1 : i32, i32
  }
  func.func @transform_4(%arg0: i32, %arg1: i32) -> (i32, i32) {
    %c0_i32 = arith.constant 0 : i32
    return %arg0, %arg1 : i32, i32
  }
}

module attributes {stable_mosaic.version = 11 : i64} {
  func.func @kernel(%arg0: i32, %arg1: i32, %arg2: memref<16x32xbf16, #tpu.memory_space<vmem>>, %arg3: memref<32x128xbf16, #tpu.memory_space<vmem>>, %arg4: memref<1x32xf32, #tpu.memory_space<vmem>>, %arg5: memref<1x32xf32, #tpu.memory_space<vmem>>, %arg6: memref<1x128xf32, #tpu.memory_space<vmem>>, %arg7: memref<16x128xbf16, #tpu.memory_space<vmem>>, %arg8: memref<16x32xbf16, #tpu.memory_space<vmem>>) attributes {dimension_semantics = [#tpu.dimension_semantics<parallel>, #tpu.dimension_semantics<arbitrary>], iteration_bounds = array<i64: 1, 1>, scalar_prefetch = 0 : i64, scratch_operands = 1 : i64, tpu.core_type = #tpu.core_type<tc>, window_params = [{transform_indices = @transform_0, window_bounds = array<i64: 16, 32>}, {transform_indices = @transform_1, window_bounds = array<i64: 32, 128>}, {pipeline_mode = #tpu.pipeline_mode<synchronous>, transform_indices = @transform_2, window_bounds = array<i64: 1, 32>}, {pipeline_mode = #tpu.pipeline_mode<synchronous>, transform_indices = @transform_3, window_bounds = array<i64: 1, 32>}, {transform_indices = @transform_4, window_bounds = array<i64: 1, 128>}, {transform_indices = @transform_5, window_bounds = array<i64: 16, 128>}]} {
    %c0_i32 = arith.constant 0 : i32
    %0 = arith.cmpi eq, %arg1, %c0_i32 : i32
    %1 = arith.extui %0 : i1 to i32
    %c0_i32_0 = arith.constant 0 : i32
    %2 = arith.cmpi ne, %1, %c0_i32_0 : i32
    scf.if %2 {
      %c0_12 = arith.constant 0 : index
      %c0_13 = arith.constant 0 : index
      %24 = vector.load %arg2[%c0_12, %c0_13] : memref<16x32xbf16, #tpu.memory_space<vmem>>, vector<16x32xbf16>
      %25 = arith.extf %24 : vector<16x32xbf16> to vector<16x32xf32>
      %cst_14 = arith.constant dense<0.000000e+00> : vector<16xf32>
      %26 = vector.multi_reduction <add>, %25, %cst_14 [1] : vector<16x32xf32> to vector<16xf32>
      %27 = vector.shape_cast %26 : vector<16xf32> to vector<16x1xf32>
      %cst_15 = arith.constant 3.200000e+01 : f32
      %28 = vector.broadcast %cst_15 : f32 to vector<16x1xf32>
      %29 = arith.divf %27, %28 : vector<16x1xf32>
      %30 = vector.broadcast %29 : vector<16x1xf32> to vector<16x32xf32>
      %31 = arith.subf %25, %30 : vector<16x32xf32>
      %32 = arith.mulf %31, %31 : vector<16x32xf32>
      %cst_16 = arith.constant dense<0.000000e+00> : vector<16xf32>
      %33 = vector.multi_reduction <add>, %32, %cst_16 [1] : vector<16x32xf32> to vector<16xf32>
      %34 = vector.shape_cast %33 : vector<16xf32> to vector<16x1xf32>
      %cst_17 = arith.constant 3.200000e+01 : f32
      %35 = vector.broadcast %cst_17 : f32 to vector<16x1xf32>
      %36 = arith.divf %34, %35 : vector<16x1xf32>
      %37 = vector.broadcast %29 : vector<16x1xf32> to vector<16x32xf32>
      %38 = arith.subf %25, %37 : vector<16x32xf32>
      %cst_18 = arith.constant 9.99999974E-6 : f32
      %39 = vector.broadcast %cst_18 : f32 to vector<16x1xf32>
      %40 = arith.addf %36, %39 : vector<16x1xf32>
      %41 = math.rsqrt %40 : vector<16x1xf32>
      %42 = vector.broadcast %41 : vector<16x1xf32> to vector<16x32xf32>
      %43 = arith.mulf %38, %42 : vector<16x32xf32>
      %c0_19 = arith.constant 0 : index
      %c0_20 = arith.constant 0 : index
      %44 = vector.load %arg4[%c0_19, %c0_20] : memref<1x32xf32, #tpu.memory_space<vmem>>, vector<1x32xf32>
      %45 = vector.broadcast %44 : vector<1x32xf32> to vector<16x32xf32>
      %46 = arith.mulf %43, %45 : vector<16x32xf32>
      %c0_21 = arith.constant 0 : index
      %c0_22 = arith.constant 0 : index
      %47 = vector.load %arg5[%c0_21, %c0_22] : memref<1x32xf32, #tpu.memory_space<vmem>>, vector<1x32xf32>
      %48 = vector.broadcast %47 : vector<1x32xf32> to vector<16x32xf32>
      %49 = arith.addf %46, %48 : vector<16x32xf32>
      %50 = arith.truncf %49 : vector<16x32xf32> to vector<16x32xbf16>
      %c0_23 = arith.constant 0 : index
      %c0_24 = arith.constant 0 : index
      %51 = vector.load %arg8[%c0_23, %c0_24] : memref<16x32xbf16, #tpu.memory_space<vmem>>, vector<16x32xbf16>
      tpu.vector_store %arg8[%c0_23, %c0_24], %50 {strides = array<i32>} : memref<16x32xbf16, #tpu.memory_space<vmem>>, vector<16x32xbf16>,
    } else {
    }
    %c0 = arith.constant 0 : index
    %c0_1 = arith.constant 0 : index
    %3 = vector.load %arg8[%c0, %c0_1] : memref<16x32xbf16, #tpu.memory_space<vmem>>, vector<16x32xbf16>
    %c0_2 = arith.constant 0 : index
    %c0_3 = arith.constant 0 : index
    %4 = vector.load %arg3[%c0_2, %c0_3] : memref<32x128xbf16, #tpu.memory_space<vmem>>, vector<32x128xbf16>
    %cst = arith.constant dense<0.000000e+00> : vector<16x128xf32>
    %5 = tpu.matmul %3, %4, %cst {dimension_numbers = #tpu.dot_dimension_numbers<[1], [0], [0], [1], [0, 0, 1, 1], [], []>} : vector<16x32xbf16>, vector<32x128xbf16>, vector<16x128xf32> -> vector<16x128xf32>
    %c0_4 = arith.constant 0 : index
    %c0_5 = arith.constant 0 : index
    %6 = vector.load %arg6[%c0_4, %c0_5] : memref<1x128xf32, #tpu.memory_space<vmem>>, vector<1x128xf32>
    %7 = vector.broadcast %6 : vector<1x128xf32> to vector<16x128xf32>
    %8 = arith.addf %5, %7 : vector<16x128xf32>
    %cst_6 = arith.constant 5.000000e-01 : f32
    %9 = vector.broadcast %cst_6 : f32 to vector<16x128xf32>
    %10 = arith.mulf %9, %8 : vector<16x128xf32>
    %cst_7 = arith.constant 4.471500e-02 : f32
    %11 = vector.broadcast %cst_7 : f32 to vector<16x128xf32>
    %12 = arith.mulf %11, %8 : vector<16x128xf32>
    %13 = arith.mulf %12, %8 : vector<16x128xf32>
    %14 = arith.mulf %13, %8 : vector<16x128xf32>
    %15 = arith.addf %8, %14 : vector<16x128xf32>
    %cst_8 = arith.constant 0.797884583 : f32
    %16 = vector.broadcast %cst_8 : f32 to vector<16x128xf32>
    %17 = arith.mulf %16, %15 : vector<16x128xf32>
    %18 = math.tanh %17 : vector<16x128xf32>
    %cst_9 = arith.constant 1.000000e+00 : f32
    %19 = vector.broadcast %cst_9 : f32 to vector<16x128xf32>
    %20 = arith.addf %19, %18 : vector<16x128xf32>
    %21 = arith.mulf %10, %20 : vector<16x128xf32>
    %22 = arith.truncf %21 : vector<16x128xf32> to vector<16x128xbf16>
    %c0_10 = arith.constant 0 : index
    %c0_11 = arith.constant 0 : index
    %23 = vector.load %arg7[%c0_10, %c0_11] : memref<16x128xbf16, #tpu.memory_space<vmem>>, vector<16x128xbf16>
    tpu.vector_store %arg7[%c0_10, %c0_11], %22 {strides = array<i32>} : memref<16x128xbf16, #tpu.memory_space<vmem>>, vector<16x128xbf16>,
    return
  }
  func.func @transform_0(%arg0: i32, %arg1: i32) -> (i32, i32) {
    %c0_i32 = arith.constant 0 : i32
    %c0_i32_0 = arith.constant 0 : i32
    return %arg0, %c0_i32 : i32, i32
  }
  func.func @transform_1(%arg0: i32, %arg1: i32) -> (i32, i32) {
    %c0_i32 = arith.constant 0 : i32
    %c0_i32_0 = arith.constant 0 : i32
    return %c0_i32, %arg1 : i32, i32
  }
  func.func @transform_2(%arg0: i32, %arg1: i32) -> (i32, i32) {
    %c0_i32 = arith.constant 0 : i32
    %c0_i32_0 = arith.constant 0 : i32
    %c0_i32_1 = arith.constant 0 : i32
    return %c0_i32, %c0_i32_0 : i32, i32
  }
  func.func @transform_3(%arg0: i32, %arg1: i32) -> (i32, i32) {
    %c0_i32 = arith.constant 0 : i32
    %c0_i32_0 = arith.constant 0 : i32
    %c0_i32_1 = arith.constant 0 : i32
    return %c0_i32, %c0_i32_0 : i32, i32
  }
  func.func @transform_4(%arg0: i32, %arg1: i32) -> (i32, i32) {
    %c0_i32 = arith.constant 0 : i32
    %c0_i32_0 = arith.constant 0 : i32
    return %c0_i32, %arg1 : i32, i32
  }
  func.func @transform_5(%arg0: i32, %arg1: i32) -> (i32, i32) {
    %c0_i32 = arith.constant 0 : i32
    return %arg0, %arg1 : i32, i32
  }
}

module attributes {stable_mosaic.version = 11 : i64} {
  func.func @kernel(%arg0: i32, %arg1: i32, %arg2: memref<6x32xbf16, #tpu.memory_space<vmem>>, %arg3: memref<32x96xbf16, #tpu.memory_space<vmem>>, %arg4: memref<1x32xf32, #tpu.memory_space<vmem>>, %arg5: memref<1x32xf32, #tpu.memory_space<vmem>>, %arg6: memref<1x96xf32, #tpu.memory_space<vmem>>, %arg7: memref<6x96xbf16, #tpu.memory_space<vmem>>, %arg8: memref<6x32xbf16, #tpu.memory_space<vmem>>) attributes {dimension_semantics = [#tpu.dimension_semantics<parallel>, #tpu.dimension_semantics<arbitrary>], iteration_bounds = array<i64: 1, 1>, scalar_prefetch = 0 : i64, scratch_operands = 1 : i64, tpu.core_type = #tpu.core_type<tc>, window_params = [{transform_indices = @transform_0, window_bounds = array<i64: 6, 32>}, {transform_indices = @transform_1, window_bounds = array<i64: 32, 96>}, {pipeline_mode = #tpu.pipeline_mode<synchronous>, transform_indices = @transform_2, window_bounds = array<i64: 1, 32>}, {pipeline_mode = #tpu.pipeline_mode<synchronous>, transform_indices = @transform_3, window_bounds = array<i64: 1, 32>}, {transform_indices = @transform_4, window_bounds = array<i64: 1, 96>}, {transform_indices = @transform_5, window_bounds = array<i64: 6, 96>}]} {
    %c0_i32 = arith.constant 0 : i32
    %0 = arith.cmpi eq, %arg1, %c0_i32 : i32
    %1 = arith.extui %0 : i1 to i32
    %c0_i32_0 = arith.constant 0 : i32
    %2 = arith.cmpi ne, %1, %c0_i32_0 : i32
    scf.if %2 {
      %c0_8 = arith.constant 0 : index
      %c0_9 = arith.constant 0 : index
      %11 = vector.load %arg2[%c0_8, %c0_9] : memref<6x32xbf16, #tpu.memory_space<vmem>>, vector<6x32xbf16>
      %12 = arith.extf %11 : vector<6x32xbf16> to vector<6x32xf32>
      %cst_10 = arith.constant dense<0.000000e+00> : vector<6xf32>
      %13 = vector.multi_reduction <add>, %12, %cst_10 [1] : vector<6x32xf32> to vector<6xf32>
      %14 = vector.shape_cast %13 : vector<6xf32> to vector<6x1xf32>
      %cst_11 = arith.constant 3.200000e+01 : f32
      %15 = vector.broadcast %cst_11 : f32 to vector<6x1xf32>
      %16 = arith.divf %14, %15 : vector<6x1xf32>
      %17 = vector.broadcast %16 : vector<6x1xf32> to vector<6x32xf32>
      %18 = arith.subf %12, %17 : vector<6x32xf32>
      %19 = arith.mulf %18, %18 : vector<6x32xf32>
      %cst_12 = arith.constant dense<0.000000e+00> : vector<6xf32>
      %20 = vector.multi_reduction <add>, %19, %cst_12 [1] : vector<6x32xf32> to vector<6xf32>
      %21 = vector.shape_cast %20 : vector<6xf32> to vector<6x1xf32>
      %cst_13 = arith.constant 3.200000e+01 : f32
      %22 = vector.broadcast %cst_13 : f32 to vector<6x1xf32>
      %23 = arith.divf %21, %22 : vector<6x1xf32>
      %24 = vector.broadcast %16 : vector<6x1xf32> to vector<6x32xf32>
      %25 = arith.subf %12, %24 : vector<6x32xf32>
      %cst_14 = arith.constant 9.99999974E-6 : f32
      %26 = vector.broadcast %cst_14 : f32 to vector<6x1xf32>
      %27 = arith.addf %23, %26 : vector<6x1xf32>
      %28 = math.rsqrt %27 : vector<6x1xf32>
      %29 = vector.broadcast %28 : vector<6x1xf32> to vector<6x32xf32>
      %30 = arith.mulf %25, %29 : vector<6x32xf32>
      %c0_15 = arith.constant 0 : index
      %c0_16 = arith.constant 0 : index
      %31 = vector.load %arg4[%c0_15, %c0_16] : memref<1x32xf32, #tpu.memory_space<vmem>>, vector<1x32xf32>
      %32 = vector.broadcast %31 : vector<1x32xf32> to vector<6x32xf32>
      %33 = arith.mulf %30, %32 : vector<6x32xf32>
      %c0_17 = arith.constant 0 : index
      %c0_18 = arith.constant 0 : index
      %34 = vector.load %arg5[%c0_17, %c0_18] : memref<1x32xf32, #tpu.memory_space<vmem>>, vector<1x32xf32>
      %35 = vector.broadcast %34 : vector<1x32xf32> to vector<6x32xf32>
      %36 = arith.addf %33, %35 : vector<6x32xf32>
      %37 = arith.truncf %36 : vector<6x32xf32> to vector<6x32xbf16>
      %c0_19 = arith.constant 0 : index
      %c0_20 = arith.constant 0 : index
      %38 = vector.load %arg8[%c0_19, %c0_20] : memref<6x32xbf16, #tpu.memory_space<vmem>>, vector<6x32xbf16>
      tpu.vector_store %arg8[%c0_19, %c0_20], %37 {strides = array<i32>} : memref<6x32xbf16, #tpu.memory_space<vmem>>, vector<6x32xbf16>,
    } else {
    }
    %c0 = arith.constant 0 : index
    %c0_1 = arith.constant 0 : index
    %3 = vector.load %arg8[%c0, %c0_1] : memref<6x32xbf16, #tpu.memory_space<vmem>>, vector<6x32xbf16>
    %c0_2 = arith.constant 0 : index
    %c0_3 = arith.constant 0 : index
    %4 = vector.load %arg3[%c0_2, %c0_3] : memref<32x96xbf16, #tpu.memory_space<vmem>>, vector<32x96xbf16>
    %cst = arith.constant dense<0.000000e+00> : vector<6x96xf32>
    %5 = tpu.matmul %3, %4, %cst {dimension_numbers = #tpu.dot_dimension_numbers<[1], [0], [0], [1], [0, 0, 1, 1], [], []>} : vector<6x32xbf16>, vector<32x96xbf16>, vector<6x96xf32> -> vector<6x96xf32>
    %c0_4 = arith.constant 0 : index
    %c0_5 = arith.constant 0 : index
    %6 = vector.load %arg6[%c0_4, %c0_5] : memref<1x96xf32, #tpu.memory_space<vmem>>, vector<1x96xf32>
    %7 = vector.broadcast %6 : vector<1x96xf32> to vector<6x96xf32>
    %8 = arith.addf %5, %7 : vector<6x96xf32>
    %9 = arith.truncf %8 : vector<6x96xf32> to vector<6x96xbf16>
    %c0_6 = arith.constant 0 : index
    %c0_7 = arith.constant 0 : index
    %10 = vector.load %arg7[%c0_6, %c0_7] : memref<6x96xbf16, #tpu.memory_space<vmem>>, vector<6x96xbf16>
    tpu.vector_store %arg7[%c0_6, %c0_7], %9 {strides = array<i32>} : memref<6x96xbf16, #tpu.memory_space<vmem>>, vector<6x96xbf16>,
    return
  }
  func.func @transform_0(%arg0: i32, %arg1: i32) -> (i32, i32) {
    %c0_i32 = arith.constant 0 : i32
    %c0_i32_0 = arith.constant 0 : i32
    return %arg0, %c0_i32 : i32, i32
  }
  func.func @transform_1(%arg0: i32, %arg1: i32) -> (i32, i32) {
    %c0_i32 = arith.constant 0 : i32
    %c0_i32_0 = arith.constant 0 : i32
    return %c0_i32, %arg1 : i32, i32
  }
  func.func @transform_2(%arg0: i32, %arg1: i32) -> (i32, i32) {
    %c0_i32 = arith.constant 0 : i32
    %c0_i32_0 = arith.constant 0 : i32
    %c0_i32_1 = arith.constant 0 : i32
    return %c0_i32, %c0_i32_0 : i32, i32
  }
  func.func @transform_3(%arg0: i32, %arg1: i32) -> (i32, i32) {
    %c0_i32 = arith.constant 0 : i32
    %c0_i32_0 = arith.constant 0 : i32
    %c0_i32_1 = arith.constant 0 : i32
    return %c0_i32, %c0_i32_0 : i32, i32
  }
  func.func @transform_4(%arg0: i32, %arg1: i32) -> (i32, i32) {
    %c0_i32 = arith.constant 0 : i32
    %c0_i32_0 = arith.constant 0 : i32
    return %c0_i32, %arg1 : i32, i32
  }
  func.func @transform_5(%arg0: i32, %arg1: i32) -> (i32, i32) {
    %c0_i32 = arith.constant 0 : i32
    return %arg0, %arg1 : i32, i32
  }
}

module attributes {stable_mosaic.version = 11 : i64} {
  func.func @kernel(%arg0: i32, %arg1: i32, %arg2: memref<6x32xbf16, #tpu.memory_space<vmem>>, %arg3: memref<32x32xbf16, #tpu.memory_space<vmem>>, %arg4: memref<1x32xf32, #tpu.memory_space<vmem>>, %arg5: memref<6x32xbf16, #tpu.memory_space<vmem>>, %arg6: memref<6x32xbf16, #tpu.memory_space<vmem>>) attributes {dimension_semantics = [#tpu.dimension_semantics<parallel>, #tpu.dimension_semantics<parallel>], iteration_bounds = array<i64: 1, 1>, scalar_prefetch = 0 : i64, scratch_operands = 0 : i64, tpu.core_type = #tpu.core_type<tc>, window_params = [{transform_indices = @transform_0, window_bounds = array<i64: 6, 32>}, {transform_indices = @transform_1, window_bounds = array<i64: 32, 32>}, {transform_indices = @transform_2, window_bounds = array<i64: 1, 32>}, {transform_indices = @transform_3, window_bounds = array<i64: 6, 32>}, {transform_indices = @transform_4, window_bounds = array<i64: 6, 32>}]} {
    %c0 = arith.constant 0 : index
    %c0_0 = arith.constant 0 : index
    %0 = vector.load %arg2[%c0, %c0_0] : memref<6x32xbf16, #tpu.memory_space<vmem>>, vector<6x32xbf16>
    %c0_1 = arith.constant 0 : index
    %c0_2 = arith.constant 0 : index
    %1 = vector.load %arg3[%c0_1, %c0_2] : memref<32x32xbf16, #tpu.memory_space<vmem>>, vector<32x32xbf16>
    %cst = arith.constant dense<0.000000e+00> : vector<6x32xf32>
    %2 = tpu.matmul %0, %1, %cst {dimension_numbers = #tpu.dot_dimension_numbers<[1], [0], [0], [1], [0, 0, 1, 1], [], []>} : vector<6x32xbf16>, vector<32x32xbf16>, vector<6x32xf32> -> vector<6x32xf32>
    %c0_3 = arith.constant 0 : index
    %c0_4 = arith.constant 0 : index
    %3 = vector.load %arg4[%c0_3, %c0_4] : memref<1x32xf32, #tpu.memory_space<vmem>>, vector<1x32xf32>
    %4 = vector.broadcast %3 : vector<1x32xf32> to vector<6x32xf32>
    %5 = arith.addf %2, %4 : vector<6x32xf32>
    %c0_5 = arith.constant 0 : index
    %c0_6 = arith.constant 0 : index
    %6 = vector.load %arg5[%c0_5, %c0_6] : memref<6x32xbf16, #tpu.memory_space<vmem>>, vector<6x32xbf16>
    %7 = arith.extf %6 : vector<6x32xbf16> to vector<6x32xf32>
    %8 = arith.addf %5, %7 : vector<6x32xf32>
    %9 = arith.truncf %8 : vector<6x32xf32> to vector<6x32xbf16>
    %c0_7 = arith.constant 0 : index
    %c0_8 = arith.constant 0 : index
    %10 = vector.load %arg6[%c0_7, %c0_8] : memref<6x32xbf16, #tpu.memory_space<vmem>>, vector<6x32xbf16>
    tpu.vector_store %arg6[%c0_7, %c0_8], %9 {strides = array<i32>} : memref<6x32xbf16, #tpu.memory_space<vmem>>, vector<6x32xbf16>,
    return
  }
  func.func @transform_0(%arg0: i32, %arg1: i32) -> (i32, i32) {
    %c0_i32 = arith.constant 0 : i32
    %c0_i32_0 = arith.constant 0 : i32
    return %arg0, %c0_i32 : i32, i32
  }
  func.func @transform_1(%arg0: i32, %arg1: i32) -> (i32, i32) {
    %c0_i32 = arith.constant 0 : i32
    %c0_i32_0 = arith.constant 0 : i32
    return %c0_i32, %arg1 : i32, i32
  }
  func.func @transform_2(%arg0: i32, %arg1: i32) -> (i32, i32) {
    %c0_i32 = arith.constant 0 : i32
    %c0_i32_0 = arith.constant 0 : i32
    return %c0_i32, %arg1 : i32, i32
  }
  func.func @transform_3(%arg0: i32, %arg1: i32) -> (i32, i32) {
    %c0_i32 = arith.constant 0 : i32
    return %arg0, %arg1 : i32, i32
  }
  func.func @transform_4(%arg0: i32, %arg1: i32) -> (i32, i32) {
    %c0_i32 = arith.constant 0 : i32
    return %arg0, %arg1 : i32, i32
  }
}

module attributes {stable_mosaic.version = 11 : i64} {
  func.func @_flash_kernel(%arg0: i32, %arg1: i32, %arg2: memref<6x32xbf16, #tpu.memory_space<vmem>>, %arg3: memref<6x32xbf16, #tpu.memory_space<vmem>>, %arg4: memref<6x32xbf16, #tpu.memory_space<vmem>>, %arg5: memref<6x32xbf16, #tpu.memory_space<vmem>>, %arg6: memref<4x6x1xf32, #tpu.memory_space<vmem>>, %arg7: memref<4x6x1xf32, #tpu.memory_space<vmem>>, %arg8: memref<4x6x8xf32, #tpu.memory_space<vmem>>) attributes {dimension_semantics = [#tpu.dimension_semantics<parallel>, #tpu.dimension_semantics<arbitrary>], iteration_bounds = array<i64: 1, 1>, scalar_prefetch = 0 : i64, scratch_operands = 3 : i64, tpu.core_type = #tpu.core_type<tc>, window_params = [{transform_indices = @transform_0, window_bounds = array<i64: 6, 32>}, {transform_indices = @transform_1, window_bounds = array<i64: 6, 32>}, {transform_indices = @transform_2, window_bounds = array<i64: 6, 32>}, {transform_indices = @transform_3, window_bounds = array<i64: 6, 32>}]} {
    %c0_i32 = arith.constant 0 : i32
    %0 = arith.cmpi eq, %arg1, %c0_i32 : i32
    %1 = arith.extui %0 : i1 to i32
    %c0_i32_0 = arith.constant 0 : i32
    %2 = arith.cmpi ne, %1, %c0_i32_0 : i32
    scf.if %2 {
      %cst = arith.constant -1.000000e+30 : f32
      %12 = vector.broadcast %cst : f32 to vector<4x6x1xf32>
      %c0 = arith.constant 0 : index
      %c0_5 = arith.constant 0 : index
      %c0_6 = arith.constant 0 : index
      %13 = vector.load %arg6[%c0, %c0_5, %c0_6] : memref<4x6x1xf32, #tpu.memory_space<vmem>>, vector<4x6x1xf32>
      tpu.vector_store %arg6[%c0, %c0_5, %c0_6], %12 {strides = array<i32>} : memref<4x6x1xf32, #tpu.memory_space<vmem>>, vector<4x6x1xf32>,
      %cst_7 = arith.constant 0.000000e+00 : f32
      %14 = vector.broadcast %cst_7 : f32 to vector<4x6x1xf32>
      %c0_8 = arith.constant 0 : index
      %c0_9 = arith.constant 0 : index
      %c0_10 = arith.constant 0 : index
      %15 = vector.load %arg7[%c0_8, %c0_9, %c0_10] : memref<4x6x1xf32, #tpu.memory_space<vmem>>, vector<4x6x1xf32>
      tpu.vector_store %arg7[%c0_8, %c0_9, %c0_10], %14 {strides = array<i32>} : memref<4x6x1xf32, #tpu.memory_space<vmem>>, vector<4x6x1xf32>,
      %cst_11 = arith.constant 0.000000e+00 : f32
      %16 = vector.broadcast %cst_11 : f32 to vector<4x6x8xf32>
      %c0_12 = arith.constant 0 : index
      %c0_13 = arith.constant 0 : index
      %c0_14 = arith.constant 0 : index
      %17 = vector.load %arg8[%c0_12, %c0_13, %c0_14] : memref<4x6x8xf32, #tpu.memory_space<vmem>>, vector<4x6x8xf32>
      tpu.vector_store %arg8[%c0_12, %c0_13, %c0_14], %16 {strides = array<i32>} : memref<4x6x8xf32, #tpu.memory_space<vmem>>, vector<4x6x8xf32>,
    } else {
    }
    %c6_i32 = arith.constant 6 : i32
    %3 = arith.muli %arg1, %c6_i32 : i32
    %c6_i32_1 = arith.constant 6 : i32
    %4 = arith.muli %arg0, %c6_i32_1 : i32
    %c5_i32 = arith.constant 5 : i32
    %5 = arith.addi %4, %c5_i32 : i32
    %6 = arith.cmpi sle, %3, %5 : i32
    %7 = arith.extui %6 : i1 to i32
    %c0_i32_2 = arith.constant 0 : i32
    %8 = arith.cmpi ne, %7, %c0_i32_2 : i32
    scf.if %8 {
      %c6_i32_5 = arith.constant 6 : i32
      %12 = arith.muli %arg1, %c6_i32_5 : i32
      %13 = tpu.iota {dimensions = array<i32: 1>} : vector<6x6xi32>
      %14 = vector.broadcast %12 : i32 to vector<6x6xi32>
      %15 = arith.addi %14, %13 : vector<6x6xi32>
      %c6_i32_6 = arith.constant 6 : i32
      %16 = arith.muli %arg0, %c6_i32_6 : i32
      %17 = tpu.iota {dimensions = array<i32: 0>} : vector<6x6xi32>
      %18 = vector.broadcast %16 : i32 to vector<6x6xi32>
      %19 = arith.addi %18, %17 : vector<6x6xi32>
      %20 = arith.cmpi sgt, %15, %19 : vector<6x6xi32>
      %c0 = arith.constant 0 : index
      %c0_7 = arith.constant 0 : index
      %21 = vector.load %arg2[%c0, %c0_7] : memref<6x32xbf16, #tpu.memory_space<vmem>>, vector<6x8xbf16>
      %c0_8 = arith.constant 0 : index
      %c0_9 = arith.constant 0 : index
      %22 = vector.load %arg3[%c0_8, %c0_9] : memref<6x32xbf16, #tpu.memory_space<vmem>>, vector<6x8xbf16>
      %cst = arith.constant dense<0.000000e+00> : vector<6x6xf32>
      %23 = tpu.matmul %21, %22, %cst {dimension_numbers = #tpu.dot_dimension_numbers<[1], [1], [0], [0], [0, 0, 1, 0], [], []>} : vector<6x8xbf16>, vector<6x8xbf16>, vector<6x6xf32> -> vector<6x6xf32>
      %cst_10 = arith.constant -1.000000e+30 : f32
      %24 = vector.broadcast %cst_10 : f32 to vector<6x6xf32>
      %25 = arith.select %20, %24, %23 : vector<6x6xi1>, vector<6x6xf32>
      %c0_11 = arith.constant 0 : index
      %c0_12 = arith.constant 0 : index
      %c0_13 = arith.constant 0 : index
      %26 = vector.load %arg6[%c0_11, %c0_12, %c0_13] : memref<4x6x1xf32, #tpu.memory_space<vmem>>, vector<1x6x1xf32>
      %27 = vector.shape_cast %26 : vector<1x6x1xf32> to vector<6x1xf32>
      %cst_14 = arith.constant dense<0xFF800000> : vector<6xf32>
      %28 = vector.multi_reduction <maximumf>, %25, %cst_14 [1] : vector<6x6xf32> to vector<6xf32>
      %29 = vector.shape_cast %28 : vector<6xf32> to vector<6x1xf32>
      %30 = arith.maximumf %27, %29 : vector<6x1xf32>
      %31 = arith.subf %27, %30 : vector<6x1xf32>
      %32 = math.exp %31 : vector<6x1xf32>
      %33 = vector.broadcast %30 : vector<6x1xf32> to vector<6x6xf32>
      %34 = arith.subf %25, %33 : vector<6x6xf32>
      %35 = math.exp %34 : vector<6x6xf32>
      %c0_15 = arith.constant 0 : index
      %c0_16 = arith.constant 0 : index
      %c0_17 = arith.constant 0 : index
      %36 = vector.load %arg7[%c0_15, %c0_16, %c0_17] : memref<4x6x1xf32, #tpu.memory_space<vmem>>, vector<1x6x1xf32>
      %37 = vector.shape_cast %36 : vector<1x6x1xf32> to vector<6x1xf32>
      %38 = arith.mulf %32, %37 : vector<6x1xf32>
      %cst_18 = arith.constant dense<0.000000e+00> : vector<6xf32>
      %39 = vector.multi_reduction <add>, %35, %cst_18 [1] : vector<6x6xf32> to vector<6xf32>
      %40 = vector.shape_cast %39 : vector<6xf32> to vector<6x1xf32>
      %41 = arith.addf %38, %40 : vector<6x1xf32>
      %c0_19 = arith.constant 0 : index
      %c0_20 = arith.constant 0 : index
      %c0_21 = arith.constant 0 : index
      %42 = vector.load %arg7[%c0_19, %c0_20, %c0_21] : memref<4x6x1xf32, #tpu.memory_space<vmem>>, vector<1x6x1xf32>
      %43 = vector.shape_cast %42 : vector<1x6x1xf32> to vector<6x1xf32>
      %44 = vector.shape_cast %41 : vector<6x1xf32> to vector<1x6x1xf32>
      tpu.vector_store %arg7[%c0_19, %c0_20, %c0_21], %44 {strides = array<i32>} : memref<4x6x1xf32, #tpu.memory_space<vmem>>, vector<1x6x1xf32>,
      %c0_22 = arith.constant 0 : index
      %c0_23 = arith.constant 0 : index
      %c0_24 = arith.constant 0 : index
      %45 = vector.load %arg8[%c0_22, %c0_23, %c0_24] : memref<4x6x8xf32, #tpu.memory_space<vmem>>, vector<1x6x8xf32>
      %46 = vector.shape_cast %45 : vector<1x6x8xf32> to vector<6x8xf32>
      %47 = vector.broadcast %32 : vector<6x1xf32> to vector<6x8xf32>
      %48 = arith.mulf %47, %46 : vector<6x8xf32>
      %49 = arith.truncf %35 : vector<6x6xf32> to vector<6x6xbf16>
      %c0_25 = arith.constant 0 : index
      %c0_26 = arith.constant 0 : index
      %50 = vector.load %arg4[%c0_25, %c0_26] : memref<6x32xbf16, #tpu.memory_space<vmem>>, vector<6x8xbf16>
      %cst_27 = arith.constant dense<0.000000e+00> : vector<6x8xf32>
      %51 = tpu.matmul %49, %50, %cst_27 {dimension_numbers = #tpu.dot_dimension_numbers<[1], [0], [0], [1], [0, 0, 1, 1], [], []>} : vector<6x6xbf16>, vector<6x8xbf16>, vector<6x8xf32> -> vector<6x8xf32>
      %52 = arith.addf %48, %51 : vector<6x8xf32>
      %c0_28 = arith.constant 0 : index
      %c0_29 = arith.constant 0 : index
      %c0_30 = arith.constant 0 : index
      %53 = vector.load %arg8[%c0_28, %c0_29, %c0_30] : memref<4x6x8xf32, #tpu.memory_space<vmem>>, vector<1x6x8xf32>
      %54 = vector.shape_cast %53 : vector<1x6x8xf32> to vector<6x8xf32>
      %55 = vector.shape_cast %52 : vector<6x8xf32> to vector<1x6x8xf32>
      tpu.vector_store %arg8[%c0_28, %c0_29, %c0_30], %55 {strides = array<i32>} : memref<4x6x8xf32, #tpu.memory_space<vmem>>, vector<1x6x8xf32>,
      %c0_31 = arith.constant 0 : index
      %c0_32 = arith.constant 0 : index
      %c0_33 = arith.constant 0 : index
      %56 = vector.load %arg6[%c0_31, %c0_32, %c0_33] : memref<4x6x1xf32, #tpu.memory_space<vmem>>, vector<1x6x1xf32>
      %57 = vector.shape_cast %56 : vector<1x6x1xf32> to vector<6x1xf32>
      %58 = vector.shape_cast %30 : vector<6x1xf32> to vector<1x6x1xf32>
      tpu.vector_store %arg6[%c0_31, %c0_32, %c0_33], %58 {strides = array<i32>} : memref<4x6x1xf32, #tpu.memory_space<vmem>>, vector<1x6x1xf32>,
      %c0_34 = arith.constant 0 : index
      %c8 = arith.constant 8 : index
      %59 = vector.load %arg2[%c0_34, %c8] : memref<6x32xbf16, #tpu.memory_space<vmem>>, vector<6x8xbf16>
      %c0_35 = arith.constant 0 : index
      %c8_36 = arith.constant 8 : index
      %60 = vector.load %arg3[%c0_35, %c8_36] : memref<6x32xbf16, #tpu.memory_space<vmem>>, vector<6x8xbf16>
      %cst_37 = arith.constant dense<0.000000e+00> : vector<6x6xf32>
      %61 = tpu.matmul %59, %60, %cst_37 {dimension_numbers = #tpu.dot_dimension_numbers<[1], [1], [0], [0], [0, 0, 1, 0], [], []>} : vector<6x8xbf16>, vector<6x8xbf16>, vector<6x6xf32> -> vector<6x6xf32>
      %cst_38 = arith.constant -1.000000e+30 : f32
      %62 = vector.broadcast %cst_38 : f32 to vector<6x6xf32>
      %63 = arith.select %20, %62, %61 : vector<6x6xi1>, vector<6x6xf32>
      %c1 = arith.constant 1 : index
      %c0_39 = arith.constant 0 : index
      %c0_40 = arith.constant 0 : index
      %64 = vector.load %arg6[%c1, %c0_39, %c0_40] : memref<4x6x1xf32, #tpu.memory_space<vmem>>, vector<1x6x1xf32>
      %65 = vector.shape_cast %64 : vector<1x6x1xf32> to vector<6x1xf32>
      %cst_41 = arith.constant dense<0xFF800000> : vector<6xf32>
      %66 = vector.multi_reduction <maximumf>, %63, %cst_41 [1] : vector<6x6xf32> to vector<6xf32>
      %67 = vector.shape_cast %66 : vector<6xf32> to vector<6x1xf32>
      %68 = arith.maximumf %65, %67 : vector<6x1xf32>
      %69 = arith.subf %65, %68 : vector<6x1xf32>
      %70 = math.exp %69 : vector<6x1xf32>
      %71 = vector.broadcast %68 : vector<6x1xf32> to vector<6x6xf32>
      %72 = arith.subf %63, %71 : vector<6x6xf32>
      %73 = math.exp %72 : vector<6x6xf32>
      %c1_42 = arith.constant 1 : index
      %c0_43 = arith.constant 0 : index
      %c0_44 = arith.constant 0 : index
      %74 = vector.load %arg7[%c1_42, %c0_43, %c0_44] : memref<4x6x1xf32, #tpu.memory_space<vmem>>, vector<1x6x1xf32>
      %75 = vector.shape_cast %74 : vector<1x6x1xf32> to vector<6x1xf32>
      %76 = arith.mulf %70, %75 : vector<6x1xf32>
      %cst_45 = arith.constant dense<0.000000e+00> : vector<6xf32>
      %77 = vector.multi_reduction <add>, %73, %cst_45 [1] : vector<6x6xf32> to vector<6xf32>
      %78 = vector.shape_cast %77 : vector<6xf32> to vector<6x1xf32>
      %79 = arith.addf %76, %78 : vector<6x1xf32>
      %c1_46 = arith.constant 1 : index
      %c0_47 = arith.constant 0 : index
      %c0_48 = arith.constant 0 : index
      %80 = vector.load %arg7[%c1_46, %c0_47, %c0_48] : memref<4x6x1xf32, #tpu.memory_space<vmem>>, vector<1x6x1xf32>
      %81 = vector.shape_cast %80 : vector<1x6x1xf32> to vector<6x1xf32>
      %82 = vector.shape_cast %79 : vector<6x1xf32> to vector<1x6x1xf32>
      tpu.vector_store %arg7[%c1_46, %c0_47, %c0_48], %82 {strides = array<i32>} : memref<4x6x1xf32, #tpu.memory_space<vmem>>, vector<1x6x1xf32>,
      %c1_49 = arith.constant 1 : index
      %c0_50 = arith.constant 0 : index
      %c0_51 = arith.constant 0 : index
      %83 = vector.load %arg8[%c1_49, %c0_50, %c0_51] : memref<4x6x8xf32, #tpu.memory_space<vmem>>, vector<1x6x8xf32>
      %84 = vector.shape_cast %83 : vector<1x6x8xf32> to vector<6x8xf32>
      %85 = vector.broadcast %70 : vector<6x1xf32> to vector<6x8xf32>
      %86 = arith.mulf %85, %84 : vector<6x8xf32>
      %87 = arith.truncf %73 : vector<6x6xf32> to vector<6x6xbf16>
      %c0_52 = arith.constant 0 : index
      %c8_53 = arith.constant 8 : index
      %88 = vector.load %arg4[%c0_52, %c8_53] : memref<6x32xbf16, #tpu.memory_space<vmem>>, vector<6x8xbf16>
      %cst_54 = arith.constant dense<0.000000e+00> : vector<6x8xf32>
      %89 = tpu.matmul %87, %88, %cst_54 {dimension_numbers = #tpu.dot_dimension_numbers<[1], [0], [0], [1], [0, 0, 1, 1], [], []>} : vector<6x6xbf16>, vector<6x8xbf16>, vector<6x8xf32> -> vector<6x8xf32>
      %90 = arith.addf %86, %89 : vector<6x8xf32>
      %c1_55 = arith.constant 1 : index
      %c0_56 = arith.constant 0 : index
      %c0_57 = arith.constant 0 : index
      %91 = vector.load %arg8[%c1_55, %c0_56, %c0_57] : memref<4x6x8xf32, #tpu.memory_space<vmem>>, vector<1x6x8xf32>
      %92 = vector.shape_cast %91 : vector<1x6x8xf32> to vector<6x8xf32>
      %93 = vector.shape_cast %90 : vector<6x8xf32> to vector<1x6x8xf32>
      tpu.vector_store %arg8[%c1_55, %c0_56, %c0_57], %93 {strides = array<i32>} : memref<4x6x8xf32, #tpu.memory_space<vmem>>, vector<1x6x8xf32>,
      %c1_58 = arith.constant 1 : index
      %c0_59 = arith.constant 0 : index
      %c0_60 = arith.constant 0 : index
      %94 = vector.load %arg6[%c1_58, %c0_59, %c0_60] : memref<4x6x1xf32, #tpu.memory_space<vmem>>, vector<1x6x1xf32>
      %95 = vector.shape_cast %94 : vector<1x6x1xf32> to vector<6x1xf32>
      %96 = vector.shape_cast %68 : vector<6x1xf32> to vector<1x6x1xf32>
      tpu.vector_store %arg6[%c1_58, %c0_59, %c0_60], %96 {strides = array<i32>} : memref<4x6x1xf32, #tpu.memory_space<vmem>>, vector<1x6x1xf32>,
      %c0_61 = arith.constant 0 : index
      %c16 = arith.constant 16 : index
      %97 = vector.load %arg2[%c0_61, %c16] : memref<6x32xbf16, #tpu.memory_space<vmem>>, vector<6x8xbf16>
      %c0_62 = arith.constant 0 : index
      %c16_63 = arith.constant 16 : index
      %98 = vector.load %arg3[%c0_62, %c16_63] : memref<6x32xbf16, #tpu.memory_space<vmem>>, vector<6x8xbf16>
      %cst_64 = arith.constant dense<0.000000e+00> : vector<6x6xf32>
      %99 = tpu.matmul %97, %98, %cst_64 {dimension_numbers = #tpu.dot_dimension_numbers<[1], [1], [0], [0], [0, 0, 1, 0], [], []>} : vector<6x8xbf16>, vector<6x8xbf16>, vector<6x6xf32> -> vector<6x6xf32>
      %cst_65 = arith.constant -1.000000e+30 : f32
      %100 = vector.broadcast %cst_65 : f32 to vector<6x6xf32>
      %101 = arith.select %20, %100, %99 : vector<6x6xi1>, vector<6x6xf32>
      %c2 = arith.constant 2 : index
      %c0_66 = arith.constant 0 : index
      %c0_67 = arith.constant 0 : index
      %102 = vector.load %arg6[%c2, %c0_66, %c0_67] : memref<4x6x1xf32, #tpu.memory_space<vmem>>, vector<1x6x1xf32>
      %103 = vector.shape_cast %102 : vector<1x6x1xf32> to vector<6x1xf32>
      %cst_68 = arith.constant dense<0xFF800000> : vector<6xf32>
      %104 = vector.multi_reduction <maximumf>, %101, %cst_68 [1] : vector<6x6xf32> to vector<6xf32>
      %105 = vector.shape_cast %104 : vector<6xf32> to vector<6x1xf32>
      %106 = arith.maximumf %103, %105 : vector<6x1xf32>
      %107 = arith.subf %103, %106 : vector<6x1xf32>
      %108 = math.exp %107 : vector<6x1xf32>
      %109 = vector.broadcast %106 : vector<6x1xf32> to vector<6x6xf32>
      %110 = arith.subf %101, %109 : vector<6x6xf32>
      %111 = math.exp %110 : vector<6x6xf32>
      %c2_69 = arith.constant 2 : index
      %c0_70 = arith.constant 0 : index
      %c0_71 = arith.constant 0 : index
      %112 = vector.load %arg7[%c2_69, %c0_70, %c0_71] : memref<4x6x1xf32, #tpu.memory_space<vmem>>, vector<1x6x1xf32>
      %113 = vector.shape_cast %112 : vector<1x6x1xf32> to vector<6x1xf32>
      %114 = arith.mulf %108, %113 : vector<6x1xf32>
      %cst_72 = arith.constant dense<0.000000e+00> : vector<6xf32>
      %115 = vector.multi_reduction <add>, %111, %cst_72 [1] : vector<6x6xf32> to vector<6xf32>
      %116 = vector.shape_cast %115 : vector<6xf32> to vector<6x1xf32>
      %117 = arith.addf %114, %116 : vector<6x1xf32>
      %c2_73 = arith.constant 2 : index
      %c0_74 = arith.constant 0 : index
      %c0_75 = arith.constant 0 : index
      %118 = vector.load %arg7[%c2_73, %c0_74, %c0_75] : memref<4x6x1xf32, #tpu.memory_space<vmem>>, vector<1x6x1xf32>
      %119 = vector.shape_cast %118 : vector<1x6x1xf32> to vector<6x1xf32>
      %120 = vector.shape_cast %117 : vector<6x1xf32> to vector<1x6x1xf32>
      tpu.vector_store %arg7[%c2_73, %c0_74, %c0_75], %120 {strides = array<i32>} : memref<4x6x1xf32, #tpu.memory_space<vmem>>, vector<1x6x1xf32>,
      %c2_76 = arith.constant 2 : index
      %c0_77 = arith.constant 0 : index
      %c0_78 = arith.constant 0 : index
      %121 = vector.load %arg8[%c2_76, %c0_77, %c0_78] : memref<4x6x8xf32, #tpu.memory_space<vmem>>, vector<1x6x8xf32>
      %122 = vector.shape_cast %121 : vector<1x6x8xf32> to vector<6x8xf32>
      %123 = vector.broadcast %108 : vector<6x1xf32> to vector<6x8xf32>
      %124 = arith.mulf %123, %122 : vector<6x8xf32>
      %125 = arith.truncf %111 : vector<6x6xf32> to vector<6x6xbf16>
      %c0_79 = arith.constant 0 : index
      %c16_80 = arith.constant 16 : index
      %126 = vector.load %arg4[%c0_79, %c16_80] : memref<6x32xbf16, #tpu.memory_space<vmem>>, vector<6x8xbf16>
      %cst_81 = arith.constant dense<0.000000e+00> : vector<6x8xf32>
      %127 = tpu.matmul %125, %126, %cst_81 {dimension_numbers = #tpu.dot_dimension_numbers<[1], [0], [0], [1], [0, 0, 1, 1], [], []>} : vector<6x6xbf16>, vector<6x8xbf16>, vector<6x8xf32> -> vector<6x8xf32>
      %128 = arith.addf %124, %127 : vector<6x8xf32>
      %c2_82 = arith.constant 2 : index
      %c0_83 = arith.constant 0 : index
      %c0_84 = arith.constant 0 : index
      %129 = vector.load %arg8[%c2_82, %c0_83, %c0_84] : memref<4x6x8xf32, #tpu.memory_space<vmem>>, vector<1x6x8xf32>
      %130 = vector.shape_cast %129 : vector<1x6x8xf32> to vector<6x8xf32>
      %131 = vector.shape_cast %128 : vector<6x8xf32> to vector<1x6x8xf32>
      tpu.vector_store %arg8[%c2_82, %c0_83, %c0_84], %131 {strides = array<i32>} : memref<4x6x8xf32, #tpu.memory_space<vmem>>, vector<1x6x8xf32>,
      %c2_85 = arith.constant 2 : index
      %c0_86 = arith.constant 0 : index
      %c0_87 = arith.constant 0 : index
      %132 = vector.load %arg6[%c2_85, %c0_86, %c0_87] : memref<4x6x1xf32, #tpu.memory_space<vmem>>, vector<1x6x1xf32>
      %133 = vector.shape_cast %132 : vector<1x6x1xf32> to vector<6x1xf32>
      %134 = vector.shape_cast %106 : vector<6x1xf32> to vector<1x6x1xf32>
      tpu.vector_store %arg6[%c2_85, %c0_86, %c0_87], %134 {strides = array<i32>} : memref<4x6x1xf32, #tpu.memory_space<vmem>>, vector<1x6x1xf32>,
      %c0_88 = arith.constant 0 : index
      %c24 = arith.constant 24 : index
      %135 = vector.load %arg2[%c0_88, %c24] : memref<6x32xbf16, #tpu.memory_space<vmem>>, vector<6x8xbf16>
      %c0_89 = arith.constant 0 : index
      %c24_90 = arith.constant 24 : index
      %136 = vector.load %arg3[%c0_89, %c24_90] : memref<6x32xbf16, #tpu.memory_space<vmem>>, vector<6x8xbf16>
      %cst_91 = arith.constant dense<0.000000e+00> : vector<6x6xf32>
      %137 = tpu.matmul %135, %136, %cst_91 {dimension_numbers = #tpu.dot_dimension_numbers<[1], [1], [0], [0], [0, 0, 1, 0], [], []>} : vector<6x8xbf16>, vector<6x8xbf16>, vector<6x6xf32> -> vector<6x6xf32>
      %cst_92 = arith.constant -1.000000e+30 : f32
      %138 = vector.broadcast %cst_92 : f32 to vector<6x6xf32>
      %139 = arith.select %20, %138, %137 : vector<6x6xi1>, vector<6x6xf32>
      %c3 = arith.constant 3 : index
      %c0_93 = arith.constant 0 : index
      %c0_94 = arith.constant 0 : index
      %140 = vector.load %arg6[%c3, %c0_93, %c0_94] : memref<4x6x1xf32, #tpu.memory_space<vmem>>, vector<1x6x1xf32>
      %141 = vector.shape_cast %140 : vector<1x6x1xf32> to vector<6x1xf32>
      %cst_95 = arith.constant dense<0xFF800000> : vector<6xf32>
      %142 = vector.multi_reduction <maximumf>, %139, %cst_95 [1] : vector<6x6xf32> to vector<6xf32>
      %143 = vector.shape_cast %142 : vector<6xf32> to vector<6x1xf32>
      %144 = arith.maximumf %141, %143 : vector<6x1xf32>
      %145 = arith.subf %141, %144 : vector<6x1xf32>
      %146 = math.exp %145 : vector<6x1xf32>
      %147 = vector.broadcast %144 : vector<6x1xf32> to vector<6x6xf32>
      %148 = arith.subf %139, %147 : vector<6x6xf32>
      %149 = math.exp %148 : vector<6x6xf32>
      %c3_96 = arith.constant 3 : index
      %c0_97 = arith.constant 0 : index
      %c0_98 = arith.constant 0 : index
      %150 = vector.load %arg7[%c3_96, %c0_97, %c0_98] : memref<4x6x1xf32, #tpu.memory_space<vmem>>, vector<1x6x1xf32>
      %151 = vector.shape_cast %150 : vector<1x6x1xf32> to vector<6x1xf32>
      %152 = arith.mulf %146, %151 : vector<6x1xf32>
      %cst_99 = arith.constant dense<0.000000e+00> : vector<6xf32>
      %153 = vector.multi_reduction <add>, %149, %cst_99 [1] : vector<6x6xf32> to vector<6xf32>
      %154 = vector.shape_cast %153 : vector<6xf32> to vector<6x1xf32>
      %155 = arith.addf %152, %154 : vector<6x1xf32>
      %c3_100 = arith.constant 3 : index
      %c0_101 = arith.constant 0 : index
      %c0_102 = arith.constant 0 : index
      %156 = vector.load %arg7[%c3_100, %c0_101, %c0_102] : memref<4x6x1xf32, #tpu.memory_space<vmem>>, vector<1x6x1xf32>
      %157 = vector.shape_cast %156 : vector<1x6x1xf32> to vector<6x1xf32>
      %158 = vector.shape_cast %155 : vector<6x1xf32> to vector<1x6x1xf32>
      tpu.vector_store %arg7[%c3_100, %c0_101, %c0_102], %158 {strides = array<i32>} : memref<4x6x1xf32, #tpu.memory_space<vmem>>, vector<1x6x1xf32>,
      %c3_103 = arith.constant 3 : index
      %c0_104 = arith.constant 0 : index
      %c0_105 = arith.constant 0 : index
      %159 = vector.load %arg8[%c3_103, %c0_104, %c0_105] : memref<4x6x8xf32, #tpu.memory_space<vmem>>, vector<1x6x8xf32>
      %160 = vector.shape_cast %159 : vector<1x6x8xf32> to vector<6x8xf32>
      %161 = vector.broadcast %146 : vector<6x1xf32> to vector<6x8xf32>
      %162 = arith.mulf %161, %160 : vector<6x8xf32>
      %163 = arith.truncf %149 : vector<6x6xf32> to vector<6x6xbf16>
      %c0_106 = arith.constant 0 : index
      %c24_107 = arith.constant 24 : index
      %164 = vector.load %arg4[%c0_106, %c24_107] : memref<6x32xbf16, #tpu.memory_space<vmem>>, vector<6x8xbf16>
      %cst_108 = arith.constant dense<0.000000e+00> : vector<6x8xf32>
      %165 = tpu.matmul %163, %164, %cst_108 {dimension_numbers = #tpu.dot_dimension_numbers<[1], [0], [0], [1], [0, 0, 1, 1], [], []>} : vector<6x6xbf16>, vector<6x8xbf16>, vector<6x8xf32> -> vector<6x8xf32>
      %166 = arith.addf %162, %165 : vector<6x8xf32>
      %c3_109 = arith.constant 3 : index
      %c0_110 = arith.constant 0 : index
      %c0_111 = arith.constant 0 : index
      %167 = vector.load %arg8[%c3_109, %c0_110, %c0_111] : memref<4x6x8xf32, #tpu.memory_space<vmem>>, vector<1x6x8xf32>
      %168 = vector.shape_cast %167 : vector<1x6x8xf32> to vector<6x8xf32>
      %169 = vector.shape_cast %166 : vector<6x8xf32> to vector<1x6x8xf32>
      tpu.vector_store %arg8[%c3_109, %c0_110, %c0_111], %169 {strides = array<i32>} : memref<4x6x8xf32, #tpu.memory_space<vmem>>, vector<1x6x8xf32>,
      %c3_112 = arith.constant 3 : index
      %c0_113 = arith.constant 0 : index
      %c0_114 = arith.constant 0 : index
      %170 = vector.load %arg6[%c3_112, %c0_113, %c0_114] : memref<4x6x1xf32, #tpu.memory_space<vmem>>, vector<1x6x1xf32>
      %171 = vector.shape_cast %170 : vector<1x6x1xf32> to vector<6x1xf32>
      %172 = vector.shape_cast %144 : vector<6x1xf32> to vector<1x6x1xf32>
      tpu.vector_store %arg6[%c3_112, %c0_113, %c0_114], %172 {strides = array<i32>} : memref<4x6x1xf32, #tpu.memory_space<vmem>>, vector<1x6x1xf32>,
    } else {
    }
    %c0_i32_3 = arith.constant 0 : i32
    %9 = arith.cmpi eq, %arg1, %c0_i32_3 : i32
    %10 = arith.extui %9 : i1 to i32
    %c0_i32_4 = arith.constant 0 : i32
    %11 = arith.cmpi ne, %10, %c0_i32_4 : i32
    scf.if %11 {
      %c0 = arith.constant 0 : index
      %c0_5 = arith.constant 0 : index
      %c0_6 = arith.constant 0 : index
      %12 = vector.load %arg8[%c0, %c0_5, %c0_6] : memref<4x6x8xf32, #tpu.memory_space<vmem>>, vector<1x6x8xf32>
      %13 = vector.shape_cast %12 : vector<1x6x8xf32> to vector<6x8xf32>
      %c0_7 = arith.constant 0 : index
      %c0_8 = arith.constant 0 : index
      %c0_9 = arith.constant 0 : index
      %14 = vector.load %arg7[%c0_7, %c0_8, %c0_9] : memref<4x6x1xf32, #tpu.memory_space<vmem>>, vector<1x6x1xf32>
      %15 = vector.shape_cast %14 : vector<1x6x1xf32> to vector<6x1xf32>
      %16 = vector.broadcast %15 : vector<6x1xf32> to vector<6x8xf32>
      %17 = arith.divf %13, %16 : vector<6x8xf32>
      %c1 = arith.constant 1 : index
      %c0_10 = arith.constant 0 : index
      %c0_11 = arith.constant 0 : index
      %18 = vector.load %arg8[%c1, %c0_10, %c0_11] : memref<4x6x8xf32, #tpu.memory_space<vmem>>, vector<1x6x8xf32>
      %19 = vector.shape_cast %18 : vector<1x6x8xf32> to vector<6x8xf32>
      %c1_12 = arith.constant 1 : index
      %c0_13 = arith.constant 0 : index
      %c0_14 = arith.constant 0 : index
      %20 = vector.load %arg7[%c1_12, %c0_13, %c0_14] : memref<4x6x1xf32, #tpu.memory_space<vmem>>, vector<1x6x1xf32>
      %21 = vector.shape_cast %20 : vector<1x6x1xf32> to vector<6x1xf32>
      %22 = vector.broadcast %21 : vector<6x1xf32> to vector<6x8xf32>
      %23 = arith.divf %19, %22 : vector<6x8xf32>
      %c2 = arith.constant 2 : index
      %c0_15 = arith.constant 0 : index
      %c0_16 = arith.constant 0 : index
      %24 = vector.load %arg8[%c2, %c0_15, %c0_16] : memref<4x6x8xf32, #tpu.memory_space<vmem>>, vector<1x6x8xf32>
      %25 = vector.shape_cast %24 : vector<1x6x8xf32> to vector<6x8xf32>
      %c2_17 = arith.constant 2 : index
      %c0_18 = arith.constant 0 : index
      %c0_19 = arith.constant 0 : index
      %26 = vector.load %arg7[%c2_17, %c0_18, %c0_19] : memref<4x6x1xf32, #tpu.memory_space<vmem>>, vector<1x6x1xf32>
      %27 = vector.shape_cast %26 : vector<1x6x1xf32> to vector<6x1xf32>
      %28 = vector.broadcast %27 : vector<6x1xf32> to vector<6x8xf32>
      %29 = arith.divf %25, %28 : vector<6x8xf32>
      %c3 = arith.constant 3 : index
      %c0_20 = arith.constant 0 : index
      %c0_21 = arith.constant 0 : index
      %30 = vector.load %arg8[%c3, %c0_20, %c0_21] : memref<4x6x8xf32, #tpu.memory_space<vmem>>, vector<1x6x8xf32>
      %31 = vector.shape_cast %30 : vector<1x6x8xf32> to vector<6x8xf32>
      %c3_22 = arith.constant 3 : index
      %c0_23 = arith.constant 0 : index
      %c0_24 = arith.constant 0 : index
      %32 = vector.load %arg7[%c3_22, %c0_23, %c0_24] : memref<4x6x1xf32, #tpu.memory_space<vmem>>, vector<1x6x1xf32>
      %33 = vector.shape_cast %32 : vector<1x6x1xf32> to vector<6x1xf32>
      %34 = vector.broadcast %33 : vector<6x1xf32> to vector<6x8xf32>
      %35 = arith.divf %31, %34 : vector<6x8xf32>
      %36 = tpu.concatenate %17, %23, %29, %35 in 1 : vector<6x8xf32>, vector<6x8xf32>, vector<6x8xf32>, vector<6x8xf32> -> vector<6x32xf32>
      %37 = arith.truncf %36 : vector<6x32xf32> to vector<6x32xbf16>
      %c0_25 = arith.constant 0 : index
      %c0_26 = arith.constant 0 : index
      %38 = vector.load %arg5[%c0_25, %c0_26] : memref<6x32xbf16, #tpu.memory_space<vmem>>, vector<6x32xbf16>
      tpu.vector_store %arg5[%c0_25, %c0_26], %37 {strides = array<i32>} : memref<6x32xbf16, #tpu.memory_space<vmem>>, vector<6x32xbf16>,
    } else {
    }
    return
  }
  func.func @transform_0(%arg0: i32, %arg1: i32) -> (i32, i32) {
    %c0_i32 = arith.constant 0 : i32
    %c0_i32_0 = arith.constant 0 : i32
    return %arg0, %c0_i32 : i32, i32
  }
  func.func @transform_1(%arg0: i32, %arg1: i32) -> (i32, i32) {
    %c0_i32 = arith.constant 0 : i32
    %c0_i32_0 = arith.constant 0 : i32
    return %arg1, %c0_i32 : i32, i32
  }
  func.func @transform_2(%arg0: i32, %arg1: i32) -> (i32, i32) {
    %c0_i32 = arith.constant 0 : i32
    %c0_i32_0 = arith.constant 0 : i32
    return %arg1, %c0_i32 : i32, i32
  }
  func.func @transform_3(%arg0: i32, %arg1: i32) -> (i32, i32) {
    %c0_i32 = arith.constant 0 : i32
    %c0_i32_0 = arith.constant 0 : i32
    return %arg0, %c0_i32 : i32, i32
  }
}

module attributes {stable_mosaic.version = 11 : i64} {
  func.func @kernel(%arg0: i32, %arg1: i32, %arg2: memref<6x32xbf16, #tpu.memory_space<vmem>>, %arg3: memref<32x32xbf16, #tpu.memory_space<vmem>>, %arg4: memref<1x32xf32, #tpu.memory_space<vmem>>, %arg5: memref<1x32xf32, #tpu.memory_space<vmem>>, %arg6: memref<1x32xf32, #tpu.memory_space<vmem>>, %arg7: memref<6x32xbf16, #tpu.memory_space<vmem>>, %arg8: memref<6x32xbf16, #tpu.memory_space<vmem>>) attributes {dimension_semantics = [#tpu.dimension_semantics<parallel>, #tpu.dimension_semantics<arbitrary>], iteration_bounds = array<i64: 1, 1>, scalar_prefetch = 0 : i64, scratch_operands = 1 : i64, tpu.core_type = #tpu.core_type<tc>, window_params = [{transform_indices = @transform_0, window_bounds = array<i64: 6, 32>}, {transform_indices = @transform_1, window_bounds = array<i64: 32, 32>}, {pipeline_mode = #tpu.pipeline_mode<synchronous>, transform_indices = @transform_2, window_bounds = array<i64: 1, 32>}, {pipeline_mode = #tpu.pipeline_mode<synchronous>, transform_indices = @transform_3, window_bounds = array<i64: 1, 32>}, {transform_indices = @transform_4, window_bounds = array<i64: 1, 32>}, {transform_indices = @transform_5, window_bounds = array<i64: 6, 32>}]} {
    %c0_i32 = arith.constant 0 : i32
    %0 = arith.cmpi eq, %arg1, %c0_i32 : i32
    %1 = arith.extui %0 : i1 to i32
    %c0_i32_0 = arith.constant 0 : i32
    %2 = arith.cmpi ne, %1, %c0_i32_0 : i32
    scf.if %2 {
      %c0_8 = arith.constant 0 : index
      %c0_9 = arith.constant 0 : index
      %11 = vector.load %arg2[%c0_8, %c0_9] : memref<6x32xbf16, #tpu.memory_space<vmem>>, vector<6x32xbf16>
      %12 = arith.extf %11 : vector<6x32xbf16> to vector<6x32xf32>
      %cst_10 = arith.constant dense<0.000000e+00> : vector<6xf32>
      %13 = vector.multi_reduction <add>, %12, %cst_10 [1] : vector<6x32xf32> to vector<6xf32>
      %14 = vector.shape_cast %13 : vector<6xf32> to vector<6x1xf32>
      %cst_11 = arith.constant 3.200000e+01 : f32
      %15 = vector.broadcast %cst_11 : f32 to vector<6x1xf32>
      %16 = arith.divf %14, %15 : vector<6x1xf32>
      %17 = vector.broadcast %16 : vector<6x1xf32> to vector<6x32xf32>
      %18 = arith.subf %12, %17 : vector<6x32xf32>
      %19 = arith.mulf %18, %18 : vector<6x32xf32>
      %cst_12 = arith.constant dense<0.000000e+00> : vector<6xf32>
      %20 = vector.multi_reduction <add>, %19, %cst_12 [1] : vector<6x32xf32> to vector<6xf32>
      %21 = vector.shape_cast %20 : vector<6xf32> to vector<6x1xf32>
      %cst_13 = arith.constant 3.200000e+01 : f32
      %22 = vector.broadcast %cst_13 : f32 to vector<6x1xf32>
      %23 = arith.divf %21, %22 : vector<6x1xf32>
      %24 = vector.broadcast %16 : vector<6x1xf32> to vector<6x32xf32>
      %25 = arith.subf %12, %24 : vector<6x32xf32>
      %cst_14 = arith.constant 9.99999974E-6 : f32
      %26 = vector.broadcast %cst_14 : f32 to vector<6x1xf32>
      %27 = arith.addf %23, %26 : vector<6x1xf32>
      %28 = math.rsqrt %27 : vector<6x1xf32>
      %29 = vector.broadcast %28 : vector<6x1xf32> to vector<6x32xf32>
      %30 = arith.mulf %25, %29 : vector<6x32xf32>
      %c0_15 = arith.constant 0 : index
      %c0_16 = arith.constant 0 : index
      %31 = vector.load %arg4[%c0_15, %c0_16] : memref<1x32xf32, #tpu.memory_space<vmem>>, vector<1x32xf32>
      %32 = vector.broadcast %31 : vector<1x32xf32> to vector<6x32xf32>
      %33 = arith.mulf %30, %32 : vector<6x32xf32>
      %c0_17 = arith.constant 0 : index
      %c0_18 = arith.constant 0 : index
      %34 = vector.load %arg5[%c0_17, %c0_18] : memref<1x32xf32, #tpu.memory_space<vmem>>, vector<1x32xf32>
      %35 = vector.broadcast %34 : vector<1x32xf32> to vector<6x32xf32>
      %36 = arith.addf %33, %35 : vector<6x32xf32>
      %37 = arith.truncf %36 : vector<6x32xf32> to vector<6x32xbf16>
      %c0_19 = arith.constant 0 : index
      %c0_20 = arith.constant 0 : index
      %38 = vector.load %arg8[%c0_19, %c0_20] : memref<6x32xbf16, #tpu.memory_space<vmem>>, vector<6x32xbf16>
      tpu.vector_store %arg8[%c0_19, %c0_20], %37 {strides = array<i32>} : memref<6x32xbf16, #tpu.memory_space<vmem>>, vector<6x32xbf16>,
    } else {
    }
    %c0 = arith.constant 0 : index
    %c0_1 = arith.constant 0 : index
    %3 = vector.load %arg8[%c0, %c0_1] : memref<6x32xbf16, #tpu.memory_space<vmem>>, vector<6x32xbf16>
    %c0_2 = arith.constant 0 : index
    %c0_3 = arith.constant 0 : index
    %4 = vector.load %arg3[%c0_2, %c0_3] : memref<32x32xbf16, #tpu.memory_space<vmem>>, vector<32x32xbf16>
    %cst = arith.constant dense<0.000000e+00> : vector<6x32xf32>
    %5 = tpu.matmul %3, %4, %cst {dimension_numbers = #tpu.dot_dimension_numbers<[1], [0], [0], [1], [0, 0, 1, 1], [], []>} : vector<6x32xbf16>, vector<32x32xbf16>, vector<6x32xf32> -> vector<6x32xf32>
    %c0_4 = arith.constant 0 : index
    %c0_5 = arith.constant 0 : index
    %6 = vector.load %arg6[%c0_4, %c0_5] : memref<1x32xf32, #tpu.memory_space<vmem>>, vector<1x32xf32>
    %7 = vector.broadcast %6 : vector<1x32xf32> to vector<6x32xf32>
    %8 = arith.addf %5, %7 : vector<6x32xf32>
    %9 = arith.truncf %8 : vector<6x32xf32> to vector<6x32xbf16>
    %c0_6 = arith.constant 0 : index
    %c0_7 = arith.constant 0 : index
    %10 = vector.load %arg7[%c0_6, %c0_7] : memref<6x32xbf16, #tpu.memory_space<vmem>>, vector<6x32xbf16>
    tpu.vector_store %arg7[%c0_6, %c0_7], %9 {strides = array<i32>} : memref<6x32xbf16, #tpu.memory_space<vmem>>, vector<6x32xbf16>,
    return
  }
  func.func @transform_0(%arg0: i32, %arg1: i32) -> (i32, i32) {
    %c0_i32 = arith.constant 0 : i32
    %c0_i32_0 = arith.constant 0 : i32
    return %arg0, %c0_i32 : i32, i32
  }
  func.func @transform_1(%arg0: i32, %arg1: i32) -> (i32, i32) {
    %c0_i32 = arith.constant 0 : i32
    %c0_i32_0 = arith.constant 0 : i32
    return %c0_i32, %arg1 : i32, i32
  }
  func.func @transform_2(%arg0: i32, %arg1: i32) -> (i32, i32) {
    %c0_i32 = arith.constant 0 : i32
    %c0_i32_0 = arith.constant 0 : i32
    %c0_i32_1 = arith.constant 0 : i32
    return %c0_i32, %c0_i32_0 : i32, i32
  }
  func.func @transform_3(%arg0: i32, %arg1: i32) -> (i32, i32) {
    %c0_i32 = arith.constant 0 : i32
    %c0_i32_0 = arith.constant 0 : i32
    %c0_i32_1 = arith.constant 0 : i32
    return %c0_i32, %c0_i32_0 : i32, i32
  }
  func.func @transform_4(%arg0: i32, %arg1: i32) -> (i32, i32) {
    %c0_i32 = arith.constant 0 : i32
    %c0_i32_0 = arith.constant 0 : i32
    return %c0_i32, %arg1 : i32, i32
  }
  func.func @transform_5(%arg0: i32, %arg1: i32) -> (i32, i32) {
    %c0_i32 = arith.constant 0 : i32
    return %arg0, %arg1 : i32, i32
  }
}

module attributes {stable_mosaic.version = 11 : i64} {
  func.func @_layernorm_kernel(%arg0: i32, %arg1: memref<16x32xbf16, #tpu.memory_space<vmem>>, %arg2: memref<1x32xf32, #tpu.memory_space<vmem>>, %arg3: memref<1x32xf32, #tpu.memory_space<vmem>>, %arg4: memref<16x32xbf16, #tpu.memory_space<vmem>>) attributes {dimension_semantics = [#tpu.dimension_semantics<parallel>], iteration_bounds = array<i64: 1>, scalar_prefetch = 0 : i64, scratch_operands = 0 : i64, tpu.core_type = #tpu.core_type<tc>, window_params = [{transform_indices = @transform_0, window_bounds = array<i64: 16, 32>}, {pipeline_mode = #tpu.pipeline_mode<synchronous>, transform_indices = @transform_1, window_bounds = array<i64: 1, 32>}, {pipeline_mode = #tpu.pipeline_mode<synchronous>, transform_indices = @transform_2, window_bounds = array<i64: 1, 32>}, {transform_indices = @transform_3, window_bounds = array<i64: 16, 32>}]} {
    %c0 = arith.constant 0 : index
    %c0_0 = arith.constant 0 : index
    %0 = vector.load %arg1[%c0, %c0_0] : memref<16x32xbf16, #tpu.memory_space<vmem>>, vector<16x32xbf16>
    %1 = arith.extf %0 : vector<16x32xbf16> to vector<16x32xf32>
    %cst = arith.constant dense<0.000000e+00> : vector<16xf32>
    %2 = vector.multi_reduction <add>, %1, %cst [1] : vector<16x32xf32> to vector<16xf32>
    %3 = vector.shape_cast %2 : vector<16xf32> to vector<16x1xf32>
    %cst_1 = arith.constant 3.200000e+01 : f32
    %4 = vector.broadcast %cst_1 : f32 to vector<16x1xf32>
    %5 = arith.divf %3, %4 : vector<16x1xf32>
    %6 = vector.broadcast %5 : vector<16x1xf32> to vector<16x32xf32>
    %7 = arith.subf %1, %6 : vector<16x32xf32>
    %8 = arith.mulf %7, %7 : vector<16x32xf32>
    %cst_2 = arith.constant dense<0.000000e+00> : vector<16xf32>
    %9 = vector.multi_reduction <add>, %8, %cst_2 [1] : vector<16x32xf32> to vector<16xf32>
    %10 = vector.shape_cast %9 : vector<16xf32> to vector<16x1xf32>
    %cst_3 = arith.constant 3.200000e+01 : f32
    %11 = vector.broadcast %cst_3 : f32 to vector<16x1xf32>
    %12 = arith.divf %10, %11 : vector<16x1xf32>
    %13 = vector.broadcast %5 : vector<16x1xf32> to vector<16x32xf32>
    %14 = arith.subf %1, %13 : vector<16x32xf32>
    %cst_4 = arith.constant 9.99999974E-6 : f32
    %15 = vector.broadcast %cst_4 : f32 to vector<16x1xf32>
    %16 = arith.addf %12, %15 : vector<16x1xf32>
    %17 = math.rsqrt %16 : vector<16x1xf32>
    %18 = vector.broadcast %17 : vector<16x1xf32> to vector<16x32xf32>
    %19 = arith.mulf %14, %18 : vector<16x32xf32>
    %c0_5 = arith.constant 0 : index
    %c0_6 = arith.constant 0 : index
    %20 = vector.load %arg2[%c0_5, %c0_6] : memref<1x32xf32, #tpu.memory_space<vmem>>, vector<1x32xf32>
    %21 = vector.broadcast %20 : vector<1x32xf32> to vector<16x32xf32>
    %22 = arith.mulf %19, %21 : vector<16x32xf32>
    %c0_7 = arith.constant 0 : index
    %c0_8 = arith.constant 0 : index
    %23 = vector.load %arg3[%c0_7, %c0_8] : memref<1x32xf32, #tpu.memory_space<vmem>>, vector<1x32xf32>
    %24 = vector.broadcast %23 : vector<1x32xf32> to vector<16x32xf32>
    %25 = arith.addf %22, %24 : vector<16x32xf32>
    %26 = arith.truncf %25 : vector<16x32xf32> to vector<16x32xbf16>
    %c0_9 = arith.constant 0 : index
    %c0_10 = arith.constant 0 : index
    %27 = vector.load %arg4[%c0_9, %c0_10] : memref<16x32xbf16, #tpu.memory_space<vmem>>, vector<16x32xbf16>
    tpu.vector_store %arg4[%c0_9, %c0_10], %26 {strides = array<i32>} : memref<16x32xbf16, #tpu.memory_space<vmem>>, vector<16x32xbf16>,
    return
  }
  func.func @transform_0(%arg0: i32) -> (i32, i32) {
    %c0_i32 = arith.constant 0 : i32
    %c0_i32_0 = arith.constant 0 : i32
    return %arg0, %c0_i32 : i32, i32
  }
  func.func @transform_1(%arg0: i32) -> (i32, i32) {
    %c0_i32 = arith.constant 0 : i32
    %c0_i32_0 = arith.constant 0 : i32
    %c0_i32_1 = arith.constant 0 : i32
    return %c0_i32, %c0_i32_0 : i32, i32
  }
  func.func @transform_2(%arg0: i32) -> (i32, i32) {
    %c0_i32 = arith.constant 0 : i32
    %c0_i32_0 = arith.constant 0 : i32
    %c0_i32_1 = arith.constant 0 : i32
    return %c0_i32, %c0_i32_0 : i32, i32
  }
  func.func @transform_3(%arg0: i32) -> (i32, i32) {
    %c0_i32 = arith.constant 0 : i32
    %c0_i32_0 = arith.constant 0 : i32
    return %arg0, %c0_i32 : i32, i32
  }
}

module attributes {stable_mosaic.version = 11 : i64} {
  func.func @kernel(%arg0: i32, %arg1: i32, %arg2: memref<16x128xbf16, #tpu.memory_space<vmem>>, %arg3: memref<128x32xbf16, #tpu.memory_space<vmem>>, %arg4: memref<1x32xf32, #tpu.memory_space<vmem>>, %arg5: memref<16x32xbf16, #tpu.memory_space<vmem>>, %arg6: memref<16x32xbf16, #tpu.memory_space<vmem>>) attributes {dimension_semantics = [#tpu.dimension_semantics<parallel>, #tpu.dimension_semantics<parallel>], iteration_bounds = array<i64: 1, 1>, scalar_prefetch = 0 : i64, scratch_operands = 0 : i64, tpu.core_type = #tpu.core_type<tc>, window_params = [{transform_indices = @transform_0, window_bounds = array<i64: 16, 128>}, {transform_indices = @transform_1, window_bounds = array<i64: 128, 32>}, {transform_indices = @transform_2, window_bounds = array<i64: 1, 32>}, {transform_indices = @transform_3, window_bounds = array<i64: 16, 32>}, {transform_indices = @transform_4, window_bounds = array<i64: 16, 32>}]} {
    %c0 = arith.constant 0 : index
    %c0_0 = arith.constant 0 : index
    %0 = vector.load %arg2[%c0, %c0_0] : memref<16x128xbf16, #tpu.memory_space<vmem>>, vector<16x128xbf16>
    %c0_1 = arith.constant 0 : index
    %c0_2 = arith.constant 0 : index
    %1 = vector.load %arg3[%c0_1, %c0_2] : memref<128x32xbf16, #tpu.memory_space<vmem>>, vector<128x32xbf16>
    %cst = arith.constant dense<0.000000e+00> : vector<16x32xf32>
    %2 = tpu.matmul %0, %1, %cst {dimension_numbers = #tpu.dot_dimension_numbers<[1], [0], [0], [1], [0, 0, 1, 1], [], []>} : vector<16x128xbf16>, vector<128x32xbf16>, vector<16x32xf32> -> vector<16x32xf32>
    %c0_3 = arith.constant 0 : index
    %c0_4 = arith.constant 0 : index
    %3 = vector.load %arg4[%c0_3, %c0_4] : memref<1x32xf32, #tpu.memory_space<vmem>>, vector<1x32xf32>
    %4 = vector.broadcast %3 : vector<1x32xf32> to vector<16x32xf32>
    %5 = arith.addf %2, %4 : vector<16x32xf32>
    %c0_5 = arith.constant 0 : index
    %c0_6 = arith.constant 0 : index
    %6 = vector.load %arg5[%c0_5, %c0_6] : memref<16x32xbf16, #tpu.memory_space<vmem>>, vector<16x32xbf16>
    %7 = arith.extf %6 : vector<16x32xbf16> to vector<16x32xf32>
    %8 = arith.addf %5, %7 : vector<16x32xf32>
    %9 = arith.truncf %8 : vector<16x32xf32> to vector<16x32xbf16>
    %c0_7 = arith.constant 0 : index
    %c0_8 = arith.constant 0 : index
    %10 = vector.load %arg6[%c0_7, %c0_8] : memref<16x32xbf16, #tpu.memory_space<vmem>>, vector<16x32xbf16>
    tpu.vector_store %arg6[%c0_7, %c0_8], %9 {strides = array<i32>} : memref<16x32xbf16, #tpu.memory_space<vmem>>, vector<16x32xbf16>,
    return
  }
  func.func @transform_0(%arg0: i32, %arg1: i32) -> (i32, i32) {
    %c0_i32 = arith.constant 0 : i32
    %c0_i32_0 = arith.constant 0 : i32
    return %arg0, %c0_i32 : i32, i32
  }
  func.func @transform_1(%arg0: i32, %arg1: i32) -> (i32, i32) {
    %c0_i32 = arith.constant 0 : i32
    %c0_i32_0 = arith.constant 0 : i32
    return %c0_i32, %arg1 : i32, i32
  }
  func.func @transform_2(%arg0: i32, %arg1: i32) -> (i32, i32) {
    %c0_i32 = arith.constant 0 : i32
    %c0_i32_0 = arith.constant 0 : i32
    return %c0_i32, %arg1 : i32, i32
  }
  func.func @transform_3(%arg0: i32, %arg1: i32) -> (i32, i32) {
    %c0_i32 = arith.constant 0 : i32
    return %arg0, %arg1 : i32, i32
  }
  func.func @transform_4(%arg0: i32, %arg1: i32) -> (i32, i32) {
    %c0_i32 = arith.constant 0 : i32
    return %arg0, %arg1 : i32, i32
  }
}

module attributes {stable_mosaic.version = 11 : i64} {
  func.func @kernel(%arg0: i32, %arg1: i32, %arg2: memref<16x32xbf16, #tpu.memory_space<vmem>>, %arg3: memref<32x32xbf16, #tpu.memory_space<vmem>>, %arg4: memref<1x32xf32, #tpu.memory_space<vmem>>, %arg5: memref<16x32xbf16, #tpu.memory_space<vmem>>) attributes {dimension_semantics = [#tpu.dimension_semantics<parallel>, #tpu.dimension_semantics<parallel>], iteration_bounds = array<i64: 1, 1>, scalar_prefetch = 0 : i64, scratch_operands = 0 : i64, tpu.core_type = #tpu.core_type<tc>, window_params = [{transform_indices = @transform_0, window_bounds = array<i64: 16, 32>}, {transform_indices = @transform_1, window_bounds = array<i64: 32, 32>}, {transform_indices = @transform_2, window_bounds = array<i64: 1, 32>}, {transform_indices = @transform_3, window_bounds = array<i64: 16, 32>}]} {
    %c0 = arith.constant 0 : index
    %c0_0 = arith.constant 0 : index
    %0 = vector.load %arg2[%c0, %c0_0] : memref<16x32xbf16, #tpu.memory_space<vmem>>, vector<16x32xbf16>
    %c0_1 = arith.constant 0 : index
    %c0_2 = arith.constant 0 : index
    %1 = vector.load %arg3[%c0_1, %c0_2] : memref<32x32xbf16, #tpu.memory_space<vmem>>, vector<32x32xbf16>
    %cst = arith.constant dense<0.000000e+00> : vector<16x32xf32>
    %2 = tpu.matmul %0, %1, %cst {dimension_numbers = #tpu.dot_dimension_numbers<[1], [0], [0], [1], [0, 0, 1, 1], [], []>} : vector<16x32xbf16>, vector<32x32xbf16>, vector<16x32xf32> -> vector<16x32xf32>
    %c0_3 = arith.constant 0 : index
    %c0_4 = arith.constant 0 : index
    %3 = vector.load %arg4[%c0_3, %c0_4] : memref<1x32xf32, #tpu.memory_space<vmem>>, vector<1x32xf32>
    %4 = vector.broadcast %3 : vector<1x32xf32> to vector<16x32xf32>
    %5 = arith.addf %2, %4 : vector<16x32xf32>
    %6 = arith.truncf %5 : vector<16x32xf32> to vector<16x32xbf16>
    %c0_5 = arith.constant 0 : index
    %c0_6 = arith.constant 0 : index
    %7 = vector.load %arg5[%c0_5, %c0_6] : memref<16x32xbf16, #tpu.memory_space<vmem>>, vector<16x32xbf16>
    tpu.vector_store %arg5[%c0_5, %c0_6], %6 {strides = array<i32>} : memref<16x32xbf16, #tpu.memory_space<vmem>>, vector<16x32xbf16>,
    return
  }
  func.func @transform_0(%arg0: i32, %arg1: i32) -> (i32, i32) {
    %c0_i32 = arith.constant 0 : i32
    %c0_i32_0 = arith.constant 0 : i32
    return %arg0, %c0_i32 : i32, i32
  }
  func.func @transform_1(%arg0: i32, %arg1: i32) -> (i32, i32) {
    %c0_i32 = arith.constant 0 : i32
    %c0_i32_0 = arith.constant 0 : i32
    return %c0_i32, %arg1 : i32, i32
  }
  func.func @transform_2(%arg0: i32, %arg1: i32) -> (i32, i32) {
    %c0_i32 = arith.constant 0 : i32
    %c0_i32_0 = arith.constant 0 : i32
    return %c0_i32, %arg1 : i32, i32
  }
  func.func @transform_3(%arg0: i32, %arg1: i32) -> (i32, i32) {
    %c0_i32 = arith.constant 0 : i32
    return %arg0, %arg1 : i32, i32
  }
}

module attributes {stable_mosaic.version = 11 : i64} {
  func.func @kernel(%arg0: i32, %arg1: i32, %arg2: memref<16x32xbf16, #tpu.memory_space<vmem>>, %arg3: memref<32x32xbf16, #tpu.memory_space<vmem>>, %arg4: memref<16x32xbf16, #tpu.memory_space<vmem>>) attributes {dimension_semantics = [#tpu.dimension_semantics<parallel>, #tpu.dimension_semantics<parallel>], iteration_bounds = array<i64: 1, 1>, scalar_prefetch = 0 : i64, scratch_operands = 0 : i64, tpu.core_type = #tpu.core_type<tc>, window_params = [{transform_indices = @transform_0, window_bounds = array<i64: 16, 32>}, {transform_indices = @transform_1, window_bounds = array<i64: 32, 32>}, {transform_indices = @transform_2, window_bounds = array<i64: 16, 32>}]} {
    %c0 = arith.constant 0 : index
    %c0_0 = arith.constant 0 : index
    %0 = vector.load %arg2[%c0, %c0_0] : memref<16x32xbf16, #tpu.memory_space<vmem>>, vector<16x32xbf16>
    %c0_1 = arith.constant 0 : index
    %c0_2 = arith.constant 0 : index
    %1 = vector.load %arg3[%c0_1, %c0_2] : memref<32x32xbf16, #tpu.memory_space<vmem>>, vector<32x32xbf16>
    %cst = arith.constant dense<0.000000e+00> : vector<16x32xf32>
    %2 = tpu.matmul %0, %1, %cst {dimension_numbers = #tpu.dot_dimension_numbers<[1], [0], [0], [1], [0, 0, 1, 1], [], []>} : vector<16x32xbf16>, vector<32x32xbf16>, vector<16x32xf32> -> vector<16x32xf32>
    %3 = arith.truncf %2 : vector<16x32xf32> to vector<16x32xbf16>
    %c0_3 = arith.constant 0 : index
    %c0_4 = arith.constant 0 : index
    %4 = vector.load %arg4[%c0_3, %c0_4] : memref<16x32xbf16, #tpu.memory_space<vmem>>, vector<16x32xbf16>
    tpu.vector_store %arg4[%c0_3, %c0_4], %3 {strides = array<i32>} : memref<16x32xbf16, #tpu.memory_space<vmem>>, vector<16x32xbf16>,
    return
  }
  func.func @transform_0(%arg0: i32, %arg1: i32) -> (i32, i32) {
    %c0_i32 = arith.constant 0 : i32
    %c0_i32_0 = arith.constant 0 : i32
    return %arg0, %c0_i32 : i32, i32
  }
  func.func @transform_1(%arg0: i32, %arg1: i32) -> (i32, i32) {
    %c0_i32 = arith.constant 0 : i32
    %c0_i32_0 = arith.constant 0 : i32
    return %c0_i32, %arg1 : i32, i32
  }
  func.func @transform_2(%arg0: i32, %arg1: i32) -> (i32, i32) {
    %c0_i32 = arith.constant 0 : i32
    return %arg0, %arg1 : i32, i32
  }
}

module attributes {stable_mosaic.version = 11 : i64} {
  func.func @_flash_kernel(%arg0: i32, %arg1: i32, %arg2: memref<6x32xbf16, #tpu.memory_space<vmem>>, %arg3: memref<16x32xbf16, #tpu.memory_space<vmem>>, %arg4: memref<16x32xbf16, #tpu.memory_space<vmem>>, %arg5: memref<6x32xbf16, #tpu.memory_space<vmem>>, %arg6: memref<4x6x1xf32, #tpu.memory_space<vmem>>, %arg7: memref<4x6x1xf32, #tpu.memory_space<vmem>>, %arg8: memref<4x6x8xf32, #tpu.memory_space<vmem>>) attributes {dimension_semantics = [#tpu.dimension_semantics<parallel>, #tpu.dimension_semantics<arbitrary>], iteration_bounds = array<i64: 1, 1>, scalar_prefetch = 0 : i64, scratch_operands = 3 : i64, tpu.core_type = #tpu.core_type<tc>, window_params = [{transform_indices = @transform_0, window_bounds = array<i64: 6, 32>}, {transform_indices = @transform_1, window_bounds = array<i64: 16, 32>}, {transform_indices = @transform_2, window_bounds = array<i64: 16, 32>}, {transform_indices = @transform_3, window_bounds = array<i64: 6, 32>}]} {
    %c0_i32 = arith.constant 0 : i32
    %0 = arith.cmpi eq, %arg1, %c0_i32 : i32
    %1 = arith.extui %0 : i1 to i32
    %c0_i32_0 = arith.constant 0 : i32
    %2 = arith.cmpi ne, %1, %c0_i32_0 : i32
    scf.if %2 {
      %cst_107 = arith.constant -1.000000e+30 : f32
      %150 = vector.broadcast %cst_107 : f32 to vector<4x6x1xf32>
      %c0_108 = arith.constant 0 : index
      %c0_109 = arith.constant 0 : index
      %c0_110 = arith.constant 0 : index
      %151 = vector.load %arg6[%c0_108, %c0_109, %c0_110] : memref<4x6x1xf32, #tpu.memory_space<vmem>>, vector<4x6x1xf32>
      tpu.vector_store %arg6[%c0_108, %c0_109, %c0_110], %150 {strides = array<i32>} : memref<4x6x1xf32, #tpu.memory_space<vmem>>, vector<4x6x1xf32>,
      %cst_111 = arith.constant 0.000000e+00 : f32
      %152 = vector.broadcast %cst_111 : f32 to vector<4x6x1xf32>
      %c0_112 = arith.constant 0 : index
      %c0_113 = arith.constant 0 : index
      %c0_114 = arith.constant 0 : index
      %153 = vector.load %arg7[%c0_112, %c0_113, %c0_114] : memref<4x6x1xf32, #tpu.memory_space<vmem>>, vector<4x6x1xf32>
      tpu.vector_store %arg7[%c0_112, %c0_113, %c0_114], %152 {strides = array<i32>} : memref<4x6x1xf32, #tpu.memory_space<vmem>>, vector<4x6x1xf32>,
      %cst_115 = arith.constant 0.000000e+00 : f32
      %154 = vector.broadcast %cst_115 : f32 to vector<4x6x8xf32>
      %c0_116 = arith.constant 0 : index
      %c0_117 = arith.constant 0 : index
      %c0_118 = arith.constant 0 : index
      %155 = vector.load %arg8[%c0_116, %c0_117, %c0_118] : memref<4x6x8xf32, #tpu.memory_space<vmem>>, vector<4x6x8xf32>
      tpu.vector_store %arg8[%c0_116, %c0_117, %c0_118], %154 {strides = array<i32>} : memref<4x6x8xf32, #tpu.memory_space<vmem>>, vector<4x6x8xf32>,
    } else {
    }
    %c0 = arith.constant 0 : index
    %c0_1 = arith.constant 0 : index
    %3 = vector.load %arg2[%c0, %c0_1] : memref<6x32xbf16, #tpu.memory_space<vmem>>, vector<6x8xbf16>
    %c0_2 = arith.constant 0 : index
    %c0_3 = arith.constant 0 : index
    %4 = vector.load %arg3[%c0_2, %c0_3] : memref<16x32xbf16, #tpu.memory_space<vmem>>, vector<16x8xbf16>
    %cst = arith.constant dense<0.000000e+00> : vector<6x16xf32>
    %5 = tpu.matmul %3, %4, %cst {dimension_numbers = #tpu.dot_dimension_numbers<[1], [1], [0], [0], [0, 0, 1, 0], [], []>} : vector<6x8xbf16>, vector<16x8xbf16>, vector<6x16xf32> -> vector<6x16xf32>
    %c0_4 = arith.constant 0 : index
    %c0_5 = arith.constant 0 : index
    %c0_6 = arith.constant 0 : index
    %6 = vector.load %arg6[%c0_4, %c0_5, %c0_6] : memref<4x6x1xf32, #tpu.memory_space<vmem>>, vector<1x6x1xf32>
    %7 = vector.shape_cast %6 : vector<1x6x1xf32> to vector<6x1xf32>
    %cst_7 = arith.constant dense<0xFF800000> : vector<6xf32>
    %8 = vector.multi_reduction <maximumf>, %5, %cst_7 [1] : vector<6x16xf32> to vector<6xf32>
    %9 = vector.shape_cast %8 : vector<6xf32> to vector<6x1xf32>
    %10 = arith.maximumf %7, %9 : vector<6x1xf32>
    %11 = arith.subf %7, %10 : vector<6x1xf32>
    %12 = math.exp %11 : vector<6x1xf32>
    %13 = vector.broadcast %10 : vector<6x1xf32> to vector<6x16xf32>
    %14 = arith.subf %5, %13 : vector<6x16xf32>
    %15 = math.exp %14 : vector<6x16xf32>
    %c0_8 = arith.constant 0 : index
    %c0_9 = arith.constant 0 : index
    %c0_10 = arith.constant 0 : index
    %16 = vector.load %arg7[%c0_8, %c0_9, %c0_10] : memref<4x6x1xf32, #tpu.memory_space<vmem>>, vector<1x6x1xf32>
    %17 = vector.shape_cast %16 : vector<1x6x1xf32> to vector<6x1xf32>
    %18 = arith.mulf %12, %17 : vector<6x1xf32>
    %cst_11 = arith.constant dense<0.000000e+00> : vector<6xf32>
    %19 = vector.multi_reduction <add>, %15, %cst_11 [1] : vector<6x16xf32> to vector<6xf32>
    %20 = vector.shape_cast %19 : vector<6xf32> to vector<6x1xf32>
    %21 = arith.addf %18, %20 : vector<6x1xf32>
    %c0_12 = arith.constant 0 : index
    %c0_13 = arith.constant 0 : index
    %c0_14 = arith.constant 0 : index
    %22 = vector.load %arg7[%c0_12, %c0_13, %c0_14] : memref<4x6x1xf32, #tpu.memory_space<vmem>>, vector<1x6x1xf32>
    %23 = vector.shape_cast %22 : vector<1x6x1xf32> to vector<6x1xf32>
    %24 = vector.shape_cast %21 : vector<6x1xf32> to vector<1x6x1xf32>
    tpu.vector_store %arg7[%c0_12, %c0_13, %c0_14], %24 {strides = array<i32>} : memref<4x6x1xf32, #tpu.memory_space<vmem>>, vector<1x6x1xf32>,
    %c0_15 = arith.constant 0 : index
    %c0_16 = arith.constant 0 : index
    %c0_17 = arith.constant 0 : index
    %25 = vector.load %arg8[%c0_15, %c0_16, %c0_17] : memref<4x6x8xf32, #tpu.memory_space<vmem>>, vector<1x6x8xf32>
    %26 = vector.shape_cast %25 : vector<1x6x8xf32> to vector<6x8xf32>
    %27 = vector.broadcast %12 : vector<6x1xf32> to vector<6x8xf32>
    %28 = arith.mulf %27, %26 : vector<6x8xf32>
    %29 = arith.truncf %15 : vector<6x16xf32> to vector<6x16xbf16>
    %c0_18 = arith.constant 0 : index
    %c0_19 = arith.constant 0 : index
    %30 = vector.load %arg4[%c0_18, %c0_19] : memref<16x32xbf16, #tpu.memory_space<vmem>>, vector<16x8xbf16>
    %cst_20 = arith.constant dense<0.000000e+00> : vector<6x8xf32>
    %31 = tpu.matmul %29, %30, %cst_20 {dimension_numbers = #tpu.dot_dimension_numbers<[1], [0], [0], [1], [0, 0, 1, 1], [], []>} : vector<6x16xbf16>, vector<16x8xbf16>, vector<6x8xf32> -> vector<6x8xf32>
    %32 = arith.addf %28, %31 : vector<6x8xf32>
    %c0_21 = arith.constant 0 : index
    %c0_22 = arith.constant 0 : index
    %c0_23 = arith.constant 0 : index
    %33 = vector.load %arg8[%c0_21, %c0_22, %c0_23] : memref<4x6x8xf32, #tpu.memory_space<vmem>>, vector<1x6x8xf32>
    %34 = vector.shape_cast %33 : vector<1x6x8xf32> to vector<6x8xf32>
    %35 = vector.shape_cast %32 : vector<6x8xf32> to vector<1x6x8xf32>
    tpu.vector_store %arg8[%c0_21, %c0_22, %c0_23], %35 {strides = array<i32>} : memref<4x6x8xf32, #tpu.memory_space<vmem>>, vector<1x6x8xf32>,
    %c0_24 = arith.constant 0 : index
    %c0_25 = arith.constant 0 : index
    %c0_26 = arith.constant 0 : index
    %36 = vector.load %arg6[%c0_24, %c0_25, %c0_26] : memref<4x6x1xf32, #tpu.memory_space<vmem>>, vector<1x6x1xf32>
    %37 = vector.shape_cast %36 : vector<1x6x1xf32> to vector<6x1xf32>
    %38 = vector.shape_cast %10 : vector<6x1xf32> to vector<1x6x1xf32>
    tpu.vector_store %arg6[%c0_24, %c0_25, %c0_26], %38 {strides = array<i32>} : memref<4x6x1xf32, #tpu.memory_space<vmem>>, vector<1x6x1xf32>,
    %c0_27 = arith.constant 0 : index
    %c8 = arith.constant 8 : index
    %39 = vector.load %arg2[%c0_27, %c8] : memref<6x32xbf16, #tpu.memory_space<vmem>>, vector<6x8xbf16>
    %c0_28 = arith.constant 0 : index
    %c8_29 = arith.constant 8 : index
    %40 = vector.load %arg3[%c0_28, %c8_29] : memref<16x32xbf16, #tpu.memory_space<vmem>>, vector<16x8xbf16>
    %cst_30 = arith.constant dense<0.000000e+00> : vector<6x16xf32>
    %41 = tpu.matmul %39, %40, %cst_30 {dimension_numbers = #tpu.dot_dimension_numbers<[1], [1], [0], [0], [0, 0, 1, 0], [], []>} : vector<6x8xbf16>, vector<16x8xbf16>, vector<6x16xf32> -> vector<6x16xf32>
    %c1 = arith.constant 1 : index
    %c0_31 = arith.constant 0 : index
    %c0_32 = arith.constant 0 : index
    %42 = vector.load %arg6[%c1, %c0_31, %c0_32] : memref<4x6x1xf32, #tpu.memory_space<vmem>>, vector<1x6x1xf32>
    %43 = vector.shape_cast %42 : vector<1x6x1xf32> to vector<6x1xf32>
    %cst_33 = arith.constant dense<0xFF800000> : vector<6xf32>
    %44 = vector.multi_reduction <maximumf>, %41, %cst_33 [1] : vector<6x16xf32> to vector<6xf32>
    %45 = vector.shape_cast %44 : vector<6xf32> to vector<6x1xf32>
    %46 = arith.maximumf %43, %45 : vector<6x1xf32>
    %47 = arith.subf %43, %46 : vector<6x1xf32>
    %48 = math.exp %47 : vector<6x1xf32>
    %49 = vector.broadcast %46 : vector<6x1xf32> to vector<6x16xf32>
    %50 = arith.subf %41, %49 : vector<6x16xf32>
    %51 = math.exp %50 : vector<6x16xf32>
    %c1_34 = arith.constant 1 : index
    %c0_35 = arith.constant 0 : index
    %c0_36 = arith.constant 0 : index
    %52 = vector.load %arg7[%c1_34, %c0_35, %c0_36] : memref<4x6x1xf32, #tpu.memory_space<vmem>>, vector<1x6x1xf32>
    %53 = vector.shape_cast %52 : vector<1x6x1xf32> to vector<6x1xf32>
    %54 = arith.mulf %48, %53 : vector<6x1xf32>
    %cst_37 = arith.constant dense<0.000000e+00> : vector<6xf32>
    %55 = vector.multi_reduction <add>, %51, %cst_37 [1] : vector<6x16xf32> to vector<6xf32>
    %56 = vector.shape_cast %55 : vector<6xf32> to vector<6x1xf32>
    %57 = arith.addf %54, %56 : vector<6x1xf32>
    %c1_38 = arith.constant 1 : index
    %c0_39 = arith.constant 0 : index
    %c0_40 = arith.constant 0 : index
    %58 = vector.load %arg7[%c1_38, %c0_39, %c0_40] : memref<4x6x1xf32, #tpu.memory_space<vmem>>, vector<1x6x1xf32>
    %59 = vector.shape_cast %58 : vector<1x6x1xf32> to vector<6x1xf32>
    %60 = vector.shape_cast %57 : vector<6x1xf32> to vector<1x6x1xf32>
    tpu.vector_store %arg7[%c1_38, %c0_39, %c0_40], %60 {strides = array<i32>} : memref<4x6x1xf32, #tpu.memory_space<vmem>>, vector<1x6x1xf32>,
    %c1_41 = arith.constant 1 : index
    %c0_42 = arith.constant 0 : index
    %c0_43 = arith.constant 0 : index
    %61 = vector.load %arg8[%c1_41, %c0_42, %c0_43] : memref<4x6x8xf32, #tpu.memory_space<vmem>>, vector<1x6x8xf32>
    %62 = vector.shape_cast %61 : vector<1x6x8xf32> to vector<6x8xf32>
    %63 = vector.broadcast %48 : vector<6x1xf32> to vector<6x8xf32>
    %64 = arith.mulf %63, %62 : vector<6x8xf32>
    %65 = arith.truncf %51 : vector<6x16xf32> to vector<6x16xbf16>
    %c0_44 = arith.constant 0 : index
    %c8_45 = arith.constant 8 : index
    %66 = vector.load %arg4[%c0_44, %c8_45] : memref<16x32xbf16, #tpu.memory_space<vmem>>, vector<16x8xbf16>
    %cst_46 = arith.constant dense<0.000000e+00> : vector<6x8xf32>
    %67 = tpu.matmul %65, %66, %cst_46 {dimension_numbers = #tpu.dot_dimension_numbers<[1], [0], [0], [1], [0, 0, 1, 1], [], []>} : vector<6x16xbf16>, vector<16x8xbf16>, vector<6x8xf32> -> vector<6x8xf32>
    %68 = arith.addf %64, %67 : vector<6x8xf32>
    %c1_47 = arith.constant 1 : index
    %c0_48 = arith.constant 0 : index
    %c0_49 = arith.constant 0 : index
    %69 = vector.load %arg8[%c1_47, %c0_48, %c0_49] : memref<4x6x8xf32, #tpu.memory_space<vmem>>, vector<1x6x8xf32>
    %70 = vector.shape_cast %69 : vector<1x6x8xf32> to vector<6x8xf32>
    %71 = vector.shape_cast %68 : vector<6x8xf32> to vector<1x6x8xf32>
    tpu.vector_store %arg8[%c1_47, %c0_48, %c0_49], %71 {strides = array<i32>} : memref<4x6x8xf32, #tpu.memory_space<vmem>>, vector<1x6x8xf32>,
    %c1_50 = arith.constant 1 : index
    %c0_51 = arith.constant 0 : index
    %c0_52 = arith.constant 0 : index
    %72 = vector.load %arg6[%c1_50, %c0_51, %c0_52] : memref<4x6x1xf32, #tpu.memory_space<vmem>>, vector<1x6x1xf32>
    %73 = vector.shape_cast %72 : vector<1x6x1xf32> to vector<6x1xf32>
    %74 = vector.shape_cast %46 : vector<6x1xf32> to vector<1x6x1xf32>
    tpu.vector_store %arg6[%c1_50, %c0_51, %c0_52], %74 {strides = array<i32>} : memref<4x6x1xf32, #tpu.memory_space<vmem>>, vector<1x6x1xf32>,
    %c0_53 = arith.constant 0 : index
    %c16 = arith.constant 16 : index
    %75 = vector.load %arg2[%c0_53, %c16] : memref<6x32xbf16, #tpu.memory_space<vmem>>, vector<6x8xbf16>
    %c0_54 = arith.constant 0 : index
    %c16_55 = arith.constant 16 : index
    %76 = vector.load %arg3[%c0_54, %c16_55] : memref<16x32xbf16, #tpu.memory_space<vmem>>, vector<16x8xbf16>
    %cst_56 = arith.constant dense<0.000000e+00> : vector<6x16xf32>
    %77 = tpu.matmul %75, %76, %cst_56 {dimension_numbers = #tpu.dot_dimension_numbers<[1], [1], [0], [0], [0, 0, 1, 0], [], []>} : vector<6x8xbf16>, vector<16x8xbf16>, vector<6x16xf32> -> vector<6x16xf32>
    %c2 = arith.constant 2 : index
    %c0_57 = arith.constant 0 : index
    %c0_58 = arith.constant 0 : index
    %78 = vector.load %arg6[%c2, %c0_57, %c0_58] : memref<4x6x1xf32, #tpu.memory_space<vmem>>, vector<1x6x1xf32>
    %79 = vector.shape_cast %78 : vector<1x6x1xf32> to vector<6x1xf32>
    %cst_59 = arith.constant dense<0xFF800000> : vector<6xf32>
    %80 = vector.multi_reduction <maximumf>, %77, %cst_59 [1] : vector<6x16xf32> to vector<6xf32>
    %81 = vector.shape_cast %80 : vector<6xf32> to vector<6x1xf32>
    %82 = arith.maximumf %79, %81 : vector<6x1xf32>
    %83 = arith.subf %79, %82 : vector<6x1xf32>
    %84 = math.exp %83 : vector<6x1xf32>
    %85 = vector.broadcast %82 : vector<6x1xf32> to vector<6x16xf32>
    %86 = arith.subf %77, %85 : vector<6x16xf32>
    %87 = math.exp %86 : vector<6x16xf32>
    %c2_60 = arith.constant 2 : index
    %c0_61 = arith.constant 0 : index
    %c0_62 = arith.constant 0 : index
    %88 = vector.load %arg7[%c2_60, %c0_61, %c0_62] : memref<4x6x1xf32, #tpu.memory_space<vmem>>, vector<1x6x1xf32>
    %89 = vector.shape_cast %88 : vector<1x6x1xf32> to vector<6x1xf32>
    %90 = arith.mulf %84, %89 : vector<6x1xf32>
    %cst_63 = arith.constant dense<0.000000e+00> : vector<6xf32>
    %91 = vector.multi_reduction <add>, %87, %cst_63 [1] : vector<6x16xf32> to vector<6xf32>
    %92 = vector.shape_cast %91 : vector<6xf32> to vector<6x1xf32>
    %93 = arith.addf %90, %92 : vector<6x1xf32>
    %c2_64 = arith.constant 2 : index
    %c0_65 = arith.constant 0 : index
    %c0_66 = arith.constant 0 : index
    %94 = vector.load %arg7[%c2_64, %c0_65, %c0_66] : memref<4x6x1xf32, #tpu.memory_space<vmem>>, vector<1x6x1xf32>
    %95 = vector.shape_cast %94 : vector<1x6x1xf32> to vector<6x1xf32>
    %96 = vector.shape_cast %93 : vector<6x1xf32> to vector<1x6x1xf32>
    tpu.vector_store %arg7[%c2_64, %c0_65, %c0_66], %96 {strides = array<i32>} : memref<4x6x1xf32, #tpu.memory_space<vmem>>, vector<1x6x1xf32>,
    %c2_67 = arith.constant 2 : index
    %c0_68 = arith.constant 0 : index
    %c0_69 = arith.constant 0 : index
    %97 = vector.load %arg8[%c2_67, %c0_68, %c0_69] : memref<4x6x8xf32, #tpu.memory_space<vmem>>, vector<1x6x8xf32>
    %98 = vector.shape_cast %97 : vector<1x6x8xf32> to vector<6x8xf32>
    %99 = vector.broadcast %84 : vector<6x1xf32> to vector<6x8xf32>
    %100 = arith.mulf %99, %98 : vector<6x8xf32>
    %101 = arith.truncf %87 : vector<6x16xf32> to vector<6x16xbf16>
    %c0_70 = arith.constant 0 : index
    %c16_71 = arith.constant 16 : index
    %102 = vector.load %arg4[%c0_70, %c16_71] : memref<16x32xbf16, #tpu.memory_space<vmem>>, vector<16x8xbf16>
    %cst_72 = arith.constant dense<0.000000e+00> : vector<6x8xf32>
    %103 = tpu.matmul %101, %102, %cst_72 {dimension_numbers = #tpu.dot_dimension_numbers<[1], [0], [0], [1], [0, 0, 1, 1], [], []>} : vector<6x16xbf16>, vector<16x8xbf16>, vector<6x8xf32> -> vector<6x8xf32>
    %104 = arith.addf %100, %103 : vector<6x8xf32>
    %c2_73 = arith.constant 2 : index
    %c0_74 = arith.constant 0 : index
    %c0_75 = arith.constant 0 : index
    %105 = vector.load %arg8[%c2_73, %c0_74, %c0_75] : memref<4x6x8xf32, #tpu.memory_space<vmem>>, vector<1x6x8xf32>
    %106 = vector.shape_cast %105 : vector<1x6x8xf32> to vector<6x8xf32>
    %107 = vector.shape_cast %104 : vector<6x8xf32> to vector<1x6x8xf32>
    tpu.vector_store %arg8[%c2_73, %c0_74, %c0_75], %107 {strides = array<i32>} : memref<4x6x8xf32, #tpu.memory_space<vmem>>, vector<1x6x8xf32>,
    %c2_76 = arith.constant 2 : index
    %c0_77 = arith.constant 0 : index
    %c0_78 = arith.constant 0 : index
    %108 = vector.load %arg6[%c2_76, %c0_77, %c0_78] : memref<4x6x1xf32, #tpu.memory_space<vmem>>, vector<1x6x1xf32>
    %109 = vector.shape_cast %108 : vector<1x6x1xf32> to vector<6x1xf32>
    %110 = vector.shape_cast %82 : vector<6x1xf32> to vector<1x6x1xf32>
    tpu.vector_store %arg6[%c2_76, %c0_77, %c0_78], %110 {strides = array<i32>} : memref<4x6x1xf32, #tpu.memory_space<vmem>>, vector<1x6x1xf32>,
    %c0_79 = arith.constant 0 : index
    %c24 = arith.constant 24 : index
    %111 = vector.load %arg2[%c0_79, %c24] : memref<6x32xbf16, #tpu.memory_space<vmem>>, vector<6x8xbf16>
    %c0_80 = arith.constant 0 : index
    %c24_81 = arith.constant 24 : index
    %112 = vector.load %arg3[%c0_80, %c24_81] : memref<16x32xbf16, #tpu.memory_space<vmem>>, vector<16x8xbf16>
    %cst_82 = arith.constant dense<0.000000e+00> : vector<6x16xf32>
    %113 = tpu.matmul %111, %112, %cst_82 {dimension_numbers = #tpu.dot_dimension_numbers<[1], [1], [0], [0], [0, 0, 1, 0], [], []>} : vector<6x8xbf16>, vector<16x8xbf16>, vector<6x16xf32> -> vector<6x16xf32>
    %c3 = arith.constant 3 : index
    %c0_83 = arith.constant 0 : index
    %c0_84 = arith.constant 0 : index
    %114 = vector.load %arg6[%c3, %c0_83, %c0_84] : memref<4x6x1xf32, #tpu.memory_space<vmem>>, vector<1x6x1xf32>
    %115 = vector.shape_cast %114 : vector<1x6x1xf32> to vector<6x1xf32>
    %cst_85 = arith.constant dense<0xFF800000> : vector<6xf32>
    %116 = vector.multi_reduction <maximumf>, %113, %cst_85 [1] : vector<6x16xf32> to vector<6xf32>
    %117 = vector.shape_cast %116 : vector<6xf32> to vector<6x1xf32>
    %118 = arith.maximumf %115, %117 : vector<6x1xf32>
    %119 = arith.subf %115, %118 : vector<6x1xf32>
    %120 = math.exp %119 : vector<6x1xf32>
    %121 = vector.broadcast %118 : vector<6x1xf32> to vector<6x16xf32>
    %122 = arith.subf %113, %121 : vector<6x16xf32>
    %123 = math.exp %122 : vector<6x16xf32>
    %c3_86 = arith.constant 3 : index
    %c0_87 = arith.constant 0 : index
    %c0_88 = arith.constant 0 : index
    %124 = vector.load %arg7[%c3_86, %c0_87, %c0_88] : memref<4x6x1xf32, #tpu.memory_space<vmem>>, vector<1x6x1xf32>
    %125 = vector.shape_cast %124 : vector<1x6x1xf32> to vector<6x1xf32>
    %126 = arith.mulf %120, %125 : vector<6x1xf32>
    %cst_89 = arith.constant dense<0.000000e+00> : vector<6xf32>
    %127 = vector.multi_reduction <add>, %123, %cst_89 [1] : vector<6x16xf32> to vector<6xf32>
    %128 = vector.shape_cast %127 : vector<6xf32> to vector<6x1xf32>
    %129 = arith.addf %126, %128 : vector<6x1xf32>
    %c3_90 = arith.constant 3 : index
    %c0_91 = arith.constant 0 : index
    %c0_92 = arith.constant 0 : index
    %130 = vector.load %arg7[%c3_90, %c0_91, %c0_92] : memref<4x6x1xf32, #tpu.memory_space<vmem>>, vector<1x6x1xf32>
    %131 = vector.shape_cast %130 : vector<1x6x1xf32> to vector<6x1xf32>
    %132 = vector.shape_cast %129 : vector<6x1xf32> to vector<1x6x1xf32>
    tpu.vector_store %arg7[%c3_90, %c0_91, %c0_92], %132 {strides = array<i32>} : memref<4x6x1xf32, #tpu.memory_space<vmem>>, vector<1x6x1xf32>,
    %c3_93 = arith.constant 3 : index
    %c0_94 = arith.constant 0 : index
    %c0_95 = arith.constant 0 : index
    %133 = vector.load %arg8[%c3_93, %c0_94, %c0_95] : memref<4x6x8xf32, #tpu.memory_space<vmem>>, vector<1x6x8xf32>
    %134 = vector.shape_cast %133 : vector<1x6x8xf32> to vector<6x8xf32>
    %135 = vector.broadcast %120 : vector<6x1xf32> to vector<6x8xf32>
    %136 = arith.mulf %135, %134 : vector<6x8xf32>
    %137 = arith.truncf %123 : vector<6x16xf32> to vector<6x16xbf16>
    %c0_96 = arith.constant 0 : index
    %c24_97 = arith.constant 24 : index
    %138 = vector.load %arg4[%c0_96, %c24_97] : memref<16x32xbf16, #tpu.memory_space<vmem>>, vector<16x8xbf16>
    %cst_98 = arith.constant dense<0.000000e+00> : vector<6x8xf32>
    %139 = tpu.matmul %137, %138, %cst_98 {dimension_numbers = #tpu.dot_dimension_numbers<[1], [0], [0], [1], [0, 0, 1, 1], [], []>} : vector<6x16xbf16>, vector<16x8xbf16>, vector<6x8xf32> -> vector<6x8xf32>
    %140 = arith.addf %136, %139 : vector<6x8xf32>
    %c3_99 = arith.constant 3 : index
    %c0_100 = arith.constant 0 : index
    %c0_101 = arith.constant 0 : index
    %141 = vector.load %arg8[%c3_99, %c0_100, %c0_101] : memref<4x6x8xf32, #tpu.memory_space<vmem>>, vector<1x6x8xf32>
    %142 = vector.shape_cast %141 : vector<1x6x8xf32> to vector<6x8xf32>
    %143 = vector.shape_cast %140 : vector<6x8xf32> to vector<1x6x8xf32>
    tpu.vector_store %arg8[%c3_99, %c0_100, %c0_101], %143 {strides = array<i32>} : memref<4x6x8xf32, #tpu.memory_space<vmem>>, vector<1x6x8xf32>,
    %c3_102 = arith.constant 3 : index
    %c0_103 = arith.constant 0 : index
    %c0_104 = arith.constant 0 : index
    %144 = vector.load %arg6[%c3_102, %c0_103, %c0_104] : memref<4x6x1xf32, #tpu.memory_space<vmem>>, vector<1x6x1xf32>
    %145 = vector.shape_cast %144 : vector<1x6x1xf32> to vector<6x1xf32>
    %146 = vector.shape_cast %118 : vector<6x1xf32> to vector<1x6x1xf32>
    tpu.vector_store %arg6[%c3_102, %c0_103, %c0_104], %146 {strides = array<i32>} : memref<4x6x1xf32, #tpu.memory_space<vmem>>, vector<1x6x1xf32>,
    %c0_i32_105 = arith.constant 0 : i32
    %147 = arith.cmpi eq, %arg1, %c0_i32_105 : i32
    %148 = arith.extui %147 : i1 to i32
    %c0_i32_106 = arith.constant 0 : i32
    %149 = arith.cmpi ne, %148, %c0_i32_106 : i32
    scf.if %149 {
      %c0_107 = arith.constant 0 : index
      %c0_108 = arith.constant 0 : index
      %c0_109 = arith.constant 0 : index
      %150 = vector.load %arg8[%c0_107, %c0_108, %c0_109] : memref<4x6x8xf32, #tpu.memory_space<vmem>>, vector<1x6x8xf32>
      %151 = vector.shape_cast %150 : vector<1x6x8xf32> to vector<6x8xf32>
      %c0_110 = arith.constant 0 : index
      %c0_111 = arith.constant 0 : index
      %c0_112 = arith.constant 0 : index
      %152 = vector.load %arg7[%c0_110, %c0_111, %c0_112] : memref<4x6x1xf32, #tpu.memory_space<vmem>>, vector<1x6x1xf32>
      %153 = vector.shape_cast %152 : vector<1x6x1xf32> to vector<6x1xf32>
      %154 = vector.broadcast %153 : vector<6x1xf32> to vector<6x8xf32>
      %155 = arith.divf %151, %154 : vector<6x8xf32>
      %c1_113 = arith.constant 1 : index
      %c0_114 = arith.constant 0 : index
      %c0_115 = arith.constant 0 : index
      %156 = vector.load %arg8[%c1_113, %c0_114, %c0_115] : memref<4x6x8xf32, #tpu.memory_space<vmem>>, vector<1x6x8xf32>
      %157 = vector.shape_cast %156 : vector<1x6x8xf32> to vector<6x8xf32>
      %c1_116 = arith.constant 1 : index
      %c0_117 = arith.constant 0 : index
      %c0_118 = arith.constant 0 : index
      %158 = vector.load %arg7[%c1_116, %c0_117, %c0_118] : memref<4x6x1xf32, #tpu.memory_space<vmem>>, vector<1x6x1xf32>
      %159 = vector.shape_cast %158 : vector<1x6x1xf32> to vector<6x1xf32>
      %160 = vector.broadcast %159 : vector<6x1xf32> to vector<6x8xf32>
      %161 = arith.divf %157, %160 : vector<6x8xf32>
      %c2_119 = arith.constant 2 : index
      %c0_120 = arith.constant 0 : index
      %c0_121 = arith.constant 0 : index
      %162 = vector.load %arg8[%c2_119, %c0_120, %c0_121] : memref<4x6x8xf32, #tpu.memory_space<vmem>>, vector<1x6x8xf32>
      %163 = vector.shape_cast %162 : vector<1x6x8xf32> to vector<6x8xf32>
      %c2_122 = arith.constant 2 : index
      %c0_123 = arith.constant 0 : index
      %c0_124 = arith.constant 0 : index
      %164 = vector.load %arg7[%c2_122, %c0_123, %c0_124] : memref<4x6x1xf32, #tpu.memory_space<vmem>>, vector<1x6x1xf32>
      %165 = vector.shape_cast %164 : vector<1x6x1xf32> to vector<6x1xf32>
      %166 = vector.broadcast %165 : vector<6x1xf32> to vector<6x8xf32>
      %167 = arith.divf %163, %166 : vector<6x8xf32>
      %c3_125 = arith.constant 3 : index
      %c0_126 = arith.constant 0 : index
      %c0_127 = arith.constant 0 : index
      %168 = vector.load %arg8[%c3_125, %c0_126, %c0_127] : memref<4x6x8xf32, #tpu.memory_space<vmem>>, vector<1x6x8xf32>
      %169 = vector.shape_cast %168 : vector<1x6x8xf32> to vector<6x8xf32>
      %c3_128 = arith.constant 3 : index
      %c0_129 = arith.constant 0 : index
      %c0_130 = arith.constant 0 : index
      %170 = vector.load %arg7[%c3_128, %c0_129, %c0_130] : memref<4x6x1xf32, #tpu.memory_space<vmem>>, vector<1x6x1xf32>
      %171 = vector.shape_cast %170 : vector<1x6x1xf32> to vector<6x1xf32>
      %172 = vector.broadcast %171 : vector<6x1xf32> to vector<6x8xf32>
      %173 = arith.divf %169, %172 : vector<6x8xf32>
      %174 = tpu.concatenate %155, %161, %167, %173 in 1 : vector<6x8xf32>, vector<6x8xf32>, vector<6x8xf32>, vector<6x8xf32> -> vector<6x32xf32>
      %175 = arith.truncf %174 : vector<6x32xf32> to vector<6x32xbf16>
      %c0_131 = arith.constant 0 : index
      %c0_132 = arith.constant 0 : index
      %176 = vector.load %arg5[%c0_131, %c0_132] : memref<6x32xbf16, #tpu.memory_space<vmem>>, vector<6x32xbf16>
      tpu.vector_store %arg5[%c0_131, %c0_132], %175 {strides = array<i32>} : memref<6x32xbf16, #tpu.memory_space<vmem>>, vector<6x32xbf16>,
    } else {
    }
    return
  }
  func.func @transform_0(%arg0: i32, %arg1: i32) -> (i32, i32) {
    %c0_i32 = arith.constant 0 : i32
    %c0_i32_0 = arith.constant 0 : i32
    return %arg0, %c0_i32 : i32, i32
  }
  func.func @transform_1(%arg0: i32, %arg1: i32) -> (i32, i32) {
    %c0_i32 = arith.constant 0 : i32
    %c0_i32_0 = arith.constant 0 : i32
    return %arg1, %c0_i32 : i32, i32
  }
  func.func @transform_2(%arg0: i32, %arg1: i32) -> (i32, i32) {
    %c0_i32 = arith.constant 0 : i32
    %c0_i32_0 = arith.constant 0 : i32
    return %arg1, %c0_i32 : i32, i32
  }
  func.func @transform_3(%arg0: i32, %arg1: i32) -> (i32, i32) {
    %c0_i32 = arith.constant 0 : i32
    %c0_i32_0 = arith.constant 0 : i32
    return %arg0, %c0_i32 : i32, i32
  }
}

module attributes {stable_mosaic.version = 11 : i64} {
  func.func @kernel(%arg0: i32, %arg1: i32, %arg2: memref<6x32xbf16, #tpu.memory_space<vmem>>, %arg3: memref<32x128xbf16, #tpu.memory_space<vmem>>, %arg4: memref<1x32xf32, #tpu.memory_space<vmem>>, %arg5: memref<1x32xf32, #tpu.memory_space<vmem>>, %arg6: memref<1x128xf32, #tpu.memory_space<vmem>>, %arg7: memref<6x128xbf16, #tpu.memory_space<vmem>>, %arg8: memref<6x32xbf16, #tpu.memory_space<vmem>>) attributes {dimension_semantics = [#tpu.dimension_semantics<parallel>, #tpu.dimension_semantics<arbitrary>], iteration_bounds = array<i64: 1, 1>, scalar_prefetch = 0 : i64, scratch_operands = 1 : i64, tpu.core_type = #tpu.core_type<tc>, window_params = [{transform_indices = @transform_0, window_bounds = array<i64: 6, 32>}, {transform_indices = @transform_1, window_bounds = array<i64: 32, 128>}, {pipeline_mode = #tpu.pipeline_mode<synchronous>, transform_indices = @transform_2, window_bounds = array<i64: 1, 32>}, {pipeline_mode = #tpu.pipeline_mode<synchronous>, transform_indices = @transform_3, window_bounds = array<i64: 1, 32>}, {transform_indices = @transform_4, window_bounds = array<i64: 1, 128>}, {transform_indices = @transform_5, window_bounds = array<i64: 6, 128>}]} {
    %c0_i32 = arith.constant 0 : i32
    %0 = arith.cmpi eq, %arg1, %c0_i32 : i32
    %1 = arith.extui %0 : i1 to i32
    %c0_i32_0 = arith.constant 0 : i32
    %2 = arith.cmpi ne, %1, %c0_i32_0 : i32
    scf.if %2 {
      %c0_12 = arith.constant 0 : index
      %c0_13 = arith.constant 0 : index
      %24 = vector.load %arg2[%c0_12, %c0_13] : memref<6x32xbf16, #tpu.memory_space<vmem>>, vector<6x32xbf16>
      %25 = arith.extf %24 : vector<6x32xbf16> to vector<6x32xf32>
      %cst_14 = arith.constant dense<0.000000e+00> : vector<6xf32>
      %26 = vector.multi_reduction <add>, %25, %cst_14 [1] : vector<6x32xf32> to vector<6xf32>
      %27 = vector.shape_cast %26 : vector<6xf32> to vector<6x1xf32>
      %cst_15 = arith.constant 3.200000e+01 : f32
      %28 = vector.broadcast %cst_15 : f32 to vector<6x1xf32>
      %29 = arith.divf %27, %28 : vector<6x1xf32>
      %30 = vector.broadcast %29 : vector<6x1xf32> to vector<6x32xf32>
      %31 = arith.subf %25, %30 : vector<6x32xf32>
      %32 = arith.mulf %31, %31 : vector<6x32xf32>
      %cst_16 = arith.constant dense<0.000000e+00> : vector<6xf32>
      %33 = vector.multi_reduction <add>, %32, %cst_16 [1] : vector<6x32xf32> to vector<6xf32>
      %34 = vector.shape_cast %33 : vector<6xf32> to vector<6x1xf32>
      %cst_17 = arith.constant 3.200000e+01 : f32
      %35 = vector.broadcast %cst_17 : f32 to vector<6x1xf32>
      %36 = arith.divf %34, %35 : vector<6x1xf32>
      %37 = vector.broadcast %29 : vector<6x1xf32> to vector<6x32xf32>
      %38 = arith.subf %25, %37 : vector<6x32xf32>
      %cst_18 = arith.constant 9.99999974E-6 : f32
      %39 = vector.broadcast %cst_18 : f32 to vector<6x1xf32>
      %40 = arith.addf %36, %39 : vector<6x1xf32>
      %41 = math.rsqrt %40 : vector<6x1xf32>
      %42 = vector.broadcast %41 : vector<6x1xf32> to vector<6x32xf32>
      %43 = arith.mulf %38, %42 : vector<6x32xf32>
      %c0_19 = arith.constant 0 : index
      %c0_20 = arith.constant 0 : index
      %44 = vector.load %arg4[%c0_19, %c0_20] : memref<1x32xf32, #tpu.memory_space<vmem>>, vector<1x32xf32>
      %45 = vector.broadcast %44 : vector<1x32xf32> to vector<6x32xf32>
      %46 = arith.mulf %43, %45 : vector<6x32xf32>
      %c0_21 = arith.constant 0 : index
      %c0_22 = arith.constant 0 : index
      %47 = vector.load %arg5[%c0_21, %c0_22] : memref<1x32xf32, #tpu.memory_space<vmem>>, vector<1x32xf32>
      %48 = vector.broadcast %47 : vector<1x32xf32> to vector<6x32xf32>
      %49 = arith.addf %46, %48 : vector<6x32xf32>
      %50 = arith.truncf %49 : vector<6x32xf32> to vector<6x32xbf16>
      %c0_23 = arith.constant 0 : index
      %c0_24 = arith.constant 0 : index
      %51 = vector.load %arg8[%c0_23, %c0_24] : memref<6x32xbf16, #tpu.memory_space<vmem>>, vector<6x32xbf16>
      tpu.vector_store %arg8[%c0_23, %c0_24], %50 {strides = array<i32>} : memref<6x32xbf16, #tpu.memory_space<vmem>>, vector<6x32xbf16>,
    } else {
    }
    %c0 = arith.constant 0 : index
    %c0_1 = arith.constant 0 : index
    %3 = vector.load %arg8[%c0, %c0_1] : memref<6x32xbf16, #tpu.memory_space<vmem>>, vector<6x32xbf16>
    %c0_2 = arith.constant 0 : index
    %c0_3 = arith.constant 0 : index
    %4 = vector.load %arg3[%c0_2, %c0_3] : memref<32x128xbf16, #tpu.memory_space<vmem>>, vector<32x128xbf16>
    %cst = arith.constant dense<0.000000e+00> : vector<6x128xf32>
    %5 = tpu.matmul %3, %4, %cst {dimension_numbers = #tpu.dot_dimension_numbers<[1], [0], [0], [1], [0, 0, 1, 1], [], []>} : vector<6x32xbf16>, vector<32x128xbf16>, vector<6x128xf32> -> vector<6x128xf32>
    %c0_4 = arith.constant 0 : index
    %c0_5 = arith.constant 0 : index
    %6 = vector.load %arg6[%c0_4, %c0_5] : memref<1x128xf32, #tpu.memory_space<vmem>>, vector<1x128xf32>
    %7 = vector.broadcast %6 : vector<1x128xf32> to vector<6x128xf32>
    %8 = arith.addf %5, %7 : vector<6x128xf32>
    %cst_6 = arith.constant 5.000000e-01 : f32
    %9 = vector.broadcast %cst_6 : f32 to vector<6x128xf32>
    %10 = arith.mulf %9, %8 : vector<6x128xf32>
    %cst_7 = arith.constant 4.471500e-02 : f32
    %11 = vector.broadcast %cst_7 : f32 to vector<6x128xf32>
    %12 = arith.mulf %11, %8 : vector<6x128xf32>
    %13 = arith.mulf %12, %8 : vector<6x128xf32>
    %14 = arith.mulf %13, %8 : vector<6x128xf32>
    %15 = arith.addf %8, %14 : vector<6x128xf32>
    %cst_8 = arith.constant 0.797884583 : f32
    %16 = vector.broadcast %cst_8 : f32 to vector<6x128xf32>
    %17 = arith.mulf %16, %15 : vector<6x128xf32>
    %18 = math.tanh %17 : vector<6x128xf32>
    %cst_9 = arith.constant 1.000000e+00 : f32
    %19 = vector.broadcast %cst_9 : f32 to vector<6x128xf32>
    %20 = arith.addf %19, %18 : vector<6x128xf32>
    %21 = arith.mulf %10, %20 : vector<6x128xf32>
    %22 = arith.truncf %21 : vector<6x128xf32> to vector<6x128xbf16>
    %c0_10 = arith.constant 0 : index
    %c0_11 = arith.constant 0 : index
    %23 = vector.load %arg7[%c0_10, %c0_11] : memref<6x128xbf16, #tpu.memory_space<vmem>>, vector<6x128xbf16>
    tpu.vector_store %arg7[%c0_10, %c0_11], %22 {strides = array<i32>} : memref<6x128xbf16, #tpu.memory_space<vmem>>, vector<6x128xbf16>,
    return
  }
  func.func @transform_0(%arg0: i32, %arg1: i32) -> (i32, i32) {
    %c0_i32 = arith.constant 0 : i32
    %c0_i32_0 = arith.constant 0 : i32
    return %arg0, %c0_i32 : i32, i32
  }
  func.func @transform_1(%arg0: i32, %arg1: i32) -> (i32, i32) {
    %c0_i32 = arith.constant 0 : i32
    %c0_i32_0 = arith.constant 0 : i32
    return %c0_i32, %arg1 : i32, i32
  }
  func.func @transform_2(%arg0: i32, %arg1: i32) -> (i32, i32) {
    %c0_i32 = arith.constant 0 : i32
    %c0_i32_0 = arith.constant 0 : i32
    %c0_i32_1 = arith.constant 0 : i32
    return %c0_i32, %c0_i32_0 : i32, i32
  }
  func.func @transform_3(%arg0: i32, %arg1: i32) -> (i32, i32) {
    %c0_i32 = arith.constant 0 : i32
    %c0_i32_0 = arith.constant 0 : i32
    %c0_i32_1 = arith.constant 0 : i32
    return %c0_i32, %c0_i32_0 : i32, i32
  }
  func.func @transform_4(%arg0: i32, %arg1: i32) -> (i32, i32) {
    %c0_i32 = arith.constant 0 : i32
    %c0_i32_0 = arith.constant 0 : i32
    return %c0_i32, %arg1 : i32, i32
  }
  func.func @transform_5(%arg0: i32, %arg1: i32) -> (i32, i32) {
    %c0_i32 = arith.constant 0 : i32
    return %arg0, %arg1 : i32, i32
  }
}

module attributes {stable_mosaic.version = 11 : i64} {
  func.func @kernel(%arg0: i32, %arg1: i32, %arg2: memref<6x128xbf16, #tpu.memory_space<vmem>>, %arg3: memref<128x32xbf16, #tpu.memory_space<vmem>>, %arg4: memref<1x32xf32, #tpu.memory_space<vmem>>, %arg5: memref<6x32xbf16, #tpu.memory_space<vmem>>, %arg6: memref<6x32xbf16, #tpu.memory_space<vmem>>) attributes {dimension_semantics = [#tpu.dimension_semantics<parallel>, #tpu.dimension_semantics<parallel>], iteration_bounds = array<i64: 1, 1>, scalar_prefetch = 0 : i64, scratch_operands = 0 : i64, tpu.core_type = #tpu.core_type<tc>, window_params = [{transform_indices = @transform_0, window_bounds = array<i64: 6, 128>}, {transform_indices = @transform_1, window_bounds = array<i64: 128, 32>}, {transform_indices = @transform_2, window_bounds = array<i64: 1, 32>}, {transform_indices = @transform_3, window_bounds = array<i64: 6, 32>}, {transform_indices = @transform_4, window_bounds = array<i64: 6, 32>}]} {
    %c0 = arith.constant 0 : index
    %c0_0 = arith.constant 0 : index
    %0 = vector.load %arg2[%c0, %c0_0] : memref<6x128xbf16, #tpu.memory_space<vmem>>, vector<6x128xbf16>
    %c0_1 = arith.constant 0 : index
    %c0_2 = arith.constant 0 : index
    %1 = vector.load %arg3[%c0_1, %c0_2] : memref<128x32xbf16, #tpu.memory_space<vmem>>, vector<128x32xbf16>
    %cst = arith.constant dense<0.000000e+00> : vector<6x32xf32>
    %2 = tpu.matmul %0, %1, %cst {dimension_numbers = #tpu.dot_dimension_numbers<[1], [0], [0], [1], [0, 0, 1, 1], [], []>} : vector<6x128xbf16>, vector<128x32xbf16>, vector<6x32xf32> -> vector<6x32xf32>
    %c0_3 = arith.constant 0 : index
    %c0_4 = arith.constant 0 : index
    %3 = vector.load %arg4[%c0_3, %c0_4] : memref<1x32xf32, #tpu.memory_space<vmem>>, vector<1x32xf32>
    %4 = vector.broadcast %3 : vector<1x32xf32> to vector<6x32xf32>
    %5 = arith.addf %2, %4 : vector<6x32xf32>
    %c0_5 = arith.constant 0 : index
    %c0_6 = arith.constant 0 : index
    %6 = vector.load %arg5[%c0_5, %c0_6] : memref<6x32xbf16, #tpu.memory_space<vmem>>, vector<6x32xbf16>
    %7 = arith.extf %6 : vector<6x32xbf16> to vector<6x32xf32>
    %8 = arith.addf %5, %7 : vector<6x32xf32>
    %9 = arith.truncf %8 : vector<6x32xf32> to vector<6x32xbf16>
    %c0_7 = arith.constant 0 : index
    %c0_8 = arith.constant 0 : index
    %10 = vector.load %arg6[%c0_7, %c0_8] : memref<6x32xbf16, #tpu.memory_space<vmem>>, vector<6x32xbf16>
    tpu.vector_store %arg6[%c0_7, %c0_8], %9 {strides = array<i32>} : memref<6x32xbf16, #tpu.memory_space<vmem>>, vector<6x32xbf16>,
    return
  }
  func.func @transform_0(%arg0: i32, %arg1: i32) -> (i32, i32) {
    %c0_i32 = arith.constant 0 : i32
    %c0_i32_0 = arith.constant 0 : i32
    return %arg0, %c0_i32 : i32, i32
  }
  func.func @transform_1(%arg0: i32, %arg1: i32) -> (i32, i32) {
    %c0_i32 = arith.constant 0 : i32
    %c0_i32_0 = arith.constant 0 : i32
    return %c0_i32, %arg1 : i32, i32
  }
  func.func @transform_2(%arg0: i32, %arg1: i32) -> (i32, i32) {
    %c0_i32 = arith.constant 0 : i32
    %c0_i32_0 = arith.constant 0 : i32
    return %c0_i32, %arg1 : i32, i32
  }
  func.func @transform_3(%arg0: i32, %arg1: i32) -> (i32, i32) {
    %c0_i32 = arith.constant 0 : i32
    return %arg0, %arg1 : i32, i32
  }
  func.func @transform_4(%arg0: i32, %arg1: i32) -> (i32, i32) {
    %c0_i32 = arith.constant 0 : i32
    return %arg0, %arg1 : i32, i32
  }
}

module attributes {stable_mosaic.version = 11 : i64} {
  func.func @kernel(%arg0: i32, %arg1: i32, %arg2: memref<6x32xbf16, #tpu.memory_space<vmem>>, %arg3: memref<32x64xbf16, #tpu.memory_space<vmem>>, %arg4: memref<1x32xf32, #tpu.memory_space<vmem>>, %arg5: memref<1x32xf32, #tpu.memory_space<vmem>>, %arg6: memref<6x64xf32, #tpu.memory_space<vmem>>, %arg7: memref<6x32xbf16, #tpu.memory_space<vmem>>) attributes {dimension_semantics = [#tpu.dimension_semantics<parallel>, #tpu.dimension_semantics<arbitrary>], iteration_bounds = array<i64: 1, 1>, scalar_prefetch = 0 : i64, scratch_operands = 1 : i64, tpu.core_type = #tpu.core_type<tc>, window_params = [{transform_indices = @transform_0, window_bounds = array<i64: 6, 32>}, {transform_indices = @transform_1, window_bounds = array<i64: 32, 64>}, {pipeline_mode = #tpu.pipeline_mode<synchronous>, transform_indices = @transform_2, window_bounds = array<i64: 1, 32>}, {pipeline_mode = #tpu.pipeline_mode<synchronous>, transform_indices = @transform_3, window_bounds = array<i64: 1, 32>}, {transform_indices = @transform_4, window_bounds = array<i64: 6, 64>}]} {
    %c0_i32 = arith.constant 0 : i32
    %0 = arith.cmpi eq, %arg1, %c0_i32 : i32
    %1 = arith.extui %0 : i1 to i32
    %c0_i32_0 = arith.constant 0 : i32
    %2 = arith.cmpi ne, %1, %c0_i32_0 : i32
    scf.if %2 {
      %c0_6 = arith.constant 0 : index
      %c0_7 = arith.constant 0 : index
      %7 = vector.load %arg2[%c0_6, %c0_7] : memref<6x32xbf16, #tpu.memory_space<vmem>>, vector<6x32xbf16>
      %8 = arith.extf %7 : vector<6x32xbf16> to vector<6x32xf32>
      %cst_8 = arith.constant dense<0.000000e+00> : vector<6xf32>
      %9 = vector.multi_reduction <add>, %8, %cst_8 [1] : vector<6x32xf32> to vector<6xf32>
      %10 = vector.shape_cast %9 : vector<6xf32> to vector<6x1xf32>
      %cst_9 = arith.constant 3.200000e+01 : f32
      %11 = vector.broadcast %cst_9 : f32 to vector<6x1xf32>
      %12 = arith.divf %10, %11 : vector<6x1xf32>
      %13 = vector.broadcast %12 : vector<6x1xf32> to vector<6x32xf32>
      %14 = arith.subf %8, %13 : vector<6x32xf32>
      %15 = arith.mulf %14, %14 : vector<6x32xf32>
      %cst_10 = arith.constant dense<0.000000e+00> : vector<6xf32>
      %16 = vector.multi_reduction <add>, %15, %cst_10 [1] : vector<6x32xf32> to vector<6xf32>
      %17 = vector.shape_cast %16 : vector<6xf32> to vector<6x1xf32>
      %cst_11 = arith.constant 3.200000e+01 : f32
      %18 = vector.broadcast %cst_11 : f32 to vector<6x1xf32>
      %19 = arith.divf %17, %18 : vector<6x1xf32>
      %20 = vector.broadcast %12 : vector<6x1xf32> to vector<6x32xf32>
      %21 = arith.subf %8, %20 : vector<6x32xf32>
      %cst_12 = arith.constant 9.99999974E-6 : f32
      %22 = vector.broadcast %cst_12 : f32 to vector<6x1xf32>
      %23 = arith.addf %19, %22 : vector<6x1xf32>
      %24 = math.rsqrt %23 : vector<6x1xf32>
      %25 = vector.broadcast %24 : vector<6x1xf32> to vector<6x32xf32>
      %26 = arith.mulf %21, %25 : vector<6x32xf32>
      %c0_13 = arith.constant 0 : index
      %c0_14 = arith.constant 0 : index
      %27 = vector.load %arg4[%c0_13, %c0_14] : memref<1x32xf32, #tpu.memory_space<vmem>>, vector<1x32xf32>
      %28 = vector.broadcast %27 : vector<1x32xf32> to vector<6x32xf32>
      %29 = arith.mulf %26, %28 : vector<6x32xf32>
      %c0_15 = arith.constant 0 : index
      %c0_16 = arith.constant 0 : index
      %30 = vector.load %arg5[%c0_15, %c0_16] : memref<1x32xf32, #tpu.memory_space<vmem>>, vector<1x32xf32>
      %31 = vector.broadcast %30 : vector<1x32xf32> to vector<6x32xf32>
      %32 = arith.addf %29, %31 : vector<6x32xf32>
      %33 = arith.truncf %32 : vector<6x32xf32> to vector<6x32xbf16>
      %c0_17 = arith.constant 0 : index
      %c0_18 = arith.constant 0 : index
      %34 = vector.load %arg7[%c0_17, %c0_18] : memref<6x32xbf16, #tpu.memory_space<vmem>>, vector<6x32xbf16>
      tpu.vector_store %arg7[%c0_17, %c0_18], %33 {strides = array<i32>} : memref<6x32xbf16, #tpu.memory_space<vmem>>, vector<6x32xbf16>,
    } else {
    }
    %c0 = arith.constant 0 : index
    %c0_1 = arith.constant 0 : index
    %3 = vector.load %arg7[%c0, %c0_1] : memref<6x32xbf16, #tpu.memory_space<vmem>>, vector<6x32xbf16>
    %c0_2 = arith.constant 0 : index
    %c0_3 = arith.constant 0 : index
    %4 = vector.load %arg3[%c0_2, %c0_3] : memref<32x64xbf16, #tpu.memory_space<vmem>>, vector<32x64xbf16>
    %cst = arith.constant dense<0.000000e+00> : vector<6x64xf32>
    %5 = tpu.matmul %3, %4, %cst {dimension_numbers = #tpu.dot_dimension_numbers<[1], [0], [0], [1], [0, 0, 1, 1], [], []>} : vector<6x32xbf16>, vector<32x64xbf16>, vector<6x64xf32> -> vector<6x64xf32>
    %c0_4 = arith.constant 0 : index
    %c0_5 = arith.constant 0 : index
    %6 = vector.load %arg6[%c0_4, %c0_5] : memref<6x64xf32, #tpu.memory_space<vmem>>, vector<6x64xf32>
    tpu.vector_store %arg6[%c0_4, %c0_5], %5 {strides = array<i32>} : memref<6x64xf32, #tpu.memory_space<vmem>>, vector<6x64xf32>,
    return
  }
  func.func @transform_0(%arg0: i32, %arg1: i32) -> (i32, i32) {
    %c0_i32 = arith.constant 0 : i32
    %c0_i32_0 = arith.constant 0 : i32
    return %arg0, %c0_i32 : i32, i32
  }
  func.func @transform_1(%arg0: i32, %arg1: i32) -> (i32, i32) {
    %c0_i32 = arith.constant 0 : i32
    %c0_i32_0 = arith.constant 0 : i32
    return %c0_i32, %arg1 : i32, i32
  }
  func.func @transform_2(%arg0: i32, %arg1: i32) -> (i32, i32) {
    %c0_i32 = arith.constant 0 : i32
    %c0_i32_0 = arith.constant 0 : i32
    %c0_i32_1 = arith.constant 0 : i32
    return %c0_i32, %c0_i32_0 : i32, i32
  }
  func.func @transform_3(%arg0: i32, %arg1: i32) -> (i32, i32) {
    %c0_i32 = arith.constant 0 : i32
    %c0_i32_0 = arith.constant 0 : i32
    %c0_i32_1 = arith.constant 0 : i32
    return %c0_i32, %c0_i32_0 : i32, i32
  }
  func.func @transform_4(%arg0: i32, %arg1: i32) -> (i32, i32) {
    %c0_i32 = arith.constant 0 : i32
    return %arg0, %arg1 : i32, i32
  }
}

</mosaic_0001>

<llo_original>
// kernel: sensevoice_forward.103
$region0: #{sensevoice_forward.103}
  #allocation0 [shape = 'u32[]', space=smem, size = 0x4, offset = 0x4, fixed_abs, tag = 'smem constant byte address 0x4 - core index']
  #allocation1 [shape = 'u32[144,128]{1,0:T(1,128)}', space=vmem, size = 0x12000, scoped, tag = 'internal scratch']
  %s0 = inlined_call_operand.vmem [shape: bf16[16,96], index: 0, kind: input, shape index: {}]
  %s1 = inlined_call_operand.vmem [shape: bf16[96,32], index: 1, kind: input, shape index: {}]
  %s2 = inlined_call_operand.vmem [shape: f32[1,32], index: 2, kind: input, shape index: {}]
  %s3 = inlined_call_operand.vmem [shape: bf16[16,32], index: 3, kind: output, shape index: {}]
  %s4 = sld [smem:[#allocation0]]
  $region22: #{sensevoice_forward.103} parent=0
    _
  %s6 = ssub.s32 1, %s4
  %s7 = scalar_select 0, %s6, %s4
  // Predicated region
  $region2: #{sensevoice_forward.103} parent=0 // pred_check
    _
  $region3: #{sensevoice_forward.103} parent=0 // pred_check_branch
    %9 = sbr.rel (0) target = $region5
  $region4: #{sensevoice_forward.103} parent=0 // pred_region
    _
  $region5: #{sensevoice_forward.103} parent=0 // pred_fallthru
    _
  // Predicated region
  $region6: #{sensevoice_forward.103} parent=0 // pred_check
    _
  $region7: #{sensevoice_forward.103} parent=0 // pred_check_branch
    %11 = sbr.rel (0) target = $region9
  $region8: #{sensevoice_forward.103} parent=0 // pred_region
    _
  $region9: #{sensevoice_forward.103} parent=0 // pred_fallthru
    _
  // Predicated region
  $region10: #{sensevoice_forward.103} parent=0 // pred_check
    _
  $region11: #{sensevoice_forward.103} parent=0 // pred_check_branch
    %13 = sbr.rel (0) target = $region13
  $region12: #{sensevoice_forward.103} parent=0 // pred_region
    _
  $region13: #{sensevoice_forward.103} parent=0 // pred_fallthru
    _
  %v15 = vld [vmem:[%s0] sm:$0xf]
  %v16 = vld [vmem:[%s0 + $0x4] sm:$0xf]
  %v17 = vld [vmem:[%s1] sm:$0xf]
  %v18 = vld [vmem:[%s1 + $0x4] sm:$0xf]
  %v19 = vld [vmem:[%s1 + $0x8] sm:$0xf]
  %v20 = vld [vmem:[%s1 + $0xc] sm:$0xf]
  %v21 = vld [vmem:[%s1 + $0x10] sm:$0xf]
  %v22 = vld [vmem:[%s1 + $0x14] sm:$0xf]
  %v23 = vld [vmem:[%s1 + $0x18] sm:$0xf]
  %v24 = vld [vmem:[%s1 + $0x1c] sm:$0xf]
  %v25 = vld [vmem:[%s1 + $0x20] sm:$0xf]
  %v26 = vld [vmem:[%s1 + $0x24] sm:$0xf]
  %v27 = vld [vmem:[%s1 + $0x28] sm:$0xf]
  %v28 = vld [vmem:[%s1 + $0x2c] sm:$0xf]
  %v29 = vld [vmem:[%s2] sm:$0x1]
  %v31 = vlaneseq
  %v32 = vshrl.u32 %v31, 7
  %v33 = vsub.s32 0, %v32
  %v34 = vrot.slane %v29, %v33
  %v38 = vunpack.c.l.b16 %v15
  %v39 = vunpack.c.l.b16 %v16
  %v40 = vpack.c.b16 %v39, %v38
  %v53 = vunpack.c.l.b16 %v17
  %v54 = vunpack.c.l.b16 %v18
  %v55 = vunpack.c.l.b16 %v19
  %v56 = vunpack.c.l.b16 %v20
  %v57 = vunpack.c.l.b16 %v21
  %v58 = vunpack.c.l.b16 %v22
  %v59 = vunpack.c.l.b16 %v23
  %v60 = vunpack.c.l.b16 %v24
  %v61 = vunpack.c.l.b16 %v25
  %v62 = vunpack.c.l.b16 %v26
  %v63 = vunpack.c.l.b16 %v27
  %v64 = vunpack.c.l.b16 %v28
  %v65 = vpack.c.b16 %v54, %v53
  %v66 = vpack.c.b16 %v56, %v55
  %v67 = vpack.c.b16 %v58, %v57
  %v68 = vpack.c.b16 %v60, %v59
  %v69 = vpack.c.b16 %v62, %v61
  %v70 = vpack.c.b16 %v64, %v63
  %vm77 = vcmask 785408
  %v79 = vsel %vm77, %v40, 0
  %81 = vmatprep.subr.bf16.mxu0 0
  %82 = vmatpush1.bf16.msra.mxu0 %v65
  %83 = vmatprep.subr.bf16.mxu0 0
  %84 = vmatpush1.bf16.msra.mxu0 %v66
  %85 = vmatprep.subr.bf16.mxu0 0
  %86 = vmatpush1.bf16.msra.mxu0 %v67
  %87 = vmatprep.subr.bf16.mxu0 0
  %88 = vmatpush1.bf16.msra.mxu0 %v68
  %89 = vmatprep.subr.bf16.mxu0 0
  %90 = vmatpush1.bf16.msra.mxu0 %v69
  %91 = vmatprep.subr.bf16.mxu0 0
  %92 = vmatpush1.bf16.msra.mxu0 %v70
  %93 = vmatprep.subr.bf16.mxu0 0
  %94 = vmatpush1.bf16.msra.mxu0 0
  %95 = vmatprep.subr.bf16.mxu0 0
  %96 = vmatpush1.bf16.msra.mxu0 0
  %97 = vmatprep.subr.bf16.mxu0 0
  %98 = vmatpush1.bf16.msra.mxu0 0
  %99 = vmatprep.subr.bf16.mxu0 0
  %100 = vmatpush1.bf16.msra.mxu0 0
  %101 = vmatprep.subr.bf16.mxu0 0
  %102 = vmatpush1.bf16.msra.mxu0 0
  %103 = vmatprep.subr.bf16.mxu0 0
  %104 = vmatpush1.bf16.msra.mxu0 0
  %105 = vmatprep.subr.bf16.mxu0 0
  %106 = vmatpush1.bf16.msra.mxu0 0
  %107 = vmatprep.subr.bf16.mxu0 0
  %108 = vmatpush1.bf16.msra.mxu0 0
  %109 = vmatprep.subr.bf16.mxu0 0
  %110 = vmatpush1.bf16.msra.mxu0 0
  %111 = vmatprep.subr.bf16.mxu0 0
  %112 = vmatpush1.bf16.msra.mxu0 0
  %113 = vmatprep.mubr.bf16.mxu0 0
  %114 = vmatmul.mubr.bf16.gmra.mrb[0].mxu0 %v79
  %v115 = vpop.f32.mrb[0].mxu0
  %v116 = vadd.f32 %v34, %v115
  %v117 = vpop.f32.mrb[0].mxu0
  %v118 = vpop.f32.mrb[0].mxu0
  %v119 = vadd.f32 %v34, %v118
  %v120 = vpop.f32.mrb[0].mxu0
  %121 = vdwg.mxu0
  %v122 = vmul.f32 %v116, 0.5
  %v123 = vmul.f32 %v119, 0.5
  %v124 = vmul.f32 %v116, 0.044715
  %v125 = vmul.f32 %v119, 0.044715
  %v126 = vmul.f32 %v124, %v116
  %v127 = vmul.f32 %v125, %v119
  %v128 = vmul.f32 %v126, %v116
  %v129 = vmul.f32 %v127, %v119
  %v130 = vadd.f32 %v116, %v128
  %v131 = vadd.f32 %v119, %v129
  %v132 = vmul.f32 %v130, 0.7978846
  %v133 = vmul.f32 %v131, 0.7978846
  %v134 = vtanh.pop %v132
  %v135 = vtanh.pop %v133
  %v136 = vadd.f32 %v134, 1.0
  %v137 = vadd.f32 %v135, 1.0
  %v138 = vmul.f32 %v122, %v136
  %v139 = vmul.f32 %v123, %v137
  %v140 = vpack.c.bf16 %v139, %v138
  %v142 = vunpack.c.l.b16 %v140
  %v143 = vunpack.c.h.b16 %v140
  %v144 = vpack.c.b16 %v142, %v142
  %v145 = vpack.c.b16 %v143, %v143
  %vm148 = vcmask 257024
  %149 = vst.msk [vmem:[%s3] sm:$0xf] %vm148, %v144
  %150 = vst.msk [vmem:[%s3 + $0x4] sm:$0xf] %vm148, %v145
  // Predicated region
  $region14: #{sensevoice_forward.103} parent=0 // pred_check
    _
  $region15: #{sensevoice_forward.103} parent=0 // pred_check_branch
    %152 = sbr.rel (0) target = $region17
  $region16: #{sensevoice_forward.103} parent=0 // pred_region
    _
  $region17: #{sensevoice_forward.103} parent=0 // pred_fallthru
    _
  // Predicated region
  $region18: #{sensevoice_forward.103} parent=0 // pred_check
    _
  $region19: #{sensevoice_forward.103} parent=0 // pred_check_branch
    %154 = sbr.rel (0) target = $region21
  $region20: #{sensevoice_forward.103} parent=0 // pred_region
    _
  $region21: #{sensevoice_forward.103} parent=0 // pred_fallthru
    _

// kernel: sensevoice_forward.102
$region0: #{sensevoice_forward.102}
  #allocation0 [shape = 'u32[]', space=smem, size = 0x4, offset = 0x4, fixed_abs, tag = 'smem constant byte address 0x4 - core index']
  #allocation1 [shape = 'u32[144,128]{1,0:T(1,128)}', space=vmem, size = 0x12000, scoped, tag = 'internal scratch']
  %s0 = inlined_call_operand.vmem [shape: bf16[32,48], index: 0, kind: input, shape index: {}]
  %s1 = inlined_call_operand.vmem [shape: bf16[48,32], index: 1, kind: input, shape index: {}]
  %s2 = inlined_call_operand.vmem [shape: f32[1,32], index: 2, kind: input, shape index: {}]
  %s3 = inlined_call_operand.vmem [shape: bf16[32,32], index: 3, kind: output, shape index: {}]
  %s4 = sld [smem:[#allocation0]]
  $region22: #{sensevoice_forward.102} parent=0
    _
  %s6 = ssub.s32 1, %s4
  %s7 = scalar_select 0, %s6, %s4
  // Predicated region
  $region2: #{sensevoice_forward.102} parent=0 // pred_check
    _
  $region3: #{sensevoice_forward.102} parent=0 // pred_check_branch
    %9 = sbr.rel (0) target = $region5
  $region4: #{sensevoice_forward.102} parent=0 // pred_region
    _
  $region5: #{sensevoice_forward.102} parent=0 // pred_fallthru
    _
  // Predicated region
  $region6: #{sensevoice_forward.102} parent=0 // pred_check
    _
  $region7: #{sensevoice_forward.102} parent=0 // pred_check_branch
    %11 = sbr.rel (0) target = $region9
  $region8: #{sensevoice_forward.102} parent=0 // pred_region
    _
  $region9: #{sensevoice_forward.102} parent=0 // pred_fallthru
    _
  // Predicated region
  $region10: #{sensevoice_forward.102} parent=0 // pred_check
    _
  $region11: #{sensevoice_forward.102} parent=0 // pred_check_branch
    %13 = sbr.rel (0) target = $region13
  $region12: #{sensevoice_forward.102} parent=0 // pred_region
    _
  $region13: #{sensevoice_forward.102} parent=0 // pred_fallthru
    _
  %v15 = vld [vmem:[%s0] sm:$0xf]
  %v16 = vld [vmem:[%s0 + $0x4] sm:$0xf]
  %v17 = vld [vmem:[%s0 + $0x8] sm:$0xf]
  %v18 = vld [vmem:[%s0 + $0xc] sm:$0xf]
  %v19 = vld [vmem:[%s1] sm:$0xf]
  %v20 = vld [vmem:[%s1 + $0x4] sm:$0xf]
  %v21 = vld [vmem:[%s1 + $0x8] sm:$0xf]
  %v22 = vld [vmem:[%s1 + $0xc] sm:$0xf]
  %v23 = vld [vmem:[%s1 + $0x10] sm:$0xf]
  %v24 = vld [vmem:[%s1 + $0x14] sm:$0xf]
  %v25 = vld [vmem:[%s2] sm:$0x1]
  %v27 = vlaneseq
  %v28 = vshrl.u32 %v27, 7
  %v29 = vsub.s32 0, %v28
  %v30 = vrot.slane %v25, %v29
  %v36 = vunpack.c.l.b16 %v15
  %v37 = vunpack.c.l.b16 %v16
  %v38 = vunpack.c.l.b16 %v17
  %v39 = vunpack.c.l.b16 %v18
  %v40 = vpack.c.b16 %v37, %v36
  %v41 = vpack.c.b16 %v39, %v38
  %v48 = vunpack.c.l.b16 %v19
  %v49 = vunpack.c.l.b16 %v20
  %v50 = vunpack.c.l.b16 %v21
  %v51 = vunpack.c.l.b16 %v22
  %v52 = vunpack.c.l.b16 %v23
  %v53 = vunpack.c.l.b16 %v24
  %v54 = vpack.c.b16 %v49, %v48
  %v55 = vpack.c.b16 %v51, %v50
  %v56 = vpack.c.b16 %v53, %v52
  %vm60 = vcmask 392192
  %v62 = vsel %vm60, %v40, 0
  %v65 = vsel %vm60, %v41, 0
  %67 = vmatprep.subr.bf16.mxu0 0
  %68 = vmatpush1.bf16.msra.mxu0 %v54
  %69 = vmatprep.subr.bf16.mxu0 0
  %70 = vmatpush1.bf16.msra.mxu0 %v55
  %71 = vmatprep.subr.bf16.mxu0 0
  %72 = vmatpush1.bf16.msra.mxu0 %v56
  %73 = vmatprep.subr.bf16.mxu0 0
  %74 = vmatpush1.bf16.msra.mxu0 0
  %75 = vmatprep.subr.bf16.mxu0 0
  %76 = vmatpush1.bf16.msra.mxu0 0
  %77 = vmatprep.subr.bf16.mxu0 0
  %78 = vmatpush1.bf16.msra.mxu0 0
  %79 = vmatprep.subr.bf16.mxu0 0
  %80 = vmatpush1.bf16.msra.mxu0 0
  %81 = vmatprep.subr.bf16.mxu0 0
  %82 = vmatpush1.bf16.msra.mxu0 0
  %83 = vmatprep.subr.bf16.mxu0 0
  %84 = vmatpush1.bf16.msra.mxu0 0
  %85 = vmatprep.subr.bf16.mxu0 0
  %86 = vmatpush1.bf16.msra.mxu0 0
  %87 = vmatprep.subr.bf16.mxu0 0
  %88 = vmatpush1.bf16.msra.mxu0 0
  %89 = vmatprep.subr.bf16.mxu0 0
  %90 = vmatpush1.bf16.msra.mxu0 0
  %91 = vmatprep.subr.bf16.mxu0 0
  %92 = vmatpush1.bf16.msra.mxu0 0
  %93 = vmatprep.subr.bf16.mxu0 0
  %94 = vmatpush1.bf16.msra.mxu0 0
  %95 = vmatprep.subr.bf16.mxu0 0
  %96 = vmatpush1.bf16.msra.mxu0 0
  %97 = vmatprep.subr.bf16.mxu0 0
  %98 = vmatpush1.bf16.msra.mxu0 0
  %99 = vmatprep.mubr.bf16.mxu0 0
  %100 = vmatmul.mubr.bf16.gmra.mrb[0].mxu0 %v62
  %v101 = vpop.f32.mrb[0].mxu0
  %v102 = vadd.f32 %v30, %v101
  %v103 = vpop.f32.mrb[0].mxu0
  %v104 = vpop.f32.mrb[0].mxu0
  %v105 = vadd.f32 %v30, %v104
  %v106 = vpop.f32.mrb[0].mxu0
  %107 = vmatprep.mubr.bf16.mxu0 0
  %108 = vmatmul.mubr.bf16.gmra.mrb[0].mxu0 %v65
  %v109 = vpop.f32.mrb[0].mxu0
  %v110 = vadd.f32 %v30, %v109
  %v111 = vpop.f32.mrb[0].mxu0
  %v112 = vpop.f32.mrb[0].mxu0
  %v113 = vadd.f32 %v30, %v112
  %v114 = vpop.f32.mrb[0].mxu0
  %115 = vdwg.mxu0
  %v116 = vmul.f32 %v102, 0.5
  %v117 = vmul.f32 %v105, 0.5
  %v118 = vmul.f32 %v110, 0.5
  %v119 = vmul.f32 %v113, 0.5
  %v120 = vmul.f32 %v102, 0.044715
  %v121 = vmul.f32 %v105, 0.044715
  %v122 = vmul.f32 %v110, 0.044715
  %v123 = vmul.f32 %v113, 0.044715
  %v124 = vmul.f32 %v120, %v102
  %v125 = vmul.f32 %v121, %v105
  %v126 = vmul.f32 %v122, %v110
  %v127 = vmul.f32 %v123, %v113
  %v128 = vmul.f32 %v124, %v102
  %v129 = vmul.f32 %v125, %v105
  %v130 = vmul.f32 %v126, %v110
  %v131 = vmul.f32 %v127, %v113
  %v132 = vadd.f32 %v102, %v128
  %v133 = vadd.f32 %v105, %v129
  %v134 = vadd.f32 %v110, %v130
  %v135 = vadd.f32 %v113, %v131
  %v136 = vmul.f32 %v132, 0.7978846
  %v137 = vmul.f32 %v133, 0.7978846
  %v138 = vmul.f32 %v134, 0.7978846
  %v139 = vmul.f32 %v135, 0.7978846
  %v140 = vtanh.pop %v136
  %v141 = vtanh.pop %v137
  %v142 = vtanh.pop %v138
  %v143 = vtanh.pop %v139
  %v144 = vadd.f32 %v140, 1.0
  %v145 = vadd.f32 %v141, 1.0
  %v146 = vadd.f32 %v142, 1.0
  %v147 = vadd.f32 %v143, 1.0
  %v148 = vmul.f32 %v116, %v144
  %v149 = vmul.f32 %v117, %v145
  %v150 = vmul.f32 %v118, %v146
  %v151 = vmul.f32 %v119, %v147
  %v152 = vpack.c.bf16 %v149, %v148
  %v153 = vpack.c.bf16 %v151, %v150
  %v156 = vunpack.c.l.b16 %v152
  %v157 = vunpack.c.h.b16 %v152
  %v158 = vunpack.c.l.b16 %v153
  %v159 = vunpack.c.h.b16 %v153
  %v160 = vpack.c.b16 %v156, %v156
  %v161 = vpack.c.b16 %v157, %v157
  %v162 = vpack.c.b16 %v158, %v158
  %v163 = vpack.c.b16 %v159, %v159
  %vm168 = vcmask 257024
  %169 = vst.msk [vmem:[%s3] sm:$0xf] %vm168, %v160
  %170 = vst.msk [vmem:[%s3 + $0x4] sm:$0xf] %vm168, %v161
  %171 = vst.msk [vmem:[%s3 + $0x8] sm:$0xf] %vm168, %v162
  %172 = vst.msk [vmem:[%s3 + $0xc] sm:$0xf] %vm168, %v163
  // Predicated region
  $region14: #{sensevoice_forward.102} parent=0 // pred_check
    _
  $region15: #{sensevoice_forward.102} parent=0 // pred_check_branch
    %174 = sbr.rel (0) target = $region17
  $region16: #{sensevoice_forward.102} parent=0 // pred_region
    _
  $region17: #{sensevoice_forward.102} parent=0 // pred_fallthru
    _
  // Predicated region
  $region18: #{sensevoice_forward.102} parent=0 // pred_check
    _
  $region19: #{sensevoice_forward.102} parent=0 // pred_check_branch
    %176 = sbr.rel (0) target = $region21
  $region20: #{sensevoice_forward.102} parent=0 // pred_region
    _
  $region21: #{sensevoice_forward.102} parent=0 // pred_fallthru
    _

// kernel: sensevoice_forward.70
$region0: #{sensevoice_forward.70}
  #allocation0 [shape = 'u32[]', space=smem, size = 0x4, offset = 0x4, fixed_abs, tag = 'smem constant byte address 0x4 - core index']
  #allocation1 [shape = 'u32[144,128]{1,0:T(1,128)}', space=vmem, size = 0x12000, scoped, tag = 'internal scratch']
  #allocation2 [shape = 'bf16[16,32]{1,0:T(16,128)(2,1)}', space=vmem, size = 0x1000, scoped, tag = 'scratch operand']
  %s0 = inlined_call_operand.vmem [shape: bf16[16,32], index: 0, kind: input, shape index: {}]
  %s1 = inlined_call_operand.vmem [shape: bf16[32,96], index: 1, kind: input, shape index: {}]
  %s2 = inlined_call_operand.vmem [shape: f32[1,32], index: 2, kind: input, shape index: {}]
  %s3 = inlined_call_operand.vmem [shape: f32[1,32], index: 3, kind: input, shape index: {}]
  %s4 = inlined_call_operand.vmem [shape: f32[1,96], index: 4, kind: input, shape index: {}]
  %s5 = inlined_call_operand.vmem [shape: bf16[16,96], index: 5, kind: output, shape index: {}]
  %s6 = sld [smem:[#allocation0]]
  $region34: #{sensevoice_forward.70} parent=0
    _
  %s8 = ssub.s32 1, %s6
  %s9 = scalar_select 0, %s8, %s6
  // Predicated region
  $region2: #{sensevoice_forward.70} parent=0 // pred_check
    _
  $region3: #{sensevoice_forward.70} parent=0 // pred_check_branch
    %11 = sbr.rel (0) target = $region5
  $region4: #{sensevoice_forward.70} parent=0 // pred_region
    _
  $region5: #{sensevoice_forward.70} parent=0 // pred_fallthru
    _
  // Predicated region
  $region6: #{sensevoice_forward.70} parent=0 // pred_check
    _
  $region7: #{sensevoice_forward.70} parent=0 // pred_check_branch
    %13 = sbr.rel (0) target = $region9
  $region8: #{sensevoice_forward.70} parent=0 // pred_region
    _
  $region9: #{sensevoice_forward.70} parent=0 // pred_fallthru
    _
  // Predicated region
  $region10: #{sensevoice_forward.70} parent=0 // pred_check
    _
  $region11: #{sensevoice_forward.70} parent=0 // pred_check_branch
    %15 = sbr.rel (0) target = $region13
  $region12: #{sensevoice_forward.70} parent=0 // pred_region
    _
  $region13: #{sensevoice_forward.70} parent=0 // pred_fallthru
    _
  // Predicated region
  $region14: #{sensevoice_forward.70} parent=0 // pred_check
    _
  $region15: #{sensevoice_forward.70} parent=0 // pred_check_branch
    %17 = sbr.rel (0) target = $region17
  $region16: #{sensevoice_forward.70} parent=0 // pred_region
    _
  $region17: #{sensevoice_forward.70} parent=0 // pred_fallthru
    _
  // Predicated region
  $region18: #{sensevoice_forward.70} parent=0 // pred_check
    _
  $region19: #{sensevoice_forward.70} parent=0 // pred_check_branch
    %19 = sbr.rel (0) target = $region21
  $region20: #{sensevoice_forward.70} parent=0 // pred_region
    _
  $region21: #{sensevoice_forward.70} parent=0 // pred_fallthru
    _
  %p21 = scmp.eq.s32.totalorder 0, 0
  // Predicated region
  $region22: #{sensevoice_forward.70} parent=0 // pred_check
    %p22 = pneg %p21
  $region23: #{sensevoice_forward.70} parent=0 // pred_check_branch
    %24 = sbr.rel (%p22) target = $region25
  $region24: #{sensevoice_forward.70} parent=0 // pred_region
    %v25 = vld [vmem:[%s0] sm:$0xf]
    %v26 = vld [vmem:[%s0 + $0x4] sm:$0xf]
    %v27 = vunpack.c.l.bf16 %v25
    %v28 = vunpack.c.l.bf16 %v26
    %vm29 = vcmask 261120
    %v30 = vsel %vm29, %v27, 0.0
    %31 = vadd.xlane.f32.xlu0 %v30
    %v32 = vpop.xlane.xlu0 %31
    %v33 = vsel %vm29, %v28, 0.0
    %34 = vadd.xlane.f32.xlu0 %v33
    %v35 = vpop.xlane.xlu0 %34
    %v36 = vrcp.pop 32.0
    %v37 = vmul.f32 %v32, %v36
    %v38 = vmul.f32 %v35, %v36
    %v39 = vsub.f32 %v27, %v37
    %v40 = vsub.f32 %v28, %v38
    %v41 = vmul.f32 %v39, %v39
    %v42 = vmul.f32 %v40, %v40
    %v43 = vsel %vm29, %v41, 0.0
    %44 = vadd.xlane.f32.xlu0 %v43
    %v45 = vpop.xlane.xlu0 %44
    %v46 = vsel %vm29, %v42, 0.0
    %47 = vadd.xlane.f32.xlu0 %v46
    %v48 = vpop.xlane.xlu0 %47
    %v49 = vmul.f32 %v45, %v36
    %v50 = vmul.f32 %v48, %v36
    %v51 = vadd.f32 %v49, 1e-05
    %v52 = vadd.f32 %v50, 1e-05
    %v53 = vrsqrt.pop %v51
    %v54 = vrsqrt.pop %v52
    %v55 = vmul.f32 %v39, %v53
    %v56 = vmul.f32 %v40, %v54
    %v57 = vld [vmem:[%s2] sm:$0x1]
    %v59 = vlaneseq
    %v60 = vshrl.u32 %v59, 7
    %v61 = vsub.s32 0, %v60
    %v62 = vrot.slane %v57, %v61
    %v64 = vmul.f32 %v55, %v62
    %v65 = vmul.f32 %v56, %v62
    %v66 = vld [vmem:[%s3] sm:$0x1]
    %v68 = vlaneseq
    %v69 = vshrl.u32 %v68, 7
    %v70 = vsub.s32 0, %v69
    %v71 = vrot.slane %v66, %v70
    %v73 = vadd.f32 %v64, %v71
    %v74 = vadd.f32 %v65, %v71
    %v75 = vpack.c.bf16 %v74, %v73
    %76 = vst.msk [vmem:[#allocation2] sm:$0xff] %vm29, %v75
  $region25: #{sensevoice_forward.70} parent=0 // pred_fallthru
    _
  %v77 = vld [vmem:[#allocation2] sm:$0xff]
  %v78 = vld [vmem:[%s1] sm:$0xf]
  %v79 = vld [vmem:[%s1 + $0x4] sm:$0xf]
  %v80 = vld [vmem:[%s1 + $0x8] sm:$0xf]
  %v81 = vld [vmem:[%s1 + $0xc] sm:$0xf]
  %v82 = vld [vmem:[%s4] sm:$0x1]
  %v84 = vlaneseq
  %v85 = vshrl.u32 %v84, 7
  %v86 = vsub.s32 0, %v85
  %v87 = vrot.slane %v82, %v86
  %v93 = vunpack.c.l.b16 %v78
  %v94 = vunpack.c.l.b16 %v79
  %v95 = vunpack.c.l.b16 %v80
  %v96 = vunpack.c.l.b16 %v81
  %v97 = vpack.c.b16 %v94, %v93
  %v98 = vpack.c.b16 %v96, %v95
  %vm101 = vcmask 261120
  %v103 = vsel %vm101, %v77, 0
  %105 = vmatprep.subr.bf16.mxu0 0
  %106 = vmatpush1.bf16.msra.mxu0 %v97
  %107 = vmatprep.subr.bf16.mxu0 0
  %108 = vmatpush1.bf16.msra.mxu0 %v98
  %109 = vmatprep.subr.bf16.mxu0 0
  %110 = vmatpush1.bf16.msra.mxu0 0
  %111 = vmatprep.subr.bf16.mxu0 0
  %112 = vmatpush1.bf16.msra.mxu0 0
  %113 = vmatprep.subr.bf16.mxu0 0
  %114 = vmatpush1.bf16.msra.mxu0 0
  %115 = vmatprep.subr.bf16.mxu0 0
  %116 = vmatpush1.bf16.msra.mxu0 0
  %117 = vmatprep.subr.bf16.mxu0 0
  %118 = vmatpush1.bf16.msra.mxu0 0
  %119 = vmatprep.subr.bf16.mxu0 0
  %120 = vmatpush1.bf16.msra.mxu0 0
  %121 = vmatprep.subr.bf16.mxu0 0
  %122 = vmatpush1.bf16.msra.mxu0 0
  %123 = vmatprep.subr.bf16.mxu0 0
  %124 = vmatpush1.bf16.msra.mxu0 0
  %125 = vmatprep.subr.bf16.mxu0 0
  %126 = vmatpush1.bf16.msra.mxu0 0
  %127 = vmatprep.subr.bf16.mxu0 0
  %128 = vmatpush1.bf16.msra.mxu0 0
  %129 = vmatprep.subr.bf16.mxu0 0
  %130 = vmatpush1.bf16.msra.mxu0 0
  %131 = vmatprep.subr.bf16.mxu0 0
  %132 = vmatpush1.bf16.msra.mxu0 0
  %133 = vmatprep.subr.bf16.mxu0 0
  %134 = vmatpush1.bf16.msra.mxu0 0
  %135 = vmatprep.subr.bf16.mxu0 0
  %136 = vmatpush1.bf16.msra.mxu0 0
  %137 = vmatprep.mubr.bf16.mxu0 0
  %138 = vmatmul.mubr.bf16.gmra.mrb[0].mxu0 %v103
  %v139 = vpop.f32.mrb[0].mxu0
  %v140 = vadd.f32 %v87, %v139
  %v141 = vpop.f32.mrb[0].mxu0
  %v142 = vpop.f32.mrb[0].mxu0
  %v143 = vadd.f32 %v87, %v142
  %v144 = vpop.f32.mrb[0].mxu0
  %145 = vdwg.mxu0
  %v146 = vpack.c.bf16 %v143, %v140
  %v148 = vunpack.c.l.b16 %v146
  %v149 = vunpack.c.h.b16 %v146
  %v150 = vpack.c.b16 %v148, %v148
  %v151 = vpack.c.b16 %v149, %v149
  %vm154 = vcmask 781312
  %155 = vst.msk [vmem:[%s5] sm:$0xf] %vm154, %v150
  %156 = vst.msk [vmem:[%s5 + $0x4] sm:$0xf] %vm154, %v151
  // Predicated region
  $region26: #{sensevoice_forward.70} parent=0 // pred_check
    _
  $region27: #{sensevoice_forward.70} parent=0 // pred_check_branch
    %158 = sbr.rel (0) target = $region29
  $region28: #{sensevoice_forward.70} parent=0 // pred_region
    _
  $region29: #{sensevoice_forward.70} parent=0 // pred_fallthru
    _
  // Predicated region
  $region30: #{sensevoice_forward.70} parent=0 // pred_check
    _
  $region31: #{sensevoice_forward.70} parent=0 // pred_check_branch
    %160 = sbr.rel (0) target = $region33
  $region32: #{sensevoice_forward.70} parent=0 // pred_region
    _
  $region33: #{sensevoice_forward.70} parent=0 // pred_fallthru
    _

// kernel: sensevoice_forward.105
$region0: #{sensevoice_forward.105}
  #allocation0 [shape = 'u32[]', space=smem, size = 0x4, offset = 0x4, fixed_abs, tag = 'smem constant byte address 0x4 - core index']
  #allocation1 [shape = 'u32[144,128]{1,0:T(1,128)}', space=vmem, size = 0x12000, scoped, tag = 'internal scratch']
  #allocation2 [shape = 'f32[4,16,1]{2,1,0:T(8,128)}', space=vmem, size = 0x8000, scoped, tag = 'scratch operand']
  #allocation3 [shape = 'f32[4,16,1]{2,1,0:T(8,128)}', space=vmem, size = 0x8000, scoped, tag = 'scratch operand']
  #allocation4 [shape = 'f32[4,16,8]{2,1,0:T(8,128)}', space=vmem, size = 0x8000, scoped, tag = 'scratch operand']
  %s0 = inlined_call_operand.vmem [shape: bf16[16,32], index: 0, kind: input, shape index: {}]
  %s1 = inlined_call_operand.vmem [shape: bf16[16,32], index: 1, kind: input, shape index: {}]
  %s2 = inlined_call_operand.vmem [shape: bf16[16,32], index: 2, kind: input, shape index: {}]
  %s3 = inlined_call_operand.vmem [shape: bf16[16,32], index: 3, kind: output, shape index: {}]
  %s4 = sld [smem:[#allocation0]]
  $region30: #{sensevoice_forward.105} parent=0
    _
  %s6 = ssub.s32 1, %s4
  %s7 = scalar_select 0, %s6, %s4
  // Predicated region
  $region2: #{sensevoice_forward.105} parent=0 // pred_check
    _
  $region3: #{sensevoice_forward.105} parent=0 // pred_check_branch
    %9 = sbr.rel (0) target = $region5
  $region4: #{sensevoice_forward.105} parent=0 // pred_region
    _
  $region5: #{sensevoice_forward.105} parent=0 // pred_fallthru
    _
  // Predicated region
  $region6: #{sensevoice_forward.105} parent=0 // pred_check
    _
  $region7: #{sensevoice_forward.105} parent=0 // pred_check_branch
    %11 = sbr.rel (0) target = $region9
  $region8: #{sensevoice_forward.105} parent=0 // pred_region
    _
  $region9: #{sensevoice_forward.105} parent=0 // pred_fallthru
    _
  // Predicated region
  $region10: #{sensevoice_forward.105} parent=0 // pred_check
    _
  $region11: #{sensevoice_forward.105} parent=0 // pred_check_branch
    %13 = sbr.rel (0) target = $region13
  $region12: #{sensevoice_forward.105} parent=0 // pred_region
    _
  $region13: #{sensevoice_forward.105} parent=0 // pred_fallthru
    _
  %p15 = scmp.eq.s32.totalorder 0, 0
  // Predicated region
  $region14: #{sensevoice_forward.105} parent=0 // pred_check
    %p16 = pneg %p15
  $region15: #{sensevoice_forward.105} parent=0 // pred_check_branch
    %18 = sbr.rel (%p16) target = $region17
  $region16: #{sensevoice_forward.105} parent=0 // pred_region
    %vm19 = vcmask 7168
    %20 = vst.msk [vmem:[#allocation2] sm:$0xff] %vm19, -1e+30
    %21 = vst.msk [vmem:[#allocation2 + $0x8] sm:$0xff] %vm19, -1e+30
    %22 = vst.msk [vmem:[#allocation2 + $0x10] sm:$0xff] %vm19, -1e+30
    %23 = vst.msk [vmem:[#allocation2 + $0x18] sm:$0xff] %vm19, -1e+30
    %24 = vst.msk [vmem:[#allocation2 + $0x20] sm:$0xff] %vm19, -1e+30
    %25 = vst.msk [vmem:[#allocation2 + $0x28] sm:$0xff] %vm19, -1e+30
    %26 = vst.msk [vmem:[#allocation2 + $0x30] sm:$0xff] %vm19, -1e+30
    %27 = vst.msk [vmem:[#allocation2 + $0x38] sm:$0xff] %vm19, -1e+30
    %28 = vst.msk [vmem:[#allocation3] sm:$0xff] %vm19, 0.0
    %29 = vst.msk [vmem:[#allocation3 + $0x8] sm:$0xff] %vm19, 0.0
    %30 = vst.msk [vmem:[#allocation3 + $0x10] sm:$0xff] %vm19, 0.0
    %31 = vst.msk [vmem:[#allocation3 + $0x18] sm:$0xff] %vm19, 0.0
    %32 = vst.msk [vmem:[#allocation3 + $0x20] sm:$0xff] %vm19, 0.0
    %33 = vst.msk [vmem:[#allocation3 + $0x28] sm:$0xff] %vm19, 0.0
    %34 = vst.msk [vmem:[#allocation3 + $0x30] sm:$0xff] %vm19, 0.0
    %35 = vst.msk [vmem:[#allocation3 + $0x38] sm:$0xff] %vm19, 0.0
    %vm36 = vcmask 64512
    %37 = vst.msk [vmem:[#allocation4] sm:$0xff] %vm36, 0.0
    %38 = vst.msk [vmem:[#allocation4 + $0x8] sm:$0xff] %vm36, 0.0
    %39 = vst.msk [vmem:[#allocation4 + $0x10] sm:$0xff] %vm36, 0.0
    %40 = vst.msk [vmem:[#allocation4 + $0x18] sm:$0xff] %vm36, 0.0
    %41 = vst.msk [vmem:[#allocation4 + $0x20] sm:$0xff] %vm36, 0.0
    %42 = vst.msk [vmem:[#allocation4 + $0x28] sm:$0xff] %vm36, 0.0
    %43 = vst.msk [vmem:[#allocation4 + $0x30] sm:$0xff] %vm36, 0.0
    %44 = vst.msk [vmem:[#allocation4 + $0x38] sm:$0xff] %vm36, 0.0
  $region17: #{sensevoice_forward.105} parent=0 // pred_fallthru
    _
  %v45 = vld [vmem:[%s0] sm:$0xf]
  %v46 = vld [vmem:[%s0 + $0x4] sm:$0xf]
  %v47 = vld [vmem:[%s1] sm:$0xf]
  %v48 = vld [vmem:[%s1 + $0x4] sm:$0xf]
  %v51 = vunpack.c.l.b16 %v45
  %v52 = vunpack.c.l.b16 %v46
  %v53 = vpack.c.b16 %v52, %v51
  %v56 = vunpack.c.l.b16 %v47
  %v57 = vunpack.c.l.b16 %v48
  %v58 = vpack.c.b16 %v57, %v56
  %vm59 = vcmask 64512
  %v61 = vsel %vm59, %v53, 0
  %v64 = vsel %vm59, %v58, 0
  %66 = vmatprep.subr.bf16.mxu0 0
  %67 = vmatpush1.bf16.xpose.msra.mxu0 %v64
  %68 = vmatprep.subr.bf16.mxu0 0
  %69 = vmatpush1.bf16.xpose.msra.mxu0 0
  %70 = vmatprep.subr.bf16.mxu0 0
  %71 = vmatpush1.bf16.xpose.msra.mxu0 0
  %72 = vmatprep.subr.bf16.mxu0 0
  %73 = vmatpush1.bf16.xpose.msra.mxu0 0
  %74 = vmatprep.subr.bf16.mxu0 0
  %75 = vmatpush1.bf16.xpose.msra.mxu0 0
  %76 = vmatprep.subr.bf16.mxu0 0
  %77 = vmatpush1.bf16.xpose.msra.mxu0 0
  %78 = vmatprep.subr.bf16.mxu0 0
  %79 = vmatpush1.bf16.xpose.msra.mxu0 0
  %80 = vmatprep.subr.bf16.mxu0 0
  %81 = vmatpush1.bf16.xpose.msra.mxu0 0
  %82 = vmatprep.subr.bf16.mxu0 0
  %83 = vmatpush1.bf16.xpose.msra.mxu0 0
  %84 = vmatprep.subr.bf16.mxu0 0
  %85 = vmatpush1.bf16.xpose.msra.mxu0 0
  %86 = vmatprep.subr.bf16.mxu0 0
  %87 = vmatpush1.bf16.xpose.msra.mxu0 0
  %88 = vmatprep.subr.bf16.mxu0 0
  %89 = vmatpush1.bf16.xpose.msra.mxu0 0
  %90 = vmatprep.subr.bf16.mxu0 0
  %91 = vmatpush1.bf16.xpose.msra.mxu0 0
  %92 = vmatprep.subr.bf16.mxu0 0
  %93 = vmatpush1.bf16.xpose.msra.mxu0 0
  %94 = vmatprep.subr.bf16.mxu0 0
  %95 = vmatpush1.bf16.xpose.msra.mxu0 0
  %96 = vmatprep.subr.bf16.mxu0 0
  %97 = vmatpush1.bf16.xpose.msra.mxu0 0
  %98 = vmatprep.mubr.bf16.mxu0 0
  %99 = vmatmul.mubr.bf16.gmra.mrb[0].mxu0 %v61
  %v100 = vpop.f32.mrb[0].mxu0
  %v101 = vadd.f32 0.0, %v100
  %v102 = vpop.f32.mrb[0].mxu0
  %v103 = vpop.f32.mrb[0].mxu0
  %v104 = vadd.f32 0.0, %v103
  %v105 = vpop.f32.mrb[0].mxu0
  %106 = vdwg.mxu0
  %v107 = vld [vmem:[#allocation2] sm:$0xff]
  %v108 = vld [vmem:[#allocation2 + $0x8] sm:$0xff]
  %vm109 = vcmask 130048
  %v110 = vsel %vm109, %v101, -inf
  %111 = vmax.xlane.f32.xlu0 %v110
  %v112 = vpop.xlane.xlu0 %111
  %v113 = vsel %vm109, %v104, -inf
  %114 = vmax.xlane.f32.xlu0 %v113
  %v115 = vpop.xlane.xlu0 %114
  %v116 = vmax.f32 %v107, %v112
  %v117 = vmax.f32 %v108, %v115
  %v118 = vsub.f32 %v107, %v116
  %v119 = vsub.f32 %v108, %v117
  %v120 = vmul.f32 %v118, 1.442695
  %v121 = vpow.pop %v120
  %v122 = vmul.f32 %v119, 1.442695
  %v123 = vpow.pop %v122
  %125 = vset.pattern.permute.xlu0 0
  %126 = vperm.xlu0 %125, %v116
  %v127 = vpop.permute.xlu0 %126
  %130 = vset.pattern.permute.xlu0 0
  %131 = vperm.xlu0 %130, %v117
  %v132 = vpop.permute.xlu0 %131
  %v134 = vsub.f32 %v101, %v127
  %v135 = vsub.f32 %v104, %v132
  %v136 = vmul.f32 %v134, 1.442695
  %v137 = vpow.pop %v136
  %v138 = vmul.f32 %v135, 1.442695
  %v139 = vpow.pop %v138
  %v140 = vld [vmem:[#allocation3] sm:$0xff]
  %v141 = vld [vmem:[#allocation3 + $0x8] sm:$0xff]
  %v142 = vmul.f32 %v121, %v140
  %v143 = vmul.f32 %v123, %v141
  %v144 = vsel %vm109, %v137, 0.0
  %145 = vadd.xlane.f32.xlu0 %v144
  %v146 = vpop.xlane.xlu0 %145
  %v147 = vsel %vm109, %v139, 0.0
  %148 = vadd.xlane.f32.xlu0 %v147
  %v149 = vpop.xlane.xlu0 %148
  %v150 = vadd.f32 %v142, %v146
  %v151 = vadd.f32 %v143, %v149
  %vm152 = vcmask 7168
  %153 = vst.msk [vmem:[#allocation3] sm:$0xff] %vm152, %v150
  %154 = vst.msk [vmem:[#allocation3 + $0x8] sm:$0xff] %vm152, %v151
  %v155 = vld [vmem:[#allocation4] sm:$0xff]
  %v156 = vld [vmem:[#allocation4 + $0x8] sm:$0xff]
  %158 = vset.pattern.permute.xlu0 0
  %159 = vperm.xlu0 %158, %v121
  %v160 = vpop.permute.xlu0 %159
  %163 = vset.pattern.permute.xlu0 0
  %164 = vperm.xlu0 %163, %v123
  %v165 = vpop.permute.xlu0 %164
  %v167 = vmul.f32 %v160, %v155
  %v168 = vmul.f32 %v165, %v156
  %v169 = vpack.c.bf16 %v139, %v137
  %v170 = vld [vmem:[%s2] sm:$0xf]
  %v171 = vld [vmem:[%s2 + $0x4] sm:$0xf]
  %v174 = vunpack.c.l.b16 %v170
  %v175 = vunpack.c.l.b16 %v171
  %v176 = vpack.c.b16 %v175, %v174
  %v179 = vsel %vm109, %v169, 0
  %181 = vmatprep.subr.bf16.mxu0 0
  %182 = vmatpush1.bf16.msra.mxu0 %v176
  %183 = vmatprep.subr.bf16.mxu0 0
  %184 = vmatpush1.bf16.msra.mxu0 0
  %185 = vmatprep.subr.bf16.mxu0 0
  %186 = vmatpush1.bf16.msra.mxu0 0
  %187 = vmatprep.subr.bf16.mxu0 0
  %188 = vmatpush1.bf16.msra.mxu0 0
  %189 = vmatprep.subr.bf16.mxu0 0
  %190 = vmatpush1.bf16.msra.mxu0 0
  %191 = vmatprep.subr.bf16.mxu0 0
  %192 = vmatpush1.bf16.msra.mxu0 0
  %193 = vmatprep.subr.bf16.mxu0 0
  %194 = vmatpush1.bf16.msra.mxu0 0
  %195 = vmatprep.subr.bf16.mxu0 0
  %196 = vmatpush1.bf16.msra.mxu0 0
  %197 = vmatprep.subr.bf16.mxu0 0
  %198 = vmatpush1.bf16.msra.mxu0 0
  %199 = vmatprep.subr.bf16.mxu0 0
  %200 = vmatpush1.bf16.msra.mxu0 0
  %201 = vmatprep.subr.bf16.mxu0 0
  %202 = vmatpush1.bf16.msra.mxu0 0
  %203 = vmatprep.subr.bf16.mxu0 0
  %204 = vmatpush1.bf16.msra.mxu0 0
  %205 = vmatprep.subr.bf16.mxu0 0
  %206 = vmatpush1.bf16.msra.mxu0 0
  %207 = vmatprep.subr.bf16.mxu0 0
  %208 = vmatpush1.bf16.msra.mxu0 0
  %209 = vmatprep.subr.bf16.mxu0 0
  %210 = vmatpush1.bf16.msra.mxu0 0
  %211 = vmatprep.subr.bf16.mxu0 0
  %212 = vmatpush1.bf16.msra.mxu0 0
  %213 = vmatprep.mubr.bf16.mxu0 0
  %214 = vmatmul.mubr.bf16.gmra.mrb[0].mxu0 %v179
  %v215 = vpop.f32.mrb[0].mxu0
  %v216 = vadd.f32 0.0, %v215
  %v217 = vpop.f32.mrb[0].mxu0
  %v218 = vpop.f32.mrb[0].mxu0
  %v219 = vadd.f32 0.0, %v218
  %v220 = vpop.f32.mrb[0].mxu0
  %221 = vdwg.mxu0
  %v222 = vadd.f32 %v167, %v216
  %v223 = vadd.f32 %v168, %v219
  %224 = vst.msk [vmem:[#allocation4] sm:$0xff] %vm59, %v222
  %225 = vst.msk [vmem:[#allocation4 + $0x8] sm:$0xff] %vm59, %v223
  %226 = vst.msk [vmem:[#allocation2] sm:$0xff] %vm152, %v116
  %227 = vst.msk [vmem:[#allocation2 + $0x8] sm:$0xff] %vm152, %v117
  %v228 = vld [vmem:[%s0] sm:$0xf]
  %v229 = vld [vmem:[%s0 + $0x4] sm:$0xf]
  %v230 = vld [vmem:[%s1] sm:$0xf]
  %v231 = vld [vmem:[%s1 + $0x4] sm:$0xf]
  %v234 = vunpack.c.l.b16 %v228
  %v235 = vunpack.c.l.b16 %v229
  %v236 = vpack.c.b16 %v235, %v234
  %237 = vrot.lane.b32.xlu0 %v236, 120
  %v238 = vpop.permute.xlu0 %237
  %v241 = vunpack.c.l.b16 %v230
  %v242 = vunpack.c.l.b16 %v231
  %v243 = vpack.c.b16 %v242, %v241
  %244 = vrot.lane.b32.xlu0 %v243, 120
  %v245 = vpop.permute.xlu0 %244
  %v247 = vsel %vm59, %v238, 0
  %v250 = vsel %vm59, %v245, 0
  %252 = vmatprep.subr.bf16.mxu0 0
  %253 = vmatpush1.bf16.xpose.msra.mxu0 %v250
  %254 = vmatprep.subr.bf16.mxu0 0
  %255 = vmatpush1.bf16.xpose.msra.mxu0 0
  %256 = vmatprep.subr.bf16.mxu0 0
  %257 = vmatpush1.bf16.xpose.msra.mxu0 0
  %258 = vmatprep.subr.bf16.mxu0 0
  %259 = vmatpush1.bf16.xpose.msra.mxu0 0
  %260 = vmatprep.subr.bf16.mxu0 0
  %261 = vmatpush1.bf16.xpose.msra.mxu0 0
  %262 = vmatprep.subr.bf16.mxu0 0
  %263 = vmatpush1.bf16.xpose.msra.mxu0 0
  %264 = vmatprep.subr.bf16.mxu0 0
  %265 = vmatpush1.bf16.xpose.msra.mxu0 0
  %266 = vmatprep.subr.bf16.mxu0 0
  %267 = vmatpush1.bf16.xpose.msra.mxu0 0
  %268 = vmatprep.subr.bf16.mxu0 0
  %269 = vmatpush1.bf16.xpose.msra.mxu0 0
  %270 = vmatprep.subr.bf16.mxu0 0
  %271 = vmatpush1.bf16.xpose.msra.mxu0 0
  %272 = vmatprep.subr.bf16.mxu0 0
  %273 = vmatpush1.bf16.xpose.msra.mxu0 0
  %274 = vmatprep.subr.bf16.mxu0 0
  %275 = vmatpush1.bf16.xpose.msra.mxu0 0
  %276 = vmatprep.subr.bf16.mxu0 0
  %277 = vmatpush1.bf16.xpose.msra.mxu0 0
  %278 = vmatprep.subr.bf16.mxu0 0
  %279 = vmatpush1.bf16.xpose.msra.mxu0 0
  %280 = vmatprep.subr.bf16.mxu0 0
  %281 = vmatpush1.bf16.xpose.msra.mxu0 0
  %282 = vmatprep.subr.bf16.mxu0 0
  %283 = vmatpush1.bf16.xpose.msra.mxu0 0
  %284 = vmatprep.mubr.bf16.mxu0 0
  %285 = vmatmul.mubr.bf16.gmra.mrb[0].mxu0 %v247
  %v286 = vpop.f32.mrb[0].mxu0
  %v287 = vadd.f32 0.0, %v286
  %v288 = vpop.f32.mrb[0].mxu0
  %v289 = vpop.f32.mrb[0].mxu0
  %v290 = vadd.f32 0.0, %v289
  %v291 = vpop.f32.mrb[0].mxu0
  %292 = vdwg.mxu0
  %s293 = scalar_lea.vmem [#allocation2], 16
  %v294 = vld [vmem:[%s293] sm:$0xff]
  %v295 = vld [vmem:[%s293 + $0x8] sm:$0xff]
  %v296 = vsel %vm109, %v287, -inf
  %297 = vmax.xlane.f32.xlu0 %v296
  %v298 = vpop.xlane.xlu0 %297
  %v299 = vsel %vm109, %v290, -inf
  %300 = vmax.xlane.f32.xlu0 %v299
  %v301 = vpop.xlane.xlu0 %300
  %v302 = vmax.f32 %v294, %v298
  %v303 = vmax.f32 %v295, %v301
  %v304 = vsub.f32 %v294, %v302
  %v305 = vsub.f32 %v295, %v303
  %v306 = vmul.f32 %v304, 1.442695
  %v307 = vpow.pop %v306
  %v308 = vmul.f32 %v305, 1.442695
  %v309 = vpow.pop %v308
  %311 = vset.pattern.permute.xlu0 0
  %312 = vperm.xlu0 %311, %v302
  %v313 = vpop.permute.xlu0 %312
  %316 = vset.pattern.permute.xlu0 0
  %317 = vperm.xlu0 %316, %v303
  %v318 = vpop.permute.xlu0 %317
  %v320 = vsub.f32 %v287, %v313
  %v321 = vsub.f32 %v290, %v318
  %v322 = vmul.f32 %v320, 1.442695
  %v323 = vpow.pop %v322
  %v324 = vmul.f32 %v321, 1.442695
  %v325 = vpow.pop %v324
  %s326 = scalar_lea.vmem [#allocation3], 16
  %v327 = vld [vmem:[%s326] sm:$0xff]
  %v328 = vld [vmem:[%s326 + $0x8] sm:$0xff]
  %v329 = vmul.f32 %v307, %v327
  %v330 = vmul.f32 %v309, %v328
  %v331 = vsel %vm109, %v323, 0.0
  %332 = vadd.xlane.f32.xlu0 %v331
  %v333 = vpop.xlane.xlu0 %332
  %v334 = vsel %vm109, %v325, 0.0
  %335 = vadd.xlane.f32.xlu0 %v334
  %v336 = vpop.xlane.xlu0 %335
  %v337 = vadd.f32 %v329, %v333
  %v338 = vadd.f32 %v330, %v336
  %339 = vst.msk [vmem:[%s326] sm:$0xff] %vm152, %v337
  %340 = vst.msk [vmem:[%s326 + $0x8] sm:$0xff] %vm152, %v338
  %s341 = scalar_lea.vmem [#allocation4], 16
  %v342 = vld [vmem:[%s341] sm:$0xff]
  %v343 = vld [vmem:[%s341 + $0x8] sm:$0xff]
  %345 = vset.pattern.permute.xlu0 0
  %346 = vperm.xlu0 %345, %v307
  %v347 = vpop.permute.xlu0 %346
  %350 = vset.pattern.permute.xlu0 0
  %351 = vperm.xlu0 %350, %v309
  %v352 = vpop.permute.xlu0 %351
  %v354 = vmul.f32 %v347, %v342
  %v355 = vmul.f32 %v352, %v343
  %v356 = vpack.c.bf16 %v325, %v323
  %v357 = vld [vmem:[%s2] sm:$0xf]
  %v358 = vld [vmem:[%s2 + $0x4] sm:$0xf]
  %v361 = vunpack.c.l.b16 %v357
  %v362 = vunpack.c.l.b16 %v358
  %v363 = vpack.c.b16 %v362, %v361
  %364 = vrot.lane.b32.xlu0 %v363, 120
  %v365 = vpop.permute.xlu0 %364
  %v368 = vsel %vm109, %v356, 0
  %370 = vmatprep.subr.bf16.mxu0 0
  %371 = vmatpush1.bf16.msra.mxu0 %v365
  %372 = vmatprep.subr.bf16.mxu0 0
  %373 = vmatpush1.bf16.msra.mxu0 0
  %374 = vmatprep.subr.bf16.mxu0 0
  %375 = vmatpush1.bf16.msra.mxu0 0
  %376 = vmatprep.subr.bf16.mxu0 0
  %377 = vmatpush1.bf16.msra.mxu0 0
  %378 = vmatprep.subr.bf16.mxu0 0
  %379 = vmatpush1.bf16.msra.mxu0 0
  %380 = vmatprep.subr.bf16.mxu0 0
  %381 = vmatpush1.bf16.msra.mxu0 0
  %382 = vmatprep.subr.bf16.mxu0 0
  %383 = vmatpush1.bf16.msra.mxu0 0
  %384 = vmatprep.subr.bf16.mxu0 0
  %385 = vmatpush1.bf16.msra.mxu0 0
  %386 = vmatprep.subr.bf16.mxu0 0
  %387 = vmatpush1.bf16.msra.mxu0 0
  %388 = vmatprep.subr.bf16.mxu0 0
  %389 = vmatpush1.bf16.msra.mxu0 0
  %390 = vmatprep.subr.bf16.mxu0 0
  %391 = vmatpush1.bf16.msra.mxu0 0
  %392 = vmatprep.subr.bf16.mxu0 0
  %393 = vmatpush1.bf16.msra.mxu0 0
  %394 = vmatprep.subr.bf16.mxu0 0
  %395 = vmatpush1.bf16.msra.mxu0 0
  %396 = vmatprep.subr.bf16.mxu0 0
  %397 = vmatpush1.bf16.msra.mxu0 0
  %398 = vmatprep.subr.bf16.mxu0 0
  %399 = vmatpush1.bf16.msra.mxu0 0
  %400 = vmatprep.subr.bf16.mxu0 0
  %401 = vmatpush1.bf16.msra.mxu0 0
  %402 = vmatprep.mubr.bf16.mxu0 0
  %403 = vmatmul.mubr.bf16.gmra.mrb[0].mxu0 %v368
  %v404 = vpop.f32.mrb[0].mxu0
  %v405 = vadd.f32 0.0, %v404
  %v406 = vpop.f32.mrb[0].mxu0
  %v407 = vpop.f32.mrb[0].mxu0
  %v408 = vadd.f32 0.0, %v407
  %v409 = vpop.f32.mrb[0].mxu0
  %410 = vdwg.mxu0
  %v411 = vadd.f32 %v354, %v405
  %v412 = vadd.f32 %v355, %v408
  %413 = vst.msk [vmem:[%s341] sm:$0xff] %vm59, %v411
  %414 = vst.msk [vmem:[%s341 + $0x8] sm:$0xff] %vm59, %v412
  %415 = vst.msk [vmem:[%s293] sm:$0xff] %vm152, %v302
  %416 = vst.msk [vmem:[%s293 + $0x8] sm:$0xff] %vm152, %v303
  %v417 = vld [vmem:[%s0] sm:$0xf]
  %v418 = vld [vmem:[%s0 + $0x4] sm:$0xf]
  %v419 = vld [vmem:[%s1] sm:$0xf]
  %v420 = vld [vmem:[%s1 + $0x4] sm:$0xf]
  %v423 = vunpack.c.l.b16 %v417
  %v424 = vunpack.c.l.b16 %v418
  %v425 = vpack.c.b16 %v424, %v423
  %426 = vrot.lane.b32.xlu0 %v425, 112
  %v427 = vpop.permute.xlu0 %426
  %v430 = vunpack.c.l.b16 %v419
  %v431 = vunpack.c.l.b16 %v420
  %v432 = vpack.c.b16 %v431, %v430
  %433 = vrot.lane.b32.xlu0 %v432, 112
  %v434 = vpop.permute.xlu0 %433
  %v436 = vsel %vm59, %v427, 0
  %v439 = vsel %vm59, %v434, 0
  %441 = vmatprep.subr.bf16.mxu0 0
  %442 = vmatpush1.bf16.xpose.msra.mxu0 %v439
  %443 = vmatprep.subr.bf16.mxu0 0
  %444 = vmatpush1.bf16.xpose.msra.mxu0 0
  %445 = vmatprep.subr.bf16.mxu0 0
  %446 = vmatpush1.bf16.xpose.msra.mxu0 0
  %447 = vmatprep.subr.bf16.mxu0 0
  %448 = vmatpush1.bf16.xpose.msra.mxu0 0
  %449 = vmatprep.subr.bf16.mxu0 0
  %450 = vmatpush1.bf16.xpose.msra.mxu0 0
  %451 = vmatprep.subr.bf16.mxu0 0
  %452 = vmatpush1.bf16.xpose.msra.mxu0 0
  %453 = vmatprep.subr.bf16.mxu0 0
  %454 = vmatpush1.bf16.xpose.msra.mxu0 0
  %455 = vmatprep.subr.bf16.mxu0 0
  %456 = vmatpush1.bf16.xpose.msra.mxu0 0
  %457 = vmatprep.subr.bf16.mxu0 0
  %458 = vmatpush1.bf16.xpose.msra.mxu0 0
  %459 = vmatprep.subr.bf16.mxu0 0
  %460 = vmatpush1.bf16.xpose.msra.mxu0 0
  %461 = vmatprep.subr.bf16.mxu0 0
  %462 = vmatpush1.bf16.xpose.msra.mxu0 0
  %463 = vmatprep.subr.bf16.mxu0 0
  %464 = vmatpush1.bf16.xpose.msra.mxu0 0
  %465 = vmatprep.subr.bf16.mxu0 0
  %466 = vmatpush1.bf16.xpose.msra.mxu0 0
  %467 = vmatprep.subr.bf16.mxu0 0
  %468 = vmatpush1.bf16.xpose.msra.mxu0 0
  %469 = vmatprep.subr.bf16.mxu0 0
  %470 = vmatpush1.bf16.xpose.msra.mxu0 0
  %471 = vmatprep.subr.bf16.mxu0 0
  %472 = vmatpush1.bf16.xpose.msra.mxu0 0
  %473 = vmatprep.mubr.bf16.mxu0 0
  %474 = vmatmul.mubr.bf16.gmra.mrb[0].mxu0 %v436
  %v475 = vpop.f32.mrb[0].mxu0
  %v476 = vadd.f32 0.0, %v475
  %v477 = vpop.f32.mrb[0].mxu0
  %v478 = vpop.f32.mrb[0].mxu0
  %v479 = vadd.f32 0.0, %v478
  %v480 = vpop.f32.mrb[0].mxu0
  %481 = vdwg.mxu0
  %s482 = scalar_lea.vmem [#allocation2], 32
  %v483 = vld [vmem:[%s482] sm:$0xff]
  %v484 = vld [vmem:[%s482 + $0x8] sm:$0xff]
  %v485 = vsel %vm109, %v476, -inf
  %486 = vmax.xlane.f32.xlu0 %v485
  %v487 = vpop.xlane.xlu0 %486
  %v488 = vsel %vm109, %v479, -inf
  %489 = vmax.xlane.f32.xlu0 %v488
  %v490 = vpop.xlane.xlu0 %489
  %v491 = vmax.f32 %v483, %v487
  %v492 = vmax.f32 %v484, %v490
  %v493 = vsub.f32 %v483, %v491
  %v494 = vsub.f32 %v484, %v492
  %v495 = vmul.f32 %v493, 1.442695
  %v496 = vpow.pop %v495
  %v497 = vmul.f32 %v494, 1.442695
  %v498 = vpow.pop %v497
  %500 = vset.pattern.permute.xlu0 0
  %501 = vperm.xlu0 %500, %v491
  %v502 = vpop.permute.xlu0 %501
  %505 = vset.pattern.permute.xlu0 0
  %506 = vperm.xlu0 %505, %v492
  %v507 = vpop.permute.xlu0 %506
  %v509 = vsub.f32 %v476, %v502
  %v510 = vsub.f32 %v479, %v507
  %v511 = vmul.f32 %v509, 1.442695
  %v512 = vpow.pop %v511
  %v513 = vmul.f32 %v510, 1.442695
  %v514 = vpow.pop %v513
  %s515 = scalar_lea.vmem [#allocation3], 32
  %v516 = vld [vmem:[%s515] sm:$0xff]
  %v517 = vld [vmem:[%s515 + $0x8] sm:$0xff]
  %v518 = vmul.f32 %v496, %v516
  %v519 = vmul.f32 %v498, %v517
  %v520 = vsel %vm109, %v512, 0.0
  %521 = vadd.xlane.f32.xlu0 %v520
  %v522 = vpop.xlane.xlu0 %521
  %v523 = vsel %vm109, %v514, 0.0
  %524 = vadd.xlane.f32.xlu0 %v523
  %v525 = vpop.xlane.xlu0 %524
  %v526 = vadd.f32 %v518, %v522
  %v527 = vadd.f32 %v519, %v525
  %528 = vst.msk [vmem:[%s515] sm:$0xff] %vm152, %v526
  %529 = vst.msk [vmem:[%s515 + $0x8] sm:$0xff] %vm152, %v527
  %s530 = scalar_lea.vmem [#allocation4], 32
  %v531 = vld [vmem:[%s530] sm:$0xff]
  %v532 = vld [vmem:[%s530 + $0x8] sm:$0xff]
  %534 = vset.pattern.permute.xlu0 0
  %535 = vperm.xlu0 %534, %v496
  %v536 = vpop.permute.xlu0 %535
  %539 = vset.pattern.permute.xlu0 0
  %540 = vperm.xlu0 %539, %v498
  %v541 = vpop.permute.xlu0 %540
  %v543 = vmul.f32 %v536, %v531
  %v544 = vmul.f32 %v541, %v532
  %v545 = vpack.c.bf16 %v514, %v512
  %v546 = vld [vmem:[%s2] sm:$0xf]
  %v547 = vld [vmem:[%s2 + $0x4] sm:$0xf]
  %v550 = vunpack.c.l.b16 %v546
  %v551 = vunpack.c.l.b16 %v547
  %v552 = vpack.c.b16 %v551, %v550
  %553 = vrot.lane.b32.xlu0 %v552, 112
  %v554 = vpop.permute.xlu0 %553
  %v557 = vsel %vm109, %v545, 0
  %559 = vmatprep.subr.bf16.mxu0 0
  %560 = vmatpush1.bf16.msra.mxu0 %v554
  %561 = vmatprep.subr.bf16.mxu0 0
  %562 = vmatpush1.bf16.msra.mxu0 0
  %563 = vmatprep.subr.bf16.mxu0 0
  %564 = vmatpush1.bf16.msra.mxu0 0
  %565 = vmatprep.subr.bf16.mxu0 0
  %566 = vmatpush1.bf16.msra.mxu0 0
  %567 = vmatprep.subr.bf16.mxu0 0
  %568 = vmatpush1.bf16.msra.mxu0 0
  %569 = vmatprep.subr.bf16.mxu0 0
  %570 = vmatpush1.bf16.msra.mxu0 0
  %571 = vmatprep.subr.bf16.mxu0 0
  %572 = vmatpush1.bf16.msra.mxu0 0
  %573 = vmatprep.subr.bf16.mxu0 0
  %574 = vmatpush1.bf16.msra.mxu0 0
  %575 = vmatprep.subr.bf16.mxu0 0
  %576 = vmatpush1.bf16.msra.mxu0 0
  %577 = vmatprep.subr.bf16.mxu0 0
  %578 = vmatpush1.bf16.msra.mxu0 0
  %579 = vmatprep.subr.bf16.mxu0 0
  %580 = vmatpush1.bf16.msra.mxu0 0
  %581 = vmatprep.subr.bf16.mxu0 0
  %582 = vmatpush1.bf16.msra.mxu0 0
  %583 = vmatprep.subr.bf16.mxu0 0
  %584 = vmatpush1.bf16.msra.mxu0 0
  %585 = vmatprep.subr.bf16.mxu0 0
  %586 = vmatpush1.bf16.msra.mxu0 0
  %587 = vmatprep.subr.bf16.mxu0 0
  %588 = vmatpush1.bf16.msra.mxu0 0
  %589 = vmatprep.subr.bf16.mxu0 0
  %590 = vmatpush1.bf16.msra.mxu0 0
  %591 = vmatprep.mubr.bf16.mxu0 0
  %592 = vmatmul.mubr.bf16.gmra.mrb[0].mxu0 %v557
  %v593 = vpop.f32.mrb[0].mxu0
  %v594 = vadd.f32 0.0, %v593
  %v595 = vpop.f32.mrb[0].mxu0
  %v596 = vpop.f32.mrb[0].mxu0
  %v597 = vadd.f32 0.0, %v596
  %v598 = vpop.f32.mrb[0].mxu0
  %599 = vdwg.mxu0
  %v600 = vadd.f32 %v543, %v594
  %v601 = vadd.f32 %v544, %v597
  %602 = vst.msk [vmem:[%s530] sm:$0xff] %vm59, %v600
  %603 = vst.msk [vmem:[%s530 + $0x8] sm:$0xff] %vm59, %v601
  %604 = vst.msk [vmem:[%s482] sm:$0xff] %vm152, %v491
  %605 = vst.msk [vmem:[%s482 + $0x8] sm:$0xff] %vm152, %v492
  %v606 = vld [vmem:[%s0] sm:$0xf]
  %v607 = vld [vmem:[%s0 + $0x4] sm:$0xf]
  %v608 = vld [vmem:[%s1] sm:$0xf]
  %v609 = vld [vmem:[%s1 + $0x4] sm:$0xf]
  %v612 = vunpack.c.l.b16 %v606
  %v613 = vunpack.c.l.b16 %v607
  %v614 = vpack.c.b16 %v613, %v612
  %615 = vrot.lane.b32.xlu0 %v614, 104
  %v616 = vpop.permute.xlu0 %615
  %v619 = vunpack.c.l.b16 %v608
  %v620 = vunpack.c.l.b16 %v609
  %v621 = vpack.c.b16 %v620, %v619
  %622 = vrot.lane.b32.xlu0 %v621, 104
  %v623 = vpop.permute.xlu0 %622
  %v625 = vsel %vm59, %v616, 0
  %v628 = vsel %vm59, %v623, 0
  %630 = vmatprep.subr.bf16.mxu0 0
  %631 = vmatpush1.bf16.xpose.msra.mxu0 %v628
  %632 = vmatprep.subr.bf16.mxu0 0
  %633 = vmatpush1.bf16.xpose.msra.mxu0 0
  %634 = vmatprep.subr.bf16.mxu0 0
  %635 = vmatpush1.bf16.xpose.msra.mxu0 0
  %636 = vmatprep.subr.bf16.mxu0 0
  %637 = vmatpush1.bf16.xpose.msra.mxu0 0
  %638 = vmatprep.subr.bf16.mxu0 0
  %639 = vmatpush1.bf16.xpose.msra.mxu0 0
  %640 = vmatprep.subr.bf16.mxu0 0
  %641 = vmatpush1.bf16.xpose.msra.mxu0 0
  %642 = vmatprep.subr.bf16.mxu0 0
  %643 = vmatpush1.bf16.xpose.msra.mxu0 0
  %644 = vmatprep.subr.bf16.mxu0 0
  %645 = vmatpush1.bf16.xpose.msra.mxu0 0
  %646 = vmatprep.subr.bf16.mxu0 0
  %647 = vmatpush1.bf16.xpose.msra.mxu0 0
  %648 = vmatprep.subr.bf16.mxu0 0
  %649 = vmatpush1.bf16.xpose.msra.mxu0 0
  %650 = vmatprep.subr.bf16.mxu0 0
  %651 = vmatpush1.bf16.xpose.msra.mxu0 0
  %652 = vmatprep.subr.bf16.mxu0 0
  %653 = vmatpush1.bf16.xpose.msra.mxu0 0
  %654 = vmatprep.subr.bf16.mxu0 0
  %655 = vmatpush1.bf16.xpose.msra.mxu0 0
  %656 = vmatprep.subr.bf16.mxu0 0
  %657 = vmatpush1.bf16.xpose.msra.mxu0 0
  %658 = vmatprep.subr.bf16.mxu0 0
  %659 = vmatpush1.bf16.xpose.msra.mxu0 0
  %660 = vmatprep.subr.bf16.mxu0 0
  %661 = vmatpush1.bf16.xpose.msra.mxu0 0
  %662 = vmatprep.mubr.bf16.mxu0 0
  %663 = vmatmul.mubr.bf16.gmra.mrb[0].mxu0 %v625
  %v664 = vpop.f32.mrb[0].mxu0
  %v665 = vadd.f32 0.0, %v664
  %v666 = vpop.f32.mrb[0].mxu0
  %v667 = vpop.f32.mrb[0].mxu0
  %v668 = vadd.f32 0.0, %v667
  %v669 = vpop.f32.mrb[0].mxu0
  %670 = vdwg.mxu0
  %s671 = scalar_lea.vmem [#allocation2], 48
  %v672 = vld [vmem:[%s671] sm:$0xff]
  %v673 = vld [vmem:[%s671 + $0x8] sm:$0xff]
  %v674 = vsel %vm109, %v665, -inf
  %675 = vmax.xlane.f32.xlu0 %v674
  %v676 = vpop.xlane.xlu0 %675
  %v677 = vsel %vm109, %v668, -inf
  %678 = vmax.xlane.f32.xlu0 %v677
  %v679 = vpop.xlane.xlu0 %678
  %v680 = vmax.f32 %v672, %v676
  %v681 = vmax.f32 %v673, %v679
  %v682 = vsub.f32 %v672, %v680
  %v683 = vsub.f32 %v673, %v681
  %v684 = vmul.f32 %v682, 1.442695
  %v685 = vpow.pop %v684
  %v686 = vmul.f32 %v683, 1.442695
  %v687 = vpow.pop %v686
  %689 = vset.pattern.permute.xlu0 0
  %690 = vperm.xlu0 %689, %v680
  %v691 = vpop.permute.xlu0 %690
  %694 = vset.pattern.permute.xlu0 0
  %695 = vperm.xlu0 %694, %v681
  %v696 = vpop.permute.xlu0 %695
  %v698 = vsub.f32 %v665, %v691
  %v699 = vsub.f32 %v668, %v696
  %v700 = vmul.f32 %v698, 1.442695
  %v701 = vpow.pop %v700
  %v702 = vmul.f32 %v699, 1.442695
  %v703 = vpow.pop %v702
  %s704 = scalar_lea.vmem [#allocation3], 48
  %v705 = vld [vmem:[%s704] sm:$0xff]
  %v706 = vld [vmem:[%s704 + $0x8] sm:$0xff]
  %v707 = vmul.f32 %v685, %v705
  %v708 = vmul.f32 %v687, %v706
  %v709 = vsel %vm109, %v701, 0.0
  %710 = vadd.xlane.f32.xlu0 %v709
  %v711 = vpop.xlane.xlu0 %710
  %v712 = vsel %vm109, %v703, 0.0
  %713 = vadd.xlane.f32.xlu0 %v712
  %v714 = vpop.xlane.xlu0 %713
  %v715 = vadd.f32 %v707, %v711
  %v716 = vadd.f32 %v708, %v714
  %717 = vst.msk [vmem:[%s704] sm:$0xff] %vm152, %v715
  %718 = vst.msk [vmem:[%s704 + $0x8] sm:$0xff] %vm152, %v716
  %s719 = scalar_lea.vmem [#allocation4], 48
  %v720 = vld [vmem:[%s719] sm:$0xff]
  %v721 = vld [vmem:[%s719 + $0x8] sm:$0xff]
  %723 = vset.pattern.permute.xlu0 0
  %724 = vperm.xlu0 %723, %v685
  %v725 = vpop.permute.xlu0 %724
  %728 = vset.pattern.permute.xlu0 0
  %729 = vperm.xlu0 %728, %v687
  %v730 = vpop.permute.xlu0 %729
  %v732 = vmul.f32 %v725, %v720
  %v733 = vmul.f32 %v730, %v721
  %v734 = vpack.c.bf16 %v703, %v701
  %v735 = vld [vmem:[%s2] sm:$0xf]
  %v736 = vld [vmem:[%s2 + $0x4] sm:$0xf]
  %v739 = vunpack.c.l.b16 %v735
  %v740 = vunpack.c.l.b16 %v736
  %v741 = vpack.c.b16 %v740, %v739
  %742 = vrot.lane.b32.xlu0 %v741, 104
  %v743 = vpop.permute.xlu0 %742
  %v746 = vsel %vm109, %v734, 0
  %748 = vmatprep.subr.bf16.mxu0 0
  %749 = vmatpush1.bf16.msra.mxu0 %v743
  %750 = vmatprep.subr.bf16.mxu0 0
  %751 = vmatpush1.bf16.msra.mxu0 0
  %752 = vmatprep.subr.bf16.mxu0 0
  %753 = vmatpush1.bf16.msra.mxu0 0
  %754 = vmatprep.subr.bf16.mxu0 0
  %755 = vmatpush1.bf16.msra.mxu0 0
  %756 = vmatprep.subr.bf16.mxu0 0
  %757 = vmatpush1.bf16.msra.mxu0 0
  %758 = vmatprep.subr.bf16.mxu0 0
  %759 = vmatpush1.bf16.msra.mxu0 0
  %760 = vmatprep.subr.bf16.mxu0 0
  %761 = vmatpush1.bf16.msra.mxu0 0
  %762 = vmatprep.subr.bf16.mxu0 0
  %763 = vmatpush1.bf16.msra.mxu0 0
  %764 = vmatprep.subr.bf16.mxu0 0
  %765 = vmatpush1.bf16.msra.mxu0 0
  %766 = vmatprep.subr.bf16.mxu0 0
  %767 = vmatpush1.bf16.msra.mxu0 0
  %768 = vmatprep.subr.bf16.mxu0 0
  %769 = vmatpush1.bf16.msra.mxu0 0
  %770 = vmatprep.subr.bf16.mxu0 0
  %771 = vmatpush1.bf16.msra.mxu0 0
  %772 = vmatprep.subr.bf16.mxu0 0
  %773 = vmatpush1.bf16.msra.mxu0 0
  %774 = vmatprep.subr.bf16.mxu0 0
  %775 = vmatpush1.bf16.msra.mxu0 0
  %776 = vmatprep.subr.bf16.mxu0 0
  %777 = vmatpush1.bf16.msra.mxu0 0
  %778 = vmatprep.subr.bf16.mxu0 0
  %779 = vmatpush1.bf16.msra.mxu0 0
  %780 = vmatprep.mubr.bf16.mxu0 0
  %781 = vmatmul.mubr.bf16.gmra.mrb[0].mxu0 %v746
  %v782 = vpop.f32.mrb[0].mxu0
  %v783 = vadd.f32 0.0, %v782
  %v784 = vpop.f32.mrb[0].mxu0
  %v785 = vpop.f32.mrb[0].mxu0
  %v786 = vadd.f32 0.0, %v785
  %v787 = vpop.f32.mrb[0].mxu0
  %788 = vdwg.mxu0
  %v789 = vadd.f32 %v732, %v783
  %v790 = vadd.f32 %v733, %v786
  %791 = vst.msk [vmem:[%s719] sm:$0xff] %vm59, %v789
  %792 = vst.msk [vmem:[%s719 + $0x8] sm:$0xff] %vm59, %v790
  %793 = vst.msk [vmem:[%s671] sm:$0xff] %vm152, %v680
  %794 = vst.msk [vmem:[%s671 + $0x8] sm:$0xff] %vm152, %v681
  // Predicated region
  $region18: #{sensevoice_forward.105} parent=0 // pred_check
    %p795 = pneg %p15
  $region19: #{sensevoice_forward.105} parent=0 // pred_check_branch
    %797 = sbr.rel (%p795) target = $region21
  $region20: #{sensevoice_forward.105} parent=0 // pred_region
    %v798 = vld [vmem:[#allocation4] sm:$0xff]
    %v799 = vld [vmem:[#allocation4 + $0x8] sm:$0xff]
    %v800 = vld [vmem:[#allocation3] sm:$0xff]
    %v801 = vld [vmem:[#allocation3 + $0x8] sm:$0xff]
    %803 = vset.pattern.permute.xlu0 0
    %804 = vperm.xlu0 %803, %v800
    %v805 = vpop.permute.xlu0 %804
    %808 = vset.pattern.permute.xlu0 0
    %809 = vperm.xlu0 %808, %v801
    %v810 = vpop.permute.xlu0 %809
    %v812 = vrcp.pop %v805
    %v813 = vmul.f32 %v798, %v812
    %v814 = vrcp.pop %v810
    %v815 = vmul.f32 %v799, %v814
    %v816 = vld [vmem:[%s341] sm:$0xff]
    %v817 = vld [vmem:[%s341 + $0x8] sm:$0xff]
    %v818 = vld [vmem:[%s326] sm:$0xff]
    %v819 = vld [vmem:[%s326 + $0x8] sm:$0xff]
    %821 = vset.pattern.permute.xlu0 0
    %822 = vperm.xlu0 %821, %v818
    %v823 = vpop.permute.xlu0 %822
    %826 = vset.pattern.permute.xlu0 0
    %827 = vperm.xlu0 %826, %v819
    %v828 = vpop.permute.xlu0 %827
    %v830 = vrcp.pop %v823
    %v831 = vmul.f32 %v816, %v830
    %v832 = vrcp.pop %v828
    %v833 = vmul.f32 %v817, %v832
    %v834 = vld [vmem:[%s530] sm:$0xff]
    %v835 = vld [vmem:[%s530 + $0x8] sm:$0xff]
    %v836 = vld [vmem:[%s515] sm:$0xff]
    %v837 = vld [vmem:[%s515 + $0x8] sm:$0xff]
    %839 = vset.pattern.permute.xlu0 0
    %840 = vperm.xlu0 %839, %v836
    %v841 = vpop.permute.xlu0 %840
    %844 = vset.pattern.permute.xlu0 0
    %845 = vperm.xlu0 %844, %v837
    %v846 = vpop.permute.xlu0 %845
    %v848 = vrcp.pop %v841
    %v849 = vmul.f32 %v834, %v848
    %v850 = vrcp.pop %v846
    %v851 = vmul.f32 %v835, %v850
    %v852 = vld [vmem:[%s719] sm:$0xff]
    %v853 = vld [vmem:[%s719 + $0x8] sm:$0xff]
    %v854 = vld [vmem:[%s704] sm:$0xff]
    %v855 = vld [vmem:[%s704 + $0x8] sm:$0xff]
    %857 = vset.pattern.permute.xlu0 0
    %858 = vperm.xlu0 %857, %v854
    %v859 = vpop.permute.xlu0 %858
    %862 = vset.pattern.permute.xlu0 0
    %863 = vperm.xlu0 %862, %v855
    %v864 = vpop.permute.xlu0 %863
    %v866 = vrcp.pop %v859
    %v867 = vmul.f32 %v852, %v866
    %v868 = vrcp.pop %v864
    %v869 = vmul.f32 %v853, %v868
    %872 = vrot.lane.b32.xlu0 %v831, 8
    %v873 = vpop.permute.xlu0 %872
    %874 = vrot.lane.b32.xlu0 %v833, 8
    %v875 = vpop.permute.xlu0 %874
    %880 = vrot.lane.b32.xlu0 %v849, 16
    %v881 = vpop.permute.xlu0 %880
    %882 = vrot.lane.b32.xlu0 %v851, 16
    %v883 = vpop.permute.xlu0 %882
    %888 = vrot.lane.b32.xlu0 %v867, 24
    %v889 = vpop.permute.xlu0 %888
    %890 = vrot.lane.b32.xlu0 %v869, 24
    %v891 = vpop.permute.xlu0 %890
    %v894 = vsel %vm59, %v813, %v873
    %v895 = vsel %vm59, %v815, %v875
    %v896 = vsel %vm109, %v894, %v881
    %v897 = vsel %vm109, %v895, %v883
    %vm898 = vcmask 195584
    %v899 = vsel %vm898, %v896, %v889
    %v900 = vsel %vm898, %v897, %v891
    %v901 = vpack.c.bf16 %v900, %v899
    %v903 = vunpack.c.l.b16 %v901
    %v904 = vunpack.c.h.b16 %v901
    %v905 = vpack.c.b16 %v903, %v903
    %v906 = vpack.c.b16 %v904, %v904
    %vm909 = vcmask 257024
    %910 = vst.msk [vmem:[%s3] sm:$0xf] %vm909, %v905
    %911 = vst.msk [vmem:[%s3 + $0x4] sm:$0xf] %vm909, %v906
  $region21: #{sensevoice_forward.105} parent=0 // pred_fallthru
    _
  // Predicated region
  $region22: #{sensevoice_forward.105} parent=0 // pred_check
    _
  $region23: #{sensevoice_forward.105} parent=0 // pred_check_branch
    %913 = sbr.rel (0) target = $region25
  $region24: #{sensevoice_forward.105} parent=0 // pred_region
    _
  $region25: #{sensevoice_forward.105} parent=0 // pred_fallthru
    _
  // Predicated region
  $region26: #{sensevoice_forward.105} parent=0 // pred_check
    _
  $region27: #{sensevoice_forward.105} parent=0 // pred_check_branch
    %915 = sbr.rel (0) target = $region29
  $region28: #{sensevoice_forward.105} parent=0 // pred_region
    _
  $region29: #{sensevoice_forward.105} parent=0 // pred_fallthru
    _

// kernel: sensevoice_forward.106
$region0: #{sensevoice_forward.106}
  #allocation0 [shape = 'u32[]', space=smem, size = 0x4, offset = 0x4, fixed_abs, tag = 'smem constant byte address 0x4 - core index']
  #allocation1 [shape = 'u32[144,128]{1,0:T(1,128)}', space=vmem, size = 0x12000, scoped, tag = 'internal scratch']
  %s0 = inlined_call_operand.vmem [shape: bf16[16,32], index: 0, kind: input, shape index: {}]
  %s1 = inlined_call_operand.vmem [shape: bf16[32,32], index: 1, kind: input, shape index: {}]
  %s2 = inlined_call_operand.vmem [shape: f32[1,32], index: 2, kind: input, shape index: {}]
  %s3 = inlined_call_operand.vmem [shape: bf16[16,32], index: 3, kind: input, shape index: {}]
  %s4 = inlined_call_operand.vmem [shape: bf16[16,32], index: 4, kind: output, shape index: {}]
  %s5 = sld [smem:[#allocation0]]
  $region26: #{sensevoice_forward.106} parent=0
    _
  %s7 = ssub.s32 1, %s5
  %s8 = scalar_select 0, %s7, %s5
  // Predicated region
  $region2: #{sensevoice_forward.106} parent=0 // pred_check
    _
  $region3: #{sensevoice_forward.106} parent=0 // pred_check_branch
    %10 = sbr.rel (0) target = $region5
  $region4: #{sensevoice_forward.106} parent=0 // pred_region
    _
  $region5: #{sensevoice_forward.106} parent=0 // pred_fallthru
    _
  // Predicated region
  $region6: #{sensevoice_forward.106} parent=0 // pred_check
    _
  $region7: #{sensevoice_forward.106} parent=0 // pred_check_branch
    %12 = sbr.rel (0) target = $region9
  $region8: #{sensevoice_forward.106} parent=0 // pred_region
    _
  $region9: #{sensevoice_forward.106} parent=0 // pred_fallthru
    _
  // Predicated region
  $region10: #{sensevoice_forward.106} parent=0 // pred_check
    _
  $region11: #{sensevoice_forward.106} parent=0 // pred_check_branch
    %14 = sbr.rel (0) target = $region13
  $region12: #{sensevoice_forward.106} parent=0 // pred_region
    _
  $region13: #{sensevoice_forward.106} parent=0 // pred_fallthru
    _
  // Predicated region
  $region14: #{sensevoice_forward.106} parent=0 // pred_check
    _
  $region15: #{sensevoice_forward.106} parent=0 // pred_check_branch
    %16 = sbr.rel (0) target = $region17
  $region16: #{sensevoice_forward.106} parent=0 // pred_region
    _
  $region17: #{sensevoice_forward.106} parent=0 // pred_fallthru
    _
  %v18 = vld [vmem:[%s0] sm:$0xf]
  %v19 = vld [vmem:[%s0 + $0x4] sm:$0xf]
  %v20 = vld [vmem:[%s1] sm:$0xf]
  %v21 = vld [vmem:[%s1 + $0x4] sm:$0xf]
  %v22 = vld [vmem:[%s1 + $0x8] sm:$0xf]
  %v23 = vld [vmem:[%s1 + $0xc] sm:$0xf]
  %v24 = vld [vmem:[%s2] sm:$0x1]
  %v26 = vlaneseq
  %v27 = vshrl.u32 %v26, 7
  %v28 = vsub.s32 0, %v27
  %v29 = vrot.slane %v24, %v28
  %v33 = vunpack.c.l.b16 %v18
  %v34 = vunpack.c.l.b16 %v19
  %v35 = vpack.c.b16 %v34, %v33
  %v40 = vunpack.c.l.b16 %v20
  %v41 = vunpack.c.l.b16 %v21
  %v42 = vunpack.c.l.b16 %v22
  %v43 = vunpack.c.l.b16 %v23
  %v44 = vpack.c.b16 %v41, %v40
  %v45 = vpack.c.b16 %v43, %v42
  %vm48 = vcmask 261120
  %v50 = vsel %vm48, %v35, 0
  %52 = vmatprep.subr.bf16.mxu0 0
  %53 = vmatpush1.bf16.msra.mxu0 %v44
  %54 = vmatprep.subr.bf16.mxu0 0
  %55 = vmatpush1.bf16.msra.mxu0 %v45
  %56 = vmatprep.subr.bf16.mxu0 0
  %57 = vmatpush1.bf16.msra.mxu0 0
  %58 = vmatprep.subr.bf16.mxu0 0
  %59 = vmatpush1.bf16.msra.mxu0 0
  %60 = vmatprep.subr.bf16.mxu0 0
  %61 = vmatpush1.bf16.msra.mxu0 0
  %62 = vmatprep.subr.bf16.mxu0 0
  %63 = vmatpush1.bf16.msra.mxu0 0
  %64 = vmatprep.subr.bf16.mxu0 0
  %65 = vmatpush1.bf16.msra.mxu0 0
  %66 = vmatprep.subr.bf16.mxu0 0
  %67 = vmatpush1.bf16.msra.mxu0 0
  %68 = vmatprep.subr.bf16.mxu0 0
  %69 = vmatpush1.bf16.msra.mxu0 0
  %70 = vmatprep.subr.bf16.mxu0 0
  %71 = vmatpush1.bf16.msra.mxu0 0
  %72 = vmatprep.subr.bf16.mxu0 0
  %73 = vmatpush1.bf16.msra.mxu0 0
  %74 = vmatprep.subr.bf16.mxu0 0
  %75 = vmatpush1.bf16.msra.mxu0 0
  %76 = vmatprep.subr.bf16.mxu0 0
  %77 = vmatpush1.bf16.msra.mxu0 0
  %78 = vmatprep.subr.bf16.mxu0 0
  %79 = vmatpush1.bf16.msra.mxu0 0
  %80 = vmatprep.subr.bf16.mxu0 0
  %81 = vmatpush1.bf16.msra.mxu0 0
  %82 = vmatprep.subr.bf16.mxu0 0
  %83 = vmatpush1.bf16.msra.mxu0 0
  %84 = vmatprep.mubr.bf16.mxu0 0
  %85 = vmatmul.mubr.bf16.gmra.mrb[0].mxu0 %v50
  %v86 = vpop.f32.mrb[0].mxu0
  %v87 = vadd.f32 %v29, %v86
  %v88 = vpop.f32.mrb[0].mxu0
  %v89 = vpop.f32.mrb[0].mxu0
  %v90 = vadd.f32 %v29, %v89
  %v91 = vpop.f32.mrb[0].mxu0
  %92 = vdwg.mxu0
  %v93 = vld [vmem:[%s3] sm:$0xf]
  %v94 = vld [vmem:[%s3 + $0x4] sm:$0xf]
  %v95 = vunpack.c.l.bf16 %v93
  %v96 = vunpack.c.l.bf16 %v94
  %v97 = vadd.f32 %v87, %v95
  %v98 = vadd.f32 %v90, %v96
  %v99 = vpack.c.bf16 %v98, %v97
  %v101 = vunpack.c.l.b16 %v99
  %v102 = vunpack.c.h.b16 %v99
  %v103 = vpack.c.b16 %v101, %v101
  %v104 = vpack.c.b16 %v102, %v102
  %vm107 = vcmask 257024
  %108 = vst.msk [vmem:[%s4] sm:$0xf] %vm107, %v103
  %109 = vst.msk [vmem:[%s4 + $0x4] sm:$0xf] %vm107, %v104
  // Predicated region
  $region18: #{sensevoice_forward.106} parent=0 // pred_check
    _
  $region19: #{sensevoice_forward.106} parent=0 // pred_check_branch
    %111 = sbr.rel (0) target = $region21
  $region20: #{sensevoice_forward.106} parent=0 // pred_region
    _
  $region21: #{sensevoice_forward.106} parent=0 // pred_fallthru
    _
  // Predicated region
  $region22: #{sensevoice_forward.106} parent=0 // pred_check
    _
  $region23: #{sensevoice_forward.106} parent=0 // pred_check_branch
    %113 = sbr.rel (0) target = $region25
  $region24: #{sensevoice_forward.106} parent=0 // pred_region
    _
  $region25: #{sensevoice_forward.106} parent=0 // pred_fallthru
    _

// kernel: sensevoice_forward.107
$region0: #{sensevoice_forward.107}
  #allocation0 [shape = 'u32[]', space=smem, size = 0x4, offset = 0x4, fixed_abs, tag = 'smem constant byte address 0x4 - core index']
  #allocation1 [shape = 'u32[144,128]{1,0:T(1,128)}', space=vmem, size = 0x12000, scoped, tag = 'internal scratch']
  #allocation2 [shape = 'bf16[16,32]{1,0:T(16,128)(2,1)}', space=vmem, size = 0x1000, scoped, tag = 'scratch operand']
  %s0 = inlined_call_operand.vmem [shape: bf16[16,32], index: 0, kind: input, shape index: {}]
  %s1 = inlined_call_operand.vmem [shape: bf16[32,128], index: 1, kind: input, shape index: {}]
  %s2 = inlined_call_operand.vmem [shape: f32[1,32], index: 2, kind: input, shape index: {}]
  %s3 = inlined_call_operand.vmem [shape: f32[1,32], index: 3, kind: input, shape index: {}]
  %s4 = inlined_call_operand.vmem [shape: f32[1,128], index: 4, kind: input, shape index: {}]
  %s5 = inlined_call_operand.vmem [shape: bf16[16,128], index: 5, kind: output, shape index: {}]
  %s6 = sld [smem:[#allocation0]]
  $region34: #{sensevoice_forward.107} parent=0
    _
  %s8 = ssub.s32 1, %s6
  %s9 = scalar_select 0, %s8, %s6
  // Predicated region
  $region2: #{sensevoice_forward.107} parent=0 // pred_check
    _
  $region3: #{sensevoice_forward.107} parent=0 // pred_check_branch
    %11 = sbr.rel (0) target = $region5
  $region4: #{sensevoice_forward.107} parent=0 // pred_region
    _
  $region5: #{sensevoice_forward.107} parent=0 // pred_fallthru
    _
  // Predicated region
  $region6: #{sensevoice_forward.107} parent=0 // pred_check
    _
  $region7: #{sensevoice_forward.107} parent=0 // pred_check_branch
    %13 = sbr.rel (0) target = $region9
  $region8: #{sensevoice_forward.107} parent=0 // pred_region
    _
  $region9: #{sensevoice_forward.107} parent=0 // pred_fallthru
    _
  // Predicated region
  $region10: #{sensevoice_forward.107} parent=0 // pred_check
    _
  $region11: #{sensevoice_forward.107} parent=0 // pred_check_branch
    %15 = sbr.rel (0) target = $region13
  $region12: #{sensevoice_forward.107} parent=0 // pred_region
    _
  $region13: #{sensevoice_forward.107} parent=0 // pred_fallthru
    _
  // Predicated region
  $region14: #{sensevoice_forward.107} parent=0 // pred_check
    _
  $region15: #{sensevoice_forward.107} parent=0 // pred_check_branch
    %17 = sbr.rel (0) target = $region17
  $region16: #{sensevoice_forward.107} parent=0 // pred_region
    _
  $region17: #{sensevoice_forward.107} parent=0 // pred_fallthru
    _
  // Predicated region
  $region18: #{sensevoice_forward.107} parent=0 // pred_check
    _
  $region19: #{sensevoice_forward.107} parent=0 // pred_check_branch
    %19 = sbr.rel (0) target = $region21
  $region20: #{sensevoice_forward.107} parent=0 // pred_region
    _
  $region21: #{sensevoice_forward.107} parent=0 // pred_fallthru
    _
  %p21 = scmp.eq.s32.totalorder 0, 0
  // Predicated region
  $region22: #{sensevoice_forward.107} parent=0 // pred_check
    %p22 = pneg %p21
  $region23: #{sensevoice_forward.107} parent=0 // pred_check_branch
    %24 = sbr.rel (%p22) target = $region25
  $region24: #{sensevoice_forward.107} parent=0 // pred_region
    %v25 = vld [vmem:[%s0] sm:$0xf]
    %v26 = vld [vmem:[%s0 + $0x4] sm:$0xf]
    %v27 = vunpack.c.l.bf16 %v25
    %v28 = vunpack.c.l.bf16 %v26
    %vm29 = vcmask 261120
    %v30 = vsel %vm29, %v27, 0.0
    %31 = vadd.xlane.f32.xlu0 %v30
    %v32 = vpop.xlane.xlu0 %31
    %v33 = vsel %vm29, %v28, 0.0
    %34 = vadd.xlane.f32.xlu0 %v33
    %v35 = vpop.xlane.xlu0 %34
    %v36 = vrcp.pop 32.0
    %v37 = vmul.f32 %v32, %v36
    %v38 = vmul.f32 %v35, %v36
    %v39 = vsub.f32 %v27, %v37
    %v40 = vsub.f32 %v28, %v38
    %v41 = vmul.f32 %v39, %v39
    %v42 = vmul.f32 %v40, %v40
    %v43 = vsel %vm29, %v41, 0.0
    %44 = vadd.xlane.f32.xlu0 %v43
    %v45 = vpop.xlane.xlu0 %44
    %v46 = vsel %vm29, %v42, 0.0
    %47 = vadd.xlane.f32.xlu0 %v46
    %v48 = vpop.xlane.xlu0 %47
    %v49 = vmul.f32 %v45, %v36
    %v50 = vmul.f32 %v48, %v36
    %v51 = vadd.f32 %v49, 1e-05
    %v52 = vadd.f32 %v50, 1e-05
    %v53 = vrsqrt.pop %v51
    %v54 = vrsqrt.pop %v52
    %v55 = vmul.f32 %v39, %v53
    %v56 = vmul.f32 %v40, %v54
    %v57 = vld [vmem:[%s2] sm:$0x1]
    %v59 = vlaneseq
    %v60 = vshrl.u32 %v59, 7
    %v61 = vsub.s32 0, %v60
    %v62 = vrot.slane %v57, %v61
    %v64 = vmul.f32 %v55, %v62
    %v65 = vmul.f32 %v56, %v62
    %v66 = vld [vmem:[%s3] sm:$0x1]
    %v68 = vlaneseq
    %v69 = vshrl.u32 %v68, 7
    %v70 = vsub.s32 0, %v69
    %v71 = vrot.slane %v66, %v70
    %v73 = vadd.f32 %v64, %v71
    %v74 = vadd.f32 %v65, %v71
    %v75 = vpack.c.bf16 %v74, %v73
    %76 = vst.msk [vmem:[#allocation2] sm:$0xff] %vm29, %v75
  $region25: #{sensevoice_forward.107} parent=0 // pred_fallthru
    _
  %v77 = vld [vmem:[#allocation2] sm:$0xff]
  %v78 = vld [vmem:[%s1] sm:$0xf]
  %v79 = vld [vmem:[%s1 + $0x4] sm:$0xf]
  %v80 = vld [vmem:[%s1 + $0x8] sm:$0xf]
  %v81 = vld [vmem:[%s1 + $0xc] sm:$0xf]
  %v82 = vld [vmem:[%s4] sm:$0x1]
  %v84 = vlaneseq
  %v85 = vshrl.u32 %v84, 7
  %v86 = vsub.s32 0, %v85
  %v87 = vrot.slane %v82, %v86
  %v93 = vunpack.c.l.b16 %v78
  %v94 = vunpack.c.l.b16 %v79
  %v95 = vunpack.c.l.b16 %v80
  %v96 = vunpack.c.l.b16 %v81
  %v97 = vpack.c.b16 %v94, %v93
  %v98 = vpack.c.b16 %v96, %v95
  %vm101 = vcmask 261120
  %v103 = vsel %vm101, %v77, 0
  %105 = vmatprep.subr.bf16.mxu0 0
  %106 = vmatpush1.bf16.msra.mxu0 %v97
  %107 = vmatprep.subr.bf16.mxu0 0
  %108 = vmatpush1.bf16.msra.mxu0 %v98
  %109 = vmatprep.subr.bf16.mxu0 0
  %110 = vmatpush1.bf16.msra.mxu0 0
  %111 = vmatprep.subr.bf16.mxu0 0
  %112 = vmatpush1.bf16.msra.mxu0 0
  %113 = vmatprep.subr.bf16.mxu0 0
  %114 = vmatpush1.bf16.msra.mxu0 0
  %115 = vmatprep.subr.bf16.mxu0 0
  %116 = vmatpush1.bf16.msra.mxu0 0
  %117 = vmatprep.subr.bf16.mxu0 0
  %118 = vmatpush1.bf16.msra.mxu0 0
  %119 = vmatprep.subr.bf16.mxu0 0
  %120 = vmatpush1.bf16.msra.mxu0 0
  %121 = vmatprep.subr.bf16.mxu0 0
  %122 = vmatpush1.bf16.msra.mxu0 0
  %123 = vmatprep.subr.bf16.mxu0 0
  %124 = vmatpush1.bf16.msra.mxu0 0
  %125 = vmatprep.subr.bf16.mxu0 0
  %126 = vmatpush1.bf16.msra.mxu0 0
  %127 = vmatprep.subr.bf16.mxu0 0
  %128 = vmatpush1.bf16.msra.mxu0 0
  %129 = vmatprep.subr.bf16.mxu0 0
  %130 = vmatpush1.bf16.msra.mxu0 0
  %131 = vmatprep.subr.bf16.mxu0 0
  %132 = vmatpush1.bf16.msra.mxu0 0
  %133 = vmatprep.subr.bf16.mxu0 0
  %134 = vmatpush1.bf16.msra.mxu0 0
  %135 = vmatprep.subr.bf16.mxu0 0
  %136 = vmatpush1.bf16.msra.mxu0 0
  %137 = vmatprep.mubr.bf16.mxu0 0
  %138 = vmatmul.mubr.bf16.gmra.mrb[0].mxu0 %v103
  %v139 = vpop.f32.mrb[0].mxu0
  %v140 = vadd.f32 %v87, %v139
  %v141 = vpop.f32.mrb[0].mxu0
  %v142 = vpop.f32.mrb[0].mxu0
  %v143 = vadd.f32 %v87, %v142
  %v144 = vpop.f32.mrb[0].mxu0
  %145 = vdwg.mxu0
  %v146 = vmul.f32 %v140, 0.5
  %v147 = vmul.f32 %v143, 0.5
  %v148 = vmul.f32 %v140, 0.044715
  %v149 = vmul.f32 %v143, 0.044715
  %v150 = vmul.f32 %v148, %v140
  %v151 = vmul.f32 %v149, %v143
  %v152 = vmul.f32 %v150, %v140
  %v153 = vmul.f32 %v151, %v143
  %v154 = vadd.f32 %v140, %v152
  %v155 = vadd.f32 %v143, %v153
  %v156 = vmul.f32 %v154, 0.7978846
  %v157 = vmul.f32 %v155, 0.7978846
  %v158 = vtanh.pop %v156
  %v159 = vtanh.pop %v157
  %v160 = vadd.f32 %v158, 1.0
  %v161 = vadd.f32 %v159, 1.0
  %v162 = vmul.f32 %v146, %v160
  %v163 = vmul.f32 %v147, %v161
  %v164 = vpack.c.bf16 %v163, %v162
  %v166 = vunpack.c.l.b16 %v164
  %v167 = vunpack.c.h.b16 %v164
  %v168 = vpack.c.b16 %v166, %v166
  %v169 = vpack.c.b16 %v167, %v167
  %172 = vst [vmem:[%s5] sm:$0xf] %v168
  %173 = vst [vmem:[%s5 + $0x4] sm:$0xf] %v169
  // Predicated region
  $region26: #{sensevoice_forward.107} parent=0 // pred_check
    _
  $region27: #{sensevoice_forward.107} parent=0 // pred_check_branch
    %175 = sbr.rel (0) target = $region29
  $region28: #{sensevoice_forward.107} parent=0 // pred_region
    _
  $region29: #{sensevoice_forward.107} parent=0 // pred_fallthru
    _
  // Predicated region
  $region30: #{sensevoice_forward.107} parent=0 // pred_check
    _
  $region31: #{sensevoice_forward.107} parent=0 // pred_check_branch
    %177 = sbr.rel (0) target = $region33
  $region32: #{sensevoice_forward.107} parent=0 // pred_region
    _
  $region33: #{sensevoice_forward.107} parent=0 // pred_fallthru
    _

// kernel: sensevoice_forward.81
$region0: #{sensevoice_forward.81}
  #allocation0 [shape = 'u32[]', space=smem, size = 0x4, offset = 0x4, fixed_abs, tag = 'smem constant byte address 0x4 - core index']
  #allocation1 [shape = 'u32[144,128]{1,0:T(1,128)}', space=vmem, size = 0x12000, scoped, tag = 'internal scratch']
  #allocation2 [shape = 'bf16[6,32]{1,0:T(8,128)(2,1)}', space=vmem, size = 0x800, scoped, tag = 'scratch operand']
  %s0 = inlined_call_operand.vmem [shape: bf16[6,32], index: 0, kind: input, shape index: {}]
  %s1 = inlined_call_operand.vmem [shape: bf16[32,96], index: 1, kind: input, shape index: {}]
  %s2 = inlined_call_operand.vmem [shape: f32[1,32], index: 2, kind: input, shape index: {}]
  %s3 = inlined_call_operand.vmem [shape: f32[1,32], index: 3, kind: input, shape index: {}]
  %s4 = inlined_call_operand.vmem [shape: f32[1,96], index: 4, kind: input, shape index: {}]
  %s5 = inlined_call_operand.vmem [shape: bf16[6,96], index: 5, kind: output, shape index: {}]
  %s6 = sld [smem:[#allocation0]]
  $region34: #{sensevoice_forward.81} parent=0
    _
  %s8 = ssub.s32 1, %s6
  %s9 = scalar_select 0, %s8, %s6
  // Predicated region
  $region2: #{sensevoice_forward.81} parent=0 // pred_check
    _
  $region3: #{sensevoice_forward.81} parent=0 // pred_check_branch
    %11 = sbr.rel (0) target = $region5
  $region4: #{sensevoice_forward.81} parent=0 // pred_region
    _
  $region5: #{sensevoice_forward.81} parent=0 // pred_fallthru
    _
  // Predicated region
  $region6: #{sensevoice_forward.81} parent=0 // pred_check
    _
  $region7: #{sensevoice_forward.81} parent=0 // pred_check_branch
    %13 = sbr.rel (0) target = $region9
  $region8: #{sensevoice_forward.81} parent=0 // pred_region
    _
  $region9: #{sensevoice_forward.81} parent=0 // pred_fallthru
    _
  // Predicated region
  $region10: #{sensevoice_forward.81} parent=0 // pred_check
    _
  $region11: #{sensevoice_forward.81} parent=0 // pred_check_branch
    %15 = sbr.rel (0) target = $region13
  $region12: #{sensevoice_forward.81} parent=0 // pred_region
    _
  $region13: #{sensevoice_forward.81} parent=0 // pred_fallthru
    _
  // Predicated region
  $region14: #{sensevoice_forward.81} parent=0 // pred_check
    _
  $region15: #{sensevoice_forward.81} parent=0 // pred_check_branch
    %17 = sbr.rel (0) target = $region17
  $region16: #{sensevoice_forward.81} parent=0 // pred_region
    _
  $region17: #{sensevoice_forward.81} parent=0 // pred_fallthru
    _
  // Predicated region
  $region18: #{sensevoice_forward.81} parent=0 // pred_check
    _
  $region19: #{sensevoice_forward.81} parent=0 // pred_check_branch
    %19 = sbr.rel (0) target = $region21
  $region20: #{sensevoice_forward.81} parent=0 // pred_region
    _
  $region21: #{sensevoice_forward.81} parent=0 // pred_fallthru
    _
  %p21 = scmp.eq.s32.totalorder 0, 0
  // Predicated region
  $region22: #{sensevoice_forward.81} parent=0 // pred_check
    %p22 = pneg %p21
  $region23: #{sensevoice_forward.81} parent=0 // pred_check_branch
    %24 = sbr.rel (%p22) target = $region25
  $region24: #{sensevoice_forward.81} parent=0 // pred_region
    %v25 = vld [vmem:[%s0] sm:$0x7]
    %v26 = vunpack.c.l.bf16 %v25
    %vm27 = vcmask 259072
    %v28 = vsel %vm27, %v26, 0.0
    %29 = vadd.xlane.f32.xlu0 %v28
    %v30 = vpop.xlane.xlu0 %29
    %v31 = vrcp.pop 32.0
    %v32 = vmul.f32 %v30, %v31
    %v33 = vsub.f32 %v26, %v32
    %v34 = vmul.f32 %v33, %v33
    %v35 = vsel %vm27, %v34, 0.0
    %36 = vadd.xlane.f32.xlu0 %v35
    %v37 = vpop.xlane.xlu0 %36
    %v38 = vmul.f32 %v37, %v31
    %v39 = vadd.f32 %v38, 1e-05
    %v40 = vrsqrt.pop %v39
    %v41 = vmul.f32 %v33, %v40
    %v42 = vld [vmem:[%s2] sm:$0x1]
    %v44 = vlaneseq
    %v45 = vshrl.u32 %v44, 7
    %v46 = vsub.s32 0, %v45
    %v47 = vrot.slane %v42, %v46
    %v49 = vmul.f32 %v41, %v47
    %v50 = vld [vmem:[%s3] sm:$0x1]
    %v52 = vlaneseq
    %v53 = vshrl.u32 %v52, 7
    %v54 = vsub.s32 0, %v53
    %v55 = vrot.slane %v50, %v54
    %v57 = vadd.f32 %v49, %v55
    %v58 = vpack.c.bf16 %v57, %v57
    %vm59 = vcmask 256000
    %60 = vst.msk [vmem:[#allocation2] sm:$0x7] %vm59, %v58
  $region25: #{sensevoice_forward.81} parent=0 // pred_fallthru
    _
  %v61 = vld [vmem:[#allocation2] sm:$0x7]
  %v62 = vld [vmem:[%s1] sm:$0xf]
  %v63 = vld [vmem:[%s1 + $0x4] sm:$0xf]
  %v64 = vld [vmem:[%s1 + $0x8] sm:$0xf]
  %v65 = vld [vmem:[%s1 + $0xc] sm:$0xf]
  %v66 = vld [vmem:[%s4] sm:$0x1]
  %v68 = vlaneseq
  %v69 = vshrl.u32 %v68, 7
  %v70 = vsub.s32 0, %v69
  %v71 = vrot.slane %v66, %v70
  %v77 = vunpack.c.l.b16 %v62
  %v78 = vunpack.c.l.b16 %v63
  %v79 = vunpack.c.l.b16 %v64
  %v80 = vunpack.c.l.b16 %v65
  %v81 = vpack.c.b16 %v78, %v77
  %v82 = vpack.c.b16 %v80, %v79
  %vm85 = vcmask 261120
  %v87 = vsel %vm85, %v61, 0
  %89 = vmatprep.subr.bf16.mxu0 0
  %90 = vmatpush1.bf16.msra.mxu0 %v81
  %91 = vmatprep.subr.bf16.mxu0 0
  %92 = vmatpush1.bf16.msra.mxu0 %v82
  %93 = vmatprep.subr.bf16.mxu0 0
  %94 = vmatpush1.bf16.msra.mxu0 0
  %95 = vmatprep.subr.bf16.mxu0 0
  %96 = vmatpush1.bf16.msra.mxu0 0
  %97 = vmatprep.subr.bf16.mxu0 0
  %98 = vmatpush1.bf16.msra.mxu0 0
  %99 = vmatprep.subr.bf16.mxu0 0
  %100 = vmatpush1.bf16.msra.mxu0 0
  %101 = vmatprep.subr.bf16.mxu0 0
  %102 = vmatpush1.bf16.msra.mxu0 0
  %103 = vmatprep.subr.bf16.mxu0 0
  %104 = vmatpush1.bf16.msra.mxu0 0
  %105 = vmatprep.subr.bf16.mxu0 0
  %106 = vmatpush1.bf16.msra.mxu0 0
  %107 = vmatprep.subr.bf16.mxu0 0
  %108 = vmatpush1.bf16.msra.mxu0 0
  %109 = vmatprep.subr.bf16.mxu0 0
  %110 = vmatpush1.bf16.msra.mxu0 0
  %111 = vmatprep.subr.bf16.mxu0 0
  %112 = vmatpush1.bf16.msra.mxu0 0
  %113 = vmatprep.subr.bf16.mxu0 0
  %114 = vmatpush1.bf16.msra.mxu0 0
  %115 = vmatprep.subr.bf16.mxu0 0
  %116 = vmatpush1.bf16.msra.mxu0 0
  %117 = vmatprep.subr.bf16.mxu0 0
  %118 = vmatpush1.bf16.msra.mxu0 0
  %119 = vmatprep.subr.bf16.mxu0 0
  %120 = vmatpush1.bf16.msra.mxu0 0
  %121 = vmatprep.mubr.bf16.mxu0 0
  %122 = vmatmul.mubr.bf16.gmra.mrb[0].mxu0 %v87
  %v123 = vpop.f32.mrb[0].mxu0
  %v124 = vadd.f32 %v71, %v123
  %v125 = vpop.f32.mrb[0].mxu0
  %v126 = vpop.f32.mrb[0].mxu0
  %v127 = vpop.f32.mrb[0].mxu0
  %128 = vdwg.mxu0
  %v129 = vpack.c.bf16 %v124, %v124
  %vm130 = vcmask 780288
  %131 = vst.msk [vmem:[%s5] sm:$0x7] %vm130, %v129
  // Predicated region
  $region26: #{sensevoice_forward.81} parent=0 // pred_check
    _
  $region27: #{sensevoice_forward.81} parent=0 // pred_check_branch
    %133 = sbr.rel (0) target = $region29
  $region28: #{sensevoice_forward.81} parent=0 // pred_region
    _
  $region29: #{sensevoice_forward.81} parent=0 // pred_fallthru
    _
  // Predicated region
  $region30: #{sensevoice_forward.81} parent=0 // pred_check
    _
  $region31: #{sensevoice_forward.81} parent=0 // pred_check_branch
    %135 = sbr.rel (0) target = $region33
  $region32: #{sensevoice_forward.81} parent=0 // pred_region
    _
  $region33: #{sensevoice_forward.81} parent=0 // pred_fallthru
    _

// kernel: sensevoice_forward.117
$region0: #{sensevoice_forward.117}
  #allocation0 [shape = 'u32[]', space=smem, size = 0x4, offset = 0x4, fixed_abs, tag = 'smem constant byte address 0x4 - core index']
  #allocation1 [shape = 'u32[144,128]{1,0:T(1,128)}', space=vmem, size = 0x12000, scoped, tag = 'internal scratch']
  %s0 = inlined_call_operand.vmem [shape: bf16[6,32], index: 0, kind: input, shape index: {}]
  %s1 = inlined_call_operand.vmem [shape: bf16[32,32], index: 1, kind: input, shape index: {}]
  %s2 = inlined_call_operand.vmem [shape: f32[1,32], index: 2, kind: input, shape index: {}]
  %s3 = inlined_call_operand.vmem [shape: bf16[6,32], index: 3, kind: input, shape index: {}]
  %s4 = inlined_call_operand.vmem [shape: bf16[6,32], index: 4, kind: output, shape index: {}]
  %s5 = sld [smem:[#allocation0]]
  $region26: #{sensevoice_forward.117} parent=0
    _
  %s7 = ssub.s32 1, %s5
  %s8 = scalar_select 0, %s7, %s5
  // Predicated region
  $region2: #{sensevoice_forward.117} parent=0 // pred_check
    _
  $region3: #{sensevoice_forward.117} parent=0 // pred_check_branch
    %10 = sbr.rel (0) target = $region5
  $region4: #{sensevoice_forward.117} parent=0 // pred_region
    _
  $region5: #{sensevoice_forward.117} parent=0 // pred_fallthru
    _
  // Predicated region
  $region6: #{sensevoice_forward.117} parent=0 // pred_check
    _
  $region7: #{sensevoice_forward.117} parent=0 // pred_check_branch
    %12 = sbr.rel (0) target = $region9
  $region8: #{sensevoice_forward.117} parent=0 // pred_region
    _
  $region9: #{sensevoice_forward.117} parent=0 // pred_fallthru
    _
  // Predicated region
  $region10: #{sensevoice_forward.117} parent=0 // pred_check
    _
  $region11: #{sensevoice_forward.117} parent=0 // pred_check_branch
    %14 = sbr.rel (0) target = $region13
  $region12: #{sensevoice_forward.117} parent=0 // pred_region
    _
  $region13: #{sensevoice_forward.117} parent=0 // pred_fallthru
    _
  // Predicated region
  $region14: #{sensevoice_forward.117} parent=0 // pred_check
    _
  $region15: #{sensevoice_forward.117} parent=0 // pred_check_branch
    %16 = sbr.rel (0) target = $region17
  $region16: #{sensevoice_forward.117} parent=0 // pred_region
    _
  $region17: #{sensevoice_forward.117} parent=0 // pred_fallthru
    _
  %v18 = vld [vmem:[%s0] sm:$0x7]
  %v19 = vld [vmem:[%s1] sm:$0xf]
  %v20 = vld [vmem:[%s1 + $0x4] sm:$0xf]
  %v21 = vld [vmem:[%s1 + $0x8] sm:$0xf]
  %v22 = vld [vmem:[%s1 + $0xc] sm:$0xf]
  %v23 = vld [vmem:[%s2] sm:$0x1]
  %v25 = vlaneseq
  %v26 = vshrl.u32 %v25, 7
  %v27 = vsub.s32 0, %v26
  %v28 = vrot.slane %v23, %v27
  %v34 = vunpack.c.l.b16 %v19
  %v35 = vunpack.c.l.b16 %v20
  %v36 = vunpack.c.l.b16 %v21
  %v37 = vunpack.c.l.b16 %v22
  %v38 = vpack.c.b16 %v35, %v34
  %v39 = vpack.c.b16 %v37, %v36
  %vm42 = vcmask 261120
  %v44 = vsel %vm42, %v18, 0
  %46 = vmatprep.subr.bf16.mxu0 0
  %47 = vmatpush1.bf16.msra.mxu0 %v38
  %48 = vmatprep.subr.bf16.mxu0 0
  %49 = vmatpush1.bf16.msra.mxu0 %v39
  %50 = vmatprep.subr.bf16.mxu0 0
  %51 = vmatpush1.bf16.msra.mxu0 0
  %52 = vmatprep.subr.bf16.mxu0 0
  %53 = vmatpush1.bf16.msra.mxu0 0
  %54 = vmatprep.subr.bf16.mxu0 0
  %55 = vmatpush1.bf16.msra.mxu0 0
  %56 = vmatprep.subr.bf16.mxu0 0
  %57 = vmatpush1.bf16.msra.mxu0 0
  %58 = vmatprep.subr.bf16.mxu0 0
  %59 = vmatpush1.bf16.msra.mxu0 0
  %60 = vmatprep.subr.bf16.mxu0 0
  %61 = vmatpush1.bf16.msra.mxu0 0
  %62 = vmatprep.subr.bf16.mxu0 0
  %63 = vmatpush1.bf16.msra.mxu0 0
  %64 = vmatprep.subr.bf16.mxu0 0
  %65 = vmatpush1.bf16.msra.mxu0 0
  %66 = vmatprep.subr.bf16.mxu0 0
  %67 = vmatpush1.bf16.msra.mxu0 0
  %68 = vmatprep.subr.bf16.mxu0 0
  %69 = vmatpush1.bf16.msra.mxu0 0
  %70 = vmatprep.subr.bf16.mxu0 0
  %71 = vmatpush1.bf16.msra.mxu0 0
  %72 = vmatprep.subr.bf16.mxu0 0
  %73 = vmatpush1.bf16.msra.mxu0 0
  %74 = vmatprep.subr.bf16.mxu0 0
  %75 = vmatpush1.bf16.msra.mxu0 0
  %76 = vmatprep.subr.bf16.mxu0 0
  %77 = vmatpush1.bf16.msra.mxu0 0
  %78 = vmatprep.mubr.bf16.mxu0 0
  %79 = vmatmul.mubr.bf16.gmra.mrb[0].mxu0 %v44
  %v80 = vpop.f32.mrb[0].mxu0
  %v81 = vadd.f32 %v28, %v80
  %v82 = vpop.f32.mrb[0].mxu0
  %v83 = vpop.f32.mrb[0].mxu0
  %v84 = vpop.f32.mrb[0].mxu0
  %85 = vdwg.mxu0
  %v86 = vld [vmem:[%s3] sm:$0x7]
  %v87 = vunpack.c.l.bf16 %v86
  %v88 = vadd.f32 %v81, %v87
  %v89 = vpack.c.bf16 %v88, %v88
  %vm90 = vcmask 256000
  %91 = vst.msk [vmem:[%s4] sm:$0x7] %vm90, %v89
  // Predicated region
  $region18: #{sensevoice_forward.117} parent=0 // pred_check
    _
  $region19: #{sensevoice_forward.117} parent=0 // pred_check_branch
    %93 = sbr.rel (0) target = $region21
  $region20: #{sensevoice_forward.117} parent=0 // pred_region
    _
  $region21: #{sensevoice_forward.117} parent=0 // pred_fallthru
    _
  // Predicated region
  $region22: #{sensevoice_forward.117} parent=0 // pred_check
    _
  $region23: #{sensevoice_forward.117} parent=0 // pred_check_branch
    %95 = sbr.rel (0) target = $region25
  $region24: #{sensevoice_forward.117} parent=0 // pred_region
    _
  $region25: #{sensevoice_forward.117} parent=0 // pred_fallthru
    _

// kernel: sensevoice_forward.80
$region0: #{sensevoice_forward.80}
  #allocation0 [shape = 'u32[]', space=smem, size = 0x4, offset = 0x4, fixed_abs, tag = 'smem constant byte address 0x4 - core index']
  #allocation1 [shape = 'u32[144,128]{1,0:T(1,128)}', space=vmem, size = 0x12000, scoped, tag = 'internal scratch']
  %s0 = inlined_call_operand.vmem [shape: bf16[16,32], index: 0, kind: input, shape index: {}]
  %s1 = inlined_call_operand.vmem [shape: f32[1,32], index: 1, kind: input, shape index: {}]
  %s2 = inlined_call_operand.vmem [shape: f32[1,32], index: 2, kind: input, shape index: {}]
  %s3 = inlined_call_operand.vmem [shape: bf16[16,32], index: 3, kind: output, shape index: {}]
  %s4 = sld [smem:[#allocation0]]
  $region22: #{sensevoice_forward.80} parent=0
    _
  %s6 = ssub.s32 1, %s4
  %s7 = scalar_select 0, %s6, %s4
  // Predicated region
  $region2: #{sensevoice_forward.80} parent=0 // pred_check
    _
  $region3: #{sensevoice_forward.80} parent=0 // pred_check_branch
    %9 = sbr.rel (0) target = $region5
  $region4: #{sensevoice_forward.80} parent=0 // pred_region
    _
  $region5: #{sensevoice_forward.80} parent=0 // pred_fallthru
    _
  // Predicated region
  $region6: #{sensevoice_forward.80} parent=0 // pred_check
    _
  $region7: #{sensevoice_forward.80} parent=0 // pred_check_branch
    %11 = sbr.rel (0) target = $region9
  $region8: #{sensevoice_forward.80} parent=0 // pred_region
    _
  $region9: #{sensevoice_forward.80} parent=0 // pred_fallthru
    _
  // Predicated region
  $region10: #{sensevoice_forward.80} parent=0 // pred_check
    _
  $region11: #{sensevoice_forward.80} parent=0 // pred_check_branch
    %13 = sbr.rel (0) target = $region13
  $region12: #{sensevoice_forward.80} parent=0 // pred_region
    _
  $region13: #{sensevoice_forward.80} parent=0 // pred_fallthru
    _
  %v14 = vld [vmem:[%s0] sm:$0xf]
  %v15 = vld [vmem:[%s0 + $0x4] sm:$0xf]
  %v16 = vunpack.c.l.bf16 %v14
  %v17 = vunpack.c.l.bf16 %v15
  %vm18 = vcmask 261120
  %v19 = vsel %vm18, %v16, 0.0
  %20 = vadd.xlane.f32.xlu0 %v19
  %v21 = vpop.xlane.xlu0 %20
  %v22 = vsel %vm18, %v17, 0.0
  %23 = vadd.xlane.f32.xlu0 %v22
  %v24 = vpop.xlane.xlu0 %23
  %v25 = vrcp.pop 32.0
  %v26 = vmul.f32 %v21, %v25
  %v27 = vmul.f32 %v24, %v25
  %v28 = vsub.f32 %v16, %v26
  %v29 = vsub.f32 %v17, %v27
  %v30 = vmul.f32 %v28, %v28
  %v31 = vmul.f32 %v29, %v29
  %v32 = vsel %vm18, %v30, 0.0
  %33 = vadd.xlane.f32.xlu0 %v32
  %v34 = vpop.xlane.xlu0 %33
  %v35 = vsel %vm18, %v31, 0.0
  %36 = vadd.xlane.f32.xlu0 %v35
  %v37 = vpop.xlane.xlu0 %36
  %v38 = vmul.f32 %v34, %v25
  %v39 = vmul.f32 %v37, %v25
  %v40 = vadd.f32 %v38, 1e-05
  %v41 = vadd.f32 %v39, 1e-05
  %v42 = vrsqrt.pop %v40
  %v43 = vrsqrt.pop %v41
  %v44 = vmul.f32 %v28, %v42
  %v45 = vmul.f32 %v29, %v43
  %v46 = vld [vmem:[%s1] sm:$0x1]
  %v48 = vlaneseq
  %v49 = vshrl.u32 %v48, 7
  %v50 = vsub.s32 0, %v49
  %v51 = vrot.slane %v46, %v50
  %v53 = vmul.f32 %v44, %v51
  %v54 = vmul.f32 %v45, %v51
  %v55 = vld [vmem:[%s2] sm:$0x1]
  %v57 = vlaneseq
  %v58 = vshrl.u32 %v57, 7
  %v59 = vsub.s32 0, %v58
  %v60 = vrot.slane %v55, %v59
  %v62 = vadd.f32 %v53, %v60
  %v63 = vadd.f32 %v54, %v60
  %v64 = vpack.c.bf16 %v63, %v62
  %v66 = vunpack.c.l.b16 %v64
  %v67 = vunpack.c.h.b16 %v64
  %v68 = vpack.c.b16 %v66, %v66
  %v69 = vpack.c.b16 %v67, %v67
  %vm72 = vcmask 257024
  %73 = vst.msk [vmem:[%s3] sm:$0xf] %vm72, %v68
  %74 = vst.msk [vmem:[%s3 + $0x4] sm:$0xf] %vm72, %v69
  // Predicated region
  $region14: #{sensevoice_forward.80} parent=0 // pred_check
    _
  $region15: #{sensevoice_forward.80} parent=0 // pred_check_branch
    %76 = sbr.rel (0) target = $region17
  $region16: #{sensevoice_forward.80} parent=0 // pred_region
    _
  $region17: #{sensevoice_forward.80} parent=0 // pred_fallthru
    _
  // Predicated region
  $region18: #{sensevoice_forward.80} parent=0 // pred_check
    _
  $region19: #{sensevoice_forward.80} parent=0 // pred_check_branch
    %78 = sbr.rel (0) target = $region21
  $region20: #{sensevoice_forward.80} parent=0 // pred_region
    _
  $region21: #{sensevoice_forward.80} parent=0 // pred_fallthru
    _

// kernel: sensevoice_forward.118
$region0: #{sensevoice_forward.118}
  #allocation0 [shape = 'u32[]', space=smem, size = 0x4, offset = 0x4, fixed_abs, tag = 'smem constant byte address 0x4 - core index']
  #allocation1 [shape = 'u32[144,128]{1,0:T(1,128)}', space=vmem, size = 0x12000, scoped, tag = 'internal scratch']
  #allocation2 [shape = 'bf16[6,32]{1,0:T(8,128)(2,1)}', space=vmem, size = 0x800, scoped, tag = 'scratch operand']
  %s0 = inlined_call_operand.vmem [shape: bf16[6,32], index: 0, kind: input, shape index: {}]
  %s1 = inlined_call_operand.vmem [shape: bf16[32,32], index: 1, kind: input, shape index: {}]
  %s2 = inlined_call_operand.vmem [shape: f32[1,32], index: 2, kind: input, shape index: {}]
  %s3 = inlined_call_operand.vmem [shape: f32[1,32], index: 3, kind: input, shape index: {}]
  %s4 = inlined_call_operand.vmem [shape: f32[1,32], index: 4, kind: input, shape index: {}]
  %s5 = inlined_call_operand.vmem [shape: bf16[6,32], index: 5, kind: output, shape index: {}]
  %s6 = sld [smem:[#allocation0]]
  $region34: #{sensevoice_forward.118} parent=0
    _
  %s8 = ssub.s32 1, %s6
  %s9 = scalar_select 0, %s8, %s6
  // Predicated region
  $region2: #{sensevoice_forward.118} parent=0 // pred_check
    _
  $region3: #{sensevoice_forward.118} parent=0 // pred_check_branch
    %11 = sbr.rel (0) target = $region5
  $region4: #{sensevoice_forward.118} parent=0 // pred_region
    _
  $region5: #{sensevoice_forward.118} parent=0 // pred_fallthru
    _
  // Predicated region
  $region6: #{sensevoice_forward.118} parent=0 // pred_check
    _
  $region7: #{sensevoice_forward.118} parent=0 // pred_check_branch
    %13 = sbr.rel (0) target = $region9
  $region8: #{sensevoice_forward.118} parent=0 // pred_region
    _
  $region9: #{sensevoice_forward.118} parent=0 // pred_fallthru
    _
  // Predicated region
  $region10: #{sensevoice_forward.118} parent=0 // pred_check
    _
  $region11: #{sensevoice_forward.118} parent=0 // pred_check_branch
    %15 = sbr.rel (0) target = $region13
  $region12: #{sensevoice_forward.118} parent=0 // pred_region
    _
  $region13: #{sensevoice_forward.118} parent=0 // pred_fallthru
    _
  // Predicated region
  $region14: #{sensevoice_forward.118} parent=0 // pred_check
    _
  $region15: #{sensevoice_forward.118} parent=0 // pred_check_branch
    %17 = sbr.rel (0) target = $region17
  $region16: #{sensevoice_forward.118} parent=0 // pred_region
    _
  $region17: #{sensevoice_forward.118} parent=0 // pred_fallthru
    _
  // Predicated region
  $region18: #{sensevoice_forward.118} parent=0 // pred_check
    _
  $region19: #{sensevoice_forward.118} parent=0 // pred_check_branch
    %19 = sbr.rel (0) target = $region21
  $region20: #{sensevoice_forward.118} parent=0 // pred_region
    _
  $region21: #{sensevoice_forward.118} parent=0 // pred_fallthru
    _
  %p21 = scmp.eq.s32.totalorder 0, 0
  // Predicated region
  $region22: #{sensevoice_forward.118} parent=0 // pred_check
    %p22 = pneg %p21
  $region23: #{sensevoice_forward.118} parent=0 // pred_check_branch
    %24 = sbr.rel (%p22) target = $region25
  $region24: #{sensevoice_forward.118} parent=0 // pred_region
    %v25 = vld [vmem:[%s0] sm:$0x7]
    %v26 = vunpack.c.l.bf16 %v25
    %vm27 = vcmask 259072
    %v28 = vsel %vm27, %v26, 0.0
    %29 = vadd.xlane.f32.xlu0 %v28
    %v30 = vpop.xlane.xlu0 %29
    %v31 = vrcp.pop 32.0
    %v32 = vmul.f32 %v30, %v31
    %v33 = vsub.f32 %v26, %v32
    %v34 = vmul.f32 %v33, %v33
    %v35 = vsel %vm27, %v34, 0.0
    %36 = vadd.xlane.f32.xlu0 %v35
    %v37 = vpop.xlane.xlu0 %36
    %v38 = vmul.f32 %v37, %v31
    %v39 = vadd.f32 %v38, 1e-05
    %v40 = vrsqrt.pop %v39
    %v41 = vmul.f32 %v33, %v40
    %v42 = vld [vmem:[%s2] sm:$0x1]
    %v44 = vlaneseq
    %v45 = vshrl.u32 %v44, 7
    %v46 = vsub.s32 0, %v45
    %v47 = vrot.slane %v42, %v46
    %v49 = vmul.f32 %v41, %v47
    %v50 = vld [vmem:[%s3] sm:$0x1]
    %v52 = vlaneseq
    %v53 = vshrl.u32 %v52, 7
    %v54 = vsub.s32 0, %v53
    %v55 = vrot.slane %v50, %v54
    %v57 = vadd.f32 %v49, %v55
    %v58 = vpack.c.bf16 %v57, %v57
    %vm59 = vcmask 256000
    %60 = vst.msk [vmem:[#allocation2] sm:$0x7] %vm59, %v58
  $region25: #{sensevoice_forward.118} parent=0 // pred_fallthru
    _
  %v61 = vld [vmem:[#allocation2] sm:$0x7]
  %v62 = vld [vmem:[%s1] sm:$0xf]
  %v63 = vld [vmem:[%s1 + $0x4] sm:$0xf]
  %v64 = vld [vmem:[%s1 + $0x8] sm:$0xf]
  %v65 = vld [vmem:[%s1 + $0xc] sm:$0xf]
  %v66 = vld [vmem:[%s4] sm:$0x1]
  %v68 = vlaneseq
  %v69 = vshrl.u32 %v68, 7
  %v70 = vsub.s32 0, %v69
  %v71 = vrot.slane %v66, %v70
  %v77 = vunpack.c.l.b16 %v62
  %v78 = vunpack.c.l.b16 %v63
  %v79 = vunpack.c.l.b16 %v64
  %v80 = vunpack.c.l.b16 %v65
  %v81 = vpack.c.b16 %v78, %v77
  %v82 = vpack.c.b16 %v80, %v79
  %vm85 = vcmask 261120
  %v87 = vsel %vm85, %v61, 0
  %89 = vmatprep.subr.bf16.mxu0 0
  %90 = vmatpush1.bf16.msra.mxu0 %v81
  %91 = vmatprep.subr.bf16.mxu0 0
  %92 = vmatpush1.bf16.msra.mxu0 %v82
  %93 = vmatprep.subr.bf16.mxu0 0
  %94 = vmatpush1.bf16.msra.mxu0 0
  %95 = vmatprep.subr.bf16.mxu0 0
  %96 = vmatpush1.bf16.msra.mxu0 0
  %97 = vmatprep.subr.bf16.mxu0 0
  %98 = vmatpush1.bf16.msra.mxu0 0
  %99 = vmatprep.subr.bf16.mxu0 0
  %100 = vmatpush1.bf16.msra.mxu0 0
  %101 = vmatprep.subr.bf16.mxu0 0
  %102 = vmatpush1.bf16.msra.mxu0 0
  %103 = vmatprep.subr.bf16.mxu0 0
  %104 = vmatpush1.bf16.msra.mxu0 0
  %105 = vmatprep.subr.bf16.mxu0 0
  %106 = vmatpush1.bf16.msra.mxu0 0
  %107 = vmatprep.subr.bf16.mxu0 0
  %108 = vmatpush1.bf16.msra.mxu0 0
  %109 = vmatprep.subr.bf16.mxu0 0
  %110 = vmatpush1.bf16.msra.mxu0 0
  %111 = vmatprep.subr.bf16.mxu0 0
  %112 = vmatpush1.bf16.msra.mxu0 0
  %113 = vmatprep.subr.bf16.mxu0 0
  %114 = vmatpush1.bf16.msra.mxu0 0
  %115 = vmatprep.subr.bf16.mxu0 0
  %116 = vmatpush1.bf16.msra.mxu0 0
  %117 = vmatprep.subr.bf16.mxu0 0
  %118 = vmatpush1.bf16.msra.mxu0 0
  %119 = vmatprep.subr.bf16.mxu0 0
  %120 = vmatpush1.bf16.msra.mxu0 0
  %121 = vmatprep.mubr.bf16.mxu0 0
  %122 = vmatmul.mubr.bf16.gmra.mrb[0].mxu0 %v87
  %v123 = vpop.f32.mrb[0].mxu0
  %v124 = vadd.f32 %v71, %v123
  %v125 = vpop.f32.mrb[0].mxu0
  %v126 = vpop.f32.mrb[0].mxu0
  %v127 = vpop.f32.mrb[0].mxu0
  %128 = vdwg.mxu0
  %v129 = vpack.c.bf16 %v124, %v124
  %vm130 = vcmask 256000
  %131 = vst.msk [vmem:[%s5] sm:$0x7] %vm130, %v129
  // Predicated region
  $region26: #{sensevoice_forward.118} parent=0 // pred_check
    _
  $region27: #{sensevoice_forward.118} parent=0 // pred_check_branch
    %133 = sbr.rel (0) target = $region29
  $region28: #{sensevoice_forward.118} parent=0 // pred_region
    _
  $region29: #{sensevoice_forward.118} parent=0 // pred_fallthru
    _
  // Predicated region
  $region30: #{sensevoice_forward.118} parent=0 // pred_check
    _
  $region31: #{sensevoice_forward.118} parent=0 // pred_check_branch
    %135 = sbr.rel (0) target = $region33
  $region32: #{sensevoice_forward.118} parent=0 // pred_region
    _
  $region33: #{sensevoice_forward.118} parent=0 // pred_fallthru
    _

// kernel: sensevoice_forward.108
$region0: #{sensevoice_forward.108}
  #allocation0 [shape = 'u32[]', space=smem, size = 0x4, offset = 0x4, fixed_abs, tag = 'smem constant byte address 0x4 - core index']
  #allocation1 [shape = 'u32[144,128]{1,0:T(1,128)}', space=vmem, size = 0x12000, scoped, tag = 'internal scratch']
  %s0 = inlined_call_operand.vmem [shape: bf16[16,128], index: 0, kind: input, shape index: {}]
  %s1 = inlined_call_operand.vmem [shape: bf16[128,32], index: 1, kind: input, shape index: {}]
  %s2 = inlined_call_operand.vmem [shape: f32[1,32], index: 2, kind: input, shape index: {}]
  %s3 = inlined_call_operand.vmem [shape: bf16[16,32], index: 3, kind: input, shape index: {}]
  %s4 = inlined_call_operand.vmem [shape: bf16[16,32], index: 4, kind: output, shape index: {}]
  %s5 = sld [smem:[#allocation0]]
  $region26: #{sensevoice_forward.108} parent=0
    _
  %s7 = ssub.s32 1, %s5
  %s8 = scalar_select 0, %s7, %s5
  // Predicated region
  $region2: #{sensevoice_forward.108} parent=0 // pred_check
    _
  $region3: #{sensevoice_forward.108} parent=0 // pred_check_branch
    %10 = sbr.rel (0) target = $region5
  $region4: #{sensevoice_forward.108} parent=0 // pred_region
    _
  $region5: #{sensevoice_forward.108} parent=0 // pred_fallthru
    _
  // Predicated region
  $region6: #{sensevoice_forward.108} parent=0 // pred_check
    _
  $region7: #{sensevoice_forward.108} parent=0 // pred_check_branch
    %12 = sbr.rel (0) target = $region9
  $region8: #{sensevoice_forward.108} parent=0 // pred_region
    _
  $region9: #{sensevoice_forward.108} parent=0 // pred_fallthru
    _
  // Predicated region
  $region10: #{sensevoice_forward.108} parent=0 // pred_check
    _
  $region11: #{sensevoice_forward.108} parent=0 // pred_check_branch
    %14 = sbr.rel (0) target = $region13
  $region12: #{sensevoice_forward.108} parent=0 // pred_region
    _
  $region13: #{sensevoice_forward.108} parent=0 // pred_fallthru
    _
  // Predicated region
  $region14: #{sensevoice_forward.108} parent=0 // pred_check
    _
  $region15: #{sensevoice_forward.108} parent=0 // pred_check_branch
    %16 = sbr.rel (0) target = $region17
  $region16: #{sensevoice_forward.108} parent=0 // pred_region
    _
  $region17: #{sensevoice_forward.108} parent=0 // pred_fallthru
    _
  %v18 = vld [vmem:[%s0] sm:$0xf]
  %v19 = vld [vmem:[%s0 + $0x4] sm:$0xf]
  %v20 = vld [vmem:[%s1] sm:$0xf]
  %v21 = vld [vmem:[%s1 + $0x4] sm:$0xf]
  %v22 = vld [vmem:[%s1 + $0x8] sm:$0xf]
  %v23 = vld [vmem:[%s1 + $0xc] sm:$0xf]
  %v24 = vld [vmem:[%s1 + $0x10] sm:$0xf]
  %v25 = vld [vmem:[%s1 + $0x14] sm:$0xf]
  %v26 = vld [vmem:[%s1 + $0x18] sm:$0xf]
  %v27 = vld [vmem:[%s1 + $0x1c] sm:$0xf]
  %v28 = vld [vmem:[%s1 + $0x20] sm:$0xf]
  %v29 = vld [vmem:[%s1 + $0x24] sm:$0xf]
  %v30 = vld [vmem:[%s1 + $0x28] sm:$0xf]
  %v31 = vld [vmem:[%s1 + $0x2c] sm:$0xf]
  %v32 = vld [vmem:[%s1 + $0x30] sm:$0xf]
  %v33 = vld [vmem:[%s1 + $0x34] sm:$0xf]
  %v34 = vld [vmem:[%s1 + $0x38] sm:$0xf]
  %v35 = vld [vmem:[%s1 + $0x3c] sm:$0xf]
  %v36 = vld [vmem:[%s2] sm:$0x1]
  %v38 = vlaneseq
  %v39 = vshrl.u32 %v38, 7
  %v40 = vsub.s32 0, %v39
  %v41 = vrot.slane %v36, %v40
  %v45 = vunpack.c.l.b16 %v18
  %v46 = vunpack.c.l.b16 %v19
  %v47 = vpack.c.b16 %v46, %v45
  %v65 = vunpack.c.l.b16 %v20
  %v66 = vunpack.c.l.b16 %v21
  %v67 = vunpack.c.l.b16 %v22
  %v68 = vunpack.c.l.b16 %v23
  %v69 = vunpack.c.l.b16 %v24
  %v70 = vunpack.c.l.b16 %v25
  %v71 = vunpack.c.l.b16 %v26
  %v72 = vunpack.c.l.b16 %v27
  %v73 = vunpack.c.l.b16 %v28
  %v74 = vunpack.c.l.b16 %v29
  %v75 = vunpack.c.l.b16 %v30
  %v76 = vunpack.c.l.b16 %v31
  %v77 = vunpack.c.l.b16 %v32
  %v78 = vunpack.c.l.b16 %v33
  %v79 = vunpack.c.l.b16 %v34
  %v80 = vunpack.c.l.b16 %v35
  %v81 = vpack.c.b16 %v66, %v65
  %v82 = vpack.c.b16 %v68, %v67
  %v83 = vpack.c.b16 %v70, %v69
  %v84 = vpack.c.b16 %v72, %v71
  %v85 = vpack.c.b16 %v74, %v73
  %v86 = vpack.c.b16 %v76, %v75
  %v87 = vpack.c.b16 %v78, %v77
  %v88 = vpack.c.b16 %v80, %v79
  %97 = vmatprep.subr.bf16.mxu0 0
  %98 = vmatpush1.bf16.msra.mxu0 %v81
  %99 = vmatprep.subr.bf16.mxu0 0
  %100 = vmatpush1.bf16.msra.mxu0 %v82
  %101 = vmatprep.subr.bf16.mxu0 0
  %102 = vmatpush1.bf16.msra.mxu0 %v83
  %103 = vmatprep.subr.bf16.mxu0 0
  %104 = vmatpush1.bf16.msra.mxu0 %v84
  %105 = vmatprep.subr.bf16.mxu0 0
  %106 = vmatpush1.bf16.msra.mxu0 %v85
  %107 = vmatprep.subr.bf16.mxu0 0
  %108 = vmatpush1.bf16.msra.mxu0 %v86
  %109 = vmatprep.subr.bf16.mxu0 0
  %110 = vmatpush1.bf16.msra.mxu0 %v87
  %111 = vmatprep.subr.bf16.mxu0 0
  %112 = vmatpush1.bf16.msra.mxu0 %v88
  %113 = vmatprep.subr.bf16.mxu0 0
  %114 = vmatpush1.bf16.msra.mxu0 0
  %115 = vmatprep.subr.bf16.mxu0 0
  %116 = vmatpush1.bf16.msra.mxu0 0
  %117 = vmatprep.subr.bf16.mxu0 0
  %118 = vmatpush1.bf16.msra.mxu0 0
  %119 = vmatprep.subr.bf16.mxu0 0
  %120 = vmatpush1.bf16.msra.mxu0 0
  %121 = vmatprep.subr.bf16.mxu0 0
  %122 = vmatpush1.bf16.msra.mxu0 0
  %123 = vmatprep.subr.bf16.mxu0 0
  %124 = vmatpush1.bf16.msra.mxu0 0
  %125 = vmatprep.subr.bf16.mxu0 0
  %126 = vmatpush1.bf16.msra.mxu0 0
  %127 = vmatprep.subr.bf16.mxu0 0
  %128 = vmatpush1.bf16.msra.mxu0 0
  %129 = vmatprep.mubr.bf16.mxu0 0
  %130 = vmatmul.mubr.bf16.gmra.mrb[0].mxu0 %v47
  %v131 = vpop.f32.mrb[0].mxu0
  %v132 = vadd.f32 %v41, %v131
  %v133 = vpop.f32.mrb[0].mxu0
  %v134 = vpop.f32.mrb[0].mxu0
  %v135 = vadd.f32 %v41, %v134
  %v136 = vpop.f32.mrb[0].mxu0
  %137 = vdwg.mxu0
  %v138 = vld [vmem:[%s3] sm:$0xf]
  %v139 = vld [vmem:[%s3 + $0x4] sm:$0xf]
  %v140 = vunpack.c.l.bf16 %v138
  %v141 = vunpack.c.l.bf16 %v139
  %v142 = vadd.f32 %v132, %v140
  %v143 = vadd.f32 %v135, %v141
  %v144 = vpack.c.bf16 %v143, %v142
  %v146 = vunpack.c.l.b16 %v144
  %v147 = vunpack.c.h.b16 %v144
  %v148 = vpack.c.b16 %v146, %v146
  %v149 = vpack.c.b16 %v147, %v147
  %vm152 = vcmask 257024
  %153 = vst.msk [vmem:[%s4] sm:$0xf] %vm152, %v148
  %154 = vst.msk [vmem:[%s4 + $0x4] sm:$0xf] %vm152, %v149
  // Predicated region
  $region18: #{sensevoice_forward.108} parent=0 // pred_check
    _
  $region19: #{sensevoice_forward.108} parent=0 // pred_check_branch
    %156 = sbr.rel (0) target = $region21
  $region20: #{sensevoice_forward.108} parent=0 // pred_region
    _
  $region21: #{sensevoice_forward.108} parent=0 // pred_fallthru
    _
  // Predicated region
  $region22: #{sensevoice_forward.108} parent=0 // pred_check
    _
  $region23: #{sensevoice_forward.108} parent=0 // pred_check_branch
    %158 = sbr.rel (0) target = $region25
  $region24: #{sensevoice_forward.108} parent=0 // pred_region
    _
  $region25: #{sensevoice_forward.108} parent=0 // pred_fallthru
    _

// kernel: sensevoice_forward.116
$region0: #{sensevoice_forward.116}
  #allocation0 [shape = 'u32[]', space=smem, size = 0x4, offset = 0x4, fixed_abs, tag = 'smem constant byte address 0x4 - core index']
  #allocation1 [shape = 'u32[144,128]{1,0:T(1,128)}', space=vmem, size = 0x12000, scoped, tag = 'internal scratch']
  #allocation2 [shape = 'f32[4,6,1]{2,1,0:T(8,128)}', space=vmem, size = 0x4000, scoped, tag = 'scratch operand']
  #allocation3 [shape = 'f32[4,6,1]{2,1,0:T(8,128)}', space=vmem, size = 0x4000, scoped, tag = 'scratch operand']
  #allocation4 [shape = 'f32[4,6,8]{2,1,0:T(8,128)}', space=vmem, size = 0x4000, scoped, tag = 'scratch operand']
  %s0 = inlined_call_operand.vmem [shape: bf16[6,32], index: 0, kind: input, shape index: {}]
  %s1 = inlined_call_operand.vmem [shape: bf16[6,32], index: 1, kind: input, shape index: {}]
  %s2 = inlined_call_operand.vmem [shape: bf16[6,32], index: 2, kind: input, shape index: {}]
  %s3 = inlined_call_operand.vmem [shape: bf16[6,32], index: 3, kind: output, shape index: {}]
  %s4 = sld [smem:[#allocation0]]
  $region34: #{sensevoice_forward.116} parent=0
    _
  %s6 = ssub.s32 1, %s4
  %s7 = scalar_select 0, %s6, %s4
  // Predicated region
  $region2: #{sensevoice_forward.116} parent=0 // pred_check
    _
  $region3: #{sensevoice_forward.116} parent=0 // pred_check_branch
    %9 = sbr.rel (0) target = $region5
  $region4: #{sensevoice_forward.116} parent=0 // pred_region
    _
  $region5: #{sensevoice_forward.116} parent=0 // pred_fallthru
    _
  // Predicated region
  $region6: #{sensevoice_forward.116} parent=0 // pred_check
    _
  $region7: #{sensevoice_forward.116} parent=0 // pred_check_branch
    %11 = sbr.rel (0) target = $region9
  $region8: #{sensevoice_forward.116} parent=0 // pred_region
    _
  $region9: #{sensevoice_forward.116} parent=0 // pred_fallthru
    _
  // Predicated region
  $region10: #{sensevoice_forward.116} parent=0 // pred_check
    _
  $region11: #{sensevoice_forward.116} parent=0 // pred_check_branch
    %13 = sbr.rel (0) target = $region13
  $region12: #{sensevoice_forward.116} parent=0 // pred_region
    _
  $region13: #{sensevoice_forward.116} parent=0 // pred_fallthru
    _
  %p15 = scmp.eq.s32.totalorder 0, 0
  // Predicated region
  $region14: #{sensevoice_forward.116} parent=0 // pred_check
    %p16 = pneg %p15
  $region15: #{sensevoice_forward.116} parent=0 // pred_check_branch
    %18 = sbr.rel (%p16) target = $region17
  $region16: #{sensevoice_forward.116} parent=0 // pred_region
    %vm19 = vcmask 5120
    %20 = vst.msk [vmem:[#allocation2] sm:$0x3f] %vm19, -1e+30
    %21 = vst.msk [vmem:[#allocation2 + $0x8] sm:$0x3f] %vm19, -1e+30
    %22 = vst.msk [vmem:[#allocation2 + $0x10] sm:$0x3f] %vm19, -1e+30
    %23 = vst.msk [vmem:[#allocation2 + $0x18] sm:$0x3f] %vm19, -1e+30
    %24 = vst.msk [vmem:[#allocation3] sm:$0x3f] %vm19, 0.0
    %25 = vst.msk [vmem:[#allocation3 + $0x8] sm:$0x3f] %vm19, 0.0
    %26 = vst.msk [vmem:[#allocation3 + $0x10] sm:$0x3f] %vm19, 0.0
    %27 = vst.msk [vmem:[#allocation3 + $0x18] sm:$0x3f] %vm19, 0.0
    %vm28 = vcmask 62464
    %29 = vst.msk [vmem:[#allocation4] sm:$0x3f] %vm28, 0.0
    %30 = vst.msk [vmem:[#allocation4 + $0x8] sm:$0x3f] %vm28, 0.0
    %31 = vst.msk [vmem:[#allocation4 + $0x10] sm:$0x3f] %vm28, 0.0
    %32 = vst.msk [vmem:[#allocation4 + $0x18] sm:$0x3f] %vm28, 0.0
  $region17: #{sensevoice_forward.116} parent=0 // pred_fallthru
    _
  %s33 = smul.u32 0, 6
  %s34 = smul.u32 0, 6
  %s35 = sadd.s32 %s34, 5
  %p36 = scmp.le.s32.totalorder %s33, %s35
  // Predicated region
  $region18: #{sensevoice_forward.116} parent=0 // pred_check
    %p37 = pneg %p36
  $region19: #{sensevoice_forward.116} parent=0 // pred_check_branch
    %39 = sbr.rel (%p37) target = $region21
  $region20: #{sensevoice_forward.116} parent=0 // pred_region
    %v40 = vlaneseq
    %v41 = vand.u32 %v40, 127
    %v42 = vstv %s33
    %v43 = vadd.s32 %v42, %v41
    %v44 = vlaneseq
    %v45 = vshrl.u32 %v44, 7
    %v46 = vstv %s34
    %v47 = vadd.s32 %v46, %v45
    %vm48 = vcmp.gt.s32.totalorder %v43, %v47
    %v49 = vld [vmem:[%s0] sm:$0x7]
    %v50 = vld [vmem:[%s1] sm:$0x7]
    %vm51 = vcmask 64512
    %v53 = vsel %vm51, %v49, 0
    %v56 = vsel %vm51, %v50, 0
    %58 = vmatprep.subr.bf16.mxu0 0
    %59 = vmatpush1.bf16.xpose.msra.mxu0 %v56
    %60 = vmatprep.subr.bf16.mxu0 0
    %61 = vmatpush1.bf16.xpose.msra.mxu0 0
    %62 = vmatprep.subr.bf16.mxu0 0
    %63 = vmatpush1.bf16.xpose.msra.mxu0 0
    %64 = vmatprep.subr.bf16.mxu0 0
    %65 = vmatpush1.bf16.xpose.msra.mxu0 0
    %66 = vmatprep.subr.bf16.mxu0 0
    %67 = vmatpush1.bf16.xpose.msra.mxu0 0
    %68 = vmatprep.subr.bf16.mxu0 0
    %69 = vmatpush1.bf16.xpose.msra.mxu0 0
    %70 = vmatprep.subr.bf16.mxu0 0
    %71 = vmatpush1.bf16.xpose.msra.mxu0 0
    %72 = vmatprep.subr.bf16.mxu0 0
    %73 = vmatpush1.bf16.xpose.msra.mxu0 0
    %74 = vmatprep.subr.bf16.mxu0 0
    %75 = vmatpush1.bf16.xpose.msra.mxu0 0
    %76 = vmatprep.subr.bf16.mxu0 0
    %77 = vmatpush1.bf16.xpose.msra.mxu0 0
    %78 = vmatprep.subr.bf16.mxu0 0
    %79 = vmatpush1.bf16.xpose.msra.mxu0 0
    %80 = vmatprep.subr.bf16.mxu0 0
    %81 = vmatpush1.bf16.xpose.msra.mxu0 0
    %82 = vmatprep.subr.bf16.mxu0 0
    %83 = vmatpush1.bf16.xpose.msra.mxu0 0
    %84 = vmatprep.subr.bf16.mxu0 0
    %85 = vmatpush1.bf16.xpose.msra.mxu0 0
    %86 = vmatprep.subr.bf16.mxu0 0
    %87 = vmatpush1.bf16.xpose.msra.mxu0 0
    %88 = vmatprep.subr.bf16.mxu0 0
    %89 = vmatpush1.bf16.xpose.msra.mxu0 0
    %90 = vmatprep.mubr.bf16.mxu0 0
    %91 = vmatmul.mubr.bf16.gmra.mrb[0].mxu0 %v53
    %v92 = vpop.f32.mrb[0].mxu0
    %v93 = vadd.f32 0.0, %v92
    %v94 = vpop.f32.mrb[0].mxu0
    %v95 = vpop.f32.mrb[0].mxu0
    %v96 = vpop.f32.mrb[0].mxu0
    %97 = vdwg.mxu0
    %v98 = vsel %vm48, -1e+30, %v93
    %v99 = vld [vmem:[#allocation2] sm:$0x3f]
    %vm100 = vcmask 46080
    %v101 = vsel %vm100, %v98, -inf
    %102 = vmax.xlane.f32.xlu0 %v101
    %v103 = vpop.xlane.xlu0 %102
    %v104 = vmax.f32 %v99, %v103
    %v105 = vsub.f32 %v99, %v104
    %v106 = vmul.f32 %v105, 1.442695
    %v107 = vpow.pop %v106
    %109 = vset.pattern.permute.xlu0 0
    %110 = vperm.xlu0 %109, %v104
    %v111 = vpop.permute.xlu0 %110
    %v113 = vsub.f32 %v98, %v111
    %v114 = vmul.f32 %v113, 1.442695
    %v115 = vpow.pop %v114
    %v116 = vld [vmem:[#allocation3] sm:$0x3f]
    %v117 = vmul.f32 %v107, %v116
    %v118 = vsel %vm100, %v115, 0.0
    %119 = vadd.xlane.f32.xlu0 %v118
    %v120 = vpop.xlane.xlu0 %119
    %v121 = vadd.f32 %v117, %v120
    %vm122 = vcmask 5120
    %123 = vst.msk [vmem:[#allocation3] sm:$0x3f] %vm122, %v121
    %v124 = vld [vmem:[#allocation4] sm:$0x3f]
    %126 = vset.pattern.permute.xlu0 0
    %127 = vperm.xlu0 %126, %v107
    %v128 = vpop.permute.xlu0 %127
    %v130 = vmul.f32 %v128, %v124
    %v131 = vpack.c.bf16 %v115, %v115
    %v132 = vld [vmem:[%s2] sm:$0x7]
    %vm133 = vcmask 48128
    %v135 = vsel %vm133, %v131, 0
    %vm137 = vcmask 1042432
    %v139 = vsel %vm137, %v132, 0
    %141 = vmatprep.subr.bf16.mxu0 0
    %142 = vmatpush1.bf16.msra.mxu0 %v139
    %143 = vmatprep.subr.bf16.mxu0 0
    %144 = vmatpush1.bf16.msra.mxu0 0
    %145 = vmatprep.subr.bf16.mxu0 0
    %146 = vmatpush1.bf16.msra.mxu0 0
    %147 = vmatprep.subr.bf16.mxu0 0
    %148 = vmatpush1.bf16.msra.mxu0 0
    %149 = vmatprep.subr.bf16.mxu0 0
    %150 = vmatpush1.bf16.msra.mxu0 0
    %151 = vmatprep.subr.bf16.mxu0 0
    %152 = vmatpush1.bf16.msra.mxu0 0
    %153 = vmatprep.subr.bf16.mxu0 0
    %154 = vmatpush1.bf16.msra.mxu0 0
    %155 = vmatprep.subr.bf16.mxu0 0
    %156 = vmatpush1.bf16.msra.mxu0 0
    %157 = vmatprep.subr.bf16.mxu0 0
    %158 = vmatpush1.bf16.msra.mxu0 0
    %159 = vmatprep.subr.bf16.mxu0 0
    %160 = vmatpush1.bf16.msra.mxu0 0
    %161 = vmatprep.subr.bf16.mxu0 0
    %162 = vmatpush1.bf16.msra.mxu0 0
    %163 = vmatprep.subr.bf16.mxu0 0
    %164 = vmatpush1.bf16.msra.mxu0 0
    %165 = vmatprep.subr.bf16.mxu0 0
    %166 = vmatpush1.bf16.msra.mxu0 0
    %167 = vmatprep.subr.bf16.mxu0 0
    %168 = vmatpush1.bf16.msra.mxu0 0
    %169 = vmatprep.subr.bf16.mxu0 0
    %170 = vmatpush1.bf16.msra.mxu0 0
    %171 = vmatprep.subr.bf16.mxu0 0
    %172 = vmatpush1.bf16.msra.mxu0 0
    %173 = vmatprep.mubr.bf16.mxu0 0
    %174 = vmatmul.mubr.bf16.gmra.mrb[0].mxu0 %v135
    %v175 = vpop.f32.mrb[0].mxu0
    %v176 = vadd.f32 0.0, %v175
    %v177 = vpop.f32.mrb[0].mxu0
    %v178 = vpop.f32.mrb[0].mxu0
    %v179 = vpop.f32.mrb[0].mxu0
    %180 = vdwg.mxu0
    %v181 = vadd.f32 %v130, %v176
    %vm182 = vcmask 62464
    %183 = vst.msk [vmem:[#allocation4] sm:$0x3f] %vm182, %v181
    %184 = vst.msk [vmem:[#allocation2] sm:$0x3f] %vm122, %v104
    %v185 = vld [vmem:[%s0] sm:$0x7]
    %v186 = vld [vmem:[%s1] sm:$0x7]
    %v188 = vunpack.c.l.b16 %v185
    %v189 = vpack.c.b16 %v188, %v188
    %190 = vrot.lane.b32.xlu0 %v189, 120
    %v191 = vpop.permute.xlu0 %190
    %v193 = vunpack.c.l.b16 %v186
    %v194 = vpack.c.b16 %v193, %v193
    %195 = vrot.lane.b32.xlu0 %v194, 120
    %v196 = vpop.permute.xlu0 %195
    %v198 = vsel %vm51, %v191, 0
    %v201 = vsel %vm51, %v196, 0
    %203 = vmatprep.subr.bf16.mxu0 0
    %204 = vmatpush1.bf16.xpose.msra.mxu0 %v201
    %205 = vmatprep.subr.bf16.mxu0 0
    %206 = vmatpush1.bf16.xpose.msra.mxu0 0
    %207 = vmatprep.subr.bf16.mxu0 0
    %208 = vmatpush1.bf16.xpose.msra.mxu0 0
    %209 = vmatprep.subr.bf16.mxu0 0
    %210 = vmatpush1.bf16.xpose.msra.mxu0 0
    %211 = vmatprep.subr.bf16.mxu0 0
    %212 = vmatpush1.bf16.xpose.msra.mxu0 0
    %213 = vmatprep.subr.bf16.mxu0 0
    %214 = vmatpush1.bf16.xpose.msra.mxu0 0
    %215 = vmatprep.subr.bf16.mxu0 0
    %216 = vmatpush1.bf16.xpose.msra.mxu0 0
    %217 = vmatprep.subr.bf16.mxu0 0
    %218 = vmatpush1.bf16.xpose.msra.mxu0 0
    %219 = vmatprep.subr.bf16.mxu0 0
    %220 = vmatpush1.bf16.xpose.msra.mxu0 0
    %221 = vmatprep.subr.bf16.mxu0 0
    %222 = vmatpush1.bf16.xpose.msra.mxu0 0
    %223 = vmatprep.subr.bf16.mxu0 0
    %224 = vmatpush1.bf16.xpose.msra.mxu0 0
    %225 = vmatprep.subr.bf16.mxu0 0
    %226 = vmatpush1.bf16.xpose.msra.mxu0 0
    %227 = vmatprep.subr.bf16.mxu0 0
    %228 = vmatpush1.bf16.xpose.msra.mxu0 0
    %229 = vmatprep.subr.bf16.mxu0 0
    %230 = vmatpush1.bf16.xpose.msra.mxu0 0
    %231 = vmatprep.subr.bf16.mxu0 0
    %232 = vmatpush1.bf16.xpose.msra.mxu0 0
    %233 = vmatprep.subr.bf16.mxu0 0
    %234 = vmatpush1.bf16.xpose.msra.mxu0 0
    %235 = vmatprep.mubr.bf16.mxu0 0
    %236 = vmatmul.mubr.bf16.gmra.mrb[0].mxu0 %v198
    %v237 = vpop.f32.mrb[0].mxu0
    %v238 = vadd.f32 0.0, %v237
    %v239 = vpop.f32.mrb[0].mxu0
    %v240 = vpop.f32.mrb[0].mxu0
    %v241 = vpop.f32.mrb[0].mxu0
    %242 = vdwg.mxu0
    %v243 = vsel %vm48, -1e+30, %v238
    %s244 = scalar_lea.vmem [#allocation2], 8
    %v245 = vld [vmem:[%s244] sm:$0x3f]
    %v246 = vsel %vm100, %v243, -inf
    %247 = vmax.xlane.f32.xlu0 %v246
    %v248 = vpop.xlane.xlu0 %247
    %v249 = vmax.f32 %v245, %v248
    %v250 = vsub.f32 %v245, %v249
    %v251 = vmul.f32 %v250, 1.442695
    %v252 = vpow.pop %v251
    %254 = vset.pattern.permute.xlu0 0
    %255 = vperm.xlu0 %254, %v249
    %v256 = vpop.permute.xlu0 %255
    %v258 = vsub.f32 %v243, %v256
    %v259 = vmul.f32 %v258, 1.442695
    %v260 = vpow.pop %v259
    %s261 = scalar_lea.vmem [#allocation3], 8
    %v262 = vld [vmem:[%s261] sm:$0x3f]
    %v263 = vmul.f32 %v252, %v262
    %v264 = vsel %vm100, %v260, 0.0
    %265 = vadd.xlane.f32.xlu0 %v264
    %v266 = vpop.xlane.xlu0 %265
    %v267 = vadd.f32 %v263, %v266
    %268 = vst.msk [vmem:[%s261] sm:$0x3f] %vm122, %v267
    %s269 = scalar_lea.vmem [#allocation4], 8
    %v270 = vld [vmem:[%s269] sm:$0x3f]
    %272 = vset.pattern.permute.xlu0 0
    %273 = vperm.xlu0 %272, %v252
    %v274 = vpop.permute.xlu0 %273
    %v276 = vmul.f32 %v274, %v270
    %v277 = vpack.c.bf16 %v260, %v260
    %v278 = vld [vmem:[%s2] sm:$0x7]
    %v280 = vunpack.c.l.b16 %v278
    %v281 = vpack.c.b16 %v280, %v280
    %282 = vrot.lane.b32.xlu0 %v281, 120
    %v283 = vpop.permute.xlu0 %282
    %v285 = vsel %vm133, %v277, 0
    %v288 = vsel %vm137, %v283, 0
    %290 = vmatprep.subr.bf16.mxu0 0
    %291 = vmatpush1.bf16.msra.mxu0 %v288
    %292 = vmatprep.subr.bf16.mxu0 0
    %293 = vmatpush1.bf16.msra.mxu0 0
    %294 = vmatprep.subr.bf16.mxu0 0
    %295 = vmatpush1.bf16.msra.mxu0 0
    %296 = vmatprep.subr.bf16.mxu0 0
    %297 = vmatpush1.bf16.msra.mxu0 0
    %298 = vmatprep.subr.bf16.mxu0 0
    %299 = vmatpush1.bf16.msra.mxu0 0
    %300 = vmatprep.subr.bf16.mxu0 0
    %301 = vmatpush1.bf16.msra.mxu0 0
    %302 = vmatprep.subr.bf16.mxu0 0
    %303 = vmatpush1.bf16.msra.mxu0 0
    %304 = vmatprep.subr.bf16.mxu0 0
    %305 = vmatpush1.bf16.msra.mxu0 0
    %306 = vmatprep.subr.bf16.mxu0 0
    %307 = vmatpush1.bf16.msra.mxu0 0
    %308 = vmatprep.subr.bf16.mxu0 0
    %309 = vmatpush1.bf16.msra.mxu0 0
    %310 = vmatprep.subr.bf16.mxu0 0
    %311 = vmatpush1.bf16.msra.mxu0 0
    %312 = vmatprep.subr.bf16.mxu0 0
    %313 = vmatpush1.bf16.msra.mxu0 0
    %314 = vmatprep.subr.bf16.mxu0 0
    %315 = vmatpush1.bf16.msra.mxu0 0
    %316 = vmatprep.subr.bf16.mxu0 0
    %317 = vmatpush1.bf16.msra.mxu0 0
    %318 = vmatprep.subr.bf16.mxu0 0
    %319 = vmatpush1.bf16.msra.mxu0 0
    %320 = vmatprep.subr.bf16.mxu0 0
    %321 = vmatpush1.bf16.msra.mxu0 0
    %322 = vmatprep.mubr.bf16.mxu0 0
    %323 = vmatmul.mubr.bf16.gmra.mrb[0].mxu0 %v285
    %v324 = vpop.f32.mrb[0].mxu0
    %v325 = vadd.f32 0.0, %v324
    %v326 = vpop.f32.mrb[0].mxu0
    %v327 = vpop.f32.mrb[0].mxu0
    %v328 = vpop.f32.mrb[0].mxu0
    %329 = vdwg.mxu0
    %v330 = vadd.f32 %v276, %v325
    %331 = vst.msk [vmem:[%s269] sm:$0x3f] %vm182, %v330
    %332 = vst.msk [vmem:[%s244] sm:$0x3f] %vm122, %v249
    %v333 = vld [vmem:[%s0] sm:$0x7]
    %v334 = vld [vmem:[%s1] sm:$0x7]
    %v336 = vunpack.c.l.b16 %v333
    %v337 = vpack.c.b16 %v336, %v336
    %338 = vrot.lane.b32.xlu0 %v337, 112
    %v339 = vpop.permute.xlu0 %338
    %v341 = vunpack.c.l.b16 %v334
    %v342 = vpack.c.b16 %v341, %v341
    %343 = vrot.lane.b32.xlu0 %v342, 112
    %v344 = vpop.permute.xlu0 %343
    %v346 = vsel %vm51, %v339, 0
    %v349 = vsel %vm51, %v344, 0
    %351 = vmatprep.subr.bf16.mxu0 0
    %352 = vmatpush1.bf16.xpose.msra.mxu0 %v349
    %353 = vmatprep.subr.bf16.mxu0 0
    %354 = vmatpush1.bf16.xpose.msra.mxu0 0
    %355 = vmatprep.subr.bf16.mxu0 0
    %356 = vmatpush1.bf16.xpose.msra.mxu0 0
    %357 = vmatprep.subr.bf16.mxu0 0
    %358 = vmatpush1.bf16.xpose.msra.mxu0 0
    %359 = vmatprep.subr.bf16.mxu0 0
    %360 = vmatpush1.bf16.xpose.msra.mxu0 0
    %361 = vmatprep.subr.bf16.mxu0 0
    %362 = vmatpush1.bf16.xpose.msra.mxu0 0
    %363 = vmatprep.subr.bf16.mxu0 0
    %364 = vmatpush1.bf16.xpose.msra.mxu0 0
    %365 = vmatprep.subr.bf16.mxu0 0
    %366 = vmatpush1.bf16.xpose.msra.mxu0 0
    %367 = vmatprep.subr.bf16.mxu0 0
    %368 = vmatpush1.bf16.xpose.msra.mxu0 0
    %369 = vmatprep.subr.bf16.mxu0 0
    %370 = vmatpush1.bf16.xpose.msra.mxu0 0
    %371 = vmatprep.subr.bf16.mxu0 0
    %372 = vmatpush1.bf16.xpose.msra.mxu0 0
    %373 = vmatprep.subr.bf16.mxu0 0
    %374 = vmatpush1.bf16.xpose.msra.mxu0 0
    %375 = vmatprep.subr.bf16.mxu0 0
    %376 = vmatpush1.bf16.xpose.msra.mxu0 0
    %377 = vmatprep.subr.bf16.mxu0 0
    %378 = vmatpush1.bf16.xpose.msra.mxu0 0
    %379 = vmatprep.subr.bf16.mxu0 0
    %380 = vmatpush1.bf16.xpose.msra.mxu0 0
    %381 = vmatprep.subr.bf16.mxu0 0
    %382 = vmatpush1.bf16.xpose.msra.mxu0 0
    %383 = vmatprep.mubr.bf16.mxu0 0
    %384 = vmatmul.mubr.bf16.gmra.mrb[0].mxu0 %v346
    %v385 = vpop.f32.mrb[0].mxu0
    %v386 = vadd.f32 0.0, %v385
    %v387 = vpop.f32.mrb[0].mxu0
    %v388 = vpop.f32.mrb[0].mxu0
    %v389 = vpop.f32.mrb[0].mxu0
    %390 = vdwg.mxu0
    %v391 = vsel %vm48, -1e+30, %v386
    %s392 = scalar_lea.vmem [#allocation2], 16
    %v393 = vld [vmem:[%s392] sm:$0x3f]
    %v394 = vsel %vm100, %v391, -inf
    %395 = vmax.xlane.f32.xlu0 %v394
    %v396 = vpop.xlane.xlu0 %395
    %v397 = vmax.f32 %v393, %v396
    %v398 = vsub.f32 %v393, %v397
    %v399 = vmul.f32 %v398, 1.442695
    %v400 = vpow.pop %v399
    %402 = vset.pattern.permute.xlu0 0
    %403 = vperm.xlu0 %402, %v397
    %v404 = vpop.permute.xlu0 %403
    %v406 = vsub.f32 %v391, %v404
    %v407 = vmul.f32 %v406, 1.442695
    %v408 = vpow.pop %v407
    %s409 = scalar_lea.vmem [#allocation3], 16
    %v410 = vld [vmem:[%s409] sm:$0x3f]
    %v411 = vmul.f32 %v400, %v410
    %v412 = vsel %vm100, %v408, 0.0
    %413 = vadd.xlane.f32.xlu0 %v412
    %v414 = vpop.xlane.xlu0 %413
    %v415 = vadd.f32 %v411, %v414
    %416 = vst.msk [vmem:[%s409] sm:$0x3f] %vm122, %v415
    %s417 = scalar_lea.vmem [#allocation4], 16
    %v418 = vld [vmem:[%s417] sm:$0x3f]
    %420 = vset.pattern.permute.xlu0 0
    %421 = vperm.xlu0 %420, %v400
    %v422 = vpop.permute.xlu0 %421
    %v424 = vmul.f32 %v422, %v418
    %v425 = vpack.c.bf16 %v408, %v408
    %v426 = vld [vmem:[%s2] sm:$0x7]
    %v428 = vunpack.c.l.b16 %v426
    %v429 = vpack.c.b16 %v428, %v428
    %430 = vrot.lane.b32.xlu0 %v429, 112
    %v431 = vpop.permute.xlu0 %430
    %v433 = vsel %vm133, %v425, 0
    %v436 = vsel %vm137, %v431, 0
    %438 = vmatprep.subr.bf16.mxu0 0
    %439 = vmatpush1.bf16.msra.mxu0 %v436
    %440 = vmatprep.subr.bf16.mxu0 0
    %441 = vmatpush1.bf16.msra.mxu0 0
    %442 = vmatprep.subr.bf16.mxu0 0
    %443 = vmatpush1.bf16.msra.mxu0 0
    %444 = vmatprep.subr.bf16.mxu0 0
    %445 = vmatpush1.bf16.msra.mxu0 0
    %446 = vmatprep.subr.bf16.mxu0 0
    %447 = vmatpush1.bf16.msra.mxu0 0
    %448 = vmatprep.subr.bf16.mxu0 0
    %449 = vmatpush1.bf16.msra.mxu0 0
    %450 = vmatprep.subr.bf16.mxu0 0
    %451 = vmatpush1.bf16.msra.mxu0 0
    %452 = vmatprep.subr.bf16.mxu0 0
    %453 = vmatpush1.bf16.msra.mxu0 0
    %454 = vmatprep.subr.bf16.mxu0 0
    %455 = vmatpush1.bf16.msra.mxu0 0
    %456 = vmatprep.subr.bf16.mxu0 0
    %457 = vmatpush1.bf16.msra.mxu0 0
    %458 = vmatprep.subr.bf16.mxu0 0
    %459 = vmatpush1.bf16.msra.mxu0 0
    %460 = vmatprep.subr.bf16.mxu0 0
    %461 = vmatpush1.bf16.msra.mxu0 0
    %462 = vmatprep.subr.bf16.mxu0 0
    %463 = vmatpush1.bf16.msra.mxu0 0
    %464 = vmatprep.subr.bf16.mxu0 0
    %465 = vmatpush1.bf16.msra.mxu0 0
    %466 = vmatprep.subr.bf16.mxu0 0
    %467 = vmatpush1.bf16.msra.mxu0 0
    %468 = vmatprep.subr.bf16.mxu0 0
    %469 = vmatpush1.bf16.msra.mxu0 0
    %470 = vmatprep.mubr.bf16.mxu0 0
    %471 = vmatmul.mubr.bf16.gmra.mrb[0].mxu0 %v433
    %v472 = vpop.f32.mrb[0].mxu0
    %v473 = vadd.f32 0.0, %v472
    %v474 = vpop.f32.mrb[0].mxu0
    %v475 = vpop.f32.mrb[0].mxu0
    %v476 = vpop.f32.mrb[0].mxu0
    %477 = vdwg.mxu0
    %v478 = vadd.f32 %v424, %v473
    %479 = vst.msk [vmem:[%s417] sm:$0x3f] %vm182, %v478
    %480 = vst.msk [vmem:[%s392] sm:$0x3f] %vm122, %v397
    %v481 = vld [vmem:[%s0] sm:$0x7]
    %v482 = vld [vmem:[%s1] sm:$0x7]
    %v484 = vunpack.c.l.b16 %v481
    %v485 = vpack.c.b16 %v484, %v484
    %486 = vrot.lane.b32.xlu0 %v485, 104
    %v487 = vpop.permute.xlu0 %486
    %v489 = vunpack.c.l.b16 %v482
    %v490 = vpack.c.b16 %v489, %v489
    %491 = vrot.lane.b32.xlu0 %v490, 104
    %v492 = vpop.permute.xlu0 %491
    %v494 = vsel %vm51, %v487, 0
    %v497 = vsel %vm51, %v492, 0
    %499 = vmatprep.subr.bf16.mxu0 0
    %500 = vmatpush1.bf16.xpose.msra.mxu0 %v497
    %501 = vmatprep.subr.bf16.mxu0 0
    %502 = vmatpush1.bf16.xpose.msra.mxu0 0
    %503 = vmatprep.subr.bf16.mxu0 0
    %504 = vmatpush1.bf16.xpose.msra.mxu0 0
    %505 = vmatprep.subr.bf16.mxu0 0
    %506 = vmatpush1.bf16.xpose.msra.mxu0 0
    %507 = vmatprep.subr.bf16.mxu0 0
    %508 = vmatpush1.bf16.xpose.msra.mxu0 0
    %509 = vmatprep.subr.bf16.mxu0 0
    %510 = vmatpush1.bf16.xpose.msra.mxu0 0
    %511 = vmatprep.subr.bf16.mxu0 0
    %512 = vmatpush1.bf16.xpose.msra.mxu0 0
    %513 = vmatprep.subr.bf16.mxu0 0
    %514 = vmatpush1.bf16.xpose.msra.mxu0 0
    %515 = vmatprep.subr.bf16.mxu0 0
    %516 = vmatpush1.bf16.xpose.msra.mxu0 0
    %517 = vmatprep.subr.bf16.mxu0 0
    %518 = vmatpush1.bf16.xpose.msra.mxu0 0
    %519 = vmatprep.subr.bf16.mxu0 0
    %520 = vmatpush1.bf16.xpose.msra.mxu0 0
    %521 = vmatprep.subr.bf16.mxu0 0
    %522 = vmatpush1.bf16.xpose.msra.mxu0 0
    %523 = vmatprep.subr.bf16.mxu0 0
    %524 = vmatpush1.bf16.xpose.msra.mxu0 0
    %525 = vmatprep.subr.bf16.mxu0 0
    %526 = vmatpush1.bf16.xpose.msra.mxu0 0
    %527 = vmatprep.subr.bf16.mxu0 0
    %528 = vmatpush1.bf16.xpose.msra.mxu0 0
    %529 = vmatprep.subr.bf16.mxu0 0
    %530 = vmatpush1.bf16.xpose.msra.mxu0 0
    %531 = vmatprep.mubr.bf16.mxu0 0
    %532 = vmatmul.mubr.bf16.gmra.mrb[0].mxu0 %v494
    %v533 = vpop.f32.mrb[0].mxu0
    %v534 = vadd.f32 0.0, %v533
    %v535 = vpop.f32.mrb[0].mxu0
    %v536 = vpop.f32.mrb[0].mxu0
    %v537 = vpop.f32.mrb[0].mxu0
    %538 = vdwg.mxu0
    %v539 = vsel %vm48, -1e+30, %v534
    %s540 = scalar_lea.vmem [#allocation2], 24
    %v541 = vld [vmem:[%s540] sm:$0x3f]
    %v542 = vsel %vm100, %v539, -inf
    %543 = vmax.xlane.f32.xlu0 %v542
    %v544 = vpop.xlane.xlu0 %543
    %v545 = vmax.f32 %v541, %v544
    %v546 = vsub.f32 %v541, %v545
    %v547 = vmul.f32 %v546, 1.442695
    %v548 = vpow.pop %v547
    %550 = vset.pattern.permute.xlu0 0
    %551 = vperm.xlu0 %550, %v545
    %v552 = vpop.permute.xlu0 %551
    %v554 = vsub.f32 %v539, %v552
    %v555 = vmul.f32 %v554, 1.442695
    %v556 = vpow.pop %v555
    %s557 = scalar_lea.vmem [#allocation3], 24
    %v558 = vld [vmem:[%s557] sm:$0x3f]
    %v559 = vmul.f32 %v548, %v558
    %v560 = vsel %vm100, %v556, 0.0
    %561 = vadd.xlane.f32.xlu0 %v560
    %v562 = vpop.xlane.xlu0 %561
    %v563 = vadd.f32 %v559, %v562
    %564 = vst.msk [vmem:[%s557] sm:$0x3f] %vm122, %v563
    %s565 = scalar_lea.vmem [#allocation4], 24
    %v566 = vld [vmem:[%s565] sm:$0x3f]
    %568 = vset.pattern.permute.xlu0 0
    %569 = vperm.xlu0 %568, %v548
    %v570 = vpop.permute.xlu0 %569
    %v572 = vmul.f32 %v570, %v566
    %v573 = vpack.c.bf16 %v556, %v556
    %v574 = vld [vmem:[%s2] sm:$0x7]
    %v576 = vunpack.c.l.b16 %v574
    %v577 = vpack.c.b16 %v576, %v576
    %578 = vrot.lane.b32.xlu0 %v577, 104
    %v579 = vpop.permute.xlu0 %578
    %v581 = vsel %vm133, %v573, 0
    %v584 = vsel %vm137, %v579, 0
    %586 = vmatprep.subr.bf16.mxu0 0
    %587 = vmatpush1.bf16.msra.mxu0 %v584
    %588 = vmatprep.subr.bf16.mxu0 0
    %589 = vmatpush1.bf16.msra.mxu0 0
    %590 = vmatprep.subr.bf16.mxu0 0
    %591 = vmatpush1.bf16.msra.mxu0 0
    %592 = vmatprep.subr.bf16.mxu0 0
    %593 = vmatpush1.bf16.msra.mxu0 0
    %594 = vmatprep.subr.bf16.mxu0 0
    %595 = vmatpush1.bf16.msra.mxu0 0
    %596 = vmatprep.subr.bf16.mxu0 0
    %597 = vmatpush1.bf16.msra.mxu0 0
    %598 = vmatprep.subr.bf16.mxu0 0
    %599 = vmatpush1.bf16.msra.mxu0 0
    %600 = vmatprep.subr.bf16.mxu0 0
    %601 = vmatpush1.bf16.msra.mxu0 0
    %602 = vmatprep.subr.bf16.mxu0 0
    %603 = vmatpush1.bf16.msra.mxu0 0
    %604 = vmatprep.subr.bf16.mxu0 0
    %605 = vmatpush1.bf16.msra.mxu0 0
    %606 = vmatprep.subr.bf16.mxu0 0
    %607 = vmatpush1.bf16.msra.mxu0 0
    %608 = vmatprep.subr.bf16.mxu0 0
    %609 = vmatpush1.bf16.msra.mxu0 0
    %610 = vmatprep.subr.bf16.mxu0 0
    %611 = vmatpush1.bf16.msra.mxu0 0
    %612 = vmatprep.subr.bf16.mxu0 0
    %613 = vmatpush1.bf16.msra.mxu0 0
    %614 = vmatprep.subr.bf16.mxu0 0
    %615 = vmatpush1.bf16.msra.mxu0 0
    %616 = vmatprep.subr.bf16.mxu0 0
    %617 = vmatpush1.bf16.msra.mxu0 0
    %618 = vmatprep.mubr.bf16.mxu0 0
    %619 = vmatmul.mubr.bf16.gmra.mrb[0].mxu0 %v581
    %v620 = vpop.f32.mrb[0].mxu0
    %v621 = vadd.f32 0.0, %v620
    %v622 = vpop.f32.mrb[0].mxu0
    %v623 = vpop.f32.mrb[0].mxu0
    %v624 = vpop.f32.mrb[0].mxu0
    %625 = vdwg.mxu0
    %v626 = vadd.f32 %v572, %v621
    %627 = vst.msk [vmem:[%s565] sm:$0x3f] %vm182, %v626
    %628 = vst.msk [vmem:[%s540] sm:$0x3f] %vm122, %v545
  $region21: #{sensevoice_forward.116} parent=0 // pred_fallthru
    _
  // Predicated region
  $region22: #{sensevoice_forward.116} parent=0 // pred_check
    %p629 = pneg %p15
  $region23: #{sensevoice_forward.116} parent=0 // pred_check_branch
    %631 = sbr.rel (%p629) target = $region25
  $region24: #{sensevoice_forward.116} parent=0 // pred_region
    %v632 = vld [vmem:[#allocation4] sm:$0x3f]
    %v633 = vld [vmem:[#allocation3] sm:$0x3f]
    %635 = vset.pattern.permute.xlu0 0
    %636 = vperm.xlu0 %635, %v633
    %v637 = vpop.permute.xlu0 %636
    %v639 = vrcp.pop %v637
    %v640 = vmul.f32 %v632, %v639
    %s641 = scalar_lea.vmem [#allocation4], 8
    %v642 = vld [vmem:[%s641] sm:$0x3f]
    %s643 = scalar_lea.vmem [#allocation3], 8
    %v644 = vld [vmem:[%s643] sm:$0x3f]
    %646 = vset.pattern.permute.xlu0 0
    %647 = vperm.xlu0 %646, %v644
    %v648 = vpop.permute.xlu0 %647
    %v650 = vrcp.pop %v648
    %v651 = vmul.f32 %v642, %v650
    %s652 = scalar_lea.vmem [#allocation4], 16
    %v653 = vld [vmem:[%s652] sm:$0x3f]
    %s654 = scalar_lea.vmem [#allocation3], 16
    %v655 = vld [vmem:[%s654] sm:$0x3f]
    %657 = vset.pattern.permute.xlu0 0
    %658 = vperm.xlu0 %657, %v655
    %v659 = vpop.permute.xlu0 %658
    %v661 = vrcp.pop %v659
    %v662 = vmul.f32 %v653, %v661
    %s663 = scalar_lea.vmem [#allocation4], 24
    %v664 = vld [vmem:[%s663] sm:$0x3f]
    %s665 = scalar_lea.vmem [#allocation3], 24
    %v666 = vld [vmem:[%s665] sm:$0x3f]
    %668 = vset.pattern.permute.xlu0 0
    %669 = vperm.xlu0 %668, %v666
    %v670 = vpop.permute.xlu0 %669
    %v672 = vrcp.pop %v670
    %v673 = vmul.f32 %v664, %v672
    %675 = vrot.lane.b32.xlu0 %v651, 8
    %v676 = vpop.permute.xlu0 %675
    %679 = vrot.lane.b32.xlu0 %v662, 16
    %v680 = vpop.permute.xlu0 %679
    %683 = vrot.lane.b32.xlu0 %v673, 24
    %v684 = vpop.permute.xlu0 %683
    %vm686 = vcmask 64512
    %v687 = vsel %vm686, %v640, %v676
    %vm688 = vcmask 130048
    %v689 = vsel %vm688, %v687, %v680
    %vm690 = vcmask 195584
    %v691 = vsel %vm690, %v689, %v684
    %v692 = vpack.c.bf16 %v691, %v691
    %vm693 = vcmask 256000
    %694 = vst.msk [vmem:[%s3] sm:$0x7] %vm693, %v692
  $region25: #{sensevoice_forward.116} parent=0 // pred_fallthru
    _
  // Predicated region
  $region26: #{sensevoice_forward.116} parent=0 // pred_check
    _
  $region27: #{sensevoice_forward.116} parent=0 // pred_check_branch
    %696 = sbr.rel (0) target = $region29
  $region28: #{sensevoice_forward.116} parent=0 // pred_region
    _
  $region29: #{sensevoice_forward.116} parent=0 // pred_fallthru
    _
  // Predicated region
  $region30: #{sensevoice_forward.116} parent=0 // pred_check
    _
  $region31: #{sensevoice_forward.116} parent=0 // pred_check_branch
    %698 = sbr.rel (0) target = $region33
  $region32: #{sensevoice_forward.116} parent=0 // pred_region
    _
  $region33: #{sensevoice_forward.116} parent=0 // pred_fallthru
    _

// kernel: sensevoice_forward.130
$region0: #{sensevoice_forward.130}
  #allocation0 [shape = 'u32[]', space=smem, size = 0x4, offset = 0x4, fixed_abs, tag = 'smem constant byte address 0x4 - core index']
  #allocation1 [shape = 'u32[144,128]{1,0:T(1,128)}', space=vmem, size = 0x12000, scoped, tag = 'internal scratch']
  %s0 = inlined_call_operand.vmem [shape: bf16[16,32], index: 0, kind: input, shape index: {}]
  %s1 = inlined_call_operand.vmem [shape: bf16[32,32], index: 1, kind: input, shape index: {}]
  %s2 = inlined_call_operand.vmem [shape: f32[1,32], index: 2, kind: input, shape index: {}]
  %s3 = inlined_call_operand.vmem [shape: bf16[16,32], index: 3, kind: output, shape index: {}]
  %s4 = sld [smem:[#allocation0]]
  $region22: #{sensevoice_forward.130} parent=0
    _
  %s6 = ssub.s32 1, %s4
  %s7 = scalar_select 0, %s6, %s4
  // Predicated region
  $region2: #{sensevoice_forward.130} parent=0 // pred_check
    _
  $region3: #{sensevoice_forward.130} parent=0 // pred_check_branch
    %9 = sbr.rel (0) target = $region5
  $region4: #{sensevoice_forward.130} parent=0 // pred_region
    _
  $region5: #{sensevoice_forward.130} parent=0 // pred_fallthru
    _
  // Predicated region
  $region6: #{sensevoice_forward.130} parent=0 // pred_check
    _
  $region7: #{sensevoice_forward.130} parent=0 // pred_check_branch
    %11 = sbr.rel (0) target = $region9
  $region8: #{sensevoice_forward.130} parent=0 // pred_region
    _
  $region9: #{sensevoice_forward.130} parent=0 // pred_fallthru
    _
  // Predicated region
  $region10: #{sensevoice_forward.130} parent=0 // pred_check
    _
  $region11: #{sensevoice_forward.130} parent=0 // pred_check_branch
    %13 = sbr.rel (0) target = $region13
  $region12: #{sensevoice_forward.130} parent=0 // pred_region
    _
  $region13: #{sensevoice_forward.130} parent=0 // pred_fallthru
    _
  %v15 = vld [vmem:[%s0] sm:$0xf]
  %v16 = vld [vmem:[%s0 + $0x4] sm:$0xf]
  %v17 = vld [vmem:[%s1] sm:$0xf]
  %v18 = vld [vmem:[%s1 + $0x4] sm:$0xf]
  %v19 = vld [vmem:[%s1 + $0x8] sm:$0xf]
  %v20 = vld [vmem:[%s1 + $0xc] sm:$0xf]
  %v21 = vld [vmem:[%s2] sm:$0x1]
  %v23 = vlaneseq
  %v24 = vshrl.u32 %v23, 7
  %v25 = vsub.s32 0, %v24
  %v26 = vrot.slane %v21, %v25
  %v30 = vunpack.c.l.b16 %v15
  %v31 = vunpack.c.l.b16 %v16
  %v32 = vpack.c.b16 %v31, %v30
  %v37 = vunpack.c.l.b16 %v17
  %v38 = vunpack.c.l.b16 %v18
  %v39 = vunpack.c.l.b16 %v19
  %v40 = vunpack.c.l.b16 %v20
  %v41 = vpack.c.b16 %v38, %v37
  %v42 = vpack.c.b16 %v40, %v39
  %vm45 = vcmask 261120
  %v47 = vsel %vm45, %v32, 0
  %49 = vmatprep.subr.bf16.mxu0 0
  %50 = vmatpush1.bf16.msra.mxu0 %v41
  %51 = vmatprep.subr.bf16.mxu0 0
  %52 = vmatpush1.bf16.msra.mxu0 %v42
  %53 = vmatprep.subr.bf16.mxu0 0
  %54 = vmatpush1.bf16.msra.mxu0 0
  %55 = vmatprep.subr.bf16.mxu0 0
  %56 = vmatpush1.bf16.msra.mxu0 0
  %57 = vmatprep.subr.bf16.mxu0 0
  %58 = vmatpush1.bf16.msra.mxu0 0
  %59 = vmatprep.subr.bf16.mxu0 0
  %60 = vmatpush1.bf16.msra.mxu0 0
  %61 = vmatprep.subr.bf16.mxu0 0
  %62 = vmatpush1.bf16.msra.mxu0 0
  %63 = vmatprep.subr.bf16.mxu0 0
  %64 = vmatpush1.bf16.msra.mxu0 0
  %65 = vmatprep.subr.bf16.mxu0 0
  %66 = vmatpush1.bf16.msra.mxu0 0
  %67 = vmatprep.subr.bf16.mxu0 0
  %68 = vmatpush1.bf16.msra.mxu0 0
  %69 = vmatprep.subr.bf16.mxu0 0
  %70 = vmatpush1.bf16.msra.mxu0 0
  %71 = vmatprep.subr.bf16.mxu0 0
  %72 = vmatpush1.bf16.msra.mxu0 0
  %73 = vmatprep.subr.bf16.mxu0 0
  %74 = vmatpush1.bf16.msra.mxu0 0
  %75 = vmatprep.subr.bf16.mxu0 0
  %76 = vmatpush1.bf16.msra.mxu0 0
  %77 = vmatprep.subr.bf16.mxu0 0
  %78 = vmatpush1.bf16.msra.mxu0 0
  %79 = vmatprep.subr.bf16.mxu0 0
  %80 = vmatpush1.bf16.msra.mxu0 0
  %81 = vmatprep.mubr.bf16.mxu0 0
  %82 = vmatmul.mubr.bf16.gmra.mrb[0].mxu0 %v47
  %v83 = vpop.f32.mrb[0].mxu0
  %v84 = vadd.f32 %v26, %v83
  %v85 = vpop.f32.mrb[0].mxu0
  %v86 = vpop.f32.mrb[0].mxu0
  %v87 = vadd.f32 %v26, %v86
  %v88 = vpop.f32.mrb[0].mxu0
  %89 = vdwg.mxu0
  %v90 = vpack.c.bf16 %v87, %v84
  %v92 = vunpack.c.l.b16 %v90
  %v93 = vunpack.c.h.b16 %v90
  %v94 = vpack.c.b16 %v92, %v92
  %v95 = vpack.c.b16 %v93, %v93
  %vm98 = vcmask 257024
  %99 = vst.msk [vmem:[%s3] sm:$0xf] %vm98, %v94
  %100 = vst.msk [vmem:[%s3 + $0x4] sm:$0xf] %vm98, %v95
  // Predicated region
  $region14: #{sensevoice_forward.130} parent=0 // pred_check
    _
  $region15: #{sensevoice_forward.130} parent=0 // pred_check_branch
    %102 = sbr.rel (0) target = $region17
  $region16: #{sensevoice_forward.130} parent=0 // pred_region
    _
  $region17: #{sensevoice_forward.130} parent=0 // pred_fallthru
    _
  // Predicated region
  $region18: #{sensevoice_forward.130} parent=0 // pred_check
    _
  $region19: #{sensevoice_forward.130} parent=0 // pred_check_branch
    %104 = sbr.rel (0) target = $region21
  $region20: #{sensevoice_forward.130} parent=0 // pred_region
    _
  $region21: #{sensevoice_forward.130} parent=0 // pred_fallthru
    _

// kernel: sensevoice_forward.129
$region0: #{sensevoice_forward.129}
  #allocation0 [shape = 'u32[]', space=smem, size = 0x4, offset = 0x4, fixed_abs, tag = 'smem constant byte address 0x4 - core index']
  #allocation1 [shape = 'u32[144,128]{1,0:T(1,128)}', space=vmem, size = 0x12000, scoped, tag = 'internal scratch']
  %s0 = inlined_call_operand.vmem [shape: bf16[16,32], index: 0, kind: input, shape index: {}]
  %s1 = inlined_call_operand.vmem [shape: bf16[32,32], index: 1, kind: input, shape index: {}]
  %s2 = inlined_call_operand.vmem [shape: bf16[16,32], index: 2, kind: output, shape index: {}]
  %s3 = sld [smem:[#allocation0]]
  $region18: #{sensevoice_forward.129} parent=0
    _
  %s5 = ssub.s32 1, %s3
  %s6 = scalar_select 0, %s5, %s3
  // Predicated region
  $region2: #{sensevoice_forward.129} parent=0 // pred_check
    _
  $region3: #{sensevoice_forward.129} parent=0 // pred_check_branch
    %8 = sbr.rel (0) target = $region5
  $region4: #{sensevoice_forward.129} parent=0 // pred_region
    _
  $region5: #{sensevoice_forward.129} parent=0 // pred_fallthru
    _
  // Predicated region
  $region6: #{sensevoice_forward.129} parent=0 // pred_check
    _
  $region7: #{sensevoice_forward.129} parent=0 // pred_check_branch
    %10 = sbr.rel (0) target = $region9
  $region8: #{sensevoice_forward.129} parent=0 // pred_region
    _
  $region9: #{sensevoice_forward.129} parent=0 // pred_fallthru
    _
  %v12 = vld [vmem:[%s0] sm:$0xf]
  %v13 = vld [vmem:[%s0 + $0x4] sm:$0xf]
  %v14 = vld [vmem:[%s1] sm:$0xf]
  %v15 = vld [vmem:[%s1 + $0x4] sm:$0xf]
  %v16 = vld [vmem:[%s1 + $0x8] sm:$0xf]
  %v17 = vld [vmem:[%s1 + $0xc] sm:$0xf]
  %v20 = vunpack.c.l.b16 %v12
  %v21 = vunpack.c.l.b16 %v13
  %v22 = vpack.c.b16 %v21, %v20
  %v27 = vunpack.c.l.b16 %v14
  %v28 = vunpack.c.l.b16 %v15
  %v29 = vunpack.c.l.b16 %v16
  %v30 = vunpack.c.l.b16 %v17
  %v31 = vpack.c.b16 %v28, %v27
  %v32 = vpack.c.b16 %v30, %v29
  %vm35 = vcmask 261120
  %v37 = vsel %vm35, %v22, 0
  %39 = vmatprep.subr.bf16.mxu0 0
  %40 = vmatpush1.bf16.msra.mxu0 %v31
  %41 = vmatprep.subr.bf16.mxu0 0
  %42 = vmatpush1.bf16.msra.mxu0 %v32
  %43 = vmatprep.subr.bf16.mxu0 0
  %44 = vmatpush1.bf16.msra.mxu0 0
  %45 = vmatprep.subr.bf16.mxu0 0
  %46 = vmatpush1.bf16.msra.mxu0 0
  %47 = vmatprep.subr.bf16.mxu0 0
  %48 = vmatpush1.bf16.msra.mxu0 0
  %49 = vmatprep.subr.bf16.mxu0 0
  %50 = vmatpush1.bf16.msra.mxu0 0
  %51 = vmatprep.subr.bf16.mxu0 0
  %52 = vmatpush1.bf16.msra.mxu0 0
  %53 = vmatprep.subr.bf16.mxu0 0
  %54 = vmatpush1.bf16.msra.mxu0 0
  %55 = vmatprep.subr.bf16.mxu0 0
  %56 = vmatpush1.bf16.msra.mxu0 0
  %57 = vmatprep.subr.bf16.mxu0 0
  %58 = vmatpush1.bf16.msra.mxu0 0
  %59 = vmatprep.subr.bf16.mxu0 0
  %60 = vmatpush1.bf16.msra.mxu0 0
  %61 = vmatprep.subr.bf16.mxu0 0
  %62 = vmatpush1.bf16.msra.mxu0 0
  %63 = vmatprep.subr.bf16.mxu0 0
  %64 = vmatpush1.bf16.msra.mxu0 0
  %65 = vmatprep.subr.bf16.mxu0 0
  %66 = vmatpush1.bf16.msra.mxu0 0
  %67 = vmatprep.subr.bf16.mxu0 0
  %68 = vmatpush1.bf16.msra.mxu0 0
  %69 = vmatprep.subr.bf16.mxu0 0
  %70 = vmatpush1.bf16.msra.mxu0 0
  %71 = vmatprep.mubr.bf16.mxu0 0
  %72 = vmatmul.mubr.bf16.gmra.mrb[0].mxu0 %v37
  %v73 = vpop.f32.mrb[0].mxu0
  %v74 = vadd.f32 0.0, %v73
  %v75 = vpop.f32.mrb[0].mxu0
  %v76 = vpop.f32.mrb[0].mxu0
  %v77 = vadd.f32 0.0, %v76
  %v78 = vpop.f32.mrb[0].mxu0
  %79 = vdwg.mxu0
  %v80 = vpack.c.bf16 %v77, %v74
  %v82 = vunpack.c.l.b16 %v80
  %v83 = vunpack.c.h.b16 %v80
  %v84 = vpack.c.b16 %v82, %v82
  %v85 = vpack.c.b16 %v83, %v83
  %vm88 = vcmask 257024
  %89 = vst.msk [vmem:[%s2] sm:$0xf] %vm88, %v84
  %90 = vst.msk [vmem:[%s2 + $0x4] sm:$0xf] %vm88, %v85
  // Predicated region
  $region10: #{sensevoice_forward.129} parent=0 // pred_check
    _
  $region11: #{sensevoice_forward.129} parent=0 // pred_check_branch
    %92 = sbr.rel (0) target = $region13
  $region12: #{sensevoice_forward.129} parent=0 // pred_region
    _
  $region13: #{sensevoice_forward.129} parent=0 // pred_fallthru
    _
  // Predicated region
  $region14: #{sensevoice_forward.129} parent=0 // pred_check
    _
  $region15: #{sensevoice_forward.129} parent=0 // pred_check_branch
    %94 = sbr.rel (0) target = $region17
  $region16: #{sensevoice_forward.129} parent=0 // pred_region
    _
  $region17: #{sensevoice_forward.129} parent=0 // pred_fallthru
    _

// kernel: sensevoice_forward.123
$region0: #{sensevoice_forward.123}
  #allocation0 [shape = 'u32[]', space=smem, size = 0x4, offset = 0x4, fixed_abs, tag = 'smem constant byte address 0x4 - core index']
  #allocation1 [shape = 'u32[144,128]{1,0:T(1,128)}', space=vmem, size = 0x12000, scoped, tag = 'internal scratch']
  #allocation2 [shape = 'bf16[6,32]{1,0:T(8,128)(2,1)}', space=vmem, size = 0x800, scoped, tag = 'scratch operand']
  %s0 = inlined_call_operand.vmem [shape: bf16[6,32], index: 0, kind: input, shape index: {}]
  %s1 = inlined_call_operand.vmem [shape: bf16[32,128], index: 1, kind: input, shape index: {}]
  %s2 = inlined_call_operand.vmem [shape: f32[1,32], index: 2, kind: input, shape index: {}]
  %s3 = inlined_call_operand.vmem [shape: f32[1,32], index: 3, kind: input, shape index: {}]
  %s4 = inlined_call_operand.vmem [shape: f32[1,128], index: 4, kind: input, shape index: {}]
  %s5 = inlined_call_operand.vmem [shape: bf16[6,128], index: 5, kind: output, shape index: {}]
  %s6 = sld [smem:[#allocation0]]
  $region34: #{sensevoice_forward.123} parent=0
    _
  %s8 = ssub.s32 1, %s6
  %s9 = scalar_select 0, %s8, %s6
  // Predicated region
  $region2: #{sensevoice_forward.123} parent=0 // pred_check
    _
  $region3: #{sensevoice_forward.123} parent=0 // pred_check_branch
    %11 = sbr.rel (0) target = $region5
  $region4: #{sensevoice_forward.123} parent=0 // pred_region
    _
  $region5: #{sensevoice_forward.123} parent=0 // pred_fallthru
    _
  // Predicated region
  $region6: #{sensevoice_forward.123} parent=0 // pred_check
    _
  $region7: #{sensevoice_forward.123} parent=0 // pred_check_branch
    %13 = sbr.rel (0) target = $region9
  $region8: #{sensevoice_forward.123} parent=0 // pred_region
    _
  $region9: #{sensevoice_forward.123} parent=0 // pred_fallthru
    _
  // Predicated region
  $region10: #{sensevoice_forward.123} parent=0 // pred_check
    _
  $region11: #{sensevoice_forward.123} parent=0 // pred_check_branch
    %15 = sbr.rel (0) target = $region13
  $region12: #{sensevoice_forward.123} parent=0 // pred_region
    _
  $region13: #{sensevoice_forward.123} parent=0 // pred_fallthru
    _
  // Predicated region
  $region14: #{sensevoice_forward.123} parent=0 // pred_check
    _
  $region15: #{sensevoice_forward.123} parent=0 // pred_check_branch
    %17 = sbr.rel (0) target = $region17
  $region16: #{sensevoice_forward.123} parent=0 // pred_region
    _
  $region17: #{sensevoice_forward.123} parent=0 // pred_fallthru
    _
  // Predicated region
  $region18: #{sensevoice_forward.123} parent=0 // pred_check
    _
  $region19: #{sensevoice_forward.123} parent=0 // pred_check_branch
    %19 = sbr.rel (0) target = $region21
  $region20: #{sensevoice_forward.123} parent=0 // pred_region
    _
  $region21: #{sensevoice_forward.123} parent=0 // pred_fallthru
    _
  %p21 = scmp.eq.s32.totalorder 0, 0
  // Predicated region
  $region22: #{sensevoice_forward.123} parent=0 // pred_check
    %p22 = pneg %p21
  $region23: #{sensevoice_forward.123} parent=0 // pred_check_branch
    %24 = sbr.rel (%p22) target = $region25
  $region24: #{sensevoice_forward.123} parent=0 // pred_region
    %v25 = vld [vmem:[%s0] sm:$0x7]
    %v26 = vunpack.c.l.bf16 %v25
    %vm27 = vcmask 259072
    %v28 = vsel %vm27, %v26, 0.0
    %29 = vadd.xlane.f32.xlu0 %v28
    %v30 = vpop.xlane.xlu0 %29
    %v31 = vrcp.pop 32.0
    %v32 = vmul.f32 %v30, %v31
    %v33 = vsub.f32 %v26, %v32
    %v34 = vmul.f32 %v33, %v33
    %v35 = vsel %vm27, %v34, 0.0
    %36 = vadd.xlane.f32.xlu0 %v35
    %v37 = vpop.xlane.xlu0 %36
    %v38 = vmul.f32 %v37, %v31
    %v39 = vadd.f32 %v38, 1e-05
    %v40 = vrsqrt.pop %v39
    %v41 = vmul.f32 %v33, %v40
    %v42 = vld [vmem:[%s2] sm:$0x1]
    %v44 = vlaneseq
    %v45 = vshrl.u32 %v44, 7
    %v46 = vsub.s32 0, %v45
    %v47 = vrot.slane %v42, %v46
    %v49 = vmul.f32 %v41, %v47
    %v50 = vld [vmem:[%s3] sm:$0x1]
    %v52 = vlaneseq
    %v53 = vshrl.u32 %v52, 7
    %v54 = vsub.s32 0, %v53
    %v55 = vrot.slane %v50, %v54
    %v57 = vadd.f32 %v49, %v55
    %v58 = vpack.c.bf16 %v57, %v57
    %vm59 = vcmask 256000
    %60 = vst.msk [vmem:[#allocation2] sm:$0x7] %vm59, %v58
  $region25: #{sensevoice_forward.123} parent=0 // pred_fallthru
    _
  %v61 = vld [vmem:[#allocation2] sm:$0x7]
  %v62 = vld [vmem:[%s1] sm:$0xf]
  %v63 = vld [vmem:[%s1 + $0x4] sm:$0xf]
  %v64 = vld [vmem:[%s1 + $0x8] sm:$0xf]
  %v65 = vld [vmem:[%s1 + $0xc] sm:$0xf]
  %v66 = vld [vmem:[%s4] sm:$0x1]
  %v68 = vlaneseq
  %v69 = vshrl.u32 %v68, 7
  %v70 = vsub.s32 0, %v69
  %v71 = vrot.slane %v66, %v70
  %v77 = vunpack.c.l.b16 %v62
  %v78 = vunpack.c.l.b16 %v63
  %v79 = vunpack.c.l.b16 %v64
  %v80 = vunpack.c.l.b16 %v65
  %v81 = vpack.c.b16 %v78, %v77
  %v82 = vpack.c.b16 %v80, %v79
  %vm85 = vcmask 261120
  %v87 = vsel %vm85, %v61, 0
  %89 = vmatprep.subr.bf16.mxu0 0
  %90 = vmatpush1.bf16.msra.mxu0 %v81
  %91 = vmatprep.subr.bf16.mxu0 0
  %92 = vmatpush1.bf16.msra.mxu0 %v82
  %93 = vmatprep.subr.bf16.mxu0 0
  %94 = vmatpush1.bf16.msra.mxu0 0
  %95 = vmatprep.subr.bf16.mxu0 0
  %96 = vmatpush1.bf16.msra.mxu0 0
  %97 = vmatprep.subr.bf16.mxu0 0
  %98 = vmatpush1.bf16.msra.mxu0 0
  %99 = vmatprep.subr.bf16.mxu0 0
  %100 = vmatpush1.bf16.msra.mxu0 0
  %101 = vmatprep.subr.bf16.mxu0 0
  %102 = vmatpush1.bf16.msra.mxu0 0
  %103 = vmatprep.subr.bf16.mxu0 0
  %104 = vmatpush1.bf16.msra.mxu0 0
  %105 = vmatprep.subr.bf16.mxu0 0
  %106 = vmatpush1.bf16.msra.mxu0 0
  %107 = vmatprep.subr.bf16.mxu0 0
  %108 = vmatpush1.bf16.msra.mxu0 0
  %109 = vmatprep.subr.bf16.mxu0 0
  %110 = vmatpush1.bf16.msra.mxu0 0
  %111 = vmatprep.subr.bf16.mxu0 0
  %112 = vmatpush1.bf16.msra.mxu0 0
  %113 = vmatprep.subr.bf16.mxu0 0
  %114 = vmatpush1.bf16.msra.mxu0 0
  %115 = vmatprep.subr.bf16.mxu0 0
  %116 = vmatpush1.bf16.msra.mxu0 0
  %117 = vmatprep.subr.bf16.mxu0 0
  %118 = vmatpush1.bf16.msra.mxu0 0
  %119 = vmatprep.subr.bf16.mxu0 0
  %120 = vmatpush1.bf16.msra.mxu0 0
  %121 = vmatprep.mubr.bf16.mxu0 0
  %122 = vmatmul.mubr.bf16.gmra.mrb[0].mxu0 %v87
  %v123 = vpop.f32.mrb[0].mxu0
  %v124 = vadd.f32 %v71, %v123
  %v125 = vpop.f32.mrb[0].mxu0
  %v126 = vpop.f32.mrb[0].mxu0
  %v127 = vpop.f32.mrb[0].mxu0
  %128 = vdwg.mxu0
  %v129 = vmul.f32 %v124, 0.5
  %v130 = vmul.f32 %v124, 0.044715
  %v131 = vmul.f32 %v130, %v124
  %v132 = vmul.f32 %v131, %v124
  %v133 = vadd.f32 %v124, %v132
  %v134 = vmul.f32 %v133, 0.7978846
  %v135 = vtanh.pop %v134
  %v136 = vadd.f32 %v135, 1.0
  %v137 = vmul.f32 %v129, %v136
  %v138 = vpack.c.bf16 %v137, %v137
  %139 = vst [vmem:[%s5] sm:$0x7] %v138
  // Predicated region
  $region26: #{sensevoice_forward.123} parent=0 // pred_check
    _
  $region27: #{sensevoice_forward.123} parent=0 // pred_check_branch
    %141 = sbr.rel (0) target = $region29
  $region28: #{sensevoice_forward.123} parent=0 // pred_region
    _
  $region29: #{sensevoice_forward.123} parent=0 // pred_fallthru
    _
  // Predicated region
  $region30: #{sensevoice_forward.123} parent=0 // pred_check
    _
  $region31: #{sensevoice_forward.123} parent=0 // pred_check_branch
    %143 = sbr.rel (0) target = $region33
  $region32: #{sensevoice_forward.123} parent=0 // pred_region
    _
  $region33: #{sensevoice_forward.123} parent=0 // pred_fallthru
    _

// kernel: sensevoice_forward.124
$region0: #{sensevoice_forward.124}
  #allocation0 [shape = 'u32[]', space=smem, size = 0x4, offset = 0x4, fixed_abs, tag = 'smem constant byte address 0x4 - core index']
  #allocation1 [shape = 'u32[144,128]{1,0:T(1,128)}', space=vmem, size = 0x12000, scoped, tag = 'internal scratch']
  %s0 = inlined_call_operand.vmem [shape: bf16[6,128], index: 0, kind: input, shape index: {}]
  %s1 = inlined_call_operand.vmem [shape: bf16[128,32], index: 1, kind: input, shape index: {}]
  %s2 = inlined_call_operand.vmem [shape: f32[1,32], index: 2, kind: input, shape index: {}]
  %s3 = inlined_call_operand.vmem [shape: bf16[6,32], index: 3, kind: input, shape index: {}]
  %s4 = inlined_call_operand.vmem [shape: bf16[6,32], index: 4, kind: output, shape index: {}]
  %s5 = sld [smem:[#allocation0]]
  $region26: #{sensevoice_forward.124} parent=0
    _
  %s7 = ssub.s32 1, %s5
  %s8 = scalar_select 0, %s7, %s5
  // Predicated region
  $region2: #{sensevoice_forward.124} parent=0 // pred_check
    _
  $region3: #{sensevoice_forward.124} parent=0 // pred_check_branch
    %10 = sbr.rel (0) target = $region5
  $region4: #{sensevoice_forward.124} parent=0 // pred_region
    _
  $region5: #{sensevoice_forward.124} parent=0 // pred_fallthru
    _
  // Predicated region
  $region6: #{sensevoice_forward.124} parent=0 // pred_check
    _
  $region7: #{sensevoice_forward.124} parent=0 // pred_check_branch
    %12 = sbr.rel (0) target = $region9
  $region8: #{sensevoice_forward.124} parent=0 // pred_region
    _
  $region9: #{sensevoice_forward.124} parent=0 // pred_fallthru
    _
  // Predicated region
  $region10: #{sensevoice_forward.124} parent=0 // pred_check
    _
  $region11: #{sensevoice_forward.124} parent=0 // pred_check_branch
    %14 = sbr.rel (0) target = $region13
  $region12: #{sensevoice_forward.124} parent=0 // pred_region
    _
  $region13: #{sensevoice_forward.124} parent=0 // pred_fallthru
    _
  // Predicated region
  $region14: #{sensevoice_forward.124} parent=0 // pred_check
    _
  $region15: #{sensevoice_forward.124} parent=0 // pred_check_branch
    %16 = sbr.rel (0) target = $region17
  $region16: #{sensevoice_forward.124} parent=0 // pred_region
    _
  $region17: #{sensevoice_forward.124} parent=0 // pred_fallthru
    _
  %v18 = vld [vmem:[%s0] sm:$0x7]
  %v19 = vld [vmem:[%s1] sm:$0xf]
  %v20 = vld [vmem:[%s1 + $0x4] sm:$0xf]
  %v21 = vld [vmem:[%s1 + $0x8] sm:$0xf]
  %v22 = vld [vmem:[%s1 + $0xc] sm:$0xf]
  %v23 = vld [vmem:[%s1 + $0x10] sm:$0xf]
  %v24 = vld [vmem:[%s1 + $0x14] sm:$0xf]
  %v25 = vld [vmem:[%s1 + $0x18] sm:$0xf]
  %v26 = vld [vmem:[%s1 + $0x1c] sm:$0xf]
  %v27 = vld [vmem:[%s1 + $0x20] sm:$0xf]
  %v28 = vld [vmem:[%s1 + $0x24] sm:$0xf]
  %v29 = vld [vmem:[%s1 + $0x28] sm:$0xf]
  %v30 = vld [vmem:[%s1 + $0x2c] sm:$0xf]
  %v31 = vld [vmem:[%s1 + $0x30] sm:$0xf]
  %v32 = vld [vmem:[%s1 + $0x34] sm:$0xf]
  %v33 = vld [vmem:[%s1 + $0x38] sm:$0xf]
  %v34 = vld [vmem:[%s1 + $0x3c] sm:$0xf]
  %v35 = vld [vmem:[%s2] sm:$0x1]
  %v37 = vlaneseq
  %v38 = vshrl.u32 %v37, 7
  %v39 = vsub.s32 0, %v38
  %v40 = vrot.slane %v35, %v39
  %v58 = vunpack.c.l.b16 %v19
  %v59 = vunpack.c.l.b16 %v20
  %v60 = vunpack.c.l.b16 %v21
  %v61 = vunpack.c.l.b16 %v22
  %v62 = vunpack.c.l.b16 %v23
  %v63 = vunpack.c.l.b16 %v24
  %v64 = vunpack.c.l.b16 %v25
  %v65 = vunpack.c.l.b16 %v26
  %v66 = vunpack.c.l.b16 %v27
  %v67 = vunpack.c.l.b16 %v28
  %v68 = vunpack.c.l.b16 %v29
  %v69 = vunpack.c.l.b16 %v30
  %v70 = vunpack.c.l.b16 %v31
  %v71 = vunpack.c.l.b16 %v32
  %v72 = vunpack.c.l.b16 %v33
  %v73 = vunpack.c.l.b16 %v34
  %v74 = vpack.c.b16 %v59, %v58
  %v75 = vpack.c.b16 %v61, %v60
  %v76 = vpack.c.b16 %v63, %v62
  %v77 = vpack.c.b16 %v65, %v64
  %v78 = vpack.c.b16 %v67, %v66
  %v79 = vpack.c.b16 %v69, %v68
  %v80 = vpack.c.b16 %v71, %v70
  %v81 = vpack.c.b16 %v73, %v72
  %90 = vmatprep.subr.bf16.mxu0 0
  %91 = vmatpush1.bf16.msra.mxu0 %v74
  %92 = vmatprep.subr.bf16.mxu0 0
  %93 = vmatpush1.bf16.msra.mxu0 %v75
  %94 = vmatprep.subr.bf16.mxu0 0
  %95 = vmatpush1.bf16.msra.mxu0 %v76
  %96 = vmatprep.subr.bf16.mxu0 0
  %97 = vmatpush1.bf16.msra.mxu0 %v77
  %98 = vmatprep.subr.bf16.mxu0 0
  %99 = vmatpush1.bf16.msra.mxu0 %v78
  %100 = vmatprep.subr.bf16.mxu0 0
  %101 = vmatpush1.bf16.msra.mxu0 %v79
  %102 = vmatprep.subr.bf16.mxu0 0
  %103 = vmatpush1.bf16.msra.mxu0 %v80
  %104 = vmatprep.subr.bf16.mxu0 0
  %105 = vmatpush1.bf16.msra.mxu0 %v81
  %106 = vmatprep.subr.bf16.mxu0 0
  %107 = vmatpush1.bf16.msra.mxu0 0
  %108 = vmatprep.subr.bf16.mxu0 0
  %109 = vmatpush1.bf16.msra.mxu0 0
  %110 = vmatprep.subr.bf16.mxu0 0
  %111 = vmatpush1.bf16.msra.mxu0 0
  %112 = vmatprep.subr.bf16.mxu0 0
  %113 = vmatpush1.bf16.msra.mxu0 0
  %114 = vmatprep.subr.bf16.mxu0 0
  %115 = vmatpush1.bf16.msra.mxu0 0
  %116 = vmatprep.subr.bf16.mxu0 0
  %117 = vmatpush1.bf16.msra.mxu0 0
  %118 = vmatprep.subr.bf16.mxu0 0
  %119 = vmatpush1.bf16.msra.mxu0 0
  %120 = vmatprep.subr.bf16.mxu0 0
  %121 = vmatpush1.bf16.msra.mxu0 0
  %122 = vmatprep.mubr.bf16.mxu0 0
  %123 = vmatmul.mubr.bf16.gmra.mrb[0].mxu0 %v18
  %v124 = vpop.f32.mrb[0].mxu0
  %v125 = vadd.f32 %v40, %v124
  %v126 = vpop.f32.mrb[0].mxu0
  %v127 = vpop.f32.mrb[0].mxu0
  %v128 = vpop.f32.mrb[0].mxu0
  %129 = vdwg.mxu0
  %v130 = vld [vmem:[%s3] sm:$0x7]
  %v131 = vunpack.c.l.bf16 %v130
  %v132 = vadd.f32 %v125, %v131
  %v133 = vpack.c.bf16 %v132, %v132
  %vm134 = vcmask 256000
  %135 = vst.msk [vmem:[%s4] sm:$0x7] %vm134, %v133
  // Predicated region
  $region18: #{sensevoice_forward.124} parent=0 // pred_check
    _
  $region19: #{sensevoice_forward.124} parent=0 // pred_check_branch
    %137 = sbr.rel (0) target = $region21
  $region20: #{sensevoice_forward.124} parent=0 // pred_region
    _
  $region21: #{sensevoice_forward.124} parent=0 // pred_fallthru
    _
  // Predicated region
  $region22: #{sensevoice_forward.124} parent=0 // pred_check
    _
  $region23: #{sensevoice_forward.124} parent=0 // pred_check_branch
    %139 = sbr.rel (0) target = $region25
  $region24: #{sensevoice_forward.124} parent=0 // pred_region
    _
  $region25: #{sensevoice_forward.124} parent=0 // pred_fallthru
    _

// kernel: sensevoice_forward.101
$region0: #{sensevoice_forward.101}
  #allocation0 [shape = 'u32[]', space=smem, size = 0x4, offset = 0x4, fixed_abs, tag = 'smem constant byte address 0x4 - core index']
  #allocation1 [shape = 'u32[144,128]{1,0:T(1,128)}', space=vmem, size = 0x12000, scoped, tag = 'internal scratch']
  #allocation2 [shape = 'bf16[6,32]{1,0:T(8,128)(2,1)}', space=vmem, size = 0x800, scoped, tag = 'scratch operand']
  %s0 = inlined_call_operand.vmem [shape: bf16[6,32], index: 0, kind: input, shape index: {}]
  %s1 = inlined_call_operand.vmem [shape: bf16[32,64], index: 1, kind: input, shape index: {}]
  %s2 = inlined_call_operand.vmem [shape: f32[1,32], index: 2, kind: input, shape index: {}]
  %s3 = inlined_call_operand.vmem [shape: f32[1,32], index: 3, kind: input, shape index: {}]
  %s4 = inlined_call_operand.vmem [shape: f32[6,64], index: 4, kind: output, shape index: {}]
  %s5 = sld [smem:[#allocation0]]
  $region30: #{sensevoice_forward.101} parent=0
    _
  %s7 = ssub.s32 1, %s5
  %s8 = scalar_select 0, %s7, %s5
  // Predicated region
  $region2: #{sensevoice_forward.101} parent=0 // pred_check
    _
  $region3: #{sensevoice_forward.101} parent=0 // pred_check_branch
    %10 = sbr.rel (0) target = $region5
  $region4: #{sensevoice_forward.101} parent=0 // pred_region
    _
  $region5: #{sensevoice_forward.101} parent=0 // pred_fallthru
    _
  // Predicated region
  $region6: #{sensevoice_forward.101} parent=0 // pred_check
    _
  $region7: #{sensevoice_forward.101} parent=0 // pred_check_branch
    %12 = sbr.rel (0) target = $region9
  $region8: #{sensevoice_forward.101} parent=0 // pred_region
    _
  $region9: #{sensevoice_forward.101} parent=0 // pred_fallthru
    _
  // Predicated region
  $region10: #{sensevoice_forward.101} parent=0 // pred_check
    _
  $region11: #{sensevoice_forward.101} parent=0 // pred_check_branch
    %14 = sbr.rel (0) target = $region13
  $region12: #{sensevoice_forward.101} parent=0 // pred_region
    _
  $region13: #{sensevoice_forward.101} parent=0 // pred_fallthru
    _
  // Predicated region
  $region14: #{sensevoice_forward.101} parent=0 // pred_check
    _
  $region15: #{sensevoice_forward.101} parent=0 // pred_check_branch
    %16 = sbr.rel (0) target = $region17
  $region16: #{sensevoice_forward.101} parent=0 // pred_region
    _
  $region17: #{sensevoice_forward.101} parent=0 // pred_fallthru
    _
  %p18 = scmp.eq.s32.totalorder 0, 0
  // Predicated region
  $region18: #{sensevoice_forward.101} parent=0 // pred_check
    %p19 = pneg %p18
  $region19: #{sensevoice_forward.101} parent=0 // pred_check_branch
    %21 = sbr.rel (%p19) target = $region21
  $region20: #{sensevoice_forward.101} parent=0 // pred_region
    %v22 = vld [vmem:[%s0] sm:$0x7]
    %v23 = vunpack.c.l.bf16 %v22
    %vm24 = vcmask 259072
    %v25 = vsel %vm24, %v23, 0.0
    %26 = vadd.xlane.f32.xlu0 %v25
    %v27 = vpop.xlane.xlu0 %26
    %v28 = vrcp.pop 32.0
    %v29 = vmul.f32 %v27, %v28
    %v30 = vsub.f32 %v23, %v29
    %v31 = vmul.f32 %v30, %v30
    %v32 = vsel %vm24, %v31, 0.0
    %33 = vadd.xlane.f32.xlu0 %v32
    %v34 = vpop.xlane.xlu0 %33
    %v35 = vmul.f32 %v34, %v28
    %v36 = vadd.f32 %v35, 1e-05
    %v37 = vrsqrt.pop %v36
    %v38 = vmul.f32 %v30, %v37
    %v39 = vld [vmem:[%s2] sm:$0x1]
    %v41 = vlaneseq
    %v42 = vshrl.u32 %v41, 7
    %v43 = vsub.s32 0, %v42
    %v44 = vrot.slane %v39, %v43
    %v46 = vmul.f32 %v38, %v44
    %v47 = vld [vmem:[%s3] sm:$0x1]
    %v49 = vlaneseq
    %v50 = vshrl.u32 %v49, 7
    %v51 = vsub.s32 0, %v50
    %v52 = vrot.slane %v47, %v51
    %v54 = vadd.f32 %v46, %v52
    %v55 = vpack.c.bf16 %v54, %v54
    %vm56 = vcmask 256000
    %57 = vst.msk [vmem:[#allocation2] sm:$0x7] %vm56, %v55
  $region21: #{sensevoice_forward.101} parent=0 // pred_fallthru
    _
  %v58 = vld [vmem:[#allocation2] sm:$0x7]
  %v59 = vld [vmem:[%s1] sm:$0xf]
  %v60 = vld [vmem:[%s1 + $0x4] sm:$0xf]
  %v61 = vld [vmem:[%s1 + $0x8] sm:$0xf]
  %v62 = vld [vmem:[%s1 + $0xc] sm:$0xf]
  %v67 = vunpack.c.l.b16 %v59
  %v68 = vunpack.c.l.b16 %v60
  %v69 = vunpack.c.l.b16 %v61
  %v70 = vunpack.c.l.b16 %v62
  %v71 = vpack.c.b16 %v68, %v67
  %v72 = vpack.c.b16 %v70, %v69
  %vm75 = vcmask 261120
  %v77 = vsel %vm75, %v58, 0
  %79 = vmatprep.subr.bf16.mxu0 0
  %80 = vmatpush1.bf16.msra.mxu0 %v71
  %81 = vmatprep.subr.bf16.mxu0 0
  %82 = vmatpush1.bf16.msra.mxu0 %v72
  %83 = vmatprep.subr.bf16.mxu0 0
  %84 = vmatpush1.bf16.msra.mxu0 0
  %85 = vmatprep.subr.bf16.mxu0 0
  %86 = vmatpush1.bf16.msra.mxu0 0
  %87 = vmatprep.subr.bf16.mxu0 0
  %88 = vmatpush1.bf16.msra.mxu0 0
  %89 = vmatprep.subr.bf16.mxu0 0
  %90 = vmatpush1.bf16.msra.mxu0 0
  %91 = vmatprep.subr.bf16.mxu0 0
  %92 = vmatpush1.bf16.msra.mxu0 0
  %93 = vmatprep.subr.bf16.mxu0 0
  %94 = vmatpush1.bf16.msra.mxu0 0
  %95 = vmatprep.subr.bf16.mxu0 0
  %96 = vmatpush1.bf16.msra.mxu0 0
  %97 = vmatprep.subr.bf16.mxu0 0
  %98 = vmatpush1.bf16.msra.mxu0 0
  %99 = vmatprep.subr.bf16.mxu0 0
  %100 = vmatpush1.bf16.msra.mxu0 0
  %101 = vmatprep.subr.bf16.mxu0 0
  %102 = vmatpush1.bf16.msra.mxu0 0
  %103 = vmatprep.subr.bf16.mxu0 0
  %104 = vmatpush1.bf16.msra.mxu0 0
  %105 = vmatprep.subr.bf16.mxu0 0
  %106 = vmatpush1.bf16.msra.mxu0 0
  %107 = vmatprep.subr.bf16.mxu0 0
  %108 = vmatpush1.bf16.msra.mxu0 0
  %109 = vmatprep.subr.bf16.mxu0 0
  %110 = vmatpush1.bf16.msra.mxu0 0
  %111 = vmatprep.mubr.bf16.mxu0 0
  %112 = vmatmul.mubr.bf16.gmra.mrb[0].mxu0 %v77
  %v113 = vpop.f32.mrb[0].mxu0
  %v114 = vadd.f32 0.0, %v113
  %v115 = vpop.f32.mrb[0].mxu0
  %v116 = vpop.f32.mrb[0].mxu0
  %v117 = vpop.f32.mrb[0].mxu0
  %118 = vdwg.mxu0
  %vm119 = vcmask 521216
  %120 = vst.msk [vmem:[%s4] sm:$0x3f] %vm119, %v114
  // Predicated region
  $region22: #{sensevoice_forward.101} parent=0 // pred_check
    _
  $region23: #{sensevoice_forward.101} parent=0 // pred_check_branch
    %122 = sbr.rel (0) target = $region25
  $region24: #{sensevoice_forward.101} parent=0 // pred_region
    _
  $region25: #{sensevoice_forward.101} parent=0 // pred_fallthru
    _
  // Predicated region
  $region26: #{sensevoice_forward.101} parent=0 // pred_check
    _
  $region27: #{sensevoice_forward.101} parent=0 // pred_check_branch
    %124 = sbr.rel (0) target = $region29
  $region28: #{sensevoice_forward.101} parent=0 // pred_region
    _
  $region29: #{sensevoice_forward.101} parent=0 // pred_fallthru
    _

// kernel: sensevoice_forward.121
$region0: #{sensevoice_forward.121}
  #allocation0 [shape = 'u32[]', space=smem, size = 0x4, offset = 0x4, fixed_abs, tag = 'smem constant byte address 0x4 - core index']
  #allocation1 [shape = 'u32[144,128]{1,0:T(1,128)}', space=vmem, size = 0x12000, scoped, tag = 'internal scratch']
  #allocation2 [shape = 'f32[4,6,1]{2,1,0:T(8,128)}', space=vmem, size = 0x4000, scoped, tag = 'scratch operand']
  #allocation3 [shape = 'f32[4,6,1]{2,1,0:T(8,128)}', space=vmem, size = 0x4000, scoped, tag = 'scratch operand']
  #allocation4 [shape = 'f32[4,6,8]{2,1,0:T(8,128)}', space=vmem, size = 0x4000, scoped, tag = 'scratch operand']
  %s0 = inlined_call_operand.vmem [shape: bf16[6,32], index: 0, kind: input, shape index: {}]
  %s1 = inlined_call_operand.vmem [shape: bf16[16,32], index: 1, kind: input, shape index: {}]
  %s2 = inlined_call_operand.vmem [shape: bf16[16,32], index: 2, kind: input, shape index: {}]
  %s3 = inlined_call_operand.vmem [shape: bf16[6,32], index: 3, kind: output, shape index: {}]
  %s4 = sld [smem:[#allocation0]]
  $region30: #{sensevoice_forward.121} parent=0
    _
  %s6 = ssub.s32 1, %s4
  %s7 = scalar_select 0, %s6, %s4
  // Predicated region
  $region2: #{sensevoice_forward.121} parent=0 // pred_check
    _
  $region3: #{sensevoice_forward.121} parent=0 // pred_check_branch
    %9 = sbr.rel (0) target = $region5
  $region4: #{sensevoice_forward.121} parent=0 // pred_region
    _
  $region5: #{sensevoice_forward.121} parent=0 // pred_fallthru
    _
  // Predicated region
  $region6: #{sensevoice_forward.121} parent=0 // pred_check
    _
  $region7: #{sensevoice_forward.121} parent=0 // pred_check_branch
    %11 = sbr.rel (0) target = $region9
  $region8: #{sensevoice_forward.121} parent=0 // pred_region
    _
  $region9: #{sensevoice_forward.121} parent=0 // pred_fallthru
    _
  // Predicated region
  $region10: #{sensevoice_forward.121} parent=0 // pred_check
    _
  $region11: #{sensevoice_forward.121} parent=0 // pred_check_branch
    %13 = sbr.rel (0) target = $region13
  $region12: #{sensevoice_forward.121} parent=0 // pred_region
    _
  $region13: #{sensevoice_forward.121} parent=0 // pred_fallthru
    _
  %p15 = scmp.eq.s32.totalorder 0, 0
  // Predicated region
  $region14: #{sensevoice_forward.121} parent=0 // pred_check
    %p16 = pneg %p15
  $region15: #{sensevoice_forward.121} parent=0 // pred_check_branch
    %18 = sbr.rel (%p16) target = $region17
  $region16: #{sensevoice_forward.121} parent=0 // pred_region
    %vm19 = vcmask 5120
    %20 = vst.msk [vmem:[#allocation2] sm:$0x3f] %vm19, -1e+30
    %21 = vst.msk [vmem:[#allocation2 + $0x8] sm:$0x3f] %vm19, -1e+30
    %22 = vst.msk [vmem:[#allocation2 + $0x10] sm:$0x3f] %vm19, -1e+30
    %23 = vst.msk [vmem:[#allocation2 + $0x18] sm:$0x3f] %vm19, -1e+30
    %24 = vst.msk [vmem:[#allocation3] sm:$0x3f] %vm19, 0.0
    %25 = vst.msk [vmem:[#allocation3 + $0x8] sm:$0x3f] %vm19, 0.0
    %26 = vst.msk [vmem:[#allocation3 + $0x10] sm:$0x3f] %vm19, 0.0
    %27 = vst.msk [vmem:[#allocation3 + $0x18] sm:$0x3f] %vm19, 0.0
    %vm28 = vcmask 62464
    %29 = vst.msk [vmem:[#allocation4] sm:$0x3f] %vm28, 0.0
    %30 = vst.msk [vmem:[#allocation4 + $0x8] sm:$0x3f] %vm28, 0.0
    %31 = vst.msk [vmem:[#allocation4 + $0x10] sm:$0x3f] %vm28, 0.0
    %32 = vst.msk [vmem:[#allocation4 + $0x18] sm:$0x3f] %vm28, 0.0
  $region17: #{sensevoice_forward.121} parent=0 // pred_fallthru
    _
  %v33 = vld [vmem:[%s0] sm:$0x7]
  %v34 = vld [vmem:[%s1] sm:$0xf]
  %v35 = vld [vmem:[%s1 + $0x4] sm:$0xf]
  %v38 = vunpack.c.l.b16 %v34
  %v39 = vunpack.c.l.b16 %v35
  %v40 = vpack.c.b16 %v39, %v38
  %vm41 = vcmask 64512
  %v43 = vsel %vm41, %v33, 0
  %v46 = vsel %vm41, %v40, 0
  %48 = vmatprep.subr.bf16.mxu0 0
  %49 = vmatpush1.bf16.xpose.msra.mxu0 %v46
  %50 = vmatprep.subr.bf16.mxu0 0
  %51 = vmatpush1.bf16.xpose.msra.mxu0 0
  %52 = vmatprep.subr.bf16.mxu0 0
  %53 = vmatpush1.bf16.xpose.msra.mxu0 0
  %54 = vmatprep.subr.bf16.mxu0 0
  %55 = vmatpush1.bf16.xpose.msra.mxu0 0
  %56 = vmatprep.subr.bf16.mxu0 0
  %57 = vmatpush1.bf16.xpose.msra.mxu0 0
  %58 = vmatprep.subr.bf16.mxu0 0
  %59 = vmatpush1.bf16.xpose.msra.mxu0 0
  %60 = vmatprep.subr.bf16.mxu0 0
  %61 = vmatpush1.bf16.xpose.msra.mxu0 0
  %62 = vmatprep.subr.bf16.mxu0 0
  %63 = vmatpush1.bf16.xpose.msra.mxu0 0
  %64 = vmatprep.subr.bf16.mxu0 0
  %65 = vmatpush1.bf16.xpose.msra.mxu0 0
  %66 = vmatprep.subr.bf16.mxu0 0
  %67 = vmatpush1.bf16.xpose.msra.mxu0 0
  %68 = vmatprep.subr.bf16.mxu0 0
  %69 = vmatpush1.bf16.xpose.msra.mxu0 0
  %70 = vmatprep.subr.bf16.mxu0 0
  %71 = vmatpush1.bf16.xpose.msra.mxu0 0
  %72 = vmatprep.subr.bf16.mxu0 0
  %73 = vmatpush1.bf16.xpose.msra.mxu0 0
  %74 = vmatprep.subr.bf16.mxu0 0
  %75 = vmatpush1.bf16.xpose.msra.mxu0 0
  %76 = vmatprep.subr.bf16.mxu0 0
  %77 = vmatpush1.bf16.xpose.msra.mxu0 0
  %78 = vmatprep.subr.bf16.mxu0 0
  %79 = vmatpush1.bf16.xpose.msra.mxu0 0
  %80 = vmatprep.mubr.bf16.mxu0 0
  %81 = vmatmul.mubr.bf16.gmra.mrb[0].mxu0 %v43
  %v82 = vpop.f32.mrb[0].mxu0
  %v83 = vadd.f32 0.0, %v82
  %v84 = vpop.f32.mrb[0].mxu0
  %v85 = vpop.f32.mrb[0].mxu0
  %v86 = vpop.f32.mrb[0].mxu0
  %87 = vdwg.mxu0
  %v88 = vld [vmem:[#allocation2] sm:$0x3f]
  %vm89 = vcmask 128000
  %v90 = vsel %vm89, %v83, -inf
  %91 = vmax.xlane.f32.xlu0 %v90
  %v92 = vpop.xlane.xlu0 %91
  %v93 = vmax.f32 %v88, %v92
  %v94 = vsub.f32 %v88, %v93
  %v95 = vmul.f32 %v94, 1.442695
  %v96 = vpow.pop %v95
  %98 = vset.pattern.permute.xlu0 0
  %99 = vperm.xlu0 %98, %v93
  %v100 = vpop.permute.xlu0 %99
  %v102 = vsub.f32 %v83, %v100
  %v103 = vmul.f32 %v102, 1.442695
  %v104 = vpow.pop %v103
  %v105 = vld [vmem:[#allocation3] sm:$0x3f]
  %v106 = vmul.f32 %v96, %v105
  %v107 = vsel %vm89, %v104, 0.0
  %108 = vadd.xlane.f32.xlu0 %v107
  %v109 = vpop.xlane.xlu0 %108
  %v110 = vadd.f32 %v106, %v109
  %vm111 = vcmask 5120
  %112 = vst.msk [vmem:[#allocation3] sm:$0x3f] %vm111, %v110
  %v113 = vld [vmem:[#allocation4] sm:$0x3f]
  %115 = vset.pattern.permute.xlu0 0
  %116 = vperm.xlu0 %115, %v96
  %v117 = vpop.permute.xlu0 %116
  %v119 = vmul.f32 %v117, %v113
  %v120 = vpack.c.bf16 %v104, %v104
  %v121 = vld [vmem:[%s2] sm:$0xf]
  %v122 = vld [vmem:[%s2 + $0x4] sm:$0xf]
  %v125 = vunpack.c.l.b16 %v121
  %v126 = vunpack.c.l.b16 %v122
  %v127 = vpack.c.b16 %v126, %v125
  %vm129 = vcmask 130048
  %v131 = vsel %vm129, %v120, 0
  %133 = vmatprep.subr.bf16.mxu0 0
  %134 = vmatpush1.bf16.msra.mxu0 %v127
  %135 = vmatprep.subr.bf16.mxu0 0
  %136 = vmatpush1.bf16.msra.mxu0 0
  %137 = vmatprep.subr.bf16.mxu0 0
  %138 = vmatpush1.bf16.msra.mxu0 0
  %139 = vmatprep.subr.bf16.mxu0 0
  %140 = vmatpush1.bf16.msra.mxu0 0
  %141 = vmatprep.subr.bf16.mxu0 0
  %142 = vmatpush1.bf16.msra.mxu0 0
  %143 = vmatprep.subr.bf16.mxu0 0
  %144 = vmatpush1.bf16.msra.mxu0 0
  %145 = vmatprep.subr.bf16.mxu0 0
  %146 = vmatpush1.bf16.msra.mxu0 0
  %147 = vmatprep.subr.bf16.mxu0 0
  %148 = vmatpush1.bf16.msra.mxu0 0
  %149 = vmatprep.subr.bf16.mxu0 0
  %150 = vmatpush1.bf16.msra.mxu0 0
  %151 = vmatprep.subr.bf16.mxu0 0
  %152 = vmatpush1.bf16.msra.mxu0 0
  %153 = vmatprep.subr.bf16.mxu0 0
  %154 = vmatpush1.bf16.msra.mxu0 0
  %155 = vmatprep.subr.bf16.mxu0 0
  %156 = vmatpush1.bf16.msra.mxu0 0
  %157 = vmatprep.subr.bf16.mxu0 0
  %158 = vmatpush1.bf16.msra.mxu0 0
  %159 = vmatprep.subr.bf16.mxu0 0
  %160 = vmatpush1.bf16.msra.mxu0 0
  %161 = vmatprep.subr.bf16.mxu0 0
  %162 = vmatpush1.bf16.msra.mxu0 0
  %163 = vmatprep.subr.bf16.mxu0 0
  %164 = vmatpush1.bf16.msra.mxu0 0
  %165 = vmatprep.mubr.bf16.mxu0 0
  %166 = vmatmul.mubr.bf16.gmra.mrb[0].mxu0 %v131
  %v167 = vpop.f32.mrb[0].mxu0
  %v168 = vadd.f32 0.0, %v167
  %v169 = vpop.f32.mrb[0].mxu0
  %v170 = vpop.f32.mrb[0].mxu0
  %v171 = vpop.f32.mrb[0].mxu0
  %172 = vdwg.mxu0
  %v173 = vadd.f32 %v119, %v168
  %vm174 = vcmask 62464
  %175 = vst.msk [vmem:[#allocation4] sm:$0x3f] %vm174, %v173
  %176 = vst.msk [vmem:[#allocation2] sm:$0x3f] %vm111, %v93
  %v177 = vld [vmem:[%s0] sm:$0x7]
  %v178 = vld [vmem:[%s1] sm:$0xf]
  %v179 = vld [vmem:[%s1 + $0x4] sm:$0xf]
  %v181 = vunpack.c.l.b16 %v177
  %v182 = vpack.c.b16 %v181, %v181
  %183 = vrot.lane.b32.xlu0 %v182, 120
  %v184 = vpop.permute.xlu0 %183
  %v187 = vunpack.c.l.b16 %v178
  %v188 = vunpack.c.l.b16 %v179
  %v189 = vpack.c.b16 %v188, %v187
  %190 = vrot.lane.b32.xlu0 %v189, 120
  %v191 = vpop.permute.xlu0 %190
  %v193 = vsel %vm41, %v184, 0
  %v196 = vsel %vm41, %v191, 0
  %198 = vmatprep.subr.bf16.mxu0 0
  %199 = vmatpush1.bf16.xpose.msra.mxu0 %v196
  %200 = vmatprep.subr.bf16.mxu0 0
  %201 = vmatpush1.bf16.xpose.msra.mxu0 0
  %202 = vmatprep.subr.bf16.mxu0 0
  %203 = vmatpush1.bf16.xpose.msra.mxu0 0
  %204 = vmatprep.subr.bf16.mxu0 0
  %205 = vmatpush1.bf16.xpose.msra.mxu0 0
  %206 = vmatprep.subr.bf16.mxu0 0
  %207 = vmatpush1.bf16.xpose.msra.mxu0 0
  %208 = vmatprep.subr.bf16.mxu0 0
  %209 = vmatpush1.bf16.xpose.msra.mxu0 0
  %210 = vmatprep.subr.bf16.mxu0 0
  %211 = vmatpush1.bf16.xpose.msra.mxu0 0
  %212 = vmatprep.subr.bf16.mxu0 0
  %213 = vmatpush1.bf16.xpose.msra.mxu0 0
  %214 = vmatprep.subr.bf16.mxu0 0
  %215 = vmatpush1.bf16.xpose.msra.mxu0 0
  %216 = vmatprep.subr.bf16.mxu0 0
  %217 = vmatpush1.bf16.xpose.msra.mxu0 0
  %218 = vmatprep.subr.bf16.mxu0 0
  %219 = vmatpush1.bf16.xpose.msra.mxu0 0
  %220 = vmatprep.subr.bf16.mxu0 0
  %221 = vmatpush1.bf16.xpose.msra.mxu0 0
  %222 = vmatprep.subr.bf16.mxu0 0
  %223 = vmatpush1.bf16.xpose.msra.mxu0 0
  %224 = vmatprep.subr.bf16.mxu0 0
  %225 = vmatpush1.bf16.xpose.msra.mxu0 0
  %226 = vmatprep.subr.bf16.mxu0 0
  %227 = vmatpush1.bf16.xpose.msra.mxu0 0
  %228 = vmatprep.subr.bf16.mxu0 0
  %229 = vmatpush1.bf16.xpose.msra.mxu0 0
  %230 = vmatprep.mubr.bf16.mxu0 0
  %231 = vmatmul.mubr.bf16.gmra.mrb[0].mxu0 %v193
  %v232 = vpop.f32.mrb[0].mxu0
  %v233 = vadd.f32 0.0, %v232
  %v234 = vpop.f32.mrb[0].mxu0
  %v235 = vpop.f32.mrb[0].mxu0
  %v236 = vpop.f32.mrb[0].mxu0
  %237 = vdwg.mxu0
  %s238 = scalar_lea.vmem [#allocation2], 8
  %v239 = vld [vmem:[%s238] sm:$0x3f]
  %v240 = vsel %vm89, %v233, -inf
  %241 = vmax.xlane.f32.xlu0 %v240
  %v242 = vpop.xlane.xlu0 %241
  %v243 = vmax.f32 %v239, %v242
  %v244 = vsub.f32 %v239, %v243
  %v245 = vmul.f32 %v244, 1.442695
  %v246 = vpow.pop %v245
  %248 = vset.pattern.permute.xlu0 0
  %249 = vperm.xlu0 %248, %v243
  %v250 = vpop.permute.xlu0 %249
  %v252 = vsub.f32 %v233, %v250
  %v253 = vmul.f32 %v252, 1.442695
  %v254 = vpow.pop %v253
  %s255 = scalar_lea.vmem [#allocation3], 8
  %v256 = vld [vmem:[%s255] sm:$0x3f]
  %v257 = vmul.f32 %v246, %v256
  %v258 = vsel %vm89, %v254, 0.0
  %259 = vadd.xlane.f32.xlu0 %v258
  %v260 = vpop.xlane.xlu0 %259
  %v261 = vadd.f32 %v257, %v260
  %262 = vst.msk [vmem:[%s255] sm:$0x3f] %vm111, %v261
  %s263 = scalar_lea.vmem [#allocation4], 8
  %v264 = vld [vmem:[%s263] sm:$0x3f]
  %266 = vset.pattern.permute.xlu0 0
  %267 = vperm.xlu0 %266, %v246
  %v268 = vpop.permute.xlu0 %267
  %v270 = vmul.f32 %v268, %v264
  %v271 = vpack.c.bf16 %v254, %v254
  %v272 = vld [vmem:[%s2] sm:$0xf]
  %v273 = vld [vmem:[%s2 + $0x4] sm:$0xf]
  %v276 = vunpack.c.l.b16 %v272
  %v277 = vunpack.c.l.b16 %v273
  %v278 = vpack.c.b16 %v277, %v276
  %279 = vrot.lane.b32.xlu0 %v278, 120
  %v280 = vpop.permute.xlu0 %279
  %v283 = vsel %vm129, %v271, 0
  %285 = vmatprep.subr.bf16.mxu0 0
  %286 = vmatpush1.bf16.msra.mxu0 %v280
  %287 = vmatprep.subr.bf16.mxu0 0
  %288 = vmatpush1.bf16.msra.mxu0 0
  %289 = vmatprep.subr.bf16.mxu0 0
  %290 = vmatpush1.bf16.msra.mxu0 0
  %291 = vmatprep.subr.bf16.mxu0 0
  %292 = vmatpush1.bf16.msra.mxu0 0
  %293 = vmatprep.subr.bf16.mxu0 0
  %294 = vmatpush1.bf16.msra.mxu0 0
  %295 = vmatprep.subr.bf16.mxu0 0
  %296 = vmatpush1.bf16.msra.mxu0 0
  %297 = vmatprep.subr.bf16.mxu0 0
  %298 = vmatpush1.bf16.msra.mxu0 0
  %299 = vmatprep.subr.bf16.mxu0 0
  %300 = vmatpush1.bf16.msra.mxu0 0
  %301 = vmatprep.subr.bf16.mxu0 0
  %302 = vmatpush1.bf16.msra.mxu0 0
  %303 = vmatprep.subr.bf16.mxu0 0
  %304 = vmatpush1.bf16.msra.mxu0 0
  %305 = vmatprep.subr.bf16.mxu0 0
  %306 = vmatpush1.bf16.msra.mxu0 0
  %307 = vmatprep.subr.bf16.mxu0 0
  %308 = vmatpush1.bf16.msra.mxu0 0
  %309 = vmatprep.subr.bf16.mxu0 0
  %310 = vmatpush1.bf16.msra.mxu0 0
  %311 = vmatprep.subr.bf16.mxu0 0
  %312 = vmatpush1.bf16.msra.mxu0 0
  %313 = vmatprep.subr.bf16.mxu0 0
  %314 = vmatpush1.bf16.msra.mxu0 0
  %315 = vmatprep.subr.bf16.mxu0 0
  %316 = vmatpush1.bf16.msra.mxu0 0
  %317 = vmatprep.mubr.bf16.mxu0 0
  %318 = vmatmul.mubr.bf16.gmra.mrb[0].mxu0 %v283
  %v319 = vpop.f32.mrb[0].mxu0
  %v320 = vadd.f32 0.0, %v319
  %v321 = vpop.f32.mrb[0].mxu0
  %v322 = vpop.f32.mrb[0].mxu0
  %v323 = vpop.f32.mrb[0].mxu0
  %324 = vdwg.mxu0
  %v325 = vadd.f32 %v270, %v320
  %326 = vst.msk [vmem:[%s263] sm:$0x3f] %vm174, %v325
  %327 = vst.msk [vmem:[%s238] sm:$0x3f] %vm111, %v243
  %v328 = vld [vmem:[%s0] sm:$0x7]
  %v329 = vld [vmem:[%s1] sm:$0xf]
  %v330 = vld [vmem:[%s1 + $0x4] sm:$0xf]
  %v332 = vunpack.c.l.b16 %v328
  %v333 = vpack.c.b16 %v332, %v332
  %334 = vrot.lane.b32.xlu0 %v333, 112
  %v335 = vpop.permute.xlu0 %334
  %v338 = vunpack.c.l.b16 %v329
  %v339 = vunpack.c.l.b16 %v330
  %v340 = vpack.c.b16 %v339, %v338
  %341 = vrot.lane.b32.xlu0 %v340, 112
  %v342 = vpop.permute.xlu0 %341
  %v344 = vsel %vm41, %v335, 0
  %v347 = vsel %vm41, %v342, 0
  %349 = vmatprep.subr.bf16.mxu0 0
  %350 = vmatpush1.bf16.xpose.msra.mxu0 %v347
  %351 = vmatprep.subr.bf16.mxu0 0
  %352 = vmatpush1.bf16.xpose.msra.mxu0 0
  %353 = vmatprep.subr.bf16.mxu0 0
  %354 = vmatpush1.bf16.xpose.msra.mxu0 0
  %355 = vmatprep.subr.bf16.mxu0 0
  %356 = vmatpush1.bf16.xpose.msra.mxu0 0
  %357 = vmatprep.subr.bf16.mxu0 0
  %358 = vmatpush1.bf16.xpose.msra.mxu0 0
  %359 = vmatprep.subr.bf16.mxu0 0
  %360 = vmatpush1.bf16.xpose.msra.mxu0 0
  %361 = vmatprep.subr.bf16.mxu0 0
  %362 = vmatpush1.bf16.xpose.msra.mxu0 0
  %363 = vmatprep.subr.bf16.mxu0 0
  %364 = vmatpush1.bf16.xpose.msra.mxu0 0
  %365 = vmatprep.subr.bf16.mxu0 0
  %366 = vmatpush1.bf16.xpose.msra.mxu0 0
  %367 = vmatprep.subr.bf16.mxu0 0
  %368 = vmatpush1.bf16.xpose.msra.mxu0 0
  %369 = vmatprep.subr.bf16.mxu0 0
  %370 = vmatpush1.bf16.xpose.msra.mxu0 0
  %371 = vmatprep.subr.bf16.mxu0 0
  %372 = vmatpush1.bf16.xpose.msra.mxu0 0
  %373 = vmatprep.subr.bf16.mxu0 0
  %374 = vmatpush1.bf16.xpose.msra.mxu0 0
  %375 = vmatprep.subr.bf16.mxu0 0
  %376 = vmatpush1.bf16.xpose.msra.mxu0 0
  %377 = vmatprep.subr.bf16.mxu0 0
  %378 = vmatpush1.bf16.xpose.msra.mxu0 0
  %379 = vmatprep.subr.bf16.mxu0 0
  %380 = vmatpush1.bf16.xpose.msra.mxu0 0
  %381 = vmatprep.mubr.bf16.mxu0 0
  %382 = vmatmul.mubr.bf16.gmra.mrb[0].mxu0 %v344
  %v383 = vpop.f32.mrb[0].mxu0
  %v384 = vadd.f32 0.0, %v383
  %v385 = vpop.f32.mrb[0].mxu0
  %v386 = vpop.f32.mrb[0].mxu0
  %v387 = vpop.f32.mrb[0].mxu0
  %388 = vdwg.mxu0
  %s389 = scalar_lea.vmem [#allocation2], 16
  %v390 = vld [vmem:[%s389] sm:$0x3f]
  %v391 = vsel %vm89, %v384, -inf
  %392 = vmax.xlane.f32.xlu0 %v391
  %v393 = vpop.xlane.xlu0 %392
  %v394 = vmax.f32 %v390, %v393
  %v395 = vsub.f32 %v390, %v394
  %v396 = vmul.f32 %v395, 1.442695
  %v397 = vpow.pop %v396
  %399 = vset.pattern.permute.xlu0 0
  %400 = vperm.xlu0 %399, %v394
  %v401 = vpop.permute.xlu0 %400
  %v403 = vsub.f32 %v384, %v401
  %v404 = vmul.f32 %v403, 1.442695
  %v405 = vpow.pop %v404
  %s406 = scalar_lea.vmem [#allocation3], 16
  %v407 = vld [vmem:[%s406] sm:$0x3f]
  %v408 = vmul.f32 %v397, %v407
  %v409 = vsel %vm89, %v405, 0.0
  %410 = vadd.xlane.f32.xlu0 %v409
  %v411 = vpop.xlane.xlu0 %410
  %v412 = vadd.f32 %v408, %v411
  %413 = vst.msk [vmem:[%s406] sm:$0x3f] %vm111, %v412
  %s414 = scalar_lea.vmem [#allocation4], 16
  %v415 = vld [vmem:[%s414] sm:$0x3f]
  %417 = vset.pattern.permute.xlu0 0
  %418 = vperm.xlu0 %417, %v397
  %v419 = vpop.permute.xlu0 %418
  %v421 = vmul.f32 %v419, %v415
  %v422 = vpack.c.bf16 %v405, %v405
  %v423 = vld [vmem:[%s2] sm:$0xf]
  %v424 = vld [vmem:[%s2 + $0x4] sm:$0xf]
  %v427 = vunpack.c.l.b16 %v423
  %v428 = vunpack.c.l.b16 %v424
  %v429 = vpack.c.b16 %v428, %v427
  %430 = vrot.lane.b32.xlu0 %v429, 112
  %v431 = vpop.permute.xlu0 %430
  %v434 = vsel %vm129, %v422, 0
  %436 = vmatprep.subr.bf16.mxu0 0
  %437 = vmatpush1.bf16.msra.mxu0 %v431
  %438 = vmatprep.subr.bf16.mxu0 0
  %439 = vmatpush1.bf16.msra.mxu0 0
  %440 = vmatprep.subr.bf16.mxu0 0
  %441 = vmatpush1.bf16.msra.mxu0 0
  %442 = vmatprep.subr.bf16.mxu0 0
  %443 = vmatpush1.bf16.msra.mxu0 0
  %444 = vmatprep.subr.bf16.mxu0 0
  %445 = vmatpush1.bf16.msra.mxu0 0
  %446 = vmatprep.subr.bf16.mxu0 0
  %447 = vmatpush1.bf16.msra.mxu0 0
  %448 = vmatprep.subr.bf16.mxu0 0
  %449 = vmatpush1.bf16.msra.mxu0 0
  %450 = vmatprep.subr.bf16.mxu0 0
  %451 = vmatpush1.bf16.msra.mxu0 0
  %452 = vmatprep.subr.bf16.mxu0 0
  %453 = vmatpush1.bf16.msra.mxu0 0
  %454 = vmatprep.subr.bf16.mxu0 0
  %455 = vmatpush1.bf16.msra.mxu0 0
  %456 = vmatprep.subr.bf16.mxu0 0
  %457 = vmatpush1.bf16.msra.mxu0 0
  %458 = vmatprep.subr.bf16.mxu0 0
  %459 = vmatpush1.bf16.msra.mxu0 0
  %460 = vmatprep.subr.bf16.mxu0 0
  %461 = vmatpush1.bf16.msra.mxu0 0
  %462 = vmatprep.subr.bf16.mxu0 0
  %463 = vmatpush1.bf16.msra.mxu0 0
  %464 = vmatprep.subr.bf16.mxu0 0
  %465 = vmatpush1.bf16.msra.mxu0 0
  %466 = vmatprep.subr.bf16.mxu0 0
  %467 = vmatpush1.bf16.msra.mxu0 0
  %468 = vmatprep.mubr.bf16.mxu0 0
  %469 = vmatmul.mubr.bf16.gmra.mrb[0].mxu0 %v434
  %v470 = vpop.f32.mrb[0].mxu0
  %v471 = vadd.f32 0.0, %v470
  %v472 = vpop.f32.mrb[0].mxu0
  %v473 = vpop.f32.mrb[0].mxu0
  %v474 = vpop.f32.mrb[0].mxu0
  %475 = vdwg.mxu0
  %v476 = vadd.f32 %v421, %v471
  %477 = vst.msk [vmem:[%s414] sm:$0x3f] %vm174, %v476
  %478 = vst.msk [vmem:[%s389] sm:$0x3f] %vm111, %v394
  %v479 = vld [vmem:[%s0] sm:$0x7]
  %v480 = vld [vmem:[%s1] sm:$0xf]
  %v481 = vld [vmem:[%s1 + $0x4] sm:$0xf]
  %v483 = vunpack.c.l.b16 %v479
  %v484 = vpack.c.b16 %v483, %v483
  %485 = vrot.lane.b32.xlu0 %v484, 104
  %v486 = vpop.permute.xlu0 %485
  %v489 = vunpack.c.l.b16 %v480
  %v490 = vunpack.c.l.b16 %v481
  %v491 = vpack.c.b16 %v490, %v489
  %492 = vrot.lane.b32.xlu0 %v491, 104
  %v493 = vpop.permute.xlu0 %492
  %v495 = vsel %vm41, %v486, 0
  %v498 = vsel %vm41, %v493, 0
  %500 = vmatprep.subr.bf16.mxu0 0
  %501 = vmatpush1.bf16.xpose.msra.mxu0 %v498
  %502 = vmatprep.subr.bf16.mxu0 0
  %503 = vmatpush1.bf16.xpose.msra.mxu0 0
  %504 = vmatprep.subr.bf16.mxu0 0
  %505 = vmatpush1.bf16.xpose.msra.mxu0 0
  %506 = vmatprep.subr.bf16.mxu0 0
  %507 = vmatpush1.bf16.xpose.msra.mxu0 0
  %508 = vmatprep.subr.bf16.mxu0 0
  %509 = vmatpush1.bf16.xpose.msra.mxu0 0
  %510 = vmatprep.subr.bf16.mxu0 0
  %511 = vmatpush1.bf16.xpose.msra.mxu0 0
  %512 = vmatprep.subr.bf16.mxu0 0
  %513 = vmatpush1.bf16.xpose.msra.mxu0 0
  %514 = vmatprep.subr.bf16.mxu0 0
  %515 = vmatpush1.bf16.xpose.msra.mxu0 0
  %516 = vmatprep.subr.bf16.mxu0 0
  %517 = vmatpush1.bf16.xpose.msra.mxu0 0
  %518 = vmatprep.subr.bf16.mxu0 0
  %519 = vmatpush1.bf16.xpose.msra.mxu0 0
  %520 = vmatprep.subr.bf16.mxu0 0
  %521 = vmatpush1.bf16.xpose.msra.mxu0 0
  %522 = vmatprep.subr.bf16.mxu0 0
  %523 = vmatpush1.bf16.xpose.msra.mxu0 0
  %524 = vmatprep.subr.bf16.mxu0 0
  %525 = vmatpush1.bf16.xpose.msra.mxu0 0
  %526 = vmatprep.subr.bf16.mxu0 0
  %527 = vmatpush1.bf16.xpose.msra.mxu0 0
  %528 = vmatprep.subr.bf16.mxu0 0
  %529 = vmatpush1.bf16.xpose.msra.mxu0 0
  %530 = vmatprep.subr.bf16.mxu0 0
  %531 = vmatpush1.bf16.xpose.msra.mxu0 0
  %532 = vmatprep.mubr.bf16.mxu0 0
  %533 = vmatmul.mubr.bf16.gmra.mrb[0].mxu0 %v495
  %v534 = vpop.f32.mrb[0].mxu0
  %v535 = vadd.f32 0.0, %v534
  %v536 = vpop.f32.mrb[0].mxu0
  %v537 = vpop.f32.mrb[0].mxu0
  %v538 = vpop.f32.mrb[0].mxu0
  %539 = vdwg.mxu0
  %s540 = scalar_lea.vmem [#allocation2], 24
  %v541 = vld [vmem:[%s540] sm:$0x3f]
  %v542 = vsel %vm89, %v535, -inf
  %543 = vmax.xlane.f32.xlu0 %v542
  %v544 = vpop.xlane.xlu0 %543
  %v545 = vmax.f32 %v541, %v544
  %v546 = vsub.f32 %v541, %v545
  %v547 = vmul.f32 %v546, 1.442695
  %v548 = vpow.pop %v547
  %550 = vset.pattern.permute.xlu0 0
  %551 = vperm.xlu0 %550, %v545
  %v552 = vpop.permute.xlu0 %551
  %v554 = vsub.f32 %v535, %v552
  %v555 = vmul.f32 %v554, 1.442695
  %v556 = vpow.pop %v555
  %s557 = scalar_lea.vmem [#allocation3], 24
  %v558 = vld [vmem:[%s557] sm:$0x3f]
  %v559 = vmul.f32 %v548, %v558
  %v560 = vsel %vm89, %v556, 0.0
  %561 = vadd.xlane.f32.xlu0 %v560
  %v562 = vpop.xlane.xlu0 %561
  %v563 = vadd.f32 %v559, %v562
  %564 = vst.msk [vmem:[%s557] sm:$0x3f] %vm111, %v563
  %s565 = scalar_lea.vmem [#allocation4], 24
  %v566 = vld [vmem:[%s565] sm:$0x3f]
  %568 = vset.pattern.permute.xlu0 0
  %569 = vperm.xlu0 %568, %v548
  %v570 = vpop.permute.xlu0 %569
  %v572 = vmul.f32 %v570, %v566
  %v573 = vpack.c.bf16 %v556, %v556
  %v574 = vld [vmem:[%s2] sm:$0xf]
  %v575 = vld [vmem:[%s2 + $0x4] sm:$0xf]
  %v578 = vunpack.c.l.b16 %v574
  %v579 = vunpack.c.l.b16 %v575
  %v580 = vpack.c.b16 %v579, %v578
  %581 = vrot.lane.b32.xlu0 %v580, 104
  %v582 = vpop.permute.xlu0 %581
  %v585 = vsel %vm129, %v573, 0
  %587 = vmatprep.subr.bf16.mxu0 0
  %588 = vmatpush1.bf16.msra.mxu0 %v582
  %589 = vmatprep.subr.bf16.mxu0 0
  %590 = vmatpush1.bf16.msra.mxu0 0
  %591 = vmatprep.subr.bf16.mxu0 0
  %592 = vmatpush1.bf16.msra.mxu0 0
  %593 = vmatprep.subr.bf16.mxu0 0
  %594 = vmatpush1.bf16.msra.mxu0 0
  %595 = vmatprep.subr.bf16.mxu0 0
  %596 = vmatpush1.bf16.msra.mxu0 0
  %597 = vmatprep.subr.bf16.mxu0 0
  %598 = vmatpush1.bf16.msra.mxu0 0
  %599 = vmatprep.subr.bf16.mxu0 0
  %600 = vmatpush1.bf16.msra.mxu0 0
  %601 = vmatprep.subr.bf16.mxu0 0
  %602 = vmatpush1.bf16.msra.mxu0 0
  %603 = vmatprep.subr.bf16.mxu0 0
  %604 = vmatpush1.bf16.msra.mxu0 0
  %605 = vmatprep.subr.bf16.mxu0 0
  %606 = vmatpush1.bf16.msra.mxu0 0
  %607 = vmatprep.subr.bf16.mxu0 0
  %608 = vmatpush1.bf16.msra.mxu0 0
  %609 = vmatprep.subr.bf16.mxu0 0
  %610 = vmatpush1.bf16.msra.mxu0 0
  %611 = vmatprep.subr.bf16.mxu0 0
  %612 = vmatpush1.bf16.msra.mxu0 0
  %613 = vmatprep.subr.bf16.mxu0 0
  %614 = vmatpush1.bf16.msra.mxu0 0
  %615 = vmatprep.subr.bf16.mxu0 0
  %616 = vmatpush1.bf16.msra.mxu0 0
  %617 = vmatprep.subr.bf16.mxu0 0
  %618 = vmatpush1.bf16.msra.mxu0 0
  %619 = vmatprep.mubr.bf16.mxu0 0
  %620 = vmatmul.mubr.bf16.gmra.mrb[0].mxu0 %v585
  %v621 = vpop.f32.mrb[0].mxu0
  %v622 = vadd.f32 0.0, %v621
  %v623 = vpop.f32.mrb[0].mxu0
  %v624 = vpop.f32.mrb[0].mxu0
  %v625 = vpop.f32.mrb[0].mxu0
  %626 = vdwg.mxu0
  %v627 = vadd.f32 %v572, %v622
  %628 = vst.msk [vmem:[%s565] sm:$0x3f] %vm174, %v627
  %629 = vst.msk [vmem:[%s540] sm:$0x3f] %vm111, %v545
  // Predicated region
  $region18: #{sensevoice_forward.121} parent=0 // pred_check
    %p630 = pneg %p15
  $region19: #{sensevoice_forward.121} parent=0 // pred_check_branch
    %632 = sbr.rel (%p630) target = $region21
  $region20: #{sensevoice_forward.121} parent=0 // pred_region
    %v633 = vld [vmem:[#allocation4] sm:$0x3f]
    %v634 = vld [vmem:[#allocation3] sm:$0x3f]
    %636 = vset.pattern.permute.xlu0 0
    %637 = vperm.xlu0 %636, %v634
    %v638 = vpop.permute.xlu0 %637
    %v640 = vrcp.pop %v638
    %v641 = vmul.f32 %v633, %v640
    %v642 = vld [vmem:[%s263] sm:$0x3f]
    %v643 = vld [vmem:[%s255] sm:$0x3f]
    %645 = vset.pattern.permute.xlu0 0
    %646 = vperm.xlu0 %645, %v643
    %v647 = vpop.permute.xlu0 %646
    %v649 = vrcp.pop %v647
    %v650 = vmul.f32 %v642, %v649
    %v651 = vld [vmem:[%s414] sm:$0x3f]
    %v652 = vld [vmem:[%s406] sm:$0x3f]
    %654 = vset.pattern.permute.xlu0 0
    %655 = vperm.xlu0 %654, %v652
    %v656 = vpop.permute.xlu0 %655
    %v658 = vrcp.pop %v656
    %v659 = vmul.f32 %v651, %v658
    %v660 = vld [vmem:[%s565] sm:$0x3f]
    %v661 = vld [vmem:[%s557] sm:$0x3f]
    %663 = vset.pattern.permute.xlu0 0
    %664 = vperm.xlu0 %663, %v661
    %v665 = vpop.permute.xlu0 %664
    %v667 = vrcp.pop %v665
    %v668 = vmul.f32 %v660, %v667
    %670 = vrot.lane.b32.xlu0 %v650, 8
    %v671 = vpop.permute.xlu0 %670
    %674 = vrot.lane.b32.xlu0 %v659, 16
    %v675 = vpop.permute.xlu0 %674
    %678 = vrot.lane.b32.xlu0 %v668, 24
    %v679 = vpop.permute.xlu0 %678
    %v681 = vsel %vm41, %v641, %v671
    %v682 = vsel %vm129, %v681, %v675
    %vm683 = vcmask 195584
    %v684 = vsel %vm683, %v682, %v679
    %v685 = vpack.c.bf16 %v684, %v684
    %vm686 = vcmask 256000
    %687 = vst.msk [vmem:[%s3] sm:$0x7] %vm686, %v685
  $region21: #{sensevoice_forward.121} parent=0 // pred_fallthru
    _
  // Predicated region
  $region22: #{sensevoice_forward.121} parent=0 // pred_check
    _
  $region23: #{sensevoice_forward.121} parent=0 // pred_check_branch
    %689 = sbr.rel (0) target = $region25
  $region24: #{sensevoice_forward.121} parent=0 // pred_region
    _
  $region25: #{sensevoice_forward.121} parent=0 // pred_fallthru
    _
  // Predicated region
  $region26: #{sensevoice_forward.121} parent=0 // pred_check
    _
  $region27: #{sensevoice_forward.121} parent=0 // pred_check_branch
    %691 = sbr.rel (0) target = $region29
  $region28: #{sensevoice_forward.121} parent=0 // pred_region
    _
  $region29: #{sensevoice_forward.121} parent=0 // pred_fallthru
    _

</llo_original>
